<compile_context>
chip_gen: v7x
topology: tpu7x:2x2x1
jax: 0.10.0
libtpu: 0.0.40
codegen_flags: <defaults>
</compile_context>

<pallas_src>
import functools

import jax
import jax.numpy as jnp
from jax import lax
from jax.experimental import pallas as pl
from jax.experimental.pallas import tpu as pltpu

EPS = 1e-5
LANE = 128
EXPANSION = 4


def _default_vmem_limit():
    # v5e/v6e: 128 MiB VMEM per TensorCore, v7x: 64 MiB. Leave ~25% headroom,
    # never request more than 96 MiB.
    try:
        cap = getattr(pltpu.get_tpu_info(), "vmem_capacity_bytes", None)
        if cap:
            return int(min(int(cap) * 3 // 4, 96 * 1024 * 1024))
    except Exception:
        pass
    return 48 * 1024 * 1024


VMEM_LIMIT = _default_vmem_limit()


# --------------------------------------------------------------------------
# Small helpers
# --------------------------------------------------------------------------
def _round_up(n, m):
    return ((n + m - 1) // m) * m


def _pad_to(a, shape):
    pads = [(0, t - s) for s, t in zip(a.shape, shape)]
    if all(p == (0, 0) for p in pads):
        return a
    return jnp.pad(a, pads)


def _pick_row_tile(m, target=1024):
    """Largest multiple of 8 that divides m and is <= target (else m)."""
    # TODO(synk): pad M to a multiple of the target tile and mask the tail in
    #             the stats instead of falling back to awkward divisors.
    t = min(target, m)
    t -= t % 8
    while t > 0 and m % t != 0:
        t -= 8
    return t if t > 0 else m


def _bn_scale_bias(ssum, ssq, count, gamma, beta):
    """Fold training-mode BN (biased variance) into per-channel scale/bias."""
    ssum = ssum.reshape(-1)
    ssq = ssq.reshape(-1)
    mean = ssum / count
    var = jnp.maximum(ssq / count - mean * mean, 0.0)
    scale = gamma * lax.rsqrt(var + EPS)
    bias = beta - mean * scale
    return scale[None, :], bias[None, :]            # each (1, C), f32


# --------------------------------------------------------------------------
# Kernel 1: single-dot matmul (+ optional fused BN+ReLU prologue on the LHS)
#           that also emits per-M-tile partial sum / sum-of-squares.
#           Grid = (M_tiles,), full-width K and N blocks.
# --------------------------------------------------------------------------
def _mm_kernel(*refs, prologue):
    if prologue:
        a_ref, s_ref, b_ref, w_ref, y_ref, sum_ref, sq_ref = refs
        a = a_ref[...].astype(jnp.float32)
        a = jnp.maximum(a * s_ref[...] + b_ref[...], 0.0).astype(jnp.bfloat16)
    else:
        a_ref, w_ref, y_ref, sum_ref, sq_ref = refs
        a = a_ref[...]
    y = jnp.dot(a, w_ref[...], preferred_element_type=jnp.float32)
    y_ref[...] = y.astype(y_ref.dtype)
    sum_ref[0] = jnp.sum(y, axis=0, keepdims=True)
    sq_ref[0] = jnp.sum(y * y, axis=0, keepdims=True)


def matmul_bn_stats(a, w, prologue_scale=None, prologue_bias=None,
                    tm_target=1024):
    """y = [relu(a*scale+bias)] @ w (bf16 out), plus per-column sum / sumsq."""
    M, K = a.shape
    Kw, Ntot = w.shape
    assert K == Kw
    prologue = prologue_scale is not None
    tm = _pick_row_tile(M, tm_target)
    nm = M // tm

    in_specs = [pl.BlockSpec((tm, K), lambda m: (m, 0))]
    inputs = [a]
    if prologue:
        in_specs += [pl.BlockSpec((1, K), lambda m: (0, 0)),
                     pl.BlockSpec((1, K), lambda m: (0, 0))]
        inputs += [prologue_scale, prologue_bias]
    in_specs.append(pl.BlockSpec((K, Ntot), lambda m: (0, 0)))
    inputs.append(w)

    y, psum, psq = pl.pallas_call(
        functools.partial(_mm_kernel, prologue=prologue),
        grid=(nm,),
        in_specs=in_specs,
        out_specs=(pl.BlockSpec((tm, Ntot), lambda m: (m, 0)),
                   pl.BlockSpec((1, 1, Ntot), lambda m: (m, 0, 0)),
                   pl.BlockSpec((1, 1, Ntot), lambda m: (m, 0, 0))),
        out_shape=(jax.ShapeDtypeStruct((M, Ntot), jnp.bfloat16),
                   jax.ShapeDtypeStruct((nm, 1, Ntot), jnp.float32),
                   jax.ShapeDtypeStruct((nm, 1, Ntot), jnp.float32)),
        compiler_params=pltpu.CompilerParams(
            dimension_semantics=("parallel",),
            vmem_limit_bytes=VMEM_LIMIT),
    )(*inputs)
    return y, jnp.sum(psum, axis=(0, 1)), jnp.sum(psq, axis=(0, 1))


# --------------------------------------------------------------------------
# Kernel 2: 3x3 conv (stride s, pad 1) with fused BN1+ReLU prologue.
#           Reads the UNPADDED conv1 output, builds the zero halo in VMEM,
#           accumulates 9 tap matmuls directly into the VMEM accumulator.
# --------------------------------------------------------------------------
def _conv2_kernel(x_ref, s_ref, b_ref, w_ref, y_ref, sum_ref, sq_ref,
                  acc_ref, pad_ref, *, stride, Ho, Wo):
    Hp, Wp, tk = pad_ref.shape
    H, W = Hp - 2, Wp - 2

    # Zero the padded scratch, then overwrite its interior with the BN1+ReLU
    # prologue.  The halo stays exactly zero (torch pads after bn1+relu)
    # without any iota/select masking.
    pad_ref[...] = jnp.zeros_like(pad_ref)
    img = x_ref[0].astype(jnp.float32)                       # (H, W, tk)
    s = s_ref[...].reshape(1, 1, tk)
    b = b_ref[...].reshape(1, 1, tk)
    pad_ref[pl.ds(1, H), pl.ds(1, W), :] = (
        jnp.maximum(img * s + b, 0.0).astype(pad_ref.dtype))

    # 9 taps of the 3x3, accumulated directly into the VMEM accumulator
    # (no huge live f32 value across the taps).
    for t in range(9):
        kh, kw = t // 3, t % 3
        if stride == 1:
            patch = pad_ref[pl.ds(kh, Ho), pl.ds(kw, Wo), :]
        else:
            patch = pad_ref[pl.ds(kh, Ho, stride), pl.ds(kw, Wo, stride), :]
        tap = jnp.dot(patch.reshape(Ho * Wo, tk), w_ref[t],
                      preferred_element_type=jnp.float32)
        if t == 0:
            acc_ref[...] = tap
        else:
            acc_ref[...] += tap

    y = acc_ref[...]
    y_ref[0] = y.astype(y_ref.dtype)
    sum_ref[0] = jnp.sum(y, axis=0, keepdims=True)
    sq_ref[0] = jnp.sum(y * y, axis=0, keepdims=True)


def conv2_3x3_bn_stats(y1_img, ch_block_offset, scale1, bias1, w_taps,
                       stride, Ho, Wo):
    """y1_img: (N, H, W, Ctot) raw bf16 conv1 output (unpadded); the conv1
    channels live at column-block `ch_block_offset` (units of Cp).
    w_taps: (9, Cp, C2p) bf16, tap-major.  Returns (y2 flat bf16, sum, sumsq).
    """
    # TODO(synk): add an output-row tile axis with a 1-row halo so large images
    #             pipeline better and shrink per-step VMEM on v7x.
    N, H, W, Ctot = y1_img.shape
    _, Cp, C2p = w_taps.shape
    tk, tn = Cp, C2p
    assert Ctot >= (ch_block_offset + 1) * tk

    y2, psum, psq = pl.pallas_call(
        functools.partial(_conv2_kernel, stride=stride, Ho=Ho, Wo=Wo),
        grid=(N,),
        in_specs=[
            pl.BlockSpec((1, H, W, tk),
                         lambda n, _o=ch_block_offset: (n, 0, 0, _o)),
            pl.BlockSpec((1, tk), lambda n: (0, 0)),
            pl.BlockSpec((1, tk), lambda n: (0, 0)),
            pl.BlockSpec((9, tk, tn), lambda n: (0, 0, 0)),
        ],
        out_specs=(pl.BlockSpec((1, Ho * Wo, tn), lambda n: (n, 0, 0)),
                   pl.BlockSpec((1, 1, tn), lambda n: (n, 0, 0)),
                   pl.BlockSpec((1, 1, tn), lambda n: (n, 0, 0))),
        out_shape=(jax.ShapeDtypeStruct((N, Ho * Wo, C2p), jnp.bfloat16),
                   jax.ShapeDtypeStruct((N, 1, C2p), jnp.float32),
                   jax.ShapeDtypeStruct((N, 1, C2p), jnp.float32)),
        scratch_shapes=[pltpu.VMEM((Ho * Wo, tn), jnp.float32),
                        pltpu.VMEM((H + 2, W + 2, tk), jnp.bfloat16)],
        compiler_params=pltpu.CompilerParams(
            dimension_semantics=("parallel",),
            vmem_limit_bytes=VMEM_LIMIT),
    )(y1_img, scale1, bias1, w_taps)
    return (y2.reshape(N * Ho * Wo, C2p),
            jnp.sum(psum, axis=(0, 1)), jnp.sum(psq, axis=(0, 1)))


# --------------------------------------------------------------------------
# Kernel 3: fused bn3(y3) + bn_s(shortcut) + residual add + ReLU.
#           Full-channel-width, lane-dense tiles; bf16 inputs, f32 output.
# --------------------------------------------------------------------------
def _bn_add_relu_kernel(y_ref, s3_ref, b3_ref, r_ref, ss_ref, bs_ref, o_ref):
    y = y_ref[...].astype(jnp.float32)
    r = r_ref[...].astype(jnp.float32)
    out = (y * s3_ref[...] + b3_ref[...]) + (r * ss_ref[...] + bs_ref[...])
    o_ref[...] = jnp.maximum(out, 0.0)


def bn_add_bn_relu(y3, s3, b3, resid, ss, bs, tm_target=1024):
    M, C = y3.shape                                   # C = co_p (padded)
    assert resid.shape[0] == M
    tm = _pick_row_tile(M, tm_target)

    return pl.pallas_call(
        _bn_add_relu_kernel,
        grid=(M // tm,),
        in_specs=[
            pl.BlockSpec((tm, C), lambda m: (m, 0)),
            pl.BlockSpec((1, C), lambda m: (0, 0)),
            pl.BlockSpec((1, C), lambda m: (0, 0)),
            pl.BlockSpec((tm, C), lambda m: (m, 0)),   # residual, col block 0
            pl.BlockSpec((1, C), lambda m: (0, 0)),
            pl.BlockSpec((1, C), lambda m: (0, 0)),
        ],
        out_specs=pl.BlockSpec((tm, C), lambda m: (m, 0)),
        out_shape=jax.ShapeDtypeStruct((M, C), jnp.float32),
        compiler_params=pltpu.CompilerParams(
            dimension_semantics=("parallel",),
            vmem_limit_bytes=VMEM_LIMIT),
    )(y3, s3, b3, resid, ss, bs)


# --------------------------------------------------------------------------
# Bottleneck module (expansion = 4)
# --------------------------------------------------------------------------
def init_bottleneck_params(key, in_planes, planes, stride):
    """Deterministic synthetic parameters, shapes matching the torch module."""
    cout = EXPANSION * planes
    keys = jax.random.split(key, 12)
    p = {}
    # conv1: torch (planes, in_planes, 1, 1) -> (in_planes, planes)
    p['w1'] = 0.1 * jax.random.normal(keys[0], (in_planes, planes), jnp.float32)
    p['g1'] = 1.0 + 0.1 * jax.random.normal(keys[1], (planes,), jnp.float32)
    p['be1'] = 0.1 * jax.random.normal(keys[2], (planes,), jnp.float32)
    # conv2: torch (planes, planes, 3, 3) -> tap-major (9, cin, cout)
    w2 = 0.1 * jax.random.normal(keys[3], (planes, planes, 3, 3), jnp.float32)
    p['w2'] = jnp.transpose(w2, (2, 3, 1, 0)).reshape(9, planes, planes)
    p['g2'] = 1.0 + 0.1 * jax.random.normal(keys[4], (planes,), jnp.float32)
    p['be2'] = 0.1 * jax.random.normal(keys[5], (planes,), jnp.float32)
    # conv3: torch (4*planes, planes, 1, 1) -> (planes, 4*planes)
    p['w3'] = 0.1 * jax.random.normal(keys[6], (planes, cout), jnp.float32)
    p['g3'] = 1.0 + 0.1 * jax.random.normal(keys[7], (cout,), jnp.float32)
    p['be3'] = 0.1 * jax.random.normal(keys[8], (cout,), jnp.float32)
    # projection shortcut (only when stride != 1 or in_planes != 4*planes)
    if stride != 1 or in_planes != cout:
        p['ws'] = 0.1 * jax.random.normal(keys[9], (in_planes, cout), jnp.float32)
        p['gs'] = 1.0 + 0.1 * jax.random.normal(keys[10], (cout,), jnp.float32)
        p['bes'] = 0.1 * jax.random.normal(keys[11], (cout,), jnp.float32)
    return p


def bottleneck_forward(x_nchw, params, stride=1):
    """Forward pass matching torch Bottleneck.forward (training-mode BN)."""
    x = jnp.transpose(x_nchw, (0, 2, 3, 1)).astype(jnp.float32)   # NCHW->NHWC
    N, H, W, Cin = x.shape
    planes = params['w1'].shape[1]
    cout = params['w3'].shape[1]
    Ho = (H + 2 - 3) // stride + 1
    Wo = (W + 2 - 3) // stride + 1
    M = N * H * W
    M2 = N * Ho * Wo
    has_proj = 'ws' in params

    # ---- pad channel dims to 128 (lane-dense), cast weights to bf16 ---------
    Cin_p = _round_up(Cin, LANE)
    pl_p = _round_up(planes, LANE)
    co_p = _round_up(cout, LANE)

    w1p = _pad_to(params['w1'], (Cin_p, pl_p)).astype(jnp.bfloat16)
    g1p = _pad_to(params['g1'], (pl_p,)); be1p = _pad_to(params['be1'], (pl_p,))
    w2p = _pad_to(params['w2'], (9, pl_p, pl_p)).astype(jnp.bfloat16)
    g2p = _pad_to(params['g2'], (pl_p,)); be2p = _pad_to(params['be2'], (pl_p,))
    w3p = _pad_to(params['w3'], (pl_p, co_p)).astype(jnp.bfloat16)
    g3p = _pad_to(params['g3'], (co_p,)); be3p = _pad_to(params['be3'], (co_p,))
    if has_proj:
        wsp = _pad_to(params['ws'], (Cin_p, co_p)).astype(jnp.bfloat16)
        gsp = _pad_to(params['gs'], (co_p,)); besp = _pad_to(params['bes'], (co_p,))

    x_flat = _pad_to(x.reshape(M, Cin), (M, Cin_p))           # f32 (identity)
    x_bf = x_flat.astype(jnp.bfloat16)

    # ---- stage A: conv1 (1x1) [+ fused projection shortcut at stride 1] -----
    fuse_shortcut = has_proj and stride == 1 and co_p % pl_p == 0
    if fuse_shortcut:
        # Shortcut columns FIRST so both conv2 (conv1 cols at block offset
        # co_p//pl_p) and the epilogue residual (cols [0:co_p]) read
        # block-aligned windows of the fused output without extra copies.
        wa = jnp.concatenate([wsp, w1p], axis=1)              # (Cin_p, co_p+pl_p)
        y1, sa, qa = matmul_bn_stats(x_bf, wa)
        ss, bs = _bn_scale_bias(sa[:co_p], qa[:co_p], M, gsp, besp)
        s1, b1 = _bn_scale_bias(sa[co_p:], qa[co_p:], M, g1p, be1p)
        resid = y1                                            # bf16, cols [0:co_p]
        conv2_in = y1.reshape(N, H, W, co_p + pl_p)
        ch_off = co_p // pl_p
    else:
        y1, s1sum, s1sq = matmul_bn_stats(x_bf, w1p)
        s1, b1 = _bn_scale_bias(s1sum, s1sq, M, g1p, be1p)
        conv2_in = y1.reshape(N, H, W, pl_p)
        ch_off = 0
        if has_proj:
            # TODO(synk): drive the strided shortcut rows from the kernel's
            #             index_map instead of materializing the subsample.
            xs = x[:, ::stride, ::stride, :].reshape(M2, Cin)
            xs_bf = _pad_to(xs, (M2, Cin_p)).astype(jnp.bfloat16)
            ys, sssum, sssq = matmul_bn_stats(xs_bf, wsp)
            ss, bs = _bn_scale_bias(sssum, sssq, M2, gsp, besp)
            resid = ys
        else:                                                 # identity shortcut
            resid = x_flat
            ss = jnp.ones((1, co_p), jnp.float32)
            bs = jnp.zeros((1, co_p), jnp.float32)

    # ---- stage B: conv2 (3x3, stride, pad 1) with fused BN1+ReLU prologue ---
    y2, s2sum, s2sq = conv2_3x3_bn_stats(conv2_in, ch_off, s1, b1, w2p,
                                         stride, Ho, Wo)
    s2, b2 = _bn_scale_bias(s2sum, s2sq, M2, g2p, be2p)

    # ---- stage C: conv3 (1x1) with fused BN2+ReLU prologue -------------------
    y3, s3sum, s3sq = matmul_bn_stats(y2, w3p, prologue_scale=s2,
                                      prologue_bias=b2)
    s3, b3 = _bn_scale_bias(s3sum, s3sq, M2, g3p, be3p)

    # ---- stage D: bn3(y3) + bn_s(shortcut) + add + ReLU (fused) --------------
    out = bn_add_bn_relu(y3, s3, b3, resid, ss, bs)

    # TODO(synk): emit only the unpadded cout columns from the epilogue when
    #             cout % 128 == 0 and fold the NHWC->NCHW transpose into it.
    out = out.reshape(N, Ho, Wo, co_p)[:, :, :, :cout]
    return jnp.transpose(out, (0, 3, 1, 2))                   # NHWC -> NCHW


# --------------------------------------------------------------------------
# Pure-JAX reference (f32) for a tolerance check
# --------------------------------------------------------------------------
def _bn_train_ref(y, gamma, beta):
    mean = jnp.mean(y, axis=(0, 1, 2))
    var = jnp.var(y, axis=(0, 1, 2))
    return (y - mean) * lax.rsqrt(var + EPS) * gamma + beta


def bottleneck_reference(x_nchw, params, stride=1):
    dn = ('NHWC', 'HWIO', 'NHWC')
    prec = lax.Precision.HIGHEST
    x = jnp.transpose(x_nchw, (0, 2, 3, 1)).astype(jnp.float32)
    planes = params['w1'].shape[1]
    y = lax.conv_general_dilated(x, params['w1'][None, None], (1, 1), 'VALID',
                                 dimension_numbers=dn, precision=prec)
    y = jax.nn.relu(_bn_train_ref(y, params['g1'], params['be1']))
    w2 = params['w2'].reshape(3, 3, planes, planes)
    y = lax.conv_general_dilated(y, w2, (stride, stride), ((1, 1), (1, 1)),
                                 dimension_numbers=dn, precision=prec)
    y = jax.nn.relu(_bn_train_ref(y, params['g2'], params['be2']))
    y = lax.conv_general_dilated(y, params['w3'][None, None], (1, 1), 'VALID',
                                 dimension_numbers=dn, precision=prec)
    y = _bn_train_ref(y, params['g3'], params['be3'])
    if 'ws' in params:
        sc = lax.conv_general_dilated(x, params['ws'][None, None],
                                      (stride, stride), 'VALID',
                                      dimension_numbers=dn, precision=prec)
        sc = _bn_train_ref(sc, params['gs'], params['bes'])
    else:
        sc = x
    out = jax.nn.relu(y + sc)
    return jnp.transpose(out, (0, 3, 1, 2))


# --------------------------------------------------------------------------
if __name__ == "__main__":
    key = jax.random.PRNGKey(0)
    k_x, k_p = jax.random.split(key)

    # Small, module-consistent shapes: N=2, in_planes=8, planes=8, H=W=16.
    # in_planes (8) != expansion*planes (32) -> projection shortcut is active.
    N, in_planes, planes, H, W, stride = 2, 8, 8, 16, 16, 1

    x = jax.random.normal(k_x, (N, in_planes, H, W), jnp.float32)   # NCHW
    params = init_bottleneck_params(k_p, in_planes, planes, stride)

    fwd = jax.jit(functools.partial(bottleneck_forward, stride=stride))
    out = jax.block_until_ready(fwd(x, params))

    assert out.shape == (N, EXPANSION * planes, H // stride, W // stride)
    assert bool(jnp.all(out >= 0.0))                   # final ReLU
    assert bool(jnp.all(jnp.isfinite(out)))

    # Tolerance check vs an f32 reference (kernels use bf16 weights/activations
    # on the MXU, so this is mixed-precision-close, not bit-exact).
    ref = jax.block_until_ready(
        jax.jit(functools.partial(bottleneck_reference, stride=stride))(x, params))
    rel_l2 = float(jnp.linalg.norm(out - ref) / (jnp.linalg.norm(ref) + 1e-6))
    assert rel_l2 < 0.05, f"relative L2 error too large: {rel_l2}"

    print("KERNEL_OK")
</pallas_src>

<mosaic_0001>
module attributes {stable_mosaic.version = 11 : i64} {
  func.func @_mm_kernel(%arg0: i32, %arg1: memref<512x128xbf16, #tpu.memory_space<vmem>>, %arg2: memref<128x256xbf16, #tpu.memory_space<vmem>>, %arg3: memref<512x256xbf16, #tpu.memory_space<vmem>>, %arg4: memref<1x1x256xf32, #tpu.memory_space<vmem>>, %arg5: memref<1x1x256xf32, #tpu.memory_space<vmem>>) attributes {dimension_semantics = [#tpu.dimension_semantics<parallel>], iteration_bounds = array<i64: 1>, scalar_prefetch = 0 : i64, scratch_operands = 0 : i64, tpu.core_type = #tpu.core_type<tc>, window_params = [{transform_indices = @transform_0, window_bounds = array<i64: 512, 128>}, {pipeline_mode = #tpu.pipeline_mode<synchronous>, transform_indices = @transform_1, window_bounds = array<i64: 128, 256>}, {transform_indices = @transform_2, window_bounds = array<i64: 512, 256>}, {transform_indices = @transform_3, window_bounds = array<i64: 1, 1, 256>}, {transform_indices = @transform_4, window_bounds = array<i64: 1, 1, 256>}]} {
    %c0 = arith.constant 0 : index
    %c0_0 = arith.constant 0 : index
    %0 = vector.load %arg1[%c0, %c0_0] : memref<512x128xbf16, #tpu.memory_space<vmem>>, vector<512x128xbf16>
    %c0_1 = arith.constant 0 : index
    %c0_2 = arith.constant 0 : index
    %1 = vector.load %arg2[%c0_1, %c0_2] : memref<128x256xbf16, #tpu.memory_space<vmem>>, vector<128x256xbf16>
    %cst = arith.constant dense<0.000000e+00> : vector<512x256xf32>
    %2 = tpu.matmul %0, %1, %cst {dimension_numbers = #tpu.dot_dimension_numbers<[1], [0], [0], [1], [0, 0, 1, 1], [], []>} : vector<512x128xbf16>, vector<128x256xbf16>, vector<512x256xf32> -> vector<512x256xf32>
    %3 = arith.truncf %2 : vector<512x256xf32> to vector<512x256xbf16>
    %c0_3 = arith.constant 0 : index
    %c0_4 = arith.constant 0 : index
    %4 = vector.load %arg3[%c0_3, %c0_4] : memref<512x256xbf16, #tpu.memory_space<vmem>>, vector<512x256xbf16>
    tpu.vector_store %arg3[%c0_3, %c0_4], %3 {strides = array<i32>} : memref<512x256xbf16, #tpu.memory_space<vmem>>, vector<512x256xbf16>,
    %cst_5 = arith.constant dense<0.000000e+00> : vector<256xf32>
    %5 = vector.multi_reduction <add>, %2, %cst_5 [0] : vector<512x256xf32> to vector<256xf32>
    %6 = vector.shape_cast %5 : vector<256xf32> to vector<1x256xf32>
    %c0_6 = arith.constant 0 : index
    %c0_7 = arith.constant 0 : index
    %c0_8 = arith.constant 0 : index
    %7 = vector.load %arg4[%c0_6, %c0_7, %c0_8] : memref<1x1x256xf32, #tpu.memory_space<vmem>>, vector<1x1x256xf32>
    %8 = vector.shape_cast %7 : vector<1x1x256xf32> to vector<1x256xf32>
    %9 = vector.shape_cast %6 : vector<1x256xf32> to vector<1x1x256xf32>
    tpu.vector_store %arg4[%c0_6, %c0_7, %c0_8], %9 {strides = array<i32>} : memref<1x1x256xf32, #tpu.memory_space<vmem>>, vector<1x1x256xf32>,
    %10 = arith.mulf %2, %2 : vector<512x256xf32>
    %cst_9 = arith.constant dense<0.000000e+00> : vector<256xf32>
    %11 = vector.multi_reduction <add>, %10, %cst_9 [0] : vector<512x256xf32> to vector<256xf32>
    %12 = vector.shape_cast %11 : vector<256xf32> to vector<1x256xf32>
    %c0_10 = arith.constant 0 : index
    %c0_11 = arith.constant 0 : index
    %c0_12 = arith.constant 0 : index
    %13 = vector.load %arg5[%c0_10, %c0_11, %c0_12] : memref<1x1x256xf32, #tpu.memory_space<vmem>>, vector<1x1x256xf32>
    %14 = vector.shape_cast %13 : vector<1x1x256xf32> to vector<1x256xf32>
    %15 = vector.shape_cast %12 : vector<1x256xf32> to vector<1x1x256xf32>
    tpu.vector_store %arg5[%c0_10, %c0_11, %c0_12], %15 {strides = array<i32>} : memref<1x1x256xf32, #tpu.memory_space<vmem>>, vector<1x1x256xf32>,
    return
  }
  func.func @transform_0(%arg0: i32) -> (i32, i32) {
    %c0_i32 = arith.constant 0 : i32
    %c0_i32_0 = arith.constant 0 : i32
    return %arg0, %c0_i32 : i32, i32
  }
  func.func @transform_1(%arg0: i32) -> (i32, i32) {
    %c0_i32 = arith.constant 0 : i32
    %c0_i32_0 = arith.constant 0 : i32
    %c0_i32_1 = arith.constant 0 : i32
    return %c0_i32, %c0_i32_0 : i32, i32
  }
  func.func @transform_2(%arg0: i32) -> (i32, i32) {
    %c0_i32 = arith.constant 0 : i32
    %c0_i32_0 = arith.constant 0 : i32
    return %arg0, %c0_i32 : i32, i32
  }
  func.func @transform_3(%arg0: i32) -> (i32, i32, i32) {
    %c0_i32 = arith.constant 0 : i32
    %c0_i32_0 = arith.constant 0 : i32
    %c0_i32_1 = arith.constant 0 : i32
    return %arg0, %c0_i32, %c0_i32_0 : i32, i32, i32
  }
  func.func @transform_4(%arg0: i32) -> (i32, i32, i32) {
    %c0_i32 = arith.constant 0 : i32
    %c0_i32_0 = arith.constant 0 : i32
    %c0_i32_1 = arith.constant 0 : i32
    return %arg0, %c0_i32, %c0_i32_0 : i32, i32, i32
  }
}

module attributes {stable_mosaic.version = 11 : i64} {
  func.func @_conv2_kernel(%arg0: i32, %arg1: memref<1x16x16x128xbf16, #tpu.memory_space<vmem>>, %arg2: memref<1x128xf32, #tpu.memory_space<vmem>>, %arg3: memref<1x128xf32, #tpu.memory_space<vmem>>, %arg4: memref<9x128x128xbf16, #tpu.memory_space<vmem>>, %arg5: memref<1x256x128xbf16, #tpu.memory_space<vmem>>, %arg6: memref<1x1x128xf32, #tpu.memory_space<vmem>>, %arg7: memref<1x1x128xf32, #tpu.memory_space<vmem>>, %arg8: memref<256x128xf32, #tpu.memory_space<vmem>>, %arg9: memref<18x18x128xbf16, #tpu.memory_space<vmem>>) attributes {dimension_semantics = [#tpu.dimension_semantics<parallel>], iteration_bounds = array<i64: 2>, scalar_prefetch = 0 : i64, scratch_operands = 2 : i64, tpu.core_type = #tpu.core_type<tc>, window_params = [{transform_indices = @transform_0, window_bounds = array<i64: 1, 16, 16, 128>}, {pipeline_mode = #tpu.pipeline_mode<synchronous>, transform_indices = @transform_1, window_bounds = array<i64: 1, 128>}, {pipeline_mode = #tpu.pipeline_mode<synchronous>, transform_indices = @transform_2, window_bounds = array<i64: 1, 128>}, {pipeline_mode = #tpu.pipeline_mode<synchronous>, transform_indices = @transform_3, window_bounds = array<i64: 9, 128, 128>}, {transform_indices = @transform_4, window_bounds = array<i64: 1, 256, 128>}, {transform_indices = @transform_5, window_bounds = array<i64: 1, 1, 128>}, {transform_indices = @transform_6, window_bounds = array<i64: 1, 1, 128>}]} {
    %cst = arith.constant 0.000000e+00 : bf16
    %0 = vector.broadcast %cst : bf16 to vector<18x18x128xbf16>
    %c0 = arith.constant 0 : index
    %c0_0 = arith.constant 0 : index
    %c0_1 = arith.constant 0 : index
    %1 = vector.load %arg9[%c0, %c0_0, %c0_1] : memref<18x18x128xbf16, #tpu.memory_space<vmem>>, vector<18x18x128xbf16>
    tpu.vector_store %arg9[%c0, %c0_0, %c0_1], %0 {strides = array<i32>} : memref<18x18x128xbf16, #tpu.memory_space<vmem>>, vector<18x18x128xbf16>,
    %c0_2 = arith.constant 0 : index
    %c0_3 = arith.constant 0 : index
    %c0_4 = arith.constant 0 : index
    %c0_5 = arith.constant 0 : index
    %2 = vector.load %arg1[%c0_2, %c0_3, %c0_4, %c0_5] : memref<1x16x16x128xbf16, #tpu.memory_space<vmem>>, vector<1x16x16x128xbf16>
    %3 = vector.shape_cast %2 : vector<1x16x16x128xbf16> to vector<16x16x128xbf16>
    %4 = arith.extf %3 : vector<16x16x128xbf16> to vector<16x16x128xf32>
    %c0_6 = arith.constant 0 : index
    %c0_7 = arith.constant 0 : index
    %5 = vector.load %arg2[%c0_6, %c0_7] : memref<1x128xf32, #tpu.memory_space<vmem>>, vector<1x128xf32>
    %6 = vector.shape_cast %5 : vector<1x128xf32> to vector<1x1x128xf32>
    %c0_8 = arith.constant 0 : index
    %c0_9 = arith.constant 0 : index
    %7 = vector.load %arg3[%c0_8, %c0_9] : memref<1x128xf32, #tpu.memory_space<vmem>>, vector<1x128xf32>
    %8 = vector.shape_cast %7 : vector<1x128xf32> to vector<1x1x128xf32>
    %9 = vector.broadcast %6 : vector<1x1x128xf32> to vector<16x16x128xf32>
    %10 = arith.mulf %4, %9 : vector<16x16x128xf32>
    %11 = vector.broadcast %8 : vector<1x1x128xf32> to vector<16x16x128xf32>
    %12 = arith.addf %10, %11 : vector<16x16x128xf32>
    %cst_10 = arith.constant 0.000000e+00 : f32
    %13 = vector.broadcast %cst_10 : f32 to vector<16x16x128xf32>
    %14 = arith.maximumf %12, %13 : vector<16x16x128xf32>
    %15 = arith.truncf %14 : vector<16x16x128xf32> to vector<16x16x128xbf16>
    %c1 = arith.constant 1 : index
    %c1_11 = arith.constant 1 : index
    %c0_12 = arith.constant 0 : index
    %16 = vector.load %arg9[%c1, %c1_11, %c0_12] : memref<18x18x128xbf16, #tpu.memory_space<vmem>>, vector<16x16x128xbf16>
    tpu.vector_store %arg9[%c1, %c1_11, %c0_12], %15 {strides = array<i32>} : memref<18x18x128xbf16, #tpu.memory_space<vmem>>, vector<16x16x128xbf16>,
    %c0_13 = arith.constant 0 : index
    %c0_14 = arith.constant 0 : index
    %c0_15 = arith.constant 0 : index
    %17 = vector.load %arg9[%c0_13, %c0_14, %c0_15] : memref<18x18x128xbf16, #tpu.memory_space<vmem>>, vector<16x16x128xbf16>
    %18 = vector.shape_cast %17 : vector<16x16x128xbf16> to vector<256x128xbf16>
    %c0_16 = arith.constant 0 : index
    %c0_17 = arith.constant 0 : index
    %c0_18 = arith.constant 0 : index
    %19 = vector.load %arg4[%c0_16, %c0_17, %c0_18] : memref<9x128x128xbf16, #tpu.memory_space<vmem>>, vector<1x128x128xbf16>
    %20 = vector.shape_cast %19 : vector<1x128x128xbf16> to vector<128x128xbf16>
    %cst_19 = arith.constant dense<0.000000e+00> : vector<256x128xf32>
    %21 = tpu.matmul %18, %20, %cst_19 {dimension_numbers = #tpu.dot_dimension_numbers<[1], [0], [0], [1], [0, 0, 1, 1], [], []>} : vector<256x128xbf16>, vector<128x128xbf16>, vector<256x128xf32> -> vector<256x128xf32>
    %c0_20 = arith.constant 0 : index
    %c0_21 = arith.constant 0 : index
    %22 = vector.load %arg8[%c0_20, %c0_21] : memref<256x128xf32, #tpu.memory_space<vmem>>, vector<256x128xf32>
    tpu.vector_store %arg8[%c0_20, %c0_21], %21 {strides = array<i32>} : memref<256x128xf32, #tpu.memory_space<vmem>>, vector<256x128xf32>,
    %c0_22 = arith.constant 0 : index
    %c1_23 = arith.constant 1 : index
    %c0_24 = arith.constant 0 : index
    %23 = vector.load %arg9[%c0_22, %c1_23, %c0_24] : memref<18x18x128xbf16, #tpu.memory_space<vmem>>, vector<16x16x128xbf16>
    %24 = vector.shape_cast %23 : vector<16x16x128xbf16> to vector<256x128xbf16>
    %c1_25 = arith.constant 1 : index
    %c0_26 = arith.constant 0 : index
    %c0_27 = arith.constant 0 : index
    %25 = vector.load %arg4[%c1_25, %c0_26, %c0_27] : memref<9x128x128xbf16, #tpu.memory_space<vmem>>, vector<1x128x128xbf16>
    %26 = vector.shape_cast %25 : vector<1x128x128xbf16> to vector<128x128xbf16>
    %cst_28 = arith.constant dense<0.000000e+00> : vector<256x128xf32>
    %27 = tpu.matmul %24, %26, %cst_28 {dimension_numbers = #tpu.dot_dimension_numbers<[1], [0], [0], [1], [0, 0, 1, 1], [], []>} : vector<256x128xbf16>, vector<128x128xbf16>, vector<256x128xf32> -> vector<256x128xf32>
    %c0_29 = arith.constant 0 : index
    %c0_30 = arith.constant 0 : index
    %28 = vector.load %arg8[%c0_29, %c0_30] : memref<256x128xf32, #tpu.memory_space<vmem>>, vector<256x128xf32>
    %29 = arith.addf %28, %27 : vector<256x128xf32>
    %c0_31 = arith.constant 0 : index
    %c0_32 = arith.constant 0 : index
    %30 = vector.load %arg8[%c0_31, %c0_32] : memref<256x128xf32, #tpu.memory_space<vmem>>, vector<256x128xf32>
    tpu.vector_store %arg8[%c0_31, %c0_32], %29 {strides = array<i32>} : memref<256x128xf32, #tpu.memory_space<vmem>>, vector<256x128xf32>,
    %c0_33 = arith.constant 0 : index
    %c2 = arith.constant 2 : index
    %c0_34 = arith.constant 0 : index
    %31 = vector.load %arg9[%c0_33, %c2, %c0_34] : memref<18x18x128xbf16, #tpu.memory_space<vmem>>, vector<16x16x128xbf16>
    %32 = vector.shape_cast %31 : vector<16x16x128xbf16> to vector<256x128xbf16>
    %c2_35 = arith.constant 2 : index
    %c0_36 = arith.constant 0 : index
    %c0_37 = arith.constant 0 : index
    %33 = vector.load %arg4[%c2_35, %c0_36, %c0_37] : memref<9x128x128xbf16, #tpu.memory_space<vmem>>, vector<1x128x128xbf16>
    %34 = vector.shape_cast %33 : vector<1x128x128xbf16> to vector<128x128xbf16>
    %cst_38 = arith.constant dense<0.000000e+00> : vector<256x128xf32>
    %35 = tpu.matmul %32, %34, %cst_38 {dimension_numbers = #tpu.dot_dimension_numbers<[1], [0], [0], [1], [0, 0, 1, 1], [], []>} : vector<256x128xbf16>, vector<128x128xbf16>, vector<256x128xf32> -> vector<256x128xf32>
    %c0_39 = arith.constant 0 : index
    %c0_40 = arith.constant 0 : index
    %36 = vector.load %arg8[%c0_39, %c0_40] : memref<256x128xf32, #tpu.memory_space<vmem>>, vector<256x128xf32>
    %37 = arith.addf %36, %35 : vector<256x128xf32>
    %c0_41 = arith.constant 0 : index
    %c0_42 = arith.constant 0 : index
    %38 = vector.load %arg8[%c0_41, %c0_42] : memref<256x128xf32, #tpu.memory_space<vmem>>, vector<256x128xf32>
    tpu.vector_store %arg8[%c0_41, %c0_42], %37 {strides = array<i32>} : memref<256x128xf32, #tpu.memory_space<vmem>>, vector<256x128xf32>,
    %c1_43 = arith.constant 1 : index
    %c0_44 = arith.constant 0 : index
    %c0_45 = arith.constant 0 : index
    %39 = vector.load %arg9[%c1_43, %c0_44, %c0_45] : memref<18x18x128xbf16, #tpu.memory_space<vmem>>, vector<16x16x128xbf16>
    %40 = vector.shape_cast %39 : vector<16x16x128xbf16> to vector<256x128xbf16>
    %c3 = arith.constant 3 : index
    %c0_46 = arith.constant 0 : index
    %c0_47 = arith.constant 0 : index
    %41 = vector.load %arg4[%c3, %c0_46, %c0_47] : memref<9x128x128xbf16, #tpu.memory_space<vmem>>, vector<1x128x128xbf16>
    %42 = vector.shape_cast %41 : vector<1x128x128xbf16> to vector<128x128xbf16>
    %cst_48 = arith.constant dense<0.000000e+00> : vector<256x128xf32>
    %43 = tpu.matmul %40, %42, %cst_48 {dimension_numbers = #tpu.dot_dimension_numbers<[1], [0], [0], [1], [0, 0, 1, 1], [], []>} : vector<256x128xbf16>, vector<128x128xbf16>, vector<256x128xf32> -> vector<256x128xf32>
    %c0_49 = arith.constant 0 : index
    %c0_50 = arith.constant 0 : index
    %44 = vector.load %arg8[%c0_49, %c0_50] : memref<256x128xf32, #tpu.memory_space<vmem>>, vector<256x128xf32>
    %45 = arith.addf %44, %43 : vector<256x128xf32>
    %c0_51 = arith.constant 0 : index
    %c0_52 = arith.constant 0 : index
    %46 = vector.load %arg8[%c0_51, %c0_52] : memref<256x128xf32, #tpu.memory_space<vmem>>, vector<256x128xf32>
    tpu.vector_store %arg8[%c0_51, %c0_52], %45 {strides = array<i32>} : memref<256x128xf32, #tpu.memory_space<vmem>>, vector<256x128xf32>,
    %c1_53 = arith.constant 1 : index
    %c1_54 = arith.constant 1 : index
    %c0_55 = arith.constant 0 : index
    %47 = vector.load %arg9[%c1_53, %c1_54, %c0_55] : memref<18x18x128xbf16, #tpu.memory_space<vmem>>, vector<16x16x128xbf16>
    %48 = vector.shape_cast %47 : vector<16x16x128xbf16> to vector<256x128xbf16>
    %c4 = arith.constant 4 : index
    %c0_56 = arith.constant 0 : index
    %c0_57 = arith.constant 0 : index
    %49 = vector.load %arg4[%c4, %c0_56, %c0_57] : memref<9x128x128xbf16, #tpu.memory_space<vmem>>, vector<1x128x128xbf16>
    %50 = vector.shape_cast %49 : vector<1x128x128xbf16> to vector<128x128xbf16>
    %cst_58 = arith.constant dense<0.000000e+00> : vector<256x128xf32>
    %51 = tpu.matmul %48, %50, %cst_58 {dimension_numbers = #tpu.dot_dimension_numbers<[1], [0], [0], [1], [0, 0, 1, 1], [], []>} : vector<256x128xbf16>, vector<128x128xbf16>, vector<256x128xf32> -> vector<256x128xf32>
    %c0_59 = arith.constant 0 : index
    %c0_60 = arith.constant 0 : index
    %52 = vector.load %arg8[%c0_59, %c0_60] : memref<256x128xf32, #tpu.memory_space<vmem>>, vector<256x128xf32>
    %53 = arith.addf %52, %51 : vector<256x128xf32>
    %c0_61 = arith.constant 0 : index
    %c0_62 = arith.constant 0 : index
    %54 = vector.load %arg8[%c0_61, %c0_62] : memref<256x128xf32, #tpu.memory_space<vmem>>, vector<256x128xf32>
    tpu.vector_store %arg8[%c0_61, %c0_62], %53 {strides = array<i32>} : memref<256x128xf32, #tpu.memory_space<vmem>>, vector<256x128xf32>,
    %c1_63 = arith.constant 1 : index
    %c2_64 = arith.constant 2 : index
    %c0_65 = arith.constant 0 : index
    %55 = vector.load %arg9[%c1_63, %c2_64, %c0_65] : memref<18x18x128xbf16, #tpu.memory_space<vmem>>, vector<16x16x128xbf16>
    %56 = vector.shape_cast %55 : vector<16x16x128xbf16> to vector<256x128xbf16>
    %c5 = arith.constant 5 : index
    %c0_66 = arith.constant 0 : index
    %c0_67 = arith.constant 0 : index
    %57 = vector.load %arg4[%c5, %c0_66, %c0_67] : memref<9x128x128xbf16, #tpu.memory_space<vmem>>, vector<1x128x128xbf16>
    %58 = vector.shape_cast %57 : vector<1x128x128xbf16> to vector<128x128xbf16>
    %cst_68 = arith.constant dense<0.000000e+00> : vector<256x128xf32>
    %59 = tpu.matmul %56, %58, %cst_68 {dimension_numbers = #tpu.dot_dimension_numbers<[1], [0], [0], [1], [0, 0, 1, 1], [], []>} : vector<256x128xbf16>, vector<128x128xbf16>, vector<256x128xf32> -> vector<256x128xf32>
    %c0_69 = arith.constant 0 : index
    %c0_70 = arith.constant 0 : index
    %60 = vector.load %arg8[%c0_69, %c0_70] : memref<256x128xf32, #tpu.memory_space<vmem>>, vector<256x128xf32>
    %61 = arith.addf %60, %59 : vector<256x128xf32>
    %c0_71 = arith.constant 0 : index
    %c0_72 = arith.constant 0 : index
    %62 = vector.load %arg8[%c0_71, %c0_72] : memref<256x128xf32, #tpu.memory_space<vmem>>, vector<256x128xf32>
    tpu.vector_store %arg8[%c0_71, %c0_72], %61 {strides = array<i32>} : memref<256x128xf32, #tpu.memory_space<vmem>>, vector<256x128xf32>,
    %c2_73 = arith.constant 2 : index
    %c0_74 = arith.constant 0 : index
    %c0_75 = arith.constant 0 : index
    %63 = vector.load %arg9[%c2_73, %c0_74, %c0_75] : memref<18x18x128xbf16, #tpu.memory_space<vmem>>, vector<16x16x128xbf16>
    %64 = vector.shape_cast %63 : vector<16x16x128xbf16> to vector<256x128xbf16>
    %c6 = arith.constant 6 : index
    %c0_76 = arith.constant 0 : index
    %c0_77 = arith.constant 0 : index
    %65 = vector.load %arg4[%c6, %c0_76, %c0_77] : memref<9x128x128xbf16, #tpu.memory_space<vmem>>, vector<1x128x128xbf16>
    %66 = vector.shape_cast %65 : vector<1x128x128xbf16> to vector<128x128xbf16>
    %cst_78 = arith.constant dense<0.000000e+00> : vector<256x128xf32>
    %67 = tpu.matmul %64, %66, %cst_78 {dimension_numbers = #tpu.dot_dimension_numbers<[1], [0], [0], [1], [0, 0, 1, 1], [], []>} : vector<256x128xbf16>, vector<128x128xbf16>, vector<256x128xf32> -> vector<256x128xf32>
    %c0_79 = arith.constant 0 : index
    %c0_80 = arith.constant 0 : index
    %68 = vector.load %arg8[%c0_79, %c0_80] : memref<256x128xf32, #tpu.memory_space<vmem>>, vector<256x128xf32>
    %69 = arith.addf %68, %67 : vector<256x128xf32>
    %c0_81 = arith.constant 0 : index
    %c0_82 = arith.constant 0 : index
    %70 = vector.load %arg8[%c0_81, %c0_82] : memref<256x128xf32, #tpu.memory_space<vmem>>, vector<256x128xf32>
    tpu.vector_store %arg8[%c0_81, %c0_82], %69 {strides = array<i32>} : memref<256x128xf32, #tpu.memory_space<vmem>>, vector<256x128xf32>,
    %c2_83 = arith.constant 2 : index
    %c1_84 = arith.constant 1 : index
    %c0_85 = arith.constant 0 : index
    %71 = vector.load %arg9[%c2_83, %c1_84, %c0_85] : memref<18x18x128xbf16, #tpu.memory_space<vmem>>, vector<16x16x128xbf16>
    %72 = vector.shape_cast %71 : vector<16x16x128xbf16> to vector<256x128xbf16>
    %c7 = arith.constant 7 : index
    %c0_86 = arith.constant 0 : index
    %c0_87 = arith.constant 0 : index
    %73 = vector.load %arg4[%c7, %c0_86, %c0_87] : memref<9x128x128xbf16, #tpu.memory_space<vmem>>, vector<1x128x128xbf16>
    %74 = vector.shape_cast %73 : vector<1x128x128xbf16> to vector<128x128xbf16>
    %cst_88 = arith.constant dense<0.000000e+00> : vector<256x128xf32>
    %75 = tpu.matmul %72, %74, %cst_88 {dimension_numbers = #tpu.dot_dimension_numbers<[1], [0], [0], [1], [0, 0, 1, 1], [], []>} : vector<256x128xbf16>, vector<128x128xbf16>, vector<256x128xf32> -> vector<256x128xf32>
    %c0_89 = arith.constant 0 : index
    %c0_90 = arith.constant 0 : index
    %76 = vector.load %arg8[%c0_89, %c0_90] : memref<256x128xf32, #tpu.memory_space<vmem>>, vector<256x128xf32>
    %77 = arith.addf %76, %75 : vector<256x128xf32>
    %c0_91 = arith.constant 0 : index
    %c0_92 = arith.constant 0 : index
    %78 = vector.load %arg8[%c0_91, %c0_92] : memref<256x128xf32, #tpu.memory_space<vmem>>, vector<256x128xf32>
    tpu.vector_store %arg8[%c0_91, %c0_92], %77 {strides = array<i32>} : memref<256x128xf32, #tpu.memory_space<vmem>>, vector<256x128xf32>,
    %c2_93 = arith.constant 2 : index
    %c2_94 = arith.constant 2 : index
    %c0_95 = arith.constant 0 : index
    %79 = vector.load %arg9[%c2_93, %c2_94, %c0_95] : memref<18x18x128xbf16, #tpu.memory_space<vmem>>, vector<16x16x128xbf16>
    %80 = vector.shape_cast %79 : vector<16x16x128xbf16> to vector<256x128xbf16>
    %c8 = arith.constant 8 : index
    %c0_96 = arith.constant 0 : index
    %c0_97 = arith.constant 0 : index
    %81 = vector.load %arg4[%c8, %c0_96, %c0_97] : memref<9x128x128xbf16, #tpu.memory_space<vmem>>, vector<1x128x128xbf16>
    %82 = vector.shape_cast %81 : vector<1x128x128xbf16> to vector<128x128xbf16>
    %cst_98 = arith.constant dense<0.000000e+00> : vector<256x128xf32>
    %83 = tpu.matmul %80, %82, %cst_98 {dimension_numbers = #tpu.dot_dimension_numbers<[1], [0], [0], [1], [0, 0, 1, 1], [], []>} : vector<256x128xbf16>, vector<128x128xbf16>, vector<256x128xf32> -> vector<256x128xf32>
    %c0_99 = arith.constant 0 : index
    %c0_100 = arith.constant 0 : index
    %84 = vector.load %arg8[%c0_99, %c0_100] : memref<256x128xf32, #tpu.memory_space<vmem>>, vector<256x128xf32>
    %85 = arith.addf %84, %83 : vector<256x128xf32>
    %c0_101 = arith.constant 0 : index
    %c0_102 = arith.constant 0 : index
    %86 = vector.load %arg8[%c0_101, %c0_102] : memref<256x128xf32, #tpu.memory_space<vmem>>, vector<256x128xf32>
    tpu.vector_store %arg8[%c0_101, %c0_102], %85 {strides = array<i32>} : memref<256x128xf32, #tpu.memory_space<vmem>>, vector<256x128xf32>,
    %c0_103 = arith.constant 0 : index
    %c0_104 = arith.constant 0 : index
    %87 = vector.load %arg8[%c0_103, %c0_104] : memref<256x128xf32, #tpu.memory_space<vmem>>, vector<256x128xf32>
    %88 = arith.truncf %87 : vector<256x128xf32> to vector<256x128xbf16>
    %c0_105 = arith.constant 0 : index
    %c0_106 = arith.constant 0 : index
    %c0_107 = arith.constant 0 : index
    %89 = vector.load %arg5[%c0_105, %c0_106, %c0_107] : memref<1x256x128xbf16, #tpu.memory_space<vmem>>, vector<1x256x128xbf16>
    %90 = vector.shape_cast %89 : vector<1x256x128xbf16> to vector<256x128xbf16>
    %91 = vector.shape_cast %88 : vector<256x128xbf16> to vector<1x256x128xbf16>
    tpu.vector_store %arg5[%c0_105, %c0_106, %c0_107], %91 {strides = array<i32>} : memref<1x256x128xbf16, #tpu.memory_space<vmem>>, vector<1x256x128xbf16>,
    %cst_108 = arith.constant dense<0.000000e+00> : vector<128xf32>
    %92 = vector.multi_reduction <add>, %87, %cst_108 [0] : vector<256x128xf32> to vector<128xf32>
    %93 = vector.shape_cast %92 : vector<128xf32> to vector<1x128xf32>
    %c0_109 = arith.constant 0 : index
    %c0_110 = arith.constant 0 : index
    %c0_111 = arith.constant 0 : index
    %94 = vector.load %arg6[%c0_109, %c0_110, %c0_111] : memref<1x1x128xf32, #tpu.memory_space<vmem>>, vector<1x1x128xf32>
    %95 = vector.shape_cast %94 : vector<1x1x128xf32> to vector<1x128xf32>
    %96 = vector.shape_cast %93 : vector<1x128xf32> to vector<1x1x128xf32>
    tpu.vector_store %arg6[%c0_109, %c0_110, %c0_111], %96 {strides = array<i32>} : memref<1x1x128xf32, #tpu.memory_space<vmem>>, vector<1x1x128xf32>,
    %97 = arith.mulf %87, %87 : vector<256x128xf32>
    %cst_112 = arith.constant dense<0.000000e+00> : vector<128xf32>
    %98 = vector.multi_reduction <add>, %97, %cst_112 [0] : vector<256x128xf32> to vector<128xf32>
    %99 = vector.shape_cast %98 : vector<128xf32> to vector<1x128xf32>
    %c0_113 = arith.constant 0 : index
    %c0_114 = arith.constant 0 : index
    %c0_115 = arith.constant 0 : index
    %100 = vector.load %arg7[%c0_113, %c0_114, %c0_115] : memref<1x1x128xf32, #tpu.memory_space<vmem>>, vector<1x1x128xf32>
    %101 = vector.shape_cast %100 : vector<1x1x128xf32> to vector<1x128xf32>
    %102 = vector.shape_cast %99 : vector<1x128xf32> to vector<1x1x128xf32>
    tpu.vector_store %arg7[%c0_113, %c0_114, %c0_115], %102 {strides = array<i32>} : memref<1x1x128xf32, #tpu.memory_space<vmem>>, vector<1x1x128xf32>,
    return
  }
  func.func @transform_0(%arg0: i32) -> (i32, i32, i32, i32) {
    %c0_i32 = arith.constant 0 : i32
    %c0_i32_0 = arith.constant 0 : i32
    %c1_i32 = arith.constant 1 : i32
    %c0_i32_1 = arith.constant 0 : i32
    return %arg0, %c0_i32, %c0_i32_0, %c1_i32 : i32, i32, i32, i32
  }
  func.func @transform_1(%arg0: i32) -> (i32, i32) {
    %c0_i32 = arith.constant 0 : i32
    %c0_i32_0 = arith.constant 0 : i32
    %c0_i32_1 = arith.constant 0 : i32
    return %c0_i32, %c0_i32_0 : i32, i32
  }
  func.func @transform_2(%arg0: i32) -> (i32, i32) {
    %c0_i32 = arith.constant 0 : i32
    %c0_i32_0 = arith.constant 0 : i32
    %c0_i32_1 = arith.constant 0 : i32
    return %c0_i32, %c0_i32_0 : i32, i32
  }
  func.func @transform_3(%arg0: i32) -> (i32, i32, i32) {
    %c0_i32 = arith.constant 0 : i32
    %c0_i32_0 = arith.constant 0 : i32
    %c0_i32_1 = arith.constant 0 : i32
    %c0_i32_2 = arith.constant 0 : i32
    return %c0_i32, %c0_i32_0, %c0_i32_1 : i32, i32, i32
  }
  func.func @transform_4(%arg0: i32) -> (i32, i32, i32) {
    %c0_i32 = arith.constant 0 : i32
    %c0_i32_0 = arith.constant 0 : i32
    %c0_i32_1 = arith.constant 0 : i32
    return %arg0, %c0_i32, %c0_i32_0 : i32, i32, i32
  }
  func.func @transform_5(%arg0: i32) -> (i32, i32, i32) {
    %c0_i32 = arith.constant 0 : i32
    %c0_i32_0 = arith.constant 0 : i32
    %c0_i32_1 = arith.constant 0 : i32
    return %arg0, %c0_i32, %c0_i32_0 : i32, i32, i32
  }
  func.func @transform_6(%arg0: i32) -> (i32, i32, i32) {
    %c0_i32 = arith.constant 0 : i32
    %c0_i32_0 = arith.constant 0 : i32
    %c0_i32_1 = arith.constant 0 : i32
    return %arg0, %c0_i32, %c0_i32_0 : i32, i32, i32
  }
}

module attributes {stable_mosaic.version = 11 : i64} {
  func.func @_mm_kernel(%arg0: i32, %arg1: memref<512x128xbf16, #tpu.memory_space<vmem>>, %arg2: memref<1x128xf32, #tpu.memory_space<vmem>>, %arg3: memref<1x128xf32, #tpu.memory_space<vmem>>, %arg4: memref<128x128xbf16, #tpu.memory_space<vmem>>, %arg5: memref<512x128xbf16, #tpu.memory_space<vmem>>, %arg6: memref<1x1x128xf32, #tpu.memory_space<vmem>>, %arg7: memref<1x1x128xf32, #tpu.memory_space<vmem>>) attributes {dimension_semantics = [#tpu.dimension_semantics<parallel>], iteration_bounds = array<i64: 1>, scalar_prefetch = 0 : i64, scratch_operands = 0 : i64, tpu.core_type = #tpu.core_type<tc>, window_params = [{transform_indices = @transform_0, window_bounds = array<i64: 512, 128>}, {pipeline_mode = #tpu.pipeline_mode<synchronous>, transform_indices = @transform_1, window_bounds = array<i64: 1, 128>}, {pipeline_mode = #tpu.pipeline_mode<synchronous>, transform_indices = @transform_2, window_bounds = array<i64: 1, 128>}, {pipeline_mode = #tpu.pipeline_mode<synchronous>, transform_indices = @transform_3, window_bounds = array<i64: 128, 128>}, {transform_indices = @transform_4, window_bounds = array<i64: 512, 128>}, {transform_indices = @transform_5, window_bounds = array<i64: 1, 1, 128>}, {transform_indices = @transform_6, window_bounds = array<i64: 1, 1, 128>}]} {
    %c0 = arith.constant 0 : index
    %c0_0 = arith.constant 0 : index
    %0 = vector.load %arg1[%c0, %c0_0] : memref<512x128xbf16, #tpu.memory_space<vmem>>, vector<512x128xbf16>
    %1 = arith.extf %0 : vector<512x128xbf16> to vector<512x128xf32>
    %c0_1 = arith.constant 0 : index
    %c0_2 = arith.constant 0 : index
    %2 = vector.load %arg2[%c0_1, %c0_2] : memref<1x128xf32, #tpu.memory_space<vmem>>, vector<1x128xf32>
    %3 = vector.broadcast %2 : vector<1x128xf32> to vector<512x128xf32>
    %4 = arith.mulf %1, %3 : vector<512x128xf32>
    %c0_3 = arith.constant 0 : index
    %c0_4 = arith.constant 0 : index
    %5 = vector.load %arg3[%c0_3, %c0_4] : memref<1x128xf32, #tpu.memory_space<vmem>>, vector<1x128xf32>
    %6 = vector.broadcast %5 : vector<1x128xf32> to vector<512x128xf32>
    %7 = arith.addf %4, %6 : vector<512x128xf32>
    %cst = arith.constant 0.000000e+00 : f32
    %8 = vector.broadcast %cst : f32 to vector<512x128xf32>
    %9 = arith.maximumf %7, %8 : vector<512x128xf32>
    %10 = arith.truncf %9 : vector<512x128xf32> to vector<512x128xbf16>
    %c0_5 = arith.constant 0 : index
    %c0_6 = arith.constant 0 : index
    %11 = vector.load %arg4[%c0_5, %c0_6] : memref<128x128xbf16, #tpu.memory_space<vmem>>, vector<128x128xbf16>
    %cst_7 = arith.constant dense<0.000000e+00> : vector<512x128xf32>
    %12 = tpu.matmul %10, %11, %cst_7 {dimension_numbers = #tpu.dot_dimension_numbers<[1], [0], [0], [1], [0, 0, 1, 1], [], []>} : vector<512x128xbf16>, vector<128x128xbf16>, vector<512x128xf32> -> vector<512x128xf32>
    %13 = arith.truncf %12 : vector<512x128xf32> to vector<512x128xbf16>
    %c0_8 = arith.constant 0 : index
    %c0_9 = arith.constant 0 : index
    %14 = vector.load %arg5[%c0_8, %c0_9] : memref<512x128xbf16, #tpu.memory_space<vmem>>, vector<512x128xbf16>
    tpu.vector_store %arg5[%c0_8, %c0_9], %13 {strides = array<i32>} : memref<512x128xbf16, #tpu.memory_space<vmem>>, vector<512x128xbf16>,
    %cst_10 = arith.constant dense<0.000000e+00> : vector<128xf32>
    %15 = vector.multi_reduction <add>, %12, %cst_10 [0] : vector<512x128xf32> to vector<128xf32>
    %16 = vector.shape_cast %15 : vector<128xf32> to vector<1x128xf32>
    %c0_11 = arith.constant 0 : index
    %c0_12 = arith.constant 0 : index
    %c0_13 = arith.constant 0 : index
    %17 = vector.load %arg6[%c0_11, %c0_12, %c0_13] : memref<1x1x128xf32, #tpu.memory_space<vmem>>, vector<1x1x128xf32>
    %18 = vector.shape_cast %17 : vector<1x1x128xf32> to vector<1x128xf32>
    %19 = vector.shape_cast %16 : vector<1x128xf32> to vector<1x1x128xf32>
    tpu.vector_store %arg6[%c0_11, %c0_12, %c0_13], %19 {strides = array<i32>} : memref<1x1x128xf32, #tpu.memory_space<vmem>>, vector<1x1x128xf32>,
    %20 = arith.mulf %12, %12 : vector<512x128xf32>
    %cst_14 = arith.constant dense<0.000000e+00> : vector<128xf32>
    %21 = vector.multi_reduction <add>, %20, %cst_14 [0] : vector<512x128xf32> to vector<128xf32>
    %22 = vector.shape_cast %21 : vector<128xf32> to vector<1x128xf32>
    %c0_15 = arith.constant 0 : index
    %c0_16 = arith.constant 0 : index
    %c0_17 = arith.constant 0 : index
    %23 = vector.load %arg7[%c0_15, %c0_16, %c0_17] : memref<1x1x128xf32, #tpu.memory_space<vmem>>, vector<1x1x128xf32>
    %24 = vector.shape_cast %23 : vector<1x1x128xf32> to vector<1x128xf32>
    %25 = vector.shape_cast %22 : vector<1x128xf32> to vector<1x1x128xf32>
    tpu.vector_store %arg7[%c0_15, %c0_16, %c0_17], %25 {strides = array<i32>} : memref<1x1x128xf32, #tpu.memory_space<vmem>>, vector<1x1x128xf32>,
    return
  }
  func.func @transform_0(%arg0: i32) -> (i32, i32) {
    %c0_i32 = arith.constant 0 : i32
    %c0_i32_0 = arith.constant 0 : i32
    return %arg0, %c0_i32 : i32, i32
  }
  func.func @transform_1(%arg0: i32) -> (i32, i32) {
    %c0_i32 = arith.constant 0 : i32
    %c0_i32_0 = arith.constant 0 : i32
    %c0_i32_1 = arith.constant 0 : i32
    return %c0_i32, %c0_i32_0 : i32, i32
  }
  func.func @transform_2(%arg0: i32) -> (i32, i32) {
    %c0_i32 = arith.constant 0 : i32
    %c0_i32_0 = arith.constant 0 : i32
    %c0_i32_1 = arith.constant 0 : i32
    return %c0_i32, %c0_i32_0 : i32, i32
  }
  func.func @transform_3(%arg0: i32) -> (i32, i32) {
    %c0_i32 = arith.constant 0 : i32
    %c0_i32_0 = arith.constant 0 : i32
    %c0_i32_1 = arith.constant 0 : i32
    return %c0_i32, %c0_i32_0 : i32, i32
  }
  func.func @transform_4(%arg0: i32) -> (i32, i32) {
    %c0_i32 = arith.constant 0 : i32
    %c0_i32_0 = arith.constant 0 : i32
    return %arg0, %c0_i32 : i32, i32
  }
  func.func @transform_5(%arg0: i32) -> (i32, i32, i32) {
    %c0_i32 = arith.constant 0 : i32
    %c0_i32_0 = arith.constant 0 : i32
    %c0_i32_1 = arith.constant 0 : i32
    return %arg0, %c0_i32, %c0_i32_0 : i32, i32, i32
  }
  func.func @transform_6(%arg0: i32) -> (i32, i32, i32) {
    %c0_i32 = arith.constant 0 : i32
    %c0_i32_0 = arith.constant 0 : i32
    %c0_i32_1 = arith.constant 0 : i32
    return %arg0, %c0_i32, %c0_i32_0 : i32, i32, i32
  }
}

module attributes {stable_mosaic.version = 11 : i64} {
  func.func @_bn_add_relu_kernel(%arg0: i32, %arg1: memref<512x128xbf16, #tpu.memory_space<vmem>>, %arg2: memref<1x128xf32, #tpu.memory_space<vmem>>, %arg3: memref<1x128xf32, #tpu.memory_space<vmem>>, %arg4: memref<512x128xbf16, #tpu.memory_space<vmem>>, %arg5: memref<1x128xf32, #tpu.memory_space<vmem>>, %arg6: memref<1x128xf32, #tpu.memory_space<vmem>>, %arg7: memref<512x128xf32, #tpu.memory_space<vmem>>) attributes {dimension_semantics = [#tpu.dimension_semantics<parallel>], iteration_bounds = array<i64: 1>, scalar_prefetch = 0 : i64, scratch_operands = 0 : i64, tpu.core_type = #tpu.core_type<tc>, window_params = [{transform_indices = @transform_0, window_bounds = array<i64: 512, 128>}, {pipeline_mode = #tpu.pipeline_mode<synchronous>, transform_indices = @transform_1, window_bounds = array<i64: 1, 128>}, {pipeline_mode = #tpu.pipeline_mode<synchronous>, transform_indices = @transform_2, window_bounds = array<i64: 1, 128>}, {transform_indices = @transform_3, window_bounds = array<i64: 512, 128>}, {pipeline_mode = #tpu.pipeline_mode<synchronous>, transform_indices = @transform_4, window_bounds = array<i64: 1, 128>}, {pipeline_mode = #tpu.pipeline_mode<synchronous>, transform_indices = @transform_5, window_bounds = array<i64: 1, 128>}, {transform_indices = @transform_6, window_bounds = array<i64: 512, 128>}]} {
    %c0 = arith.constant 0 : index
    %c0_0 = arith.constant 0 : index
    %0 = vector.load %arg1[%c0, %c0_0] : memref<512x128xbf16, #tpu.memory_space<vmem>>, vector<512x128xbf16>
    %1 = arith.extf %0 : vector<512x128xbf16> to vector<512x128xf32>
    %c0_1 = arith.constant 0 : index
    %c0_2 = arith.constant 0 : index
    %2 = vector.load %arg4[%c0_1, %c0_2] : memref<512x128xbf16, #tpu.memory_space<vmem>>, vector<512x128xbf16>
    %3 = arith.extf %2 : vector<512x128xbf16> to vector<512x128xf32>
    %c0_3 = arith.constant 0 : index
    %c0_4 = arith.constant 0 : index
    %4 = vector.load %arg2[%c0_3, %c0_4] : memref<1x128xf32, #tpu.memory_space<vmem>>, vector<1x128xf32>
    %5 = vector.broadcast %4 : vector<1x128xf32> to vector<512x128xf32>
    %6 = arith.mulf %1, %5 : vector<512x128xf32>
    %c0_5 = arith.constant 0 : index
    %c0_6 = arith.constant 0 : index
    %7 = vector.load %arg3[%c0_5, %c0_6] : memref<1x128xf32, #tpu.memory_space<vmem>>, vector<1x128xf32>
    %8 = vector.broadcast %7 : vector<1x128xf32> to vector<512x128xf32>
    %9 = arith.addf %6, %8 : vector<512x128xf32>
    %c0_7 = arith.constant 0 : index
    %c0_8 = arith.constant 0 : index
    %10 = vector.load %arg5[%c0_7, %c0_8] : memref<1x128xf32, #tpu.memory_space<vmem>>, vector<1x128xf32>
    %11 = vector.broadcast %10 : vector<1x128xf32> to vector<512x128xf32>
    %12 = arith.mulf %3, %11 : vector<512x128xf32>
    %c0_9 = arith.constant 0 : index
    %c0_10 = arith.constant 0 : index
    %13 = vector.load %arg6[%c0_9, %c0_10] : memref<1x128xf32, #tpu.memory_space<vmem>>, vector<1x128xf32>
    %14 = vector.broadcast %13 : vector<1x128xf32> to vector<512x128xf32>
    %15 = arith.addf %12, %14 : vector<512x128xf32>
    %16 = arith.addf %9, %15 : vector<512x128xf32>
    %cst = arith.constant 0.000000e+00 : f32
    %17 = vector.broadcast %cst : f32 to vector<512x128xf32>
    %18 = arith.maximumf %16, %17 : vector<512x128xf32>
    %c0_11 = arith.constant 0 : index
    %c0_12 = arith.constant 0 : index
    %19 = vector.load %arg7[%c0_11, %c0_12] : memref<512x128xf32, #tpu.memory_space<vmem>>, vector<512x128xf32>
    tpu.vector_store %arg7[%c0_11, %c0_12], %18 {strides = array<i32>} : memref<512x128xf32, #tpu.memory_space<vmem>>, vector<512x128xf32>,
    return
  }
  func.func @transform_0(%arg0: i32) -> (i32, i32) {
    %c0_i32 = arith.constant 0 : i32
    %c0_i32_0 = arith.constant 0 : i32
    return %arg0, %c0_i32 : i32, i32
  }
  func.func @transform_1(%arg0: i32) -> (i32, i32) {
    %c0_i32 = arith.constant 0 : i32
    %c0_i32_0 = arith.constant 0 : i32
    %c0_i32_1 = arith.constant 0 : i32
    return %c0_i32, %c0_i32_0 : i32, i32
  }
  func.func @transform_2(%arg0: i32) -> (i32, i32) {
    %c0_i32 = arith.constant 0 : i32
    %c0_i32_0 = arith.constant 0 : i32
    %c0_i32_1 = arith.constant 0 : i32
    return %c0_i32, %c0_i32_0 : i32, i32
  }
  func.func @transform_3(%arg0: i32) -> (i32, i32) {
    %c0_i32 = arith.constant 0 : i32
    %c0_i32_0 = arith.constant 0 : i32
    return %arg0, %c0_i32 : i32, i32
  }
  func.func @transform_4(%arg0: i32) -> (i32, i32) {
    %c0_i32 = arith.constant 0 : i32
    %c0_i32_0 = arith.constant 0 : i32
    %c0_i32_1 = arith.constant 0 : i32
    return %c0_i32, %c0_i32_0 : i32, i32
  }
  func.func @transform_5(%arg0: i32) -> (i32, i32) {
    %c0_i32 = arith.constant 0 : i32
    %c0_i32_0 = arith.constant 0 : i32
    %c0_i32_1 = arith.constant 0 : i32
    return %c0_i32, %c0_i32_0 : i32, i32
  }
  func.func @transform_6(%arg0: i32) -> (i32, i32) {
    %c0_i32 = arith.constant 0 : i32
    %c0_i32_0 = arith.constant 0 : i32
    return %arg0, %c0_i32 : i32, i32
  }
}

</mosaic_0001>

<llo_original>
// kernel: bottleneck_forward.4
$region0: #{bottleneck_forward.4}
  #allocation0 [shape = 'u32[]', space=smem, size = 0x4, offset = 0x4, fixed_abs, tag = 'smem constant byte address 0x4 - core index']
  #allocation1 [shape = 'u32[144,128]{1,0:T(1,128)}', space=vmem, size = 0x12000, scoped, tag = 'internal scratch']
  %s0 = inlined_call_operand.vmem [shape: bf16[512,128], index: 0, kind: input, shape index: {}]
  %s1 = inlined_call_operand.vmem [shape: bf16[128,256], index: 1, kind: input, shape index: {}]
  %s2 = inlined_call_operand.vmem [shape: bf16[512,256], index: 2, kind: output, shape index: {0}]
  %s3 = inlined_call_operand.vmem [shape: f32[1,1,256], index: 3, kind: output, shape index: {1}]
  %s4 = inlined_call_operand.vmem [shape: f32[1,1,256], index: 4, kind: output, shape index: {2}]
  %5 = xla_tuple %s2, %s3, %s4
  %s6 = sld [smem:[#allocation0]]
  $region34: #{bottleneck_forward.4} parent=0
    _
  %s8 = ssub.s32 1, %s6
  %s9 = scalar_select 0, %s8, %s6
  // Predicated region
  $region2: #{bottleneck_forward.4} parent=0 // pred_check
    _
  $region3: #{bottleneck_forward.4} parent=0 // pred_check_branch
    %11 = sbr.rel (0) target = $region5
  $region4: #{bottleneck_forward.4} parent=0 // pred_region
    _
  $region5: #{bottleneck_forward.4} parent=0 // pred_fallthru
    _
  // Predicated region
  $region6: #{bottleneck_forward.4} parent=0 // pred_check
    _
  $region7: #{bottleneck_forward.4} parent=0 // pred_check_branch
    %13 = sbr.rel (0) target = $region9
  $region8: #{bottleneck_forward.4} parent=0 // pred_region
    _
  $region9: #{bottleneck_forward.4} parent=0 // pred_fallthru
    _
  %v15 = vld [vmem:[%s0] sm:$0xf]
  %v16 = vld [vmem:[%s0 + $0x4] sm:$0xf]
  %v17 = vld [vmem:[%s0 + $0x8] sm:$0xf]
  %v18 = vld [vmem:[%s0 + $0xc] sm:$0xf]
  %v19 = vld [vmem:[%s0 + $0x10] sm:$0xf]
  %v20 = vld [vmem:[%s0 + $0x14] sm:$0xf]
  %v21 = vld [vmem:[%s0 + $0x18] sm:$0xf]
  %v22 = vld [vmem:[%s0 + $0x1c] sm:$0xf]
  %v23 = vld [vmem:[%s0 + $0x20] sm:$0xf]
  %v24 = vld [vmem:[%s0 + $0x24] sm:$0xf]
  %v25 = vld [vmem:[%s0 + $0x28] sm:$0xf]
  %v26 = vld [vmem:[%s0 + $0x2c] sm:$0xf]
  %v27 = vld [vmem:[%s0 + $0x30] sm:$0xf]
  %v28 = vld [vmem:[%s0 + $0x34] sm:$0xf]
  %v29 = vld [vmem:[%s0 + $0x38] sm:$0xf]
  %v30 = vld [vmem:[%s0 + $0x3c] sm:$0xf]
  %v31 = vld [vmem:[%s0 + $0x40] sm:$0xf]
  %v32 = vld [vmem:[%s0 + $0x44] sm:$0xf]
  %v33 = vld [vmem:[%s0 + $0x48] sm:$0xf]
  %v34 = vld [vmem:[%s0 + $0x4c] sm:$0xf]
  %v35 = vld [vmem:[%s0 + $0x50] sm:$0xf]
  %v36 = vld [vmem:[%s0 + $0x54] sm:$0xf]
  %v37 = vld [vmem:[%s0 + $0x58] sm:$0xf]
  %v38 = vld [vmem:[%s0 + $0x5c] sm:$0xf]
  %v39 = vld [vmem:[%s0 + $0x60] sm:$0xf]
  %v40 = vld [vmem:[%s0 + $0x64] sm:$0xf]
  %v41 = vld [vmem:[%s0 + $0x68] sm:$0xf]
  %v42 = vld [vmem:[%s0 + $0x6c] sm:$0xf]
  %v43 = vld [vmem:[%s0 + $0x70] sm:$0xf]
  %v44 = vld [vmem:[%s0 + $0x74] sm:$0xf]
  %v45 = vld [vmem:[%s0 + $0x78] sm:$0xf]
  %v46 = vld [vmem:[%s0 + $0x7c] sm:$0xf]
  %v47 = vld [vmem:[%s0 + $0x80] sm:$0xf]
  %v48 = vld [vmem:[%s0 + $0x84] sm:$0xf]
  %v49 = vld [vmem:[%s0 + $0x88] sm:$0xf]
  %v50 = vld [vmem:[%s0 + $0x8c] sm:$0xf]
  %v51 = vld [vmem:[%s0 + $0x90] sm:$0xf]
  %v52 = vld [vmem:[%s0 + $0x94] sm:$0xf]
  %v53 = vld [vmem:[%s0 + $0x98] sm:$0xf]
  %v54 = vld [vmem:[%s0 + $0x9c] sm:$0xf]
  %v55 = vld [vmem:[%s0 + $0xa0] sm:$0xf]
  %v56 = vld [vmem:[%s0 + $0xa4] sm:$0xf]
  %v57 = vld [vmem:[%s0 + $0xa8] sm:$0xf]
  %v58 = vld [vmem:[%s0 + $0xac] sm:$0xf]
  %v59 = vld [vmem:[%s0 + $0xb0] sm:$0xf]
  %v60 = vld [vmem:[%s0 + $0xb4] sm:$0xf]
  %v61 = vld [vmem:[%s0 + $0xb8] sm:$0xf]
  %v62 = vld [vmem:[%s0 + $0xbc] sm:$0xf]
  %v63 = vld [vmem:[%s0 + $0xc0] sm:$0xf]
  %v64 = vld [vmem:[%s0 + $0xc4] sm:$0xf]
  %v65 = vld [vmem:[%s0 + $0xc8] sm:$0xf]
  %v66 = vld [vmem:[%s0 + $0xcc] sm:$0xf]
  %v67 = vld [vmem:[%s0 + $0xd0] sm:$0xf]
  %v68 = vld [vmem:[%s0 + $0xd4] sm:$0xf]
  %v69 = vld [vmem:[%s0 + $0xd8] sm:$0xf]
  %v70 = vld [vmem:[%s0 + $0xdc] sm:$0xf]
  %v71 = vld [vmem:[%s0 + $0xe0] sm:$0xf]
  %v72 = vld [vmem:[%s0 + $0xe4] sm:$0xf]
  %v73 = vld [vmem:[%s0 + $0xe8] sm:$0xf]
  %v74 = vld [vmem:[%s0 + $0xec] sm:$0xf]
  %v75 = vld [vmem:[%s0 + $0xf0] sm:$0xf]
  %v76 = vld [vmem:[%s0 + $0xf4] sm:$0xf]
  %v77 = vld [vmem:[%s0 + $0xf8] sm:$0xf]
  %v78 = vld [vmem:[%s0 + $0xfc] sm:$0xf]
  %v79 = vld [vmem:[%s1] sm:$0xff]
  %v80 = vld [vmem:[%s1 + $0x8] sm:$0xff]
  %v81 = vld [vmem:[%s1 + $0x10] sm:$0xff]
  %v82 = vld [vmem:[%s1 + $0x18] sm:$0xff]
  %v83 = vld [vmem:[%s1 + $0x20] sm:$0xff]
  %v84 = vld [vmem:[%s1 + $0x28] sm:$0xff]
  %v85 = vld [vmem:[%s1 + $0x30] sm:$0xff]
  %v86 = vld [vmem:[%s1 + $0x38] sm:$0xff]
  %v87 = vld [vmem:[%s1 + $0x40] sm:$0xff]
  %v88 = vld [vmem:[%s1 + $0x48] sm:$0xff]
  %v89 = vld [vmem:[%s1 + $0x50] sm:$0xff]
  %v90 = vld [vmem:[%s1 + $0x58] sm:$0xff]
  %v91 = vld [vmem:[%s1 + $0x60] sm:$0xff]
  %v92 = vld [vmem:[%s1 + $0x68] sm:$0xff]
  %v93 = vld [vmem:[%s1 + $0x70] sm:$0xff]
  %v94 = vld [vmem:[%s1 + $0x78] sm:$0xff]
  %v159 = vunpack.c.l.b16 %v15
  %v160 = vunpack.c.l.b16 %v16
  %v161 = vunpack.c.l.b16 %v17
  %v162 = vunpack.c.l.b16 %v18
  %v163 = vunpack.c.l.b16 %v19
  %v164 = vunpack.c.l.b16 %v20
  %v165 = vunpack.c.l.b16 %v21
  %v166 = vunpack.c.l.b16 %v22
  %v167 = vunpack.c.l.b16 %v23
  %v168 = vunpack.c.l.b16 %v24
  %v169 = vunpack.c.l.b16 %v25
  %v170 = vunpack.c.l.b16 %v26
  %v171 = vunpack.c.l.b16 %v27
  %v172 = vunpack.c.l.b16 %v28
  %v173 = vunpack.c.l.b16 %v29
  %v174 = vunpack.c.l.b16 %v30
  %v175 = vunpack.c.l.b16 %v31
  %v176 = vunpack.c.l.b16 %v32
  %v177 = vunpack.c.l.b16 %v33
  %v178 = vunpack.c.l.b16 %v34
  %v179 = vunpack.c.l.b16 %v35
  %v180 = vunpack.c.l.b16 %v36
  %v181 = vunpack.c.l.b16 %v37
  %v182 = vunpack.c.l.b16 %v38
  %v183 = vunpack.c.l.b16 %v39
  %v184 = vunpack.c.l.b16 %v40
  %v185 = vunpack.c.l.b16 %v41
  %v186 = vunpack.c.l.b16 %v42
  %v187 = vunpack.c.l.b16 %v43
  %v188 = vunpack.c.l.b16 %v44
  %v189 = vunpack.c.l.b16 %v45
  %v190 = vunpack.c.l.b16 %v46
  %v191 = vunpack.c.l.b16 %v47
  %v192 = vunpack.c.l.b16 %v48
  %v193 = vunpack.c.l.b16 %v49
  %v194 = vunpack.c.l.b16 %v50
  %v195 = vunpack.c.l.b16 %v51
  %v196 = vunpack.c.l.b16 %v52
  %v197 = vunpack.c.l.b16 %v53
  %v198 = vunpack.c.l.b16 %v54
  %v199 = vunpack.c.l.b16 %v55
  %v200 = vunpack.c.l.b16 %v56
  %v201 = vunpack.c.l.b16 %v57
  %v202 = vunpack.c.l.b16 %v58
  %v203 = vunpack.c.l.b16 %v59
  %v204 = vunpack.c.l.b16 %v60
  %v205 = vunpack.c.l.b16 %v61
  %v206 = vunpack.c.l.b16 %v62
  %v207 = vunpack.c.l.b16 %v63
  %v208 = vunpack.c.l.b16 %v64
  %v209 = vunpack.c.l.b16 %v65
  %v210 = vunpack.c.l.b16 %v66
  %v211 = vunpack.c.l.b16 %v67
  %v212 = vunpack.c.l.b16 %v68
  %v213 = vunpack.c.l.b16 %v69
  %v214 = vunpack.c.l.b16 %v70
  %v215 = vunpack.c.l.b16 %v71
  %v216 = vunpack.c.l.b16 %v72
  %v217 = vunpack.c.l.b16 %v73
  %v218 = vunpack.c.l.b16 %v74
  %v219 = vunpack.c.l.b16 %v75
  %v220 = vunpack.c.l.b16 %v76
  %v221 = vunpack.c.l.b16 %v77
  %v222 = vunpack.c.l.b16 %v78
  %v223 = vpack.c.b16 %v160, %v159
  %v224 = vpack.c.b16 %v162, %v161
  %v225 = vpack.c.b16 %v164, %v163
  %v226 = vpack.c.b16 %v166, %v165
  %v227 = vpack.c.b16 %v168, %v167
  %v228 = vpack.c.b16 %v170, %v169
  %v229 = vpack.c.b16 %v172, %v171
  %v230 = vpack.c.b16 %v174, %v173
  %v231 = vpack.c.b16 %v176, %v175
  %v232 = vpack.c.b16 %v178, %v177
  %v233 = vpack.c.b16 %v180, %v179
  %v234 = vpack.c.b16 %v182, %v181
  %v235 = vpack.c.b16 %v184, %v183
  %v236 = vpack.c.b16 %v186, %v185
  %v237 = vpack.c.b16 %v188, %v187
  %v238 = vpack.c.b16 %v190, %v189
  %v239 = vpack.c.b16 %v192, %v191
  %v240 = vpack.c.b16 %v194, %v193
  %v241 = vpack.c.b16 %v196, %v195
  %v242 = vpack.c.b16 %v198, %v197
  %v243 = vpack.c.b16 %v200, %v199
  %v244 = vpack.c.b16 %v202, %v201
  %v245 = vpack.c.b16 %v204, %v203
  %v246 = vpack.c.b16 %v206, %v205
  %v247 = vpack.c.b16 %v208, %v207
  %v248 = vpack.c.b16 %v210, %v209
  %v249 = vpack.c.b16 %v212, %v211
  %v250 = vpack.c.b16 %v214, %v213
  %v251 = vpack.c.b16 %v216, %v215
  %v252 = vpack.c.b16 %v218, %v217
  %v253 = vpack.c.b16 %v220, %v219
  %v254 = vpack.c.b16 %v222, %v221
  %v303 = vunpack.c.l.b16 %v79
  %v304 = vunpack.c.h.b16 %v79
  %v305 = vunpack.c.l.b16 %v80
  %v306 = vunpack.c.h.b16 %v80
  %v307 = vunpack.c.l.b16 %v81
  %v308 = vunpack.c.h.b16 %v81
  %v309 = vunpack.c.l.b16 %v82
  %v310 = vunpack.c.h.b16 %v82
  %v311 = vunpack.c.l.b16 %v83
  %v312 = vunpack.c.h.b16 %v83
  %v313 = vunpack.c.l.b16 %v84
  %v314 = vunpack.c.h.b16 %v84
  %v315 = vunpack.c.l.b16 %v85
  %v316 = vunpack.c.h.b16 %v85
  %v317 = vunpack.c.l.b16 %v86
  %v318 = vunpack.c.h.b16 %v86
  %v319 = vunpack.c.l.b16 %v87
  %v320 = vunpack.c.h.b16 %v87
  %v321 = vunpack.c.l.b16 %v88
  %v322 = vunpack.c.h.b16 %v88
  %v323 = vunpack.c.l.b16 %v89
  %v324 = vunpack.c.h.b16 %v89
  %v325 = vunpack.c.l.b16 %v90
  %v326 = vunpack.c.h.b16 %v90
  %v327 = vunpack.c.l.b16 %v91
  %v328 = vunpack.c.h.b16 %v91
  %v329 = vunpack.c.l.b16 %v92
  %v330 = vunpack.c.h.b16 %v92
  %v331 = vunpack.c.l.b16 %v93
  %v332 = vunpack.c.h.b16 %v93
  %v333 = vunpack.c.l.b16 %v94
  %v334 = vunpack.c.h.b16 %v94
  %v335 = vpack.c.b16 %v305, %v303
  %v336 = vpack.c.b16 %v306, %v304
  %v337 = vpack.c.b16 %v309, %v307
  %v338 = vpack.c.b16 %v310, %v308
  %v339 = vpack.c.b16 %v313, %v311
  %v340 = vpack.c.b16 %v314, %v312
  %v341 = vpack.c.b16 %v317, %v315
  %v342 = vpack.c.b16 %v318, %v316
  %v343 = vpack.c.b16 %v321, %v319
  %v344 = vpack.c.b16 %v322, %v320
  %v345 = vpack.c.b16 %v325, %v323
  %v346 = vpack.c.b16 %v326, %v324
  %v347 = vpack.c.b16 %v329, %v327
  %v348 = vpack.c.b16 %v330, %v328
  %v349 = vpack.c.b16 %v333, %v331
  %v350 = vpack.c.b16 %v334, %v332
  %367 = vmatprep.subr.bf16.mxu0 %v336
  %368 = vmatpush1.bf16.msra.mxu0 %v335
  %369 = vmatprep.subr.bf16.mxu0 %v338
  %370 = vmatpush1.bf16.msra.mxu0 %v337
  %371 = vmatprep.subr.bf16.mxu0 %v340
  %372 = vmatpush1.bf16.msra.mxu0 %v339
  %373 = vmatprep.subr.bf16.mxu0 %v342
  %374 = vmatpush1.bf16.msra.mxu0 %v341
  %375 = vmatprep.subr.bf16.mxu0 %v344
  %376 = vmatpush1.bf16.msra.mxu0 %v343
  %377 = vmatprep.subr.bf16.mxu0 %v346
  %378 = vmatpush1.bf16.msra.mxu0 %v345
  %379 = vmatprep.subr.bf16.mxu0 %v348
  %380 = vmatpush1.bf16.msra.mxu0 %v347
  %381 = vmatprep.subr.bf16.mxu0 %v350
  %382 = vmatpush1.bf16.msra.mxu0 %v349
  %383 = vmatprep.subr.bf16.mxu0 0
  %384 = vmatpush1.bf16.msra.mxu0 0
  %385 = vmatprep.subr.bf16.mxu0 0
  %386 = vmatpush1.bf16.msra.mxu0 0
  %387 = vmatprep.subr.bf16.mxu0 0
  %388 = vmatpush1.bf16.msra.mxu0 0
  %389 = vmatprep.subr.bf16.mxu0 0
  %390 = vmatpush1.bf16.msra.mxu0 0
  %391 = vmatprep.subr.bf16.mxu0 0
  %392 = vmatpush1.bf16.msra.mxu0 0
  %393 = vmatprep.subr.bf16.mxu0 0
  %394 = vmatpush1.bf16.msra.mxu0 0
  %395 = vmatprep.subr.bf16.mxu0 0
  %396 = vmatpush1.bf16.msra.mxu0 0
  %397 = vmatprep.subr.bf16.mxu0 0
  %398 = vmatpush1.bf16.msra.mxu0 0
  %399 = vmatprep.mubr.bf16.mxu0 0
  %400 = vmatmul.mubr.bf16.gmra.mrb[0].mxu0 %v223
  %v401 = vpop.f32.mrb[0].mxu0
  %v402 = vadd.f32 0.0, %v401
  %v403 = vpop.f32.mrb[0].mxu0
  %v404 = vadd.f32 0.0, %v403
  %v405 = vpop.f32.mrb[0].mxu0
  %v406 = vadd.f32 0.0, %v405
  %v407 = vpop.f32.mrb[0].mxu0
  %v408 = vadd.f32 0.0, %v407
  %409 = vmatprep.mubr.bf16.mxu0 0
  %410 = vmatmul.mubr.bf16.gmra.mrb[0].mxu0 %v224
  %v411 = vpop.f32.mrb[0].mxu0
  %v412 = vadd.f32 0.0, %v411
  %v413 = vpop.f32.mrb[0].mxu0
  %v414 = vadd.f32 0.0, %v413
  %v415 = vpop.f32.mrb[0].mxu0
  %v416 = vadd.f32 0.0, %v415
  %v417 = vpop.f32.mrb[0].mxu0
  %v418 = vadd.f32 0.0, %v417
  %419 = vmatprep.mubr.bf16.mxu0 0
  %420 = vmatmul.mubr.bf16.gmra.mrb[0].mxu0 %v225
  %v421 = vpop.f32.mrb[0].mxu0
  %v422 = vadd.f32 0.0, %v421
  %v423 = vpop.f32.mrb[0].mxu0
  %v424 = vadd.f32 0.0, %v423
  %v425 = vpop.f32.mrb[0].mxu0
  %v426 = vadd.f32 0.0, %v425
  %v427 = vpop.f32.mrb[0].mxu0
  %v428 = vadd.f32 0.0, %v427
  %429 = vmatprep.mubr.bf16.mxu0 0
  %430 = vmatmul.mubr.bf16.gmra.mrb[0].mxu0 %v226
  %v431 = vpop.f32.mrb[0].mxu0
  %v432 = vadd.f32 0.0, %v431
  %v433 = vpop.f32.mrb[0].mxu0
  %v434 = vadd.f32 0.0, %v433
  %v435 = vpop.f32.mrb[0].mxu0
  %v436 = vadd.f32 0.0, %v435
  %v437 = vpop.f32.mrb[0].mxu0
  %v438 = vadd.f32 0.0, %v437
  %439 = vmatprep.mubr.bf16.mxu0 0
  %440 = vmatmul.mubr.bf16.gmra.mrb[0].mxu0 %v227
  %v441 = vpop.f32.mrb[0].mxu0
  %v442 = vadd.f32 0.0, %v441
  %v443 = vpop.f32.mrb[0].mxu0
  %v444 = vadd.f32 0.0, %v443
  %v445 = vpop.f32.mrb[0].mxu0
  %v446 = vadd.f32 0.0, %v445
  %v447 = vpop.f32.mrb[0].mxu0
  %v448 = vadd.f32 0.0, %v447
  %449 = vmatprep.mubr.bf16.mxu0 0
  %450 = vmatmul.mubr.bf16.gmra.mrb[0].mxu0 %v228
  %v451 = vpop.f32.mrb[0].mxu0
  %v452 = vadd.f32 0.0, %v451
  %v453 = vpop.f32.mrb[0].mxu0
  %v454 = vadd.f32 0.0, %v453
  %v455 = vpop.f32.mrb[0].mxu0
  %v456 = vadd.f32 0.0, %v455
  %v457 = vpop.f32.mrb[0].mxu0
  %v458 = vadd.f32 0.0, %v457
  %459 = vmatprep.mubr.bf16.mxu0 0
  %460 = vmatmul.mubr.bf16.gmra.mrb[0].mxu0 %v229
  %v461 = vpop.f32.mrb[0].mxu0
  %v462 = vadd.f32 0.0, %v461
  %v463 = vpop.f32.mrb[0].mxu0
  %v464 = vadd.f32 0.0, %v463
  %v465 = vpop.f32.mrb[0].mxu0
  %v466 = vadd.f32 0.0, %v465
  %v467 = vpop.f32.mrb[0].mxu0
  %v468 = vadd.f32 0.0, %v467
  %469 = vmatprep.mubr.bf16.mxu0 0
  %470 = vmatmul.mubr.bf16.gmra.mrb[0].mxu0 %v230
  %v471 = vpop.f32.mrb[0].mxu0
  %v472 = vadd.f32 0.0, %v471
  %v473 = vpop.f32.mrb[0].mxu0
  %v474 = vadd.f32 0.0, %v473
  %v475 = vpop.f32.mrb[0].mxu0
  %v476 = vadd.f32 0.0, %v475
  %v477 = vpop.f32.mrb[0].mxu0
  %v478 = vadd.f32 0.0, %v477
  %479 = vmatprep.mubr.bf16.mxu0 0
  %480 = vmatmul.mubr.bf16.gmra.mrb[0].mxu0 %v231
  %v481 = vpop.f32.mrb[0].mxu0
  %v482 = vadd.f32 0.0, %v481
  %v483 = vpop.f32.mrb[0].mxu0
  %v484 = vadd.f32 0.0, %v483
  %v485 = vpop.f32.mrb[0].mxu0
  %v486 = vadd.f32 0.0, %v485
  %v487 = vpop.f32.mrb[0].mxu0
  %v488 = vadd.f32 0.0, %v487
  %489 = vmatprep.mubr.bf16.mxu0 0
  %490 = vmatmul.mubr.bf16.gmra.mrb[0].mxu0 %v232
  %v491 = vpop.f32.mrb[0].mxu0
  %v492 = vadd.f32 0.0, %v491
  %v493 = vpop.f32.mrb[0].mxu0
  %v494 = vadd.f32 0.0, %v493
  %v495 = vpop.f32.mrb[0].mxu0
  %v496 = vadd.f32 0.0, %v495
  %v497 = vpop.f32.mrb[0].mxu0
  %v498 = vadd.f32 0.0, %v497
  %499 = vmatprep.mubr.bf16.mxu0 0
  %500 = vmatmul.mubr.bf16.gmra.mrb[0].mxu0 %v233
  %v501 = vpop.f32.mrb[0].mxu0
  %v502 = vadd.f32 0.0, %v501
  %v503 = vpop.f32.mrb[0].mxu0
  %v504 = vadd.f32 0.0, %v503
  %v505 = vpop.f32.mrb[0].mxu0
  %v506 = vadd.f32 0.0, %v505
  %v507 = vpop.f32.mrb[0].mxu0
  %v508 = vadd.f32 0.0, %v507
  %509 = vmatprep.mubr.bf16.mxu0 0
  %510 = vmatmul.mubr.bf16.gmra.mrb[0].mxu0 %v234
  %v511 = vpop.f32.mrb[0].mxu0
  %v512 = vadd.f32 0.0, %v511
  %v513 = vpop.f32.mrb[0].mxu0
  %v514 = vadd.f32 0.0, %v513
  %v515 = vpop.f32.mrb[0].mxu0
  %v516 = vadd.f32 0.0, %v515
  %v517 = vpop.f32.mrb[0].mxu0
  %v518 = vadd.f32 0.0, %v517
  %519 = vmatprep.mubr.bf16.mxu0 0
  %520 = vmatmul.mubr.bf16.gmra.mrb[0].mxu0 %v235
  %v521 = vpop.f32.mrb[0].mxu0
  %v522 = vadd.f32 0.0, %v521
  %v523 = vpop.f32.mrb[0].mxu0
  %v524 = vadd.f32 0.0, %v523
  %v525 = vpop.f32.mrb[0].mxu0
  %v526 = vadd.f32 0.0, %v525
  %v527 = vpop.f32.mrb[0].mxu0
  %v528 = vadd.f32 0.0, %v527
  %529 = vmatprep.mubr.bf16.mxu0 0
  %530 = vmatmul.mubr.bf16.gmra.mrb[0].mxu0 %v236
  %v531 = vpop.f32.mrb[0].mxu0
  %v532 = vadd.f32 0.0, %v531
  %v533 = vpop.f32.mrb[0].mxu0
  %v534 = vadd.f32 0.0, %v533
  %v535 = vpop.f32.mrb[0].mxu0
  %v536 = vadd.f32 0.0, %v535
  %v537 = vpop.f32.mrb[0].mxu0
  %v538 = vadd.f32 0.0, %v537
  %539 = vmatprep.mubr.bf16.mxu0 0
  %540 = vmatmul.mubr.bf16.gmra.mrb[0].mxu0 %v237
  %v541 = vpop.f32.mrb[0].mxu0
  %v542 = vadd.f32 0.0, %v541
  %v543 = vpop.f32.mrb[0].mxu0
  %v544 = vadd.f32 0.0, %v543
  %v545 = vpop.f32.mrb[0].mxu0
  %v546 = vadd.f32 0.0, %v545
  %v547 = vpop.f32.mrb[0].mxu0
  %v548 = vadd.f32 0.0, %v547
  %549 = vmatprep.mubr.bf16.mxu0 0
  %550 = vmatmul.mubr.bf16.gmra.mrb[0].mxu0 %v238
  %v551 = vpop.f32.mrb[0].mxu0
  %v552 = vadd.f32 0.0, %v551
  %v553 = vpop.f32.mrb[0].mxu0
  %v554 = vadd.f32 0.0, %v553
  %v555 = vpop.f32.mrb[0].mxu0
  %v556 = vadd.f32 0.0, %v555
  %v557 = vpop.f32.mrb[0].mxu0
  %v558 = vadd.f32 0.0, %v557
  %559 = vmatprep.mubr.bf16.mxu0 0
  %560 = vmatmul.mubr.bf16.gmra.mrb[0].mxu0 %v239
  %v561 = vpop.f32.mrb[0].mxu0
  %v562 = vadd.f32 0.0, %v561
  %v563 = vpop.f32.mrb[0].mxu0
  %v564 = vadd.f32 0.0, %v563
  %v565 = vpop.f32.mrb[0].mxu0
  %v566 = vadd.f32 0.0, %v565
  %v567 = vpop.f32.mrb[0].mxu0
  %v568 = vadd.f32 0.0, %v567
  %569 = vmatprep.mubr.bf16.mxu0 0
  %570 = vmatmul.mubr.bf16.gmra.mrb[0].mxu0 %v240
  %v571 = vpop.f32.mrb[0].mxu0
  %v572 = vadd.f32 0.0, %v571
  %v573 = vpop.f32.mrb[0].mxu0
  %v574 = vadd.f32 0.0, %v573
  %v575 = vpop.f32.mrb[0].mxu0
  %v576 = vadd.f32 0.0, %v575
  %v577 = vpop.f32.mrb[0].mxu0
  %v578 = vadd.f32 0.0, %v577
  %579 = vmatprep.mubr.bf16.mxu0 0
  %580 = vmatmul.mubr.bf16.gmra.mrb[0].mxu0 %v241
  %v581 = vpop.f32.mrb[0].mxu0
  %v582 = vadd.f32 0.0, %v581
  %v583 = vpop.f32.mrb[0].mxu0
  %v584 = vadd.f32 0.0, %v583
  %v585 = vpop.f32.mrb[0].mxu0
  %v586 = vadd.f32 0.0, %v585
  %v587 = vpop.f32.mrb[0].mxu0
  %v588 = vadd.f32 0.0, %v587
  %589 = vmatprep.mubr.bf16.mxu0 0
  %590 = vmatmul.mubr.bf16.gmra.mrb[0].mxu0 %v242
  %v591 = vpop.f32.mrb[0].mxu0
  %v592 = vadd.f32 0.0, %v591
  %v593 = vpop.f32.mrb[0].mxu0
  %v594 = vadd.f32 0.0, %v593
  %v595 = vpop.f32.mrb[0].mxu0
  %v596 = vadd.f32 0.0, %v595
  %v597 = vpop.f32.mrb[0].mxu0
  %v598 = vadd.f32 0.0, %v597
  %599 = vmatprep.mubr.bf16.mxu0 0
  %600 = vmatmul.mubr.bf16.gmra.mrb[0].mxu0 %v243
  %v601 = vpop.f32.mrb[0].mxu0
  %v602 = vadd.f32 0.0, %v601
  %v603 = vpop.f32.mrb[0].mxu0
  %v604 = vadd.f32 0.0, %v603
  %v605 = vpop.f32.mrb[0].mxu0
  %v606 = vadd.f32 0.0, %v605
  %v607 = vpop.f32.mrb[0].mxu0
  %v608 = vadd.f32 0.0, %v607
  %609 = vmatprep.mubr.bf16.mxu0 0
  %610 = vmatmul.mubr.bf16.gmra.mrb[0].mxu0 %v244
  %v611 = vpop.f32.mrb[0].mxu0
  %v612 = vadd.f32 0.0, %v611
  %v613 = vpop.f32.mrb[0].mxu0
  %v614 = vadd.f32 0.0, %v613
  %v615 = vpop.f32.mrb[0].mxu0
  %v616 = vadd.f32 0.0, %v615
  %v617 = vpop.f32.mrb[0].mxu0
  %v618 = vadd.f32 0.0, %v617
  %619 = vmatprep.mubr.bf16.mxu0 0
  %620 = vmatmul.mubr.bf16.gmra.mrb[0].mxu0 %v245
  %v621 = vpop.f32.mrb[0].mxu0
  %v622 = vadd.f32 0.0, %v621
  %v623 = vpop.f32.mrb[0].mxu0
  %v624 = vadd.f32 0.0, %v623
  %v625 = vpop.f32.mrb[0].mxu0
  %v626 = vadd.f32 0.0, %v625
  %v627 = vpop.f32.mrb[0].mxu0
  %v628 = vadd.f32 0.0, %v627
  %629 = vmatprep.mubr.bf16.mxu0 0
  %630 = vmatmul.mubr.bf16.gmra.mrb[0].mxu0 %v246
  %v631 = vpop.f32.mrb[0].mxu0
  %v632 = vadd.f32 0.0, %v631
  %v633 = vpop.f32.mrb[0].mxu0
  %v634 = vadd.f32 0.0, %v633
  %v635 = vpop.f32.mrb[0].mxu0
  %v636 = vadd.f32 0.0, %v635
  %v637 = vpop.f32.mrb[0].mxu0
  %v638 = vadd.f32 0.0, %v637
  %639 = vmatprep.mubr.bf16.mxu0 0
  %640 = vmatmul.mubr.bf16.gmra.mrb[0].mxu0 %v247
  %v641 = vpop.f32.mrb[0].mxu0
  %v642 = vadd.f32 0.0, %v641
  %v643 = vpop.f32.mrb[0].mxu0
  %v644 = vadd.f32 0.0, %v643
  %v645 = vpop.f32.mrb[0].mxu0
  %v646 = vadd.f32 0.0, %v645
  %v647 = vpop.f32.mrb[0].mxu0
  %v648 = vadd.f32 0.0, %v647
  %649 = vmatprep.mubr.bf16.mxu0 0
  %650 = vmatmul.mubr.bf16.gmra.mrb[0].mxu0 %v248
  %v651 = vpop.f32.mrb[0].mxu0
  %v652 = vadd.f32 0.0, %v651
  %v653 = vpop.f32.mrb[0].mxu0
  %v654 = vadd.f32 0.0, %v653
  %v655 = vpop.f32.mrb[0].mxu0
  %v656 = vadd.f32 0.0, %v655
  %v657 = vpop.f32.mrb[0].mxu0
  %v658 = vadd.f32 0.0, %v657
  %659 = vmatprep.mubr.bf16.mxu0 0
  %660 = vmatmul.mubr.bf16.gmra.mrb[0].mxu0 %v249
  %v661 = vpop.f32.mrb[0].mxu0
  %v662 = vadd.f32 0.0, %v661
  %v663 = vpop.f32.mrb[0].mxu0
  %v664 = vadd.f32 0.0, %v663
  %v665 = vpop.f32.mrb[0].mxu0
  %v666 = vadd.f32 0.0, %v665
  %v667 = vpop.f32.mrb[0].mxu0
  %v668 = vadd.f32 0.0, %v667
  %669 = vmatprep.mubr.bf16.mxu0 0
  %670 = vmatmul.mubr.bf16.gmra.mrb[0].mxu0 %v250
  %v671 = vpop.f32.mrb[0].mxu0
  %v672 = vadd.f32 0.0, %v671
  %v673 = vpop.f32.mrb[0].mxu0
  %v674 = vadd.f32 0.0, %v673
  %v675 = vpop.f32.mrb[0].mxu0
  %v676 = vadd.f32 0.0, %v675
  %v677 = vpop.f32.mrb[0].mxu0
  %v678 = vadd.f32 0.0, %v677
  %679 = vmatprep.mubr.bf16.mxu0 0
  %680 = vmatmul.mubr.bf16.gmra.mrb[0].mxu0 %v251
  %v681 = vpop.f32.mrb[0].mxu0
  %v682 = vadd.f32 0.0, %v681
  %v683 = vpop.f32.mrb[0].mxu0
  %v684 = vadd.f32 0.0, %v683
  %v685 = vpop.f32.mrb[0].mxu0
  %v686 = vadd.f32 0.0, %v685
  %v687 = vpop.f32.mrb[0].mxu0
  %v688 = vadd.f32 0.0, %v687
  %689 = vmatprep.mubr.bf16.mxu0 0
  %690 = vmatmul.mubr.bf16.gmra.mrb[0].mxu0 %v252
  %v691 = vpop.f32.mrb[0].mxu0
  %v692 = vadd.f32 0.0, %v691
  %v693 = vpop.f32.mrb[0].mxu0
  %v694 = vadd.f32 0.0, %v693
  %v695 = vpop.f32.mrb[0].mxu0
  %v696 = vadd.f32 0.0, %v695
  %v697 = vpop.f32.mrb[0].mxu0
  %v698 = vadd.f32 0.0, %v697
  %699 = vmatprep.mubr.bf16.mxu0 0
  %700 = vmatmul.mubr.bf16.gmra.mrb[0].mxu0 %v253
  %v701 = vpop.f32.mrb[0].mxu0
  %v702 = vadd.f32 0.0, %v701
  %v703 = vpop.f32.mrb[0].mxu0
  %v704 = vadd.f32 0.0, %v703
  %v705 = vpop.f32.mrb[0].mxu0
  %v706 = vadd.f32 0.0, %v705
  %v707 = vpop.f32.mrb[0].mxu0
  %v708 = vadd.f32 0.0, %v707
  %709 = vmatprep.mubr.bf16.mxu0 0
  %710 = vmatmul.mubr.bf16.gmra.mrb[0].mxu0 %v254
  %v711 = vpop.f32.mrb[0].mxu0
  %v712 = vadd.f32 0.0, %v711
  %v713 = vpop.f32.mrb[0].mxu0
  %v714 = vadd.f32 0.0, %v713
  %v715 = vpop.f32.mrb[0].mxu0
  %v716 = vadd.f32 0.0, %v715
  %v717 = vpop.f32.mrb[0].mxu0
  %v718 = vadd.f32 0.0, %v717
  %719 = vdwg.mxu0
  %v720 = vpack.c.bf16 %v406, %v402
  %v721 = vpack.c.bf16 %v408, %v404
  %v722 = vpack.c.bf16 %v416, %v412
  %v723 = vpack.c.bf16 %v418, %v414
  %v724 = vpack.c.bf16 %v426, %v422
  %v725 = vpack.c.bf16 %v428, %v424
  %v726 = vpack.c.bf16 %v436, %v432
  %v727 = vpack.c.bf16 %v438, %v434
  %v728 = vpack.c.bf16 %v446, %v442
  %v729 = vpack.c.bf16 %v448, %v444
  %v730 = vpack.c.bf16 %v456, %v452
  %v731 = vpack.c.bf16 %v458, %v454
  %v732 = vpack.c.bf16 %v466, %v462
  %v733 = vpack.c.bf16 %v468, %v464
  %v734 = vpack.c.bf16 %v476, %v472
  %v735 = vpack.c.bf16 %v478, %v474
  %v736 = vpack.c.bf16 %v486, %v482
  %v737 = vpack.c.bf16 %v488, %v484
  %v738 = vpack.c.bf16 %v496, %v492
  %v739 = vpack.c.bf16 %v498, %v494
  %v740 = vpack.c.bf16 %v506, %v502
  %v741 = vpack.c.bf16 %v508, %v504
  %v742 = vpack.c.bf16 %v516, %v512
  %v743 = vpack.c.bf16 %v518, %v514
  %v744 = vpack.c.bf16 %v526, %v522
  %v745 = vpack.c.bf16 %v528, %v524
  %v746 = vpack.c.bf16 %v536, %v532
  %v747 = vpack.c.bf16 %v538, %v534
  %v748 = vpack.c.bf16 %v546, %v542
  %v749 = vpack.c.bf16 %v548, %v544
  %v750 = vpack.c.bf16 %v556, %v552
  %v751 = vpack.c.bf16 %v558, %v554
  %v752 = vpack.c.bf16 %v566, %v562
  %v753 = vpack.c.bf16 %v568, %v564
  %v754 = vpack.c.bf16 %v576, %v572
  %v755 = vpack.c.bf16 %v578, %v574
  %v756 = vpack.c.bf16 %v586, %v582
  %v757 = vpack.c.bf16 %v588, %v584
  %v758 = vpack.c.bf16 %v596, %v592
  %v759 = vpack.c.bf16 %v598, %v594
  %v760 = vpack.c.bf16 %v606, %v602
  %v761 = vpack.c.bf16 %v608, %v604
  %v762 = vpack.c.bf16 %v616, %v612
  %v763 = vpack.c.bf16 %v618, %v614
  %v764 = vpack.c.bf16 %v626, %v622
  %v765 = vpack.c.bf16 %v628, %v624
  %v766 = vpack.c.bf16 %v636, %v632
  %v767 = vpack.c.bf16 %v638, %v634
  %v768 = vpack.c.bf16 %v646, %v642
  %v769 = vpack.c.bf16 %v648, %v644
  %v770 = vpack.c.bf16 %v656, %v652
  %v771 = vpack.c.bf16 %v658, %v654
  %v772 = vpack.c.bf16 %v666, %v662
  %v773 = vpack.c.bf16 %v668, %v664
  %v774 = vpack.c.bf16 %v676, %v672
  %v775 = vpack.c.bf16 %v678, %v674
  %v776 = vpack.c.bf16 %v686, %v682
  %v777 = vpack.c.bf16 %v688, %v684
  %v778 = vpack.c.bf16 %v696, %v692
  %v779 = vpack.c.bf16 %v698, %v694
  %v780 = vpack.c.bf16 %v706, %v702
  %v781 = vpack.c.bf16 %v708, %v704
  %v782 = vpack.c.bf16 %v716, %v712
  %v783 = vpack.c.bf16 %v718, %v714
  %v848 = vunpack.c.l.b16 %v720
  %v849 = vunpack.c.l.b16 %v721
  %v850 = vunpack.c.h.b16 %v720
  %v851 = vunpack.c.h.b16 %v721
  %v852 = vunpack.c.l.b16 %v722
  %v853 = vunpack.c.l.b16 %v723
  %v854 = vunpack.c.h.b16 %v722
  %v855 = vunpack.c.h.b16 %v723
  %v856 = vunpack.c.l.b16 %v724
  %v857 = vunpack.c.l.b16 %v725
  %v858 = vunpack.c.h.b16 %v724
  %v859 = vunpack.c.h.b16 %v725
  %v860 = vunpack.c.l.b16 %v726
  %v861 = vunpack.c.l.b16 %v727
  %v862 = vunpack.c.h.b16 %v726
  %v863 = vunpack.c.h.b16 %v727
  %v864 = vunpack.c.l.b16 %v728
  %v865 = vunpack.c.l.b16 %v729
  %v866 = vunpack.c.h.b16 %v728
  %v867 = vunpack.c.h.b16 %v729
  %v868 = vunpack.c.l.b16 %v730
  %v869 = vunpack.c.l.b16 %v731
  %v870 = vunpack.c.h.b16 %v730
  %v871 = vunpack.c.h.b16 %v731
  %v872 = vunpack.c.l.b16 %v732
  %v873 = vunpack.c.l.b16 %v733
  %v874 = vunpack.c.h.b16 %v732
  %v875 = vunpack.c.h.b16 %v733
  %v876 = vunpack.c.l.b16 %v734
  %v877 = vunpack.c.l.b16 %v735
  %v878 = vunpack.c.h.b16 %v734
  %v879 = vunpack.c.h.b16 %v735
  %v880 = vunpack.c.l.b16 %v736
  %v881 = vunpack.c.l.b16 %v737
  %v882 = vunpack.c.h.b16 %v736
  %v883 = vunpack.c.h.b16 %v737
  %v884 = vunpack.c.l.b16 %v738
  %v885 = vunpack.c.l.b16 %v739
  %v886 = vunpack.c.h.b16 %v738
  %v887 = vunpack.c.h.b16 %v739
  %v888 = vunpack.c.l.b16 %v740
  %v889 = vunpack.c.l.b16 %v741
  %v890 = vunpack.c.h.b16 %v740
  %v891 = vunpack.c.h.b16 %v741
  %v892 = vunpack.c.l.b16 %v742
  %v893 = vunpack.c.l.b16 %v743
  %v894 = vunpack.c.h.b16 %v742
  %v895 = vunpack.c.h.b16 %v743
  %v896 = vunpack.c.l.b16 %v744
  %v897 = vunpack.c.l.b16 %v745
  %v898 = vunpack.c.h.b16 %v744
  %v899 = vunpack.c.h.b16 %v745
  %v900 = vunpack.c.l.b16 %v746
  %v901 = vunpack.c.l.b16 %v747
  %v902 = vunpack.c.h.b16 %v746
  %v903 = vunpack.c.h.b16 %v747
  %v904 = vunpack.c.l.b16 %v748
  %v905 = vunpack.c.l.b16 %v749
  %v906 = vunpack.c.h.b16 %v748
  %v907 = vunpack.c.h.b16 %v749
  %v908 = vunpack.c.l.b16 %v750
  %v909 = vunpack.c.l.b16 %v751
  %v910 = vunpack.c.h.b16 %v750
  %v911 = vunpack.c.h.b16 %v751
  %v912 = vunpack.c.l.b16 %v752
  %v913 = vunpack.c.l.b16 %v753
  %v914 = vunpack.c.h.b16 %v752
  %v915 = vunpack.c.h.b16 %v753
  %v916 = vunpack.c.l.b16 %v754
  %v917 = vunpack.c.l.b16 %v755
  %v918 = vunpack.c.h.b16 %v754
  %v919 = vunpack.c.h.b16 %v755
  %v920 = vunpack.c.l.b16 %v756
  %v921 = vunpack.c.l.b16 %v757
  %v922 = vunpack.c.h.b16 %v756
  %v923 = vunpack.c.h.b16 %v757
  %v924 = vunpack.c.l.b16 %v758
  %v925 = vunpack.c.l.b16 %v759
  %v926 = vunpack.c.h.b16 %v758
  %v927 = vunpack.c.h.b16 %v759
  %v928 = vunpack.c.l.b16 %v760
  %v929 = vunpack.c.l.b16 %v761
  %v930 = vunpack.c.h.b16 %v760
  %v931 = vunpack.c.h.b16 %v761
  %v932 = vunpack.c.l.b16 %v762
  %v933 = vunpack.c.l.b16 %v763
  %v934 = vunpack.c.h.b16 %v762
  %v935 = vunpack.c.h.b16 %v763
  %v936 = vunpack.c.l.b16 %v764
  %v937 = vunpack.c.l.b16 %v765
  %v938 = vunpack.c.h.b16 %v764
  %v939 = vunpack.c.h.b16 %v765
  %v940 = vunpack.c.l.b16 %v766
  %v941 = vunpack.c.l.b16 %v767
  %v942 = vunpack.c.h.b16 %v766
  %v943 = vunpack.c.h.b16 %v767
  %v944 = vunpack.c.l.b16 %v768
  %v945 = vunpack.c.l.b16 %v769
  %v946 = vunpack.c.h.b16 %v768
  %v947 = vunpack.c.h.b16 %v769
  %v948 = vunpack.c.l.b16 %v770
  %v949 = vunpack.c.l.b16 %v771
  %v950 = vunpack.c.h.b16 %v770
  %v951 = vunpack.c.h.b16 %v771
  %v952 = vunpack.c.l.b16 %v772
  %v953 = vunpack.c.l.b16 %v773
  %v954 = vunpack.c.h.b16 %v772
  %v955 = vunpack.c.h.b16 %v773
  %v956 = vunpack.c.l.b16 %v774
  %v957 = vunpack.c.l.b16 %v775
  %v958 = vunpack.c.h.b16 %v774
  %v959 = vunpack.c.h.b16 %v775
  %v960 = vunpack.c.l.b16 %v776
  %v961 = vunpack.c.l.b16 %v777
  %v962 = vunpack.c.h.b16 %v776
  %v963 = vunpack.c.h.b16 %v777
  %v964 = vunpack.c.l.b16 %v778
  %v965 = vunpack.c.l.b16 %v779
  %v966 = vunpack.c.h.b16 %v778
  %v967 = vunpack.c.h.b16 %v779
  %v968 = vunpack.c.l.b16 %v780
  %v969 = vunpack.c.l.b16 %v781
  %v970 = vunpack.c.h.b16 %v780
  %v971 = vunpack.c.h.b16 %v781
  %v972 = vunpack.c.l.b16 %v782
  %v973 = vunpack.c.l.b16 %v783
  %v974 = vunpack.c.h.b16 %v782
  %v975 = vunpack.c.h.b16 %v783
  %v976 = vpack.c.b16 %v849, %v848
  %v977 = vpack.c.b16 %v851, %v850
  %v978 = vpack.c.b16 %v853, %v852
  %v979 = vpack.c.b16 %v855, %v854
  %v980 = vpack.c.b16 %v857, %v856
  %v981 = vpack.c.b16 %v859, %v858
  %v982 = vpack.c.b16 %v861, %v860
  %v983 = vpack.c.b16 %v863, %v862
  %v984 = vpack.c.b16 %v865, %v864
  %v985 = vpack.c.b16 %v867, %v866
  %v986 = vpack.c.b16 %v869, %v868
  %v987 = vpack.c.b16 %v871, %v870
  %v988 = vpack.c.b16 %v873, %v872
  %v989 = vpack.c.b16 %v875, %v874
  %v990 = vpack.c.b16 %v877, %v876
  %v991 = vpack.c.b16 %v879, %v878
  %v992 = vpack.c.b16 %v881, %v880
  %v993 = vpack.c.b16 %v883, %v882
  %v994 = vpack.c.b16 %v885, %v884
  %v995 = vpack.c.b16 %v887, %v886
  %v996 = vpack.c.b16 %v889, %v888
  %v997 = vpack.c.b16 %v891, %v890
  %v998 = vpack.c.b16 %v893, %v892
  %v999 = vpack.c.b16 %v895, %v894
  %v1000 = vpack.c.b16 %v897, %v896
  %v1001 = vpack.c.b16 %v899, %v898
  %v1002 = vpack.c.b16 %v901, %v900
  %v1003 = vpack.c.b16 %v903, %v902
  %v1004 = vpack.c.b16 %v905, %v904
  %v1005 = vpack.c.b16 %v907, %v906
  %v1006 = vpack.c.b16 %v909, %v908
  %v1007 = vpack.c.b16 %v911, %v910
  %v1008 = vpack.c.b16 %v913, %v912
  %v1009 = vpack.c.b16 %v915, %v914
  %v1010 = vpack.c.b16 %v917, %v916
  %v1011 = vpack.c.b16 %v919, %v918
  %v1012 = vpack.c.b16 %v921, %v920
  %v1013 = vpack.c.b16 %v923, %v922
  %v1014 = vpack.c.b16 %v925, %v924
  %v1015 = vpack.c.b16 %v927, %v926
  %v1016 = vpack.c.b16 %v929, %v928
  %v1017 = vpack.c.b16 %v931, %v930
  %v1018 = vpack.c.b16 %v933, %v932
  %v1019 = vpack.c.b16 %v935, %v934
  %v1020 = vpack.c.b16 %v937, %v936
  %v1021 = vpack.c.b16 %v939, %v938
  %v1022 = vpack.c.b16 %v941, %v940
  %v1023 = vpack.c.b16 %v943, %v942
  %v1024 = vpack.c.b16 %v945, %v944
  %v1025 = vpack.c.b16 %v947, %v946
  %v1026 = vpack.c.b16 %v949, %v948
  %v1027 = vpack.c.b16 %v951, %v950
  %v1028 = vpack.c.b16 %v953, %v952
  %v1029 = vpack.c.b16 %v955, %v954
  %v1030 = vpack.c.b16 %v957, %v956
  %v1031 = vpack.c.b16 %v959, %v958
  %v1032 = vpack.c.b16 %v961, %v960
  %v1033 = vpack.c.b16 %v963, %v962
  %v1034 = vpack.c.b16 %v965, %v964
  %v1035 = vpack.c.b16 %v967, %v966
  %v1036 = vpack.c.b16 %v969, %v968
  %v1037 = vpack.c.b16 %v971, %v970
  %v1038 = vpack.c.b16 %v973, %v972
  %v1039 = vpack.c.b16 %v975, %v974
  %1104 = vst [vmem:[%s2] sm:$0xff] %v976
  %1105 = vst [vmem:[%s2 + $0x8] sm:$0xff] %v977
  %1106 = vst [vmem:[%s2 + $0x10] sm:$0xff] %v978
  %1107 = vst [vmem:[%s2 + $0x18] sm:$0xff] %v979
  %1108 = vst [vmem:[%s2 + $0x20] sm:$0xff] %v980
  %1109 = vst [vmem:[%s2 + $0x28] sm:$0xff] %v981
  %1110 = vst [vmem:[%s2 + $0x30] sm:$0xff] %v982
  %1111 = vst [vmem:[%s2 + $0x38] sm:$0xff] %v983
  %1112 = vst [vmem:[%s2 + $0x40] sm:$0xff] %v984
  %1113 = vst [vmem:[%s2 + $0x48] sm:$0xff] %v985
  %1114 = vst [vmem:[%s2 + $0x50] sm:$0xff] %v986
  %1115 = vst [vmem:[%s2 + $0x58] sm:$0xff] %v987
  %1116 = vst [vmem:[%s2 + $0x60] sm:$0xff] %v988
  %1117 = vst [vmem:[%s2 + $0x68] sm:$0xff] %v989
  %1118 = vst [vmem:[%s2 + $0x70] sm:$0xff] %v990
  %1119 = vst [vmem:[%s2 + $0x78] sm:$0xff] %v991
  %1120 = vst [vmem:[%s2 + $0x80] sm:$0xff] %v992
  %1121 = vst [vmem:[%s2 + $0x88] sm:$0xff] %v993
  %1122 = vst [vmem:[%s2 + $0x90] sm:$0xff] %v994
  %1123 = vst [vmem:[%s2 + $0x98] sm:$0xff] %v995
  %1124 = vst [vmem:[%s2 + $0xa0] sm:$0xff] %v996
  %1125 = vst [vmem:[%s2 + $0xa8] sm:$0xff] %v997
  %1126 = vst [vmem:[%s2 + $0xb0] sm:$0xff] %v998
  %1127 = vst [vmem:[%s2 + $0xb8] sm:$0xff] %v999
  %1128 = vst [vmem:[%s2 + $0xc0] sm:$0xff] %v1000
  %1129 = vst [vmem:[%s2 + $0xc8] sm:$0xff] %v1001
  %1130 = vst [vmem:[%s2 + $0xd0] sm:$0xff] %v1002
  %1131 = vst [vmem:[%s2 + $0xd8] sm:$0xff] %v1003
  %1132 = vst [vmem:[%s2 + $0xe0] sm:$0xff] %v1004
  %1133 = vst [vmem:[%s2 + $0xe8] sm:$0xff] %v1005
  %1134 = vst [vmem:[%s2 + $0xf0] sm:$0xff] %v1006
  %1135 = vst [vmem:[%s2 + $0xf8] sm:$0xff] %v1007
  %1136 = vst [vmem:[%s2 + $0x100] sm:$0xff] %v1008
  %1137 = vst [vmem:[%s2 + $0x108] sm:$0xff] %v1009
  %1138 = vst [vmem:[%s2 + $0x110] sm:$0xff] %v1010
  %1139 = vst [vmem:[%s2 + $0x118] sm:$0xff] %v1011
  %1140 = vst [vmem:[%s2 + $0x120] sm:$0xff] %v1012
  %1141 = vst [vmem:[%s2 + $0x128] sm:$0xff] %v1013
  %1142 = vst [vmem:[%s2 + $0x130] sm:$0xff] %v1014
  %1143 = vst [vmem:[%s2 + $0x138] sm:$0xff] %v1015
  %1144 = vst [vmem:[%s2 + $0x140] sm:$0xff] %v1016
  %1145 = vst [vmem:[%s2 + $0x148] sm:$0xff] %v1017
  %1146 = vst [vmem:[%s2 + $0x150] sm:$0xff] %v1018
  %1147 = vst [vmem:[%s2 + $0x158] sm:$0xff] %v1019
  %1148 = vst [vmem:[%s2 + $0x160] sm:$0xff] %v1020
  %1149 = vst [vmem:[%s2 + $0x168] sm:$0xff] %v1021
  %1150 = vst [vmem:[%s2 + $0x170] sm:$0xff] %v1022
  %1151 = vst [vmem:[%s2 + $0x178] sm:$0xff] %v1023
  %1152 = vst [vmem:[%s2 + $0x180] sm:$0xff] %v1024
  %1153 = vst [vmem:[%s2 + $0x188] sm:$0xff] %v1025
  %1154 = vst [vmem:[%s2 + $0x190] sm:$0xff] %v1026
  %1155 = vst [vmem:[%s2 + $0x198] sm:$0xff] %v1027
  %1156 = vst [vmem:[%s2 + $0x1a0] sm:$0xff] %v1028
  %1157 = vst [vmem:[%s2 + $0x1a8] sm:$0xff] %v1029
  %1158 = vst [vmem:[%s2 + $0x1b0] sm:$0xff] %v1030
  %1159 = vst [vmem:[%s2 + $0x1b8] sm:$0xff] %v1031
  %1160 = vst [vmem:[%s2 + $0x1c0] sm:$0xff] %v1032
  %1161 = vst [vmem:[%s2 + $0x1c8] sm:$0xff] %v1033
  %1162 = vst [vmem:[%s2 + $0x1d0] sm:$0xff] %v1034
  %1163 = vst [vmem:[%s2 + $0x1d8] sm:$0xff] %v1035
  %1164 = vst [vmem:[%s2 + $0x1e0] sm:$0xff] %v1036
  %1165 = vst [vmem:[%s2 + $0x1e8] sm:$0xff] %v1037
  %1166 = vst [vmem:[%s2 + $0x1f0] sm:$0xff] %v1038
  %1167 = vst [vmem:[%s2 + $0x1f8] sm:$0xff] %v1039
  %v1168 = vadd.f32 %v402, %v406
  %v1169 = vadd.f32 %v1168, %v412
  %v1170 = vadd.f32 %v1169, %v416
  %v1171 = vadd.f32 %v1170, %v422
  %v1172 = vadd.f32 %v1171, %v426
  %v1173 = vadd.f32 %v1172, %v432
  %v1174 = vadd.f32 %v1173, %v436
  %v1175 = vadd.f32 %v1174, %v442
  %v1176 = vadd.f32 %v1175, %v446
  %v1177 = vadd.f32 %v1176, %v452
  %v1178 = vadd.f32 %v1177, %v456
  %v1179 = vadd.f32 %v1178, %v462
  %v1180 = vadd.f32 %v1179, %v466
  %v1181 = vadd.f32 %v1180, %v472
  %v1182 = vadd.f32 %v1181, %v476
  %v1183 = vadd.f32 %v1182, %v482
  %v1184 = vadd.f32 %v1183, %v486
  %v1185 = vadd.f32 %v1184, %v492
  %v1186 = vadd.f32 %v1185, %v496
  %v1187 = vadd.f32 %v1186, %v502
  %v1188 = vadd.f32 %v1187, %v506
  %v1189 = vadd.f32 %v1188, %v512
  %v1190 = vadd.f32 %v1189, %v516
  %v1191 = vadd.f32 %v1190, %v522
  %v1192 = vadd.f32 %v1191, %v526
  %v1193 = vadd.f32 %v1192, %v532
  %v1194 = vadd.f32 %v1193, %v536
  %v1195 = vadd.f32 %v1194, %v542
  %v1196 = vadd.f32 %v1195, %v546
  %v1197 = vadd.f32 %v1196, %v552
  %v1198 = vadd.f32 %v1197, %v556
  %v1199 = vadd.f32 %v1198, %v562
  %v1200 = vadd.f32 %v1199, %v566
  %v1201 = vadd.f32 %v1200, %v572
  %v1202 = vadd.f32 %v1201, %v576
  %v1203 = vadd.f32 %v1202, %v582
  %v1204 = vadd.f32 %v1203, %v586
  %v1205 = vadd.f32 %v1204, %v592
  %v1206 = vadd.f32 %v1205, %v596
  %v1207 = vadd.f32 %v1206, %v602
  %v1208 = vadd.f32 %v1207, %v606
  %v1209 = vadd.f32 %v1208, %v612
  %v1210 = vadd.f32 %v1209, %v616
  %v1211 = vadd.f32 %v1210, %v622
  %v1212 = vadd.f32 %v1211, %v626
  %v1213 = vadd.f32 %v1212, %v632
  %v1214 = vadd.f32 %v1213, %v636
  %v1215 = vadd.f32 %v1214, %v642
  %v1216 = vadd.f32 %v1215, %v646
  %v1217 = vadd.f32 %v1216, %v652
  %v1218 = vadd.f32 %v1217, %v656
  %v1219 = vadd.f32 %v1218, %v662
  %v1220 = vadd.f32 %v1219, %v666
  %v1221 = vadd.f32 %v1220, %v672
  %v1222 = vadd.f32 %v1221, %v676
  %v1223 = vadd.f32 %v1222, %v682
  %v1224 = vadd.f32 %v1223, %v686
  %v1225 = vadd.f32 %v1224, %v692
  %v1226 = vadd.f32 %v1225, %v696
  %v1227 = vadd.f32 %v1226, %v702
  %v1228 = vadd.f32 %v1227, %v706
  %v1229 = vadd.f32 %v1228, %v712
  %v1230 = vadd.f32 %v1229, %v716
  %v1231 = vrot.slane %v1230, 4
  %v1232 = vadd.f32 %v1230, %v1231
  %v1233 = vrot.slane %v1232, 2
  %v1234 = vadd.f32 %v1232, %v1233
  %v1235 = vrot.slane %v1234, 1
  %v1236 = vadd.f32 %v1234, %v1235
  %v1237 = vadd.f32 %v404, %v408
  %v1238 = vadd.f32 %v1237, %v414
  %v1239 = vadd.f32 %v1238, %v418
  %v1240 = vadd.f32 %v1239, %v424
  %v1241 = vadd.f32 %v1240, %v428
  %v1242 = vadd.f32 %v1241, %v434
  %v1243 = vadd.f32 %v1242, %v438
  %v1244 = vadd.f32 %v1243, %v444
  %v1245 = vadd.f32 %v1244, %v448
  %v1246 = vadd.f32 %v1245, %v454
  %v1247 = vadd.f32 %v1246, %v458
  %v1248 = vadd.f32 %v1247, %v464
  %v1249 = vadd.f32 %v1248, %v468
  %v1250 = vadd.f32 %v1249, %v474
  %v1251 = vadd.f32 %v1250, %v478
  %v1252 = vadd.f32 %v1251, %v484
  %v1253 = vadd.f32 %v1252, %v488
  %v1254 = vadd.f32 %v1253, %v494
  %v1255 = vadd.f32 %v1254, %v498
  %v1256 = vadd.f32 %v1255, %v504
  %v1257 = vadd.f32 %v1256, %v508
  %v1258 = vadd.f32 %v1257, %v514
  %v1259 = vadd.f32 %v1258, %v518
  %v1260 = vadd.f32 %v1259, %v524
  %v1261 = vadd.f32 %v1260, %v528
  %v1262 = vadd.f32 %v1261, %v534
  %v1263 = vadd.f32 %v1262, %v538
  %v1264 = vadd.f32 %v1263, %v544
  %v1265 = vadd.f32 %v1264, %v548
  %v1266 = vadd.f32 %v1265, %v554
  %v1267 = vadd.f32 %v1266, %v558
  %v1268 = vadd.f32 %v1267, %v564
  %v1269 = vadd.f32 %v1268, %v568
  %v1270 = vadd.f32 %v1269, %v574
  %v1271 = vadd.f32 %v1270, %v578
  %v1272 = vadd.f32 %v1271, %v584
  %v1273 = vadd.f32 %v1272, %v588
  %v1274 = vadd.f32 %v1273, %v594
  %v1275 = vadd.f32 %v1274, %v598
  %v1276 = vadd.f32 %v1275, %v604
  %v1277 = vadd.f32 %v1276, %v608
  %v1278 = vadd.f32 %v1277, %v614
  %v1279 = vadd.f32 %v1278, %v618
  %v1280 = vadd.f32 %v1279, %v624
  %v1281 = vadd.f32 %v1280, %v628
  %v1282 = vadd.f32 %v1281, %v634
  %v1283 = vadd.f32 %v1282, %v638
  %v1284 = vadd.f32 %v1283, %v644
  %v1285 = vadd.f32 %v1284, %v648
  %v1286 = vadd.f32 %v1285, %v654
  %v1287 = vadd.f32 %v1286, %v658
  %v1288 = vadd.f32 %v1287, %v664
  %v1289 = vadd.f32 %v1288, %v668
  %v1290 = vadd.f32 %v1289, %v674
  %v1291 = vadd.f32 %v1290, %v678
  %v1292 = vadd.f32 %v1291, %v684
  %v1293 = vadd.f32 %v1292, %v688
  %v1294 = vadd.f32 %v1293, %v694
  %v1295 = vadd.f32 %v1294, %v698
  %v1296 = vadd.f32 %v1295, %v704
  %v1297 = vadd.f32 %v1296, %v708
  %v1298 = vadd.f32 %v1297, %v714
  %v1299 = vadd.f32 %v1298, %v718
  %v1300 = vrot.slane %v1299, 4
  %v1301 = vadd.f32 %v1299, %v1300
  %v1302 = vrot.slane %v1301, 2
  %v1303 = vadd.f32 %v1301, %v1302
  %v1304 = vrot.slane %v1303, 1
  %v1305 = vadd.f32 %v1303, %v1304
  %v1308 = vcombine.low %v1236, %v1305
  %v1310 = vunpack.c.l.s4 1966171168
  %v1311 = vunpack.c.0.s8 %v1310
  %v1312 = vlaneseq
  %v1313 = vshrl.u32 %v1312, 7
  %v1314 = vsub.s32 %v1311, %v1313
  %v1315 = vrot.slane %v1308, %v1314
  %v1317 = vunpack.c.l.s4 1966171168
  %v1318 = vunpack.c.0.s8 %v1317
  %v1319 = vlaneseq
  %v1320 = vshrl.u32 %v1319, 7
  %v1321 = vsub.s32 %v1318, %v1320
  %v1322 = vrot.slane %v1315, %v1321
  %v1324 = vlaneseq
  %vm1325 = vcmp.ge.s32.totalorder %v1324, 0
  %vm1326 = vcmp.lt.s32.totalorder %v1324, 256
  %vm1327 = vmand %vm1325, %vm1326
  %1328 = vst.msk [vmem:[%s3] sm:$0x3] %vm1327, %v1322
  %v1329 = vmul.f32 %v402, %v402
  %v1330 = vmul.f32 %v404, %v404
  %v1331 = vmul.f32 %v406, %v406
  %v1332 = vmul.f32 %v408, %v408
  %v1333 = vmul.f32 %v412, %v412
  %v1334 = vmul.f32 %v414, %v414
  %v1335 = vmul.f32 %v416, %v416
  %v1336 = vmul.f32 %v418, %v418
  %v1337 = vmul.f32 %v422, %v422
  %v1338 = vmul.f32 %v424, %v424
  %v1339 = vmul.f32 %v426, %v426
  %v1340 = vmul.f32 %v428, %v428
  %v1341 = vmul.f32 %v432, %v432
  %v1342 = vmul.f32 %v434, %v434
  %v1343 = vmul.f32 %v436, %v436
  %v1344 = vmul.f32 %v438, %v438
  %v1345 = vmul.f32 %v442, %v442
  %v1346 = vmul.f32 %v444, %v444
  %v1347 = vmul.f32 %v446, %v446
  %v1348 = vmul.f32 %v448, %v448
  %v1349 = vmul.f32 %v452, %v452
  %v1350 = vmul.f32 %v454, %v454
  %v1351 = vmul.f32 %v456, %v456
  %v1352 = vmul.f32 %v458, %v458
  %v1353 = vmul.f32 %v462, %v462
  %v1354 = vmul.f32 %v464, %v464
  %v1355 = vmul.f32 %v466, %v466
  %v1356 = vmul.f32 %v468, %v468
  %v1357 = vmul.f32 %v472, %v472
  %v1358 = vmul.f32 %v474, %v474
  %v1359 = vmul.f32 %v476, %v476
  %v1360 = vmul.f32 %v478, %v478
  %v1361 = vmul.f32 %v482, %v482
  %v1362 = vmul.f32 %v484, %v484
  %v1363 = vmul.f32 %v486, %v486
  %v1364 = vmul.f32 %v488, %v488
  %v1365 = vmul.f32 %v492, %v492
  %v1366 = vmul.f32 %v494, %v494
  %v1367 = vmul.f32 %v496, %v496
  %v1368 = vmul.f32 %v498, %v498
  %v1369 = vmul.f32 %v502, %v502
  %v1370 = vmul.f32 %v504, %v504
  %v1371 = vmul.f32 %v506, %v506
  %v1372 = vmul.f32 %v508, %v508
  %v1373 = vmul.f32 %v512, %v512
  %v1374 = vmul.f32 %v514, %v514
  %v1375 = vmul.f32 %v516, %v516
  %v1376 = vmul.f32 %v518, %v518
  %v1377 = vmul.f32 %v522, %v522
  %v1378 = vmul.f32 %v524, %v524
  %v1379 = vmul.f32 %v526, %v526
  %v1380 = vmul.f32 %v528, %v528
  %v1381 = vmul.f32 %v532, %v532
  %v1382 = vmul.f32 %v534, %v534
  %v1383 = vmul.f32 %v536, %v536
  %v1384 = vmul.f32 %v538, %v538
  %v1385 = vmul.f32 %v542, %v542
  %v1386 = vmul.f32 %v544, %v544
  %v1387 = vmul.f32 %v546, %v546
  %v1388 = vmul.f32 %v548, %v548
  %v1389 = vmul.f32 %v552, %v552
  %v1390 = vmul.f32 %v554, %v554
  %v1391 = vmul.f32 %v556, %v556
  %v1392 = vmul.f32 %v558, %v558
  %v1393 = vmul.f32 %v562, %v562
  %v1394 = vmul.f32 %v564, %v564
  %v1395 = vmul.f32 %v566, %v566
  %v1396 = vmul.f32 %v568, %v568
  %v1397 = vmul.f32 %v572, %v572
  %v1398 = vmul.f32 %v574, %v574
  %v1399 = vmul.f32 %v576, %v576
  %v1400 = vmul.f32 %v578, %v578
  %v1401 = vmul.f32 %v582, %v582
  %v1402 = vmul.f32 %v584, %v584
  %v1403 = vmul.f32 %v586, %v586
  %v1404 = vmul.f32 %v588, %v588
  %v1405 = vmul.f32 %v592, %v592
  %v1406 = vmul.f32 %v594, %v594
  %v1407 = vmul.f32 %v596, %v596
  %v1408 = vmul.f32 %v598, %v598
  %v1409 = vmul.f32 %v602, %v602
  %v1410 = vmul.f32 %v604, %v604
  %v1411 = vmul.f32 %v606, %v606
  %v1412 = vmul.f32 %v608, %v608
  %v1413 = vmul.f32 %v612, %v612
  %v1414 = vmul.f32 %v614, %v614
  %v1415 = vmul.f32 %v616, %v616
  %v1416 = vmul.f32 %v618, %v618
  %v1417 = vmul.f32 %v622, %v622
  %v1418 = vmul.f32 %v624, %v624
  %v1419 = vmul.f32 %v626, %v626
  %v1420 = vmul.f32 %v628, %v628
  %v1421 = vmul.f32 %v632, %v632
  %v1422 = vmul.f32 %v634, %v634
  %v1423 = vmul.f32 %v636, %v636
  %v1424 = vmul.f32 %v638, %v638
  %v1425 = vmul.f32 %v642, %v642
  %v1426 = vmul.f32 %v644, %v644
  %v1427 = vmul.f32 %v646, %v646
  %v1428 = vmul.f32 %v648, %v648
  %v1429 = vmul.f32 %v652, %v652
  %v1430 = vmul.f32 %v654, %v654
  %v1431 = vmul.f32 %v656, %v656
  %v1432 = vmul.f32 %v658, %v658
  %v1433 = vmul.f32 %v662, %v662
  %v1434 = vmul.f32 %v664, %v664
  %v1435 = vmul.f32 %v666, %v666
  %v1436 = vmul.f32 %v668, %v668
  %v1437 = vmul.f32 %v672, %v672
  %v1438 = vmul.f32 %v674, %v674
  %v1439 = vmul.f32 %v676, %v676
  %v1440 = vmul.f32 %v678, %v678
  %v1441 = vmul.f32 %v682, %v682
  %v1442 = vmul.f32 %v684, %v684
  %v1443 = vmul.f32 %v686, %v686
  %v1444 = vmul.f32 %v688, %v688
  %v1445 = vmul.f32 %v692, %v692
  %v1446 = vmul.f32 %v694, %v694
  %v1447 = vmul.f32 %v696, %v696
  %v1448 = vmul.f32 %v698, %v698
  %v1449 = vmul.f32 %v702, %v702
  %v1450 = vmul.f32 %v704, %v704
  %v1451 = vmul.f32 %v706, %v706
  %v1452 = vmul.f32 %v708, %v708
  %v1453 = vmul.f32 %v712, %v712
  %v1454 = vmul.f32 %v714, %v714
  %v1455 = vmul.f32 %v716, %v716
  %v1456 = vmul.f32 %v718, %v718
  %v1457 = vadd.f32 %v1329, %v1331
  %v1458 = vadd.f32 %v1457, %v1333
  %v1459 = vadd.f32 %v1458, %v1335
  %v1460 = vadd.f32 %v1459, %v1337
  %v1461 = vadd.f32 %v1460, %v1339
  %v1462 = vadd.f32 %v1461, %v1341
  %v1463 = vadd.f32 %v1462, %v1343
  %v1464 = vadd.f32 %v1463, %v1345
  %v1465 = vadd.f32 %v1464, %v1347
  %v1466 = vadd.f32 %v1465, %v1349
  %v1467 = vadd.f32 %v1466, %v1351
  %v1468 = vadd.f32 %v1467, %v1353
  %v1469 = vadd.f32 %v1468, %v1355
  %v1470 = vadd.f32 %v1469, %v1357
  %v1471 = vadd.f32 %v1470, %v1359
  %v1472 = vadd.f32 %v1471, %v1361
  %v1473 = vadd.f32 %v1472, %v1363
  %v1474 = vadd.f32 %v1473, %v1365
  %v1475 = vadd.f32 %v1474, %v1367
  %v1476 = vadd.f32 %v1475, %v1369
  %v1477 = vadd.f32 %v1476, %v1371
  %v1478 = vadd.f32 %v1477, %v1373
  %v1479 = vadd.f32 %v1478, %v1375
  %v1480 = vadd.f32 %v1479, %v1377
  %v1481 = vadd.f32 %v1480, %v1379
  %v1482 = vadd.f32 %v1481, %v1381
  %v1483 = vadd.f32 %v1482, %v1383
  %v1484 = vadd.f32 %v1483, %v1385
  %v1485 = vadd.f32 %v1484, %v1387
  %v1486 = vadd.f32 %v1485, %v1389
  %v1487 = vadd.f32 %v1486, %v1391
  %v1488 = vadd.f32 %v1487, %v1393
  %v1489 = vadd.f32 %v1488, %v1395
  %v1490 = vadd.f32 %v1489, %v1397
  %v1491 = vadd.f32 %v1490, %v1399
  %v1492 = vadd.f32 %v1491, %v1401
  %v1493 = vadd.f32 %v1492, %v1403
  %v1494 = vadd.f32 %v1493, %v1405
  %v1495 = vadd.f32 %v1494, %v1407
  %v1496 = vadd.f32 %v1495, %v1409
  %v1497 = vadd.f32 %v1496, %v1411
  %v1498 = vadd.f32 %v1497, %v1413
  %v1499 = vadd.f32 %v1498, %v1415
  %v1500 = vadd.f32 %v1499, %v1417
  %v1501 = vadd.f32 %v1500, %v1419
  %v1502 = vadd.f32 %v1501, %v1421
  %v1503 = vadd.f32 %v1502, %v1423
  %v1504 = vadd.f32 %v1503, %v1425
  %v1505 = vadd.f32 %v1504, %v1427
  %v1506 = vadd.f32 %v1505, %v1429
  %v1507 = vadd.f32 %v1506, %v1431
  %v1508 = vadd.f32 %v1507, %v1433
  %v1509 = vadd.f32 %v1508, %v1435
  %v1510 = vadd.f32 %v1509, %v1437
  %v1511 = vadd.f32 %v1510, %v1439
  %v1512 = vadd.f32 %v1511, %v1441
  %v1513 = vadd.f32 %v1512, %v1443
  %v1514 = vadd.f32 %v1513, %v1445
  %v1515 = vadd.f32 %v1514, %v1447
  %v1516 = vadd.f32 %v1515, %v1449
  %v1517 = vadd.f32 %v1516, %v1451
  %v1518 = vadd.f32 %v1517, %v1453
  %v1519 = vadd.f32 %v1518, %v1455
  %v1520 = vrot.slane %v1519, 4
  %v1521 = vadd.f32 %v1519, %v1520
  %v1522 = vrot.slane %v1521, 2
  %v1523 = vadd.f32 %v1521, %v1522
  %v1524 = vrot.slane %v1523, 1
  %v1525 = vadd.f32 %v1523, %v1524
  %v1526 = vadd.f32 %v1330, %v1332
  %v1527 = vadd.f32 %v1526, %v1334
  %v1528 = vadd.f32 %v1527, %v1336
  %v1529 = vadd.f32 %v1528, %v1338
  %v1530 = vadd.f32 %v1529, %v1340
  %v1531 = vadd.f32 %v1530, %v1342
  %v1532 = vadd.f32 %v1531, %v1344
  %v1533 = vadd.f32 %v1532, %v1346
  %v1534 = vadd.f32 %v1533, %v1348
  %v1535 = vadd.f32 %v1534, %v1350
  %v1536 = vadd.f32 %v1535, %v1352
  %v1537 = vadd.f32 %v1536, %v1354
  %v1538 = vadd.f32 %v1537, %v1356
  %v1539 = vadd.f32 %v1538, %v1358
  %v1540 = vadd.f32 %v1539, %v1360
  %v1541 = vadd.f32 %v1540, %v1362
  %v1542 = vadd.f32 %v1541, %v1364
  %v1543 = vadd.f32 %v1542, %v1366
  %v1544 = vadd.f32 %v1543, %v1368
  %v1545 = vadd.f32 %v1544, %v1370
  %v1546 = vadd.f32 %v1545, %v1372
  %v1547 = vadd.f32 %v1546, %v1374
  %v1548 = vadd.f32 %v1547, %v1376
  %v1549 = vadd.f32 %v1548, %v1378
  %v1550 = vadd.f32 %v1549, %v1380
  %v1551 = vadd.f32 %v1550, %v1382
  %v1552 = vadd.f32 %v1551, %v1384
  %v1553 = vadd.f32 %v1552, %v1386
  %v1554 = vadd.f32 %v1553, %v1388
  %v1555 = vadd.f32 %v1554, %v1390
  %v1556 = vadd.f32 %v1555, %v1392
  %v1557 = vadd.f32 %v1556, %v1394
  %v1558 = vadd.f32 %v1557, %v1396
  %v1559 = vadd.f32 %v1558, %v1398
  %v1560 = vadd.f32 %v1559, %v1400
  %v1561 = vadd.f32 %v1560, %v1402
  %v1562 = vadd.f32 %v1561, %v1404
  %v1563 = vadd.f32 %v1562, %v1406
  %v1564 = vadd.f32 %v1563, %v1408
  %v1565 = vadd.f32 %v1564, %v1410
  %v1566 = vadd.f32 %v1565, %v1412
  %v1567 = vadd.f32 %v1566, %v1414
  %v1568 = vadd.f32 %v1567, %v1416
  %v1569 = vadd.f32 %v1568, %v1418
  %v1570 = vadd.f32 %v1569, %v1420
  %v1571 = vadd.f32 %v1570, %v1422
  %v1572 = vadd.f32 %v1571, %v1424
  %v1573 = vadd.f32 %v1572, %v1426
  %v1574 = vadd.f32 %v1573, %v1428
  %v1575 = vadd.f32 %v1574, %v1430
  %v1576 = vadd.f32 %v1575, %v1432
  %v1577 = vadd.f32 %v1576, %v1434
  %v1578 = vadd.f32 %v1577, %v1436
  %v1579 = vadd.f32 %v1578, %v1438
  %v1580 = vadd.f32 %v1579, %v1440
  %v1581 = vadd.f32 %v1580, %v1442
  %v1582 = vadd.f32 %v1581, %v1444
  %v1583 = vadd.f32 %v1582, %v1446
  %v1584 = vadd.f32 %v1583, %v1448
  %v1585 = vadd.f32 %v1584, %v1450
  %v1586 = vadd.f32 %v1585, %v1452
  %v1587 = vadd.f32 %v1586, %v1454
  %v1588 = vadd.f32 %v1587, %v1456
  %v1589 = vrot.slane %v1588, 4
  %v1590 = vadd.f32 %v1588, %v1589
  %v1591 = vrot.slane %v1590, 2
  %v1592 = vadd.f32 %v1590, %v1591
  %v1593 = vrot.slane %v1592, 1
  %v1594 = vadd.f32 %v1592, %v1593
  %v1597 = vcombine.low %v1525, %v1594
  %v1599 = vunpack.c.l.s4 1966171168
  %v1600 = vunpack.c.0.s8 %v1599
  %v1601 = vlaneseq
  %v1602 = vshrl.u32 %v1601, 7
  %v1603 = vsub.s32 %v1600, %v1602
  %v1604 = vrot.slane %v1597, %v1603
  %v1606 = vunpack.c.l.s4 1966171168
  %v1607 = vunpack.c.0.s8 %v1606
  %v1608 = vlaneseq
  %v1609 = vshrl.u32 %v1608, 7
  %v1610 = vsub.s32 %v1607, %v1609
  %v1611 = vrot.slane %v1604, %v1610
  %1613 = vst.msk [vmem:[%s4] sm:$0x3] %vm1327, %v1611
  // Predicated region
  $region10: #{bottleneck_forward.4} parent=0 // pred_check
    _
  $region11: #{bottleneck_forward.4} parent=0 // pred_check_branch
    %1615 = sbr.rel (0) target = $region13
  $region12: #{bottleneck_forward.4} parent=0 // pred_region
    _
  $region13: #{bottleneck_forward.4} parent=0 // pred_fallthru
    _
  // Predicated region
  $region14: #{bottleneck_forward.4} parent=0 // pred_check
    _
  $region15: #{bottleneck_forward.4} parent=0 // pred_check_branch
    %1617 = sbr.rel (0) target = $region17
  $region16: #{bottleneck_forward.4} parent=0 // pred_region
    _
  $region17: #{bottleneck_forward.4} parent=0 // pred_fallthru
    _
  // Predicated region
  $region18: #{bottleneck_forward.4} parent=0 // pred_check
    _
  $region19: #{bottleneck_forward.4} parent=0 // pred_check_branch
    %1619 = sbr.rel (0) target = $region21
  $region20: #{bottleneck_forward.4} parent=0 // pred_region
    _
  $region21: #{bottleneck_forward.4} parent=0 // pred_fallthru
    _
  // Predicated region
  $region22: #{bottleneck_forward.4} parent=0 // pred_check
    _
  $region23: #{bottleneck_forward.4} parent=0 // pred_check_branch
    %1621 = sbr.rel (0) target = $region25
  $region24: #{bottleneck_forward.4} parent=0 // pred_region
    _
  $region25: #{bottleneck_forward.4} parent=0 // pred_fallthru
    _
  // Predicated region
  $region26: #{bottleneck_forward.4} parent=0 // pred_check
    _
  $region27: #{bottleneck_forward.4} parent=0 // pred_check_branch
    %1623 = sbr.rel (0) target = $region29
  $region28: #{bottleneck_forward.4} parent=0 // pred_region
    _
  $region29: #{bottleneck_forward.4} parent=0 // pred_fallthru
    _
  // Predicated region
  $region30: #{bottleneck_forward.4} parent=0 // pred_check
    _
  $region31: #{bottleneck_forward.4} parent=0 // pred_check_branch
    %1625 = sbr.rel (0) target = $region33
  $region32: #{bottleneck_forward.4} parent=0 // pred_region
    _
  $region33: #{bottleneck_forward.4} parent=0 // pred_fallthru
    _

// kernel: bottleneck_forward.7
$region0: #{bottleneck_forward.7}
  #allocation0 [shape = 'u32[]', space=smem, size = 0x4, offset = 0x4, fixed_abs, tag = 'smem constant byte address 0x4 - core index']
  #allocation1 [shape = 'u32[144,128]{1,0:T(1,128)}', space=vmem, size = 0x12000, scoped, tag = 'internal scratch']
  %s0 = inlined_call_operand.vmem [shape: bf16[512,128], index: 0, kind: input, shape index: {}]
  %s1 = inlined_call_operand.vmem [shape: f32[1,128], index: 1, kind: input, shape index: {}]
  %s2 = inlined_call_operand.vmem [shape: f32[1,128], index: 2, kind: input, shape index: {}]
  %s3 = inlined_call_operand.vmem [shape: bf16[512,256], index: 3, kind: input, shape index: {}]
  %s4 = inlined_call_operand.vmem [shape: f32[1,128], index: 4, kind: input, shape index: {}]
  %s5 = inlined_call_operand.vmem [shape: f32[1,128], index: 5, kind: input, shape index: {}]
  %s6 = inlined_call_operand.vmem [shape: f32[512,128], index: 6, kind: output, shape index: {}]
  %s7 = sld [smem:[#allocation0]]
  $region75: #{bottleneck_forward.7} parent=0
    _
  %s9 = ssub.s32 1, %s7
  %s10 = scalar_select 0, %s9, %s7
  $region1: #{bottleneck_forward.7} parent=0
    #allocation2 [shape = 'u8[131072]{0}', space=vmem, size = 0x20000, scoped, tag = 'input window, operand 3, single buffered']
    // Predicated region
    $region2: #{bottleneck_forward.7} parent=1 // pred_check
      _
    $region3: #{bottleneck_forward.7} parent=1 // pred_check_branch
      %12 = sbr.rel (0) target = $region5
    $region4: #{bottleneck_forward.7} parent=1 // pred_region
      _
    $region5: #{bottleneck_forward.7} parent=1 // pred_fallthru
      _
    // Predicated region
    $region6: #{bottleneck_forward.7} parent=1 // pred_check
      _
    $region7: #{bottleneck_forward.7} parent=1 // pred_check_branch
      %14 = sbr.rel (0) target = $region9
    $region8: #{bottleneck_forward.7} parent=1 // pred_region
      _
    $region9: #{bottleneck_forward.7} parent=1 // pred_fallthru
      _
    // Predicated region
    $region10: #{bottleneck_forward.7} parent=1 // pred_check
      _
    $region11: #{bottleneck_forward.7} parent=1 // pred_check_branch
      %16 = sbr.rel (0) target = $region13
    $region12: #{bottleneck_forward.7} parent=1 // pred_region
      _
    $region13: #{bottleneck_forward.7} parent=1 // pred_fallthru
      _
    // Predicated region
    $region14: #{bottleneck_forward.7} parent=1 // pred_check
      _
    $region15: #{bottleneck_forward.7} parent=1 // pred_check_branch
      %18 = sbr.rel (0) target = $region17
    $region16: #{bottleneck_forward.7} parent=1 // pred_region
      // Predicated region
      $region18: #{bottleneck_forward.7} parent=16 // pred_check
        _
      $region19: #{bottleneck_forward.7} parent=16 // pred_check_branch
        %20 = sbr.rel (0) target = $region21
      $region20: #{bottleneck_forward.7} parent=16 // pred_region
        // Predicated region
        $region22: #{bottleneck_forward.7} parent=20 // pred_check
          _
        $region23: #{bottleneck_forward.7} parent=20 // pred_check_branch
          %22 = sbr.rel target = $region25
        $region24: #{bottleneck_forward.7} parent=20 // pred_region
          // Predicated region
          $region37: #{bottleneck_forward.7} parent=24 // pred_check
            _
          $region38: #{bottleneck_forward.7} parent=24 // pred_check_branch
            %163 = sbr.rel (0) target = $region40
          $region39: #{bottleneck_forward.7} parent=24 // pred_region
            loop: start=0, step=1, limit=1
            $region41: #{bottleneck_forward.7} parent=39 // loop_pre_header
              _
            $region42: #{bottleneck_forward.7} parent=39 // loop_header
              %s165 = sphi 0, %s169
              %p166 = scmp.ge.s32.totalorder %s165, 1
              %s170 = sphi %s3, %s3
              %s171 = sphi [#allocation2], [#allocation2]
            $region43: #{bottleneck_forward.7} parent=39 // loop_header_branch
              %168 = sbr.rel (%p166) target = $region47
            $region44: #{bottleneck_forward.7} parent=39 // loop_body
              _
            $region45: #{bottleneck_forward.7} parent=39 // loop_footer
              %s169 = sadd.s32 1, %s165
            $region46: #{bottleneck_forward.7} parent=39 // loop_footer_branch
              %164 = sbr.rel target = $region42
            $region47: #{bottleneck_forward.7} parent=39 // loop_exit
              _
            loop: start=0, step=1, limit=1
            $region48: #{bottleneck_forward.7} parent=39 // loop_pre_header
              _
            $region49: #{bottleneck_forward.7} parent=39 // loop_header
              %s174 = sphi 0, %s178
              %p175 = scmp.ge.s32.totalorder %s174, 1
              %s179 = sphi %s3, %s3
              %s180 = sphi [#allocation2], [#allocation2]
            $region50: #{bottleneck_forward.7} parent=39 // loop_header_branch
              %177 = sbr.rel (%p175) target = $region54
            $region51: #{bottleneck_forward.7} parent=39 // loop_body
              %v181 = vld [vmem:[%s179] sm:$0xf]
              %182 = vst [vmem:[%s180] sm:$0xf] %v181
              %v183 = vld [vmem:[%s179 + $0x8] sm:$0xf]
              %184 = vst [vmem:[%s180 + $0x4] sm:$0xf] %v183
              %v185 = vld [vmem:[%s179 + $0x10] sm:$0xf]
              %186 = vst [vmem:[%s180 + $0x8] sm:$0xf] %v185
              %v187 = vld [vmem:[%s179 + $0x18] sm:$0xf]
              %188 = vst [vmem:[%s180 + $0xc] sm:$0xf] %v187
              %v189 = vld [vmem:[%s179 + $0x20] sm:$0xf]
              %190 = vst [vmem:[%s180 + $0x10] sm:$0xf] %v189
              %v191 = vld [vmem:[%s179 + $0x28] sm:$0xf]
              %192 = vst [vmem:[%s180 + $0x14] sm:$0xf] %v191
              %v193 = vld [vmem:[%s179 + $0x30] sm:$0xf]
              %194 = vst [vmem:[%s180 + $0x18] sm:$0xf] %v193
              %v195 = vld [vmem:[%s179 + $0x38] sm:$0xf]
              %196 = vst [vmem:[%s180 + $0x1c] sm:$0xf] %v195
              %v197 = vld [vmem:[%s179 + $0x40] sm:$0xf]
              %198 = vst [vmem:[%s180 + $0x20] sm:$0xf] %v197
              %v199 = vld [vmem:[%s179 + $0x48] sm:$0xf]
              %200 = vst [vmem:[%s180 + $0x24] sm:$0xf] %v199
              %v201 = vld [vmem:[%s179 + $0x50] sm:$0xf]
              %202 = vst [vmem:[%s180 + $0x28] sm:$0xf] %v201
              %v203 = vld [vmem:[%s179 + $0x58] sm:$0xf]
              %204 = vst [vmem:[%s180 + $0x2c] sm:$0xf] %v203
              %v205 = vld [vmem:[%s179 + $0x60] sm:$0xf]
              %206 = vst [vmem:[%s180 + $0x30] sm:$0xf] %v205
              %v207 = vld [vmem:[%s179 + $0x68] sm:$0xf]
              %208 = vst [vmem:[%s180 + $0x34] sm:$0xf] %v207
              %v209 = vld [vmem:[%s179 + $0x70] sm:$0xf]
              %210 = vst [vmem:[%s180 + $0x38] sm:$0xf] %v209
              %v211 = vld [vmem:[%s179 + $0x78] sm:$0xf]
              %212 = vst [vmem:[%s180 + $0x3c] sm:$0xf] %v211
              %v213 = vld [vmem:[%s179 + $0x80] sm:$0xf]
              %214 = vst [vmem:[%s180 + $0x40] sm:$0xf] %v213
              %v215 = vld [vmem:[%s179 + $0x88] sm:$0xf]
              %216 = vst [vmem:[%s180 + $0x44] sm:$0xf] %v215
              %v217 = vld [vmem:[%s179 + $0x90] sm:$0xf]
              %218 = vst [vmem:[%s180 + $0x48] sm:$0xf] %v217
              %v219 = vld [vmem:[%s179 + $0x98] sm:$0xf]
              %220 = vst [vmem:[%s180 + $0x4c] sm:$0xf] %v219
              %v221 = vld [vmem:[%s179 + $0xa0] sm:$0xf]
              %222 = vst [vmem:[%s180 + $0x50] sm:$0xf] %v221
              %v223 = vld [vmem:[%s179 + $0xa8] sm:$0xf]
              %224 = vst [vmem:[%s180 + $0x54] sm:$0xf] %v223
              %v225 = vld [vmem:[%s179 + $0xb0] sm:$0xf]
              %226 = vst [vmem:[%s180 + $0x58] sm:$0xf] %v225
              %v227 = vld [vmem:[%s179 + $0xb8] sm:$0xf]
              %228 = vst [vmem:[%s180 + $0x5c] sm:$0xf] %v227
              %v229 = vld [vmem:[%s179 + $0xc0] sm:$0xf]
              %230 = vst [vmem:[%s180 + $0x60] sm:$0xf] %v229
              %v231 = vld [vmem:[%s179 + $0xc8] sm:$0xf]
              %232 = vst [vmem:[%s180 + $0x64] sm:$0xf] %v231
              %v233 = vld [vmem:[%s179 + $0xd0] sm:$0xf]
              %234 = vst [vmem:[%s180 + $0x68] sm:$0xf] %v233
              %v235 = vld [vmem:[%s179 + $0xd8] sm:$0xf]
              %236 = vst [vmem:[%s180 + $0x6c] sm:$0xf] %v235
              %v237 = vld [vmem:[%s179 + $0xe0] sm:$0xf]
              %238 = vst [vmem:[%s180 + $0x70] sm:$0xf] %v237
              %v239 = vld [vmem:[%s179 + $0xe8] sm:$0xf]
              %240 = vst [vmem:[%s180 + $0x74] sm:$0xf] %v239
              %v241 = vld [vmem:[%s179 + $0xf0] sm:$0xf]
              %242 = vst [vmem:[%s180 + $0x78] sm:$0xf] %v241
              %v243 = vld [vmem:[%s179 + $0xf8] sm:$0xf]
              %244 = vst [vmem:[%s180 + $0x7c] sm:$0xf] %v243
              %v245 = vld [vmem:[%s179 + $0x100] sm:$0xf]
              %246 = vst [vmem:[%s180 + $0x80] sm:$0xf] %v245
              %v247 = vld [vmem:[%s179 + $0x108] sm:$0xf]
              %248 = vst [vmem:[%s180 + $0x84] sm:$0xf] %v247
              %v249 = vld [vmem:[%s179 + $0x110] sm:$0xf]
              %250 = vst [vmem:[%s180 + $0x88] sm:$0xf] %v249
              %v251 = vld [vmem:[%s179 + $0x118] sm:$0xf]
              %252 = vst [vmem:[%s180 + $0x8c] sm:$0xf] %v251
              %v253 = vld [vmem:[%s179 + $0x120] sm:$0xf]
              %254 = vst [vmem:[%s180 + $0x90] sm:$0xf] %v253
              %v255 = vld [vmem:[%s179 + $0x128] sm:$0xf]
              %256 = vst [vmem:[%s180 + $0x94] sm:$0xf] %v255
              %v257 = vld [vmem:[%s179 + $0x130] sm:$0xf]
              %258 = vst [vmem:[%s180 + $0x98] sm:$0xf] %v257
              %v259 = vld [vmem:[%s179 + $0x138] sm:$0xf]
              %260 = vst [vmem:[%s180 + $0x9c] sm:$0xf] %v259
              %v261 = vld [vmem:[%s179 + $0x140] sm:$0xf]
              %262 = vst [vmem:[%s180 + $0xa0] sm:$0xf] %v261
              %v263 = vld [vmem:[%s179 + $0x148] sm:$0xf]
              %264 = vst [vmem:[%s180 + $0xa4] sm:$0xf] %v263
              %v265 = vld [vmem:[%s179 + $0x150] sm:$0xf]
              %266 = vst [vmem:[%s180 + $0xa8] sm:$0xf] %v265
              %v267 = vld [vmem:[%s179 + $0x158] sm:$0xf]
              %268 = vst [vmem:[%s180 + $0xac] sm:$0xf] %v267
              %v269 = vld [vmem:[%s179 + $0x160] sm:$0xf]
              %270 = vst [vmem:[%s180 + $0xb0] sm:$0xf] %v269
              %v271 = vld [vmem:[%s179 + $0x168] sm:$0xf]
              %272 = vst [vmem:[%s180 + $0xb4] sm:$0xf] %v271
              %v273 = vld [vmem:[%s179 + $0x170] sm:$0xf]
              %274 = vst [vmem:[%s180 + $0xb8] sm:$0xf] %v273
              %v275 = vld [vmem:[%s179 + $0x178] sm:$0xf]
              %276 = vst [vmem:[%s180 + $0xbc] sm:$0xf] %v275
              %v277 = vld [vmem:[%s179 + $0x180] sm:$0xf]
              %278 = vst [vmem:[%s180 + $0xc0] sm:$0xf] %v277
              %v279 = vld [vmem:[%s179 + $0x188] sm:$0xf]
              %280 = vst [vmem:[%s180 + $0xc4] sm:$0xf] %v279
              %v281 = vld [vmem:[%s179 + $0x190] sm:$0xf]
              %282 = vst [vmem:[%s180 + $0xc8] sm:$0xf] %v281
              %v283 = vld [vmem:[%s179 + $0x198] sm:$0xf]
              %284 = vst [vmem:[%s180 + $0xcc] sm:$0xf] %v283
              %v285 = vld [vmem:[%s179 + $0x1a0] sm:$0xf]
              %286 = vst [vmem:[%s180 + $0xd0] sm:$0xf] %v285
              %v287 = vld [vmem:[%s179 + $0x1a8] sm:$0xf]
              %288 = vst [vmem:[%s180 + $0xd4] sm:$0xf] %v287
              %v289 = vld [vmem:[%s179 + $0x1b0] sm:$0xf]
              %290 = vst [vmem:[%s180 + $0xd8] sm:$0xf] %v289
              %v291 = vld [vmem:[%s179 + $0x1b8] sm:$0xf]
              %292 = vst [vmem:[%s180 + $0xdc] sm:$0xf] %v291
              %v293 = vld [vmem:[%s179 + $0x1c0] sm:$0xf]
              %294 = vst [vmem:[%s180 + $0xe0] sm:$0xf] %v293
              %v295 = vld [vmem:[%s179 + $0x1c8] sm:$0xf]
              %296 = vst [vmem:[%s180 + $0xe4] sm:$0xf] %v295
              %v297 = vld [vmem:[%s179 + $0x1d0] sm:$0xf]
              %298 = vst [vmem:[%s180 + $0xe8] sm:$0xf] %v297
              %v299 = vld [vmem:[%s179 + $0x1d8] sm:$0xf]
              %300 = vst [vmem:[%s180 + $0xec] sm:$0xf] %v299
              %v301 = vld [vmem:[%s179 + $0x1e0] sm:$0xf]
              %302 = vst [vmem:[%s180 + $0xf0] sm:$0xf] %v301
              %v303 = vld [vmem:[%s179 + $0x1e8] sm:$0xf]
              %304 = vst [vmem:[%s180 + $0xf4] sm:$0xf] %v303
              %v305 = vld [vmem:[%s179 + $0x1f0] sm:$0xf]
              %306 = vst [vmem:[%s180 + $0xf8] sm:$0xf] %v305
              %v307 = vld [vmem:[%s179 + $0x1f8] sm:$0xf]
              %308 = vst [vmem:[%s180 + $0xfc] sm:$0xf] %v307
            $region52: #{bottleneck_forward.7} parent=39 // loop_footer
              %s178 = sadd.s32 1, %s174
            $region53: #{bottleneck_forward.7} parent=39 // loop_footer_branch
              %173 = sbr.rel target = $region49
            $region54: #{bottleneck_forward.7} parent=39 // loop_exit
              _
          $region40: #{bottleneck_forward.7} parent=24 // pred_fallthru
            _
        $region25: #{bottleneck_forward.7} parent=20 // pred_fallthru
          _
        // Predicated region
        $region26: #{bottleneck_forward.7} parent=20 // pred_check
          _
        $region27: #{bottleneck_forward.7} parent=20 // pred_check_branch
          %24 = sbr.rel (0) target = $region29
        $region28: #{bottleneck_forward.7} parent=20 // pred_region
          loop: start=0, step=1, limit=1
          $region30: #{bottleneck_forward.7} parent=28 // loop_pre_header
            _
          $region31: #{bottleneck_forward.7} parent=28 // loop_header
            %s27 = sphi 0, %s31
            %p28 = scmp.ge.s32.totalorder %s27, 1
            %s32 = sphi %s3, %s3
            %s33 = sphi [#allocation2], [#allocation2]
          $region32: #{bottleneck_forward.7} parent=28 // loop_header_branch
            %30 = sbr.rel (%p28) target = $region36
          $region33: #{bottleneck_forward.7} parent=28 // loop_body
            %v34 = vld [vmem:[%s32] sm:$0xf]
            %35 = vst [vmem:[%s33] sm:$0xf] %v34
            %v36 = vld [vmem:[%s32 + $0x8] sm:$0xf]
            %37 = vst [vmem:[%s33 + $0x4] sm:$0xf] %v36
            %v38 = vld [vmem:[%s32 + $0x10] sm:$0xf]
            %39 = vst [vmem:[%s33 + $0x8] sm:$0xf] %v38
            %v40 = vld [vmem:[%s32 + $0x18] sm:$0xf]
            %41 = vst [vmem:[%s33 + $0xc] sm:$0xf] %v40
            %v42 = vld [vmem:[%s32 + $0x20] sm:$0xf]
            %43 = vst [vmem:[%s33 + $0x10] sm:$0xf] %v42
            %v44 = vld [vmem:[%s32 + $0x28] sm:$0xf]
            %45 = vst [vmem:[%s33 + $0x14] sm:$0xf] %v44
            %v46 = vld [vmem:[%s32 + $0x30] sm:$0xf]
            %47 = vst [vmem:[%s33 + $0x18] sm:$0xf] %v46
            %v48 = vld [vmem:[%s32 + $0x38] sm:$0xf]
            %49 = vst [vmem:[%s33 + $0x1c] sm:$0xf] %v48
            %v50 = vld [vmem:[%s32 + $0x40] sm:$0xf]
            %51 = vst [vmem:[%s33 + $0x20] sm:$0xf] %v50
            %v52 = vld [vmem:[%s32 + $0x48] sm:$0xf]
            %53 = vst [vmem:[%s33 + $0x24] sm:$0xf] %v52
            %v54 = vld [vmem:[%s32 + $0x50] sm:$0xf]
            %55 = vst [vmem:[%s33 + $0x28] sm:$0xf] %v54
            %v56 = vld [vmem:[%s32 + $0x58] sm:$0xf]
            %57 = vst [vmem:[%s33 + $0x2c] sm:$0xf] %v56
            %v58 = vld [vmem:[%s32 + $0x60] sm:$0xf]
            %59 = vst [vmem:[%s33 + $0x30] sm:$0xf] %v58
            %v60 = vld [vmem:[%s32 + $0x68] sm:$0xf]
            %61 = vst [vmem:[%s33 + $0x34] sm:$0xf] %v60
            %v62 = vld [vmem:[%s32 + $0x70] sm:$0xf]
            %63 = vst [vmem:[%s33 + $0x38] sm:$0xf] %v62
            %v64 = vld [vmem:[%s32 + $0x78] sm:$0xf]
            %65 = vst [vmem:[%s33 + $0x3c] sm:$0xf] %v64
            %v66 = vld [vmem:[%s32 + $0x80] sm:$0xf]
            %67 = vst [vmem:[%s33 + $0x40] sm:$0xf] %v66
            %v68 = vld [vmem:[%s32 + $0x88] sm:$0xf]
            %69 = vst [vmem:[%s33 + $0x44] sm:$0xf] %v68
            %v70 = vld [vmem:[%s32 + $0x90] sm:$0xf]
            %71 = vst [vmem:[%s33 + $0x48] sm:$0xf] %v70
            %v72 = vld [vmem:[%s32 + $0x98] sm:$0xf]
            %73 = vst [vmem:[%s33 + $0x4c] sm:$0xf] %v72
            %v74 = vld [vmem:[%s32 + $0xa0] sm:$0xf]
            %75 = vst [vmem:[%s33 + $0x50] sm:$0xf] %v74
            %v76 = vld [vmem:[%s32 + $0xa8] sm:$0xf]
            %77 = vst [vmem:[%s33 + $0x54] sm:$0xf] %v76
            %v78 = vld [vmem:[%s32 + $0xb0] sm:$0xf]
            %79 = vst [vmem:[%s33 + $0x58] sm:$0xf] %v78
            %v80 = vld [vmem:[%s32 + $0xb8] sm:$0xf]
            %81 = vst [vmem:[%s33 + $0x5c] sm:$0xf] %v80
            %v82 = vld [vmem:[%s32 + $0xc0] sm:$0xf]
            %83 = vst [vmem:[%s33 + $0x60] sm:$0xf] %v82
            %v84 = vld [vmem:[%s32 + $0xc8] sm:$0xf]
            %85 = vst [vmem:[%s33 + $0x64] sm:$0xf] %v84
            %v86 = vld [vmem:[%s32 + $0xd0] sm:$0xf]
            %87 = vst [vmem:[%s33 + $0x68] sm:$0xf] %v86
            %v88 = vld [vmem:[%s32 + $0xd8] sm:$0xf]
            %89 = vst [vmem:[%s33 + $0x6c] sm:$0xf] %v88
            %v90 = vld [vmem:[%s32 + $0xe0] sm:$0xf]
            %91 = vst [vmem:[%s33 + $0x70] sm:$0xf] %v90
            %v92 = vld [vmem:[%s32 + $0xe8] sm:$0xf]
            %93 = vst [vmem:[%s33 + $0x74] sm:$0xf] %v92
            %v94 = vld [vmem:[%s32 + $0xf0] sm:$0xf]
            %95 = vst [vmem:[%s33 + $0x78] sm:$0xf] %v94
            %v96 = vld [vmem:[%s32 + $0xf8] sm:$0xf]
            %97 = vst [vmem:[%s33 + $0x7c] sm:$0xf] %v96
            %v98 = vld [vmem:[%s32 + $0x100] sm:$0xf]
            %99 = vst [vmem:[%s33 + $0x80] sm:$0xf] %v98
            %v100 = vld [vmem:[%s32 + $0x108] sm:$0xf]
            %101 = vst [vmem:[%s33 + $0x84] sm:$0xf] %v100
            %v102 = vld [vmem:[%s32 + $0x110] sm:$0xf]
            %103 = vst [vmem:[%s33 + $0x88] sm:$0xf] %v102
            %v104 = vld [vmem:[%s32 + $0x118] sm:$0xf]
            %105 = vst [vmem:[%s33 + $0x8c] sm:$0xf] %v104
            %v106 = vld [vmem:[%s32 + $0x120] sm:$0xf]
            %107 = vst [vmem:[%s33 + $0x90] sm:$0xf] %v106
            %v108 = vld [vmem:[%s32 + $0x128] sm:$0xf]
            %109 = vst [vmem:[%s33 + $0x94] sm:$0xf] %v108
            %v110 = vld [vmem:[%s32 + $0x130] sm:$0xf]
            %111 = vst [vmem:[%s33 + $0x98] sm:$0xf] %v110
            %v112 = vld [vmem:[%s32 + $0x138] sm:$0xf]
            %113 = vst [vmem:[%s33 + $0x9c] sm:$0xf] %v112
            %v114 = vld [vmem:[%s32 + $0x140] sm:$0xf]
            %115 = vst [vmem:[%s33 + $0xa0] sm:$0xf] %v114
            %v116 = vld [vmem:[%s32 + $0x148] sm:$0xf]
            %117 = vst [vmem:[%s33 + $0xa4] sm:$0xf] %v116
            %v118 = vld [vmem:[%s32 + $0x150] sm:$0xf]
            %119 = vst [vmem:[%s33 + $0xa8] sm:$0xf] %v118
            %v120 = vld [vmem:[%s32 + $0x158] sm:$0xf]
            %121 = vst [vmem:[%s33 + $0xac] sm:$0xf] %v120
            %v122 = vld [vmem:[%s32 + $0x160] sm:$0xf]
            %123 = vst [vmem:[%s33 + $0xb0] sm:$0xf] %v122
            %v124 = vld [vmem:[%s32 + $0x168] sm:$0xf]
            %125 = vst [vmem:[%s33 + $0xb4] sm:$0xf] %v124
            %v126 = vld [vmem:[%s32 + $0x170] sm:$0xf]
            %127 = vst [vmem:[%s33 + $0xb8] sm:$0xf] %v126
            %v128 = vld [vmem:[%s32 + $0x178] sm:$0xf]
            %129 = vst [vmem:[%s33 + $0xbc] sm:$0xf] %v128
            %v130 = vld [vmem:[%s32 + $0x180] sm:$0xf]
            %131 = vst [vmem:[%s33 + $0xc0] sm:$0xf] %v130
            %v132 = vld [vmem:[%s32 + $0x188] sm:$0xf]
            %133 = vst [vmem:[%s33 + $0xc4] sm:$0xf] %v132
            %v134 = vld [vmem:[%s32 + $0x190] sm:$0xf]
            %135 = vst [vmem:[%s33 + $0xc8] sm:$0xf] %v134
            %v136 = vld [vmem:[%s32 + $0x198] sm:$0xf]
            %137 = vst [vmem:[%s33 + $0xcc] sm:$0xf] %v136
            %v138 = vld [vmem:[%s32 + $0x1a0] sm:$0xf]
            %139 = vst [vmem:[%s33 + $0xd0] sm:$0xf] %v138
            %v140 = vld [vmem:[%s32 + $0x1a8] sm:$0xf]
            %141 = vst [vmem:[%s33 + $0xd4] sm:$0xf] %v140
            %v142 = vld [vmem:[%s32 + $0x1b0] sm:$0xf]
            %143 = vst [vmem:[%s33 + $0xd8] sm:$0xf] %v142
            %v144 = vld [vmem:[%s32 + $0x1b8] sm:$0xf]
            %145 = vst [vmem:[%s33 + $0xdc] sm:$0xf] %v144
            %v146 = vld [vmem:[%s32 + $0x1c0] sm:$0xf]
            %147 = vst [vmem:[%s33 + $0xe0] sm:$0xf] %v146
            %v148 = vld [vmem:[%s32 + $0x1c8] sm:$0xf]
            %149 = vst [vmem:[%s33 + $0xe4] sm:$0xf] %v148
            %v150 = vld [vmem:[%s32 + $0x1d0] sm:$0xf]
            %151 = vst [vmem:[%s33 + $0xe8] sm:$0xf] %v150
            %v152 = vld [vmem:[%s32 + $0x1d8] sm:$0xf]
            %153 = vst [vmem:[%s33 + $0xec] sm:$0xf] %v152
            %v154 = vld [vmem:[%s32 + $0x1e0] sm:$0xf]
            %155 = vst [vmem:[%s33 + $0xf0] sm:$0xf] %v154
            %v156 = vld [vmem:[%s32 + $0x1e8] sm:$0xf]
            %157 = vst [vmem:[%s33 + $0xf4] sm:$0xf] %v156
            %v158 = vld [vmem:[%s32 + $0x1f0] sm:$0xf]
            %159 = vst [vmem:[%s33 + $0xf8] sm:$0xf] %v158
            %v160 = vld [vmem:[%s32 + $0x1f8] sm:$0xf]
            %161 = vst [vmem:[%s33 + $0xfc] sm:$0xf] %v160
          $region34: #{bottleneck_forward.7} parent=28 // loop_footer
            %s31 = sadd.s32 1, %s27
          $region35: #{bottleneck_forward.7} parent=28 // loop_footer_branch
            %26 = sbr.rel target = $region31
          $region36: #{bottleneck_forward.7} parent=28 // loop_exit
            _
        $region29: #{bottleneck_forward.7} parent=20 // pred_fallthru
          _
      $region21: #{bottleneck_forward.7} parent=16 // pred_fallthru
        _
      %309 = vnop
    $region17: #{bottleneck_forward.7} parent=1 // pred_fallthru
      _
    // Predicated region
    $region55: #{bottleneck_forward.7} parent=1 // pred_check
      _
    $region56: #{bottleneck_forward.7} parent=1 // pred_check_branch
      %311 = sbr.rel (0) target = $region58
    $region57: #{bottleneck_forward.7} parent=1 // pred_region
      _
    $region58: #{bottleneck_forward.7} parent=1 // pred_fallthru
      _
    // Predicated region
    $region59: #{bottleneck_forward.7} parent=1 // pred_check
      _
    $region60: #{bottleneck_forward.7} parent=1 // pred_check_branch
      %313 = sbr.rel (0) target = $region62
    $region61: #{bottleneck_forward.7} parent=1 // pred_region
      _
    $region62: #{bottleneck_forward.7} parent=1 // pred_fallthru
      _
    // Predicated region
    $region63: #{bottleneck_forward.7} parent=1 // pred_check
      _
    $region64: #{bottleneck_forward.7} parent=1 // pred_check_branch
      %315 = sbr.rel (0) target = $region66
    $region65: #{bottleneck_forward.7} parent=1 // pred_region
      _
    $region66: #{bottleneck_forward.7} parent=1 // pred_fallthru
      _
    %v316 = vld [vmem:[%s0] sm:$0xf]
    %v317 = vld [vmem:[%s0 + $0x4] sm:$0xf]
    %v318 = vld [vmem:[%s0 + $0x8] sm:$0xf]
    %v319 = vld [vmem:[%s0 + $0xc] sm:$0xf]
    %v320 = vld [vmem:[%s0 + $0x10] sm:$0xf]
    %v321 = vld [vmem:[%s0 + $0x14] sm:$0xf]
    %v322 = vld [vmem:[%s0 + $0x18] sm:$0xf]
    %v323 = vld [vmem:[%s0 + $0x1c] sm:$0xf]
    %v324 = vld [vmem:[%s0 + $0x20] sm:$0xf]
    %v325 = vld [vmem:[%s0 + $0x24] sm:$0xf]
    %v326 = vld [vmem:[%s0 + $0x28] sm:$0xf]
    %v327 = vld [vmem:[%s0 + $0x2c] sm:$0xf]
    %v328 = vld [vmem:[%s0 + $0x30] sm:$0xf]
    %v329 = vld [vmem:[%s0 + $0x34] sm:$0xf]
    %v330 = vld [vmem:[%s0 + $0x38] sm:$0xf]
    %v331 = vld [vmem:[%s0 + $0x3c] sm:$0xf]
    %v332 = vld [vmem:[%s0 + $0x40] sm:$0xf]
    %v333 = vld [vmem:[%s0 + $0x44] sm:$0xf]
    %v334 = vld [vmem:[%s0 + $0x48] sm:$0xf]
    %v335 = vld [vmem:[%s0 + $0x4c] sm:$0xf]
    %v336 = vld [vmem:[%s0 + $0x50] sm:$0xf]
    %v337 = vld [vmem:[%s0 + $0x54] sm:$0xf]
    %v338 = vld [vmem:[%s0 + $0x58] sm:$0xf]
    %v339 = vld [vmem:[%s0 + $0x5c] sm:$0xf]
    %v340 = vld [vmem:[%s0 + $0x60] sm:$0xf]
    %v341 = vld [vmem:[%s0 + $0x64] sm:$0xf]
    %v342 = vld [vmem:[%s0 + $0x68] sm:$0xf]
    %v343 = vld [vmem:[%s0 + $0x6c] sm:$0xf]
    %v344 = vld [vmem:[%s0 + $0x70] sm:$0xf]
    %v345 = vld [vmem:[%s0 + $0x74] sm:$0xf]
    %v346 = vld [vmem:[%s0 + $0x78] sm:$0xf]
    %v347 = vld [vmem:[%s0 + $0x7c] sm:$0xf]
    %v348 = vld [vmem:[%s0 + $0x80] sm:$0xf]
    %v349 = vld [vmem:[%s0 + $0x84] sm:$0xf]
    %v350 = vld [vmem:[%s0 + $0x88] sm:$0xf]
    %v351 = vld [vmem:[%s0 + $0x8c] sm:$0xf]
    %v352 = vld [vmem:[%s0 + $0x90] sm:$0xf]
    %v353 = vld [vmem:[%s0 + $0x94] sm:$0xf]
    %v354 = vld [vmem:[%s0 + $0x98] sm:$0xf]
    %v355 = vld [vmem:[%s0 + $0x9c] sm:$0xf]
    %v356 = vld [vmem:[%s0 + $0xa0] sm:$0xf]
    %v357 = vld [vmem:[%s0 + $0xa4] sm:$0xf]
    %v358 = vld [vmem:[%s0 + $0xa8] sm:$0xf]
    %v359 = vld [vmem:[%s0 + $0xac] sm:$0xf]
    %v360 = vld [vmem:[%s0 + $0xb0] sm:$0xf]
    %v361 = vld [vmem:[%s0 + $0xb4] sm:$0xf]
    %v362 = vld [vmem:[%s0 + $0xb8] sm:$0xf]
    %v363 = vld [vmem:[%s0 + $0xbc] sm:$0xf]
    %v364 = vld [vmem:[%s0 + $0xc0] sm:$0xf]
    %v365 = vld [vmem:[%s0 + $0xc4] sm:$0xf]
    %v366 = vld [vmem:[%s0 + $0xc8] sm:$0xf]
    %v367 = vld [vmem:[%s0 + $0xcc] sm:$0xf]
    %v368 = vld [vmem:[%s0 + $0xd0] sm:$0xf]
    %v369 = vld [vmem:[%s0 + $0xd4] sm:$0xf]
    %v370 = vld [vmem:[%s0 + $0xd8] sm:$0xf]
    %v371 = vld [vmem:[%s0 + $0xdc] sm:$0xf]
    %v372 = vld [vmem:[%s0 + $0xe0] sm:$0xf]
    %v373 = vld [vmem:[%s0 + $0xe4] sm:$0xf]
    %v374 = vld [vmem:[%s0 + $0xe8] sm:$0xf]
    %v375 = vld [vmem:[%s0 + $0xec] sm:$0xf]
    %v376 = vld [vmem:[%s0 + $0xf0] sm:$0xf]
    %v377 = vld [vmem:[%s0 + $0xf4] sm:$0xf]
    %v378 = vld [vmem:[%s0 + $0xf8] sm:$0xf]
    %v379 = vld [vmem:[%s0 + $0xfc] sm:$0xf]
    %v380 = vunpack.c.l.bf16 %v316
    %v381 = vunpack.c.l.bf16 %v317
    %v382 = vunpack.c.l.bf16 %v318
    %v383 = vunpack.c.l.bf16 %v319
    %v384 = vunpack.c.l.bf16 %v320
    %v385 = vunpack.c.l.bf16 %v321
    %v386 = vunpack.c.l.bf16 %v322
    %v387 = vunpack.c.l.bf16 %v323
    %v388 = vunpack.c.l.bf16 %v324
    %v389 = vunpack.c.l.bf16 %v325
    %v390 = vunpack.c.l.bf16 %v326
    %v391 = vunpack.c.l.bf16 %v327
    %v392 = vunpack.c.l.bf16 %v328
    %v393 = vunpack.c.l.bf16 %v329
    %v394 = vunpack.c.l.bf16 %v330
    %v395 = vunpack.c.l.bf16 %v331
    %v396 = vunpack.c.l.bf16 %v332
    %v397 = vunpack.c.l.bf16 %v333
    %v398 = vunpack.c.l.bf16 %v334
    %v399 = vunpack.c.l.bf16 %v335
    %v400 = vunpack.c.l.bf16 %v336
    %v401 = vunpack.c.l.bf16 %v337
    %v402 = vunpack.c.l.bf16 %v338
    %v403 = vunpack.c.l.bf16 %v339
    %v404 = vunpack.c.l.bf16 %v340
    %v405 = vunpack.c.l.bf16 %v341
    %v406 = vunpack.c.l.bf16 %v342
    %v407 = vunpack.c.l.bf16 %v343
    %v408 = vunpack.c.l.bf16 %v344
    %v409 = vunpack.c.l.bf16 %v345
    %v410 = vunpack.c.l.bf16 %v346
    %v411 = vunpack.c.l.bf16 %v347
    %v412 = vunpack.c.l.bf16 %v348
    %v413 = vunpack.c.l.bf16 %v349
    %v414 = vunpack.c.l.bf16 %v350
    %v415 = vunpack.c.l.bf16 %v351
    %v416 = vunpack.c.l.bf16 %v352
    %v417 = vunpack.c.l.bf16 %v353
    %v418 = vunpack.c.l.bf16 %v354
    %v419 = vunpack.c.l.bf16 %v355
    %v420 = vunpack.c.l.bf16 %v356
    %v421 = vunpack.c.l.bf16 %v357
    %v422 = vunpack.c.l.bf16 %v358
    %v423 = vunpack.c.l.bf16 %v359
    %v424 = vunpack.c.l.bf16 %v360
    %v425 = vunpack.c.l.bf16 %v361
    %v426 = vunpack.c.l.bf16 %v362
    %v427 = vunpack.c.l.bf16 %v363
    %v428 = vunpack.c.l.bf16 %v364
    %v429 = vunpack.c.l.bf16 %v365
    %v430 = vunpack.c.l.bf16 %v366
    %v431 = vunpack.c.l.bf16 %v367
    %v432 = vunpack.c.l.bf16 %v368
    %v433 = vunpack.c.l.bf16 %v369
    %v434 = vunpack.c.l.bf16 %v370
    %v435 = vunpack.c.l.bf16 %v371
    %v436 = vunpack.c.l.bf16 %v372
    %v437 = vunpack.c.l.bf16 %v373
    %v438 = vunpack.c.l.bf16 %v374
    %v439 = vunpack.c.l.bf16 %v375
    %v440 = vunpack.c.l.bf16 %v376
    %v441 = vunpack.c.l.bf16 %v377
    %v442 = vunpack.c.l.bf16 %v378
    %v443 = vunpack.c.l.bf16 %v379
    %v444 = vld [vmem:[#allocation2] sm:$0xf]
    %v445 = vld [vmem:[#allocation2 + $0x4] sm:$0xf]
    %v446 = vld [vmem:[#allocation2 + $0x8] sm:$0xf]
    %v447 = vld [vmem:[#allocation2 + $0xc] sm:$0xf]
    %v448 = vld [vmem:[#allocation2 + $0x10] sm:$0xf]
    %v449 = vld [vmem:[#allocation2 + $0x14] sm:$0xf]
    %v450 = vld [vmem:[#allocation2 + $0x18] sm:$0xf]
    %v451 = vld [vmem:[#allocation2 + $0x1c] sm:$0xf]
    %v452 = vld [vmem:[#allocation2 + $0x20] sm:$0xf]
    %v453 = vld [vmem:[#allocation2 + $0x24] sm:$0xf]
    %v454 = vld [vmem:[#allocation2 + $0x28] sm:$0xf]
    %v455 = vld [vmem:[#allocation2 + $0x2c] sm:$0xf]
    %v456 = vld [vmem:[#allocation2 + $0x30] sm:$0xf]
    %v457 = vld [vmem:[#allocation2 + $0x34] sm:$0xf]
    %v458 = vld [vmem:[#allocation2 + $0x38] sm:$0xf]
    %v459 = vld [vmem:[#allocation2 + $0x3c] sm:$0xf]
    %v460 = vld [vmem:[#allocation2 + $0x40] sm:$0xf]
    %v461 = vld [vmem:[#allocation2 + $0x44] sm:$0xf]
    %v462 = vld [vmem:[#allocation2 + $0x48] sm:$0xf]
    %v463 = vld [vmem:[#allocation2 + $0x4c] sm:$0xf]
    %v464 = vld [vmem:[#allocation2 + $0x50] sm:$0xf]
    %v465 = vld [vmem:[#allocation2 + $0x54] sm:$0xf]
    %v466 = vld [vmem:[#allocation2 + $0x58] sm:$0xf]
    %v467 = vld [vmem:[#allocation2 + $0x5c] sm:$0xf]
    %v468 = vld [vmem:[#allocation2 + $0x60] sm:$0xf]
    %v469 = vld [vmem:[#allocation2 + $0x64] sm:$0xf]
    %v470 = vld [vmem:[#allocation2 + $0x68] sm:$0xf]
    %v471 = vld [vmem:[#allocation2 + $0x6c] sm:$0xf]
    %v472 = vld [vmem:[#allocation2 + $0x70] sm:$0xf]
    %v473 = vld [vmem:[#allocation2 + $0x74] sm:$0xf]
    %v474 = vld [vmem:[#allocation2 + $0x78] sm:$0xf]
    %v475 = vld [vmem:[#allocation2 + $0x7c] sm:$0xf]
    %v476 = vld [vmem:[#allocation2 + $0x80] sm:$0xf]
    %v477 = vld [vmem:[#allocation2 + $0x84] sm:$0xf]
    %v478 = vld [vmem:[#allocation2 + $0x88] sm:$0xf]
    %v479 = vld [vmem:[#allocation2 + $0x8c] sm:$0xf]
    %v480 = vld [vmem:[#allocation2 + $0x90] sm:$0xf]
    %v481 = vld [vmem:[#allocation2 + $0x94] sm:$0xf]
    %v482 = vld [vmem:[#allocation2 + $0x98] sm:$0xf]
    %v483 = vld [vmem:[#allocation2 + $0x9c] sm:$0xf]
    %v484 = vld [vmem:[#allocation2 + $0xa0] sm:$0xf]
    %v485 = vld [vmem:[#allocation2 + $0xa4] sm:$0xf]
    %v486 = vld [vmem:[#allocation2 + $0xa8] sm:$0xf]
    %v487 = vld [vmem:[#allocation2 + $0xac] sm:$0xf]
    %v488 = vld [vmem:[#allocation2 + $0xb0] sm:$0xf]
    %v489 = vld [vmem:[#allocation2 + $0xb4] sm:$0xf]
    %v490 = vld [vmem:[#allocation2 + $0xb8] sm:$0xf]
    %v491 = vld [vmem:[#allocation2 + $0xbc] sm:$0xf]
    %v492 = vld [vmem:[#allocation2 + $0xc0] sm:$0xf]
    %v493 = vld [vmem:[#allocation2 + $0xc4] sm:$0xf]
    %v494 = vld [vmem:[#allocation2 + $0xc8] sm:$0xf]
    %v495 = vld [vmem:[#allocation2 + $0xcc] sm:$0xf]
    %v496 = vld [vmem:[#allocation2 + $0xd0] sm:$0xf]
    %v497 = vld [vmem:[#allocation2 + $0xd4] sm:$0xf]
    %v498 = vld [vmem:[#allocation2 + $0xd8] sm:$0xf]
    %v499 = vld [vmem:[#allocation2 + $0xdc] sm:$0xf]
    %v500 = vld [vmem:[#allocation2 + $0xe0] sm:$0xf]
    %v501 = vld [vmem:[#allocation2 + $0xe4] sm:$0xf]
    %v502 = vld [vmem:[#allocation2 + $0xe8] sm:$0xf]
    %v503 = vld [vmem:[#allocation2 + $0xec] sm:$0xf]
    %v504 = vld [vmem:[#allocation2 + $0xf0] sm:$0xf]
    %v505 = vld [vmem:[#allocation2 + $0xf4] sm:$0xf]
    %v506 = vld [vmem:[#allocation2 + $0xf8] sm:$0xf]
    %v507 = vld [vmem:[#allocation2 + $0xfc] sm:$0xf]
    %v508 = vunpack.c.l.bf16 %v444
    %v509 = vunpack.c.l.bf16 %v445
    %v510 = vunpack.c.l.bf16 %v446
    %v511 = vunpack.c.l.bf16 %v447
    %v512 = vunpack.c.l.bf16 %v448
    %v513 = vunpack.c.l.bf16 %v449
    %v514 = vunpack.c.l.bf16 %v450
    %v515 = vunpack.c.l.bf16 %v451
    %v516 = vunpack.c.l.bf16 %v452
    %v517 = vunpack.c.l.bf16 %v453
    %v518 = vunpack.c.l.bf16 %v454
    %v519 = vunpack.c.l.bf16 %v455
    %v520 = vunpack.c.l.bf16 %v456
    %v521 = vunpack.c.l.bf16 %v457
    %v522 = vunpack.c.l.bf16 %v458
    %v523 = vunpack.c.l.bf16 %v459
    %v524 = vunpack.c.l.bf16 %v460
    %v525 = vunpack.c.l.bf16 %v461
    %v526 = vunpack.c.l.bf16 %v462
    %v527 = vunpack.c.l.bf16 %v463
    %v528 = vunpack.c.l.bf16 %v464
    %v529 = vunpack.c.l.bf16 %v465
    %v530 = vunpack.c.l.bf16 %v466
    %v531 = vunpack.c.l.bf16 %v467
    %v532 = vunpack.c.l.bf16 %v468
    %v533 = vunpack.c.l.bf16 %v469
    %v534 = vunpack.c.l.bf16 %v470
    %v535 = vunpack.c.l.bf16 %v471
    %v536 = vunpack.c.l.bf16 %v472
    %v537 = vunpack.c.l.bf16 %v473
    %v538 = vunpack.c.l.bf16 %v474
    %v539 = vunpack.c.l.bf16 %v475
    %v540 = vunpack.c.l.bf16 %v476
    %v541 = vunpack.c.l.bf16 %v477
    %v542 = vunpack.c.l.bf16 %v478
    %v543 = vunpack.c.l.bf16 %v479
    %v544 = vunpack.c.l.bf16 %v480
    %v545 = vunpack.c.l.bf16 %v481
    %v546 = vunpack.c.l.bf16 %v482
    %v547 = vunpack.c.l.bf16 %v483
    %v548 = vunpack.c.l.bf16 %v484
    %v549 = vunpack.c.l.bf16 %v485
    %v550 = vunpack.c.l.bf16 %v486
    %v551 = vunpack.c.l.bf16 %v487
    %v552 = vunpack.c.l.bf16 %v488
    %v553 = vunpack.c.l.bf16 %v489
    %v554 = vunpack.c.l.bf16 %v490
    %v555 = vunpack.c.l.bf16 %v491
    %v556 = vunpack.c.l.bf16 %v492
    %v557 = vunpack.c.l.bf16 %v493
    %v558 = vunpack.c.l.bf16 %v494
    %v559 = vunpack.c.l.bf16 %v495
    %v560 = vunpack.c.l.bf16 %v496
    %v561 = vunpack.c.l.bf16 %v497
    %v562 = vunpack.c.l.bf16 %v498
    %v563 = vunpack.c.l.bf16 %v499
    %v564 = vunpack.c.l.bf16 %v500
    %v565 = vunpack.c.l.bf16 %v501
    %v566 = vunpack.c.l.bf16 %v502
    %v567 = vunpack.c.l.bf16 %v503
    %v568 = vunpack.c.l.bf16 %v504
    %v569 = vunpack.c.l.bf16 %v505
    %v570 = vunpack.c.l.bf16 %v506
    %v571 = vunpack.c.l.bf16 %v507
    %v572 = vld [vmem:[%s1] sm:$0x1]
    %v574 = vlaneseq
    %v575 = vshrl.u32 %v574, 7
    %v576 = vsub.s32 0, %v575
    %v577 = vrot.slane %v572, %v576
    %v579 = vmul.f32 %v380, %v577
    %v580 = vmul.f32 %v381, %v577
    %v581 = vmul.f32 %v382, %v577
    %v582 = vmul.f32 %v383, %v577
    %v583 = vmul.f32 %v384, %v577
    %v584 = vmul.f32 %v385, %v577
    %v585 = vmul.f32 %v386, %v577
    %v586 = vmul.f32 %v387, %v577
    %v587 = vmul.f32 %v388, %v577
    %v588 = vmul.f32 %v389, %v577
    %v589 = vmul.f32 %v390, %v577
    %v590 = vmul.f32 %v391, %v577
    %v591 = vmul.f32 %v392, %v577
    %v592 = vmul.f32 %v393, %v577
    %v593 = vmul.f32 %v394, %v577
    %v594 = vmul.f32 %v395, %v577
    %v595 = vmul.f32 %v396, %v577
    %v596 = vmul.f32 %v397, %v577
    %v597 = vmul.f32 %v398, %v577
    %v598 = vmul.f32 %v399, %v577
    %v599 = vmul.f32 %v400, %v577
    %v600 = vmul.f32 %v401, %v577
    %v601 = vmul.f32 %v402, %v577
    %v602 = vmul.f32 %v403, %v577
    %v603 = vmul.f32 %v404, %v577
    %v604 = vmul.f32 %v405, %v577
    %v605 = vmul.f32 %v406, %v577
    %v606 = vmul.f32 %v407, %v577
    %v607 = vmul.f32 %v408, %v577
    %v608 = vmul.f32 %v409, %v577
    %v609 = vmul.f32 %v410, %v577
    %v610 = vmul.f32 %v411, %v577
    %v611 = vmul.f32 %v412, %v577
    %v612 = vmul.f32 %v413, %v577
    %v613 = vmul.f32 %v414, %v577
    %v614 = vmul.f32 %v415, %v577
    %v615 = vmul.f32 %v416, %v577
    %v616 = vmul.f32 %v417, %v577
    %v617 = vmul.f32 %v418, %v577
    %v618 = vmul.f32 %v419, %v577
    %v619 = vmul.f32 %v420, %v577
    %v620 = vmul.f32 %v421, %v577
    %v621 = vmul.f32 %v422, %v577
    %v622 = vmul.f32 %v423, %v577
    %v623 = vmul.f32 %v424, %v577
    %v624 = vmul.f32 %v425, %v577
    %v625 = vmul.f32 %v426, %v577
    %v626 = vmul.f32 %v427, %v577
    %v627 = vmul.f32 %v428, %v577
    %v628 = vmul.f32 %v429, %v577
    %v629 = vmul.f32 %v430, %v577
    %v630 = vmul.f32 %v431, %v577
    %v631 = vmul.f32 %v432, %v577
    %v632 = vmul.f32 %v433, %v577
    %v633 = vmul.f32 %v434, %v577
    %v634 = vmul.f32 %v435, %v577
    %v635 = vmul.f32 %v436, %v577
    %v636 = vmul.f32 %v437, %v577
    %v637 = vmul.f32 %v438, %v577
    %v638 = vmul.f32 %v439, %v577
    %v639 = vmul.f32 %v440, %v577
    %v640 = vmul.f32 %v441, %v577
    %v641 = vmul.f32 %v442, %v577
    %v642 = vmul.f32 %v443, %v577
    %v643 = vld [vmem:[%s2] sm:$0x1]
    %v645 = vlaneseq
    %v646 = vshrl.u32 %v645, 7
    %v647 = vsub.s32 0, %v646
    %v648 = vrot.slane %v643, %v647
    %v650 = vadd.f32 %v579, %v648
    %v651 = vadd.f32 %v580, %v648
    %v652 = vadd.f32 %v581, %v648
    %v653 = vadd.f32 %v582, %v648
    %v654 = vadd.f32 %v583, %v648
    %v655 = vadd.f32 %v584, %v648
    %v656 = vadd.f32 %v585, %v648
    %v657 = vadd.f32 %v586, %v648
    %v658 = vadd.f32 %v587, %v648
    %v659 = vadd.f32 %v588, %v648
    %v660 = vadd.f32 %v589, %v648
    %v661 = vadd.f32 %v590, %v648
    %v662 = vadd.f32 %v591, %v648
    %v663 = vadd.f32 %v592, %v648
    %v664 = vadd.f32 %v593, %v648
    %v665 = vadd.f32 %v594, %v648
    %v666 = vadd.f32 %v595, %v648
    %v667 = vadd.f32 %v596, %v648
    %v668 = vadd.f32 %v597, %v648
    %v669 = vadd.f32 %v598, %v648
    %v670 = vadd.f32 %v599, %v648
    %v671 = vadd.f32 %v600, %v648
    %v672 = vadd.f32 %v601, %v648
    %v673 = vadd.f32 %v602, %v648
    %v674 = vadd.f32 %v603, %v648
    %v675 = vadd.f32 %v604, %v648
    %v676 = vadd.f32 %v605, %v648
    %v677 = vadd.f32 %v606, %v648
    %v678 = vadd.f32 %v607, %v648
    %v679 = vadd.f32 %v608, %v648
    %v680 = vadd.f32 %v609, %v648
    %v681 = vadd.f32 %v610, %v648
    %v682 = vadd.f32 %v611, %v648
    %v683 = vadd.f32 %v612, %v648
    %v684 = vadd.f32 %v613, %v648
    %v685 = vadd.f32 %v614, %v648
    %v686 = vadd.f32 %v615, %v648
    %v687 = vadd.f32 %v616, %v648
    %v688 = vadd.f32 %v617, %v648
    %v689 = vadd.f32 %v618, %v648
    %v690 = vadd.f32 %v619, %v648
    %v691 = vadd.f32 %v620, %v648
    %v692 = vadd.f32 %v621, %v648
    %v693 = vadd.f32 %v622, %v648
    %v694 = vadd.f32 %v623, %v648
    %v695 = vadd.f32 %v624, %v648
    %v696 = vadd.f32 %v625, %v648
    %v697 = vadd.f32 %v626, %v648
    %v698 = vadd.f32 %v627, %v648
    %v699 = vadd.f32 %v628, %v648
    %v700 = vadd.f32 %v629, %v648
    %v701 = vadd.f32 %v630, %v648
    %v702 = vadd.f32 %v631, %v648
    %v703 = vadd.f32 %v632, %v648
    %v704 = vadd.f32 %v633, %v648
    %v705 = vadd.f32 %v634, %v648
    %v706 = vadd.f32 %v635, %v648
    %v707 = vadd.f32 %v636, %v648
    %v708 = vadd.f32 %v637, %v648
    %v709 = vadd.f32 %v638, %v648
    %v710 = vadd.f32 %v639, %v648
    %v711 = vadd.f32 %v640, %v648
    %v712 = vadd.f32 %v641, %v648
    %v713 = vadd.f32 %v642, %v648
    %v714 = vld [vmem:[%s4] sm:$0x1]
    %v716 = vlaneseq
    %v717 = vshrl.u32 %v716, 7
    %v718 = vsub.s32 0, %v717
    %v719 = vrot.slane %v714, %v718
    %v721 = vmul.f32 %v508, %v719
    %v722 = vmul.f32 %v509, %v719
    %v723 = vmul.f32 %v510, %v719
    %v724 = vmul.f32 %v511, %v719
    %v725 = vmul.f32 %v512, %v719
    %v726 = vmul.f32 %v513, %v719
    %v727 = vmul.f32 %v514, %v719
    %v728 = vmul.f32 %v515, %v719
    %v729 = vmul.f32 %v516, %v719
    %v730 = vmul.f32 %v517, %v719
    %v731 = vmul.f32 %v518, %v719
    %v732 = vmul.f32 %v519, %v719
    %v733 = vmul.f32 %v520, %v719
    %v734 = vmul.f32 %v521, %v719
    %v735 = vmul.f32 %v522, %v719
    %v736 = vmul.f32 %v523, %v719
    %v737 = vmul.f32 %v524, %v719
    %v738 = vmul.f32 %v525, %v719
    %v739 = vmul.f32 %v526, %v719
    %v740 = vmul.f32 %v527, %v719
    %v741 = vmul.f32 %v528, %v719
    %v742 = vmul.f32 %v529, %v719
    %v743 = vmul.f32 %v530, %v719
    %v744 = vmul.f32 %v531, %v719
    %v745 = vmul.f32 %v532, %v719
    %v746 = vmul.f32 %v533, %v719
    %v747 = vmul.f32 %v534, %v719
    %v748 = vmul.f32 %v535, %v719
    %v749 = vmul.f32 %v536, %v719
    %v750 = vmul.f32 %v537, %v719
    %v751 = vmul.f32 %v538, %v719
    %v752 = vmul.f32 %v539, %v719
    %v753 = vmul.f32 %v540, %v719
    %v754 = vmul.f32 %v541, %v719
    %v755 = vmul.f32 %v542, %v719
    %v756 = vmul.f32 %v543, %v719
    %v757 = vmul.f32 %v544, %v719
    %v758 = vmul.f32 %v545, %v719
    %v759 = vmul.f32 %v546, %v719
    %v760 = vmul.f32 %v547, %v719
    %v761 = vmul.f32 %v548, %v719
    %v762 = vmul.f32 %v549, %v719
    %v763 = vmul.f32 %v550, %v719
    %v764 = vmul.f32 %v551, %v719
    %v765 = vmul.f32 %v552, %v719
    %v766 = vmul.f32 %v553, %v719
    %v767 = vmul.f32 %v554, %v719
    %v768 = vmul.f32 %v555, %v719
    %v769 = vmul.f32 %v556, %v719
    %v770 = vmul.f32 %v557, %v719
    %v771 = vmul.f32 %v558, %v719
    %v772 = vmul.f32 %v559, %v719
    %v773 = vmul.f32 %v560, %v719
    %v774 = vmul.f32 %v561, %v719
    %v775 = vmul.f32 %v562, %v719
    %v776 = vmul.f32 %v563, %v719
    %v777 = vmul.f32 %v564, %v719
    %v778 = vmul.f32 %v565, %v719
    %v779 = vmul.f32 %v566, %v719
    %v780 = vmul.f32 %v567, %v719
    %v781 = vmul.f32 %v568, %v719
    %v782 = vmul.f32 %v569, %v719
    %v783 = vmul.f32 %v570, %v719
    %v784 = vmul.f32 %v571, %v719
    %v785 = vld [vmem:[%s5] sm:$0x1]
    %v787 = vlaneseq
    %v788 = vshrl.u32 %v787, 7
    %v789 = vsub.s32 0, %v788
    %v790 = vrot.slane %v785, %v789
    %v792 = vadd.f32 %v721, %v790
    %v793 = vadd.f32 %v722, %v790
    %v794 = vadd.f32 %v723, %v790
    %v795 = vadd.f32 %v724, %v790
    %v796 = vadd.f32 %v725, %v790
    %v797 = vadd.f32 %v726, %v790
    %v798 = vadd.f32 %v727, %v790
    %v799 = vadd.f32 %v728, %v790
    %v800 = vadd.f32 %v729, %v790
    %v801 = vadd.f32 %v730, %v790
    %v802 = vadd.f32 %v731, %v790
    %v803 = vadd.f32 %v732, %v790
    %v804 = vadd.f32 %v733, %v790
    %v805 = vadd.f32 %v734, %v790
    %v806 = vadd.f32 %v735, %v790
    %v807 = vadd.f32 %v736, %v790
    %v808 = vadd.f32 %v737, %v790
    %v809 = vadd.f32 %v738, %v790
    %v810 = vadd.f32 %v739, %v790
    %v811 = vadd.f32 %v740, %v790
    %v812 = vadd.f32 %v741, %v790
    %v813 = vadd.f32 %v742, %v790
    %v814 = vadd.f32 %v743, %v790
    %v815 = vadd.f32 %v744, %v790
    %v816 = vadd.f32 %v745, %v790
    %v817 = vadd.f32 %v746, %v790
    %v818 = vadd.f32 %v747, %v790
    %v819 = vadd.f32 %v748, %v790
    %v820 = vadd.f32 %v749, %v790
    %v821 = vadd.f32 %v750, %v790
    %v822 = vadd.f32 %v751, %v790
    %v823 = vadd.f32 %v752, %v790
    %v824 = vadd.f32 %v753, %v790
    %v825 = vadd.f32 %v754, %v790
    %v826 = vadd.f32 %v755, %v790
    %v827 = vadd.f32 %v756, %v790
    %v828 = vadd.f32 %v757, %v790
    %v829 = vadd.f32 %v758, %v790
    %v830 = vadd.f32 %v759, %v790
    %v831 = vadd.f32 %v760, %v790
    %v832 = vadd.f32 %v761, %v790
    %v833 = vadd.f32 %v762, %v790
    %v834 = vadd.f32 %v763, %v790
    %v835 = vadd.f32 %v764, %v790
    %v836 = vadd.f32 %v765, %v790
    %v837 = vadd.f32 %v766, %v790
    %v838 = vadd.f32 %v767, %v790
    %v839 = vadd.f32 %v768, %v790
    %v840 = vadd.f32 %v769, %v790
    %v841 = vadd.f32 %v770, %v790
    %v842 = vadd.f32 %v771, %v790
    %v843 = vadd.f32 %v772, %v790
    %v844 = vadd.f32 %v773, %v790
    %v845 = vadd.f32 %v774, %v790
    %v846 = vadd.f32 %v775, %v790
    %v847 = vadd.f32 %v776, %v790
    %v848 = vadd.f32 %v777, %v790
    %v849 = vadd.f32 %v778, %v790
    %v850 = vadd.f32 %v779, %v790
    %v851 = vadd.f32 %v780, %v790
    %v852 = vadd.f32 %v781, %v790
    %v853 = vadd.f32 %v782, %v790
    %v854 = vadd.f32 %v783, %v790
    %v855 = vadd.f32 %v784, %v790
    %v856 = vadd.f32 %v650, %v792
    %v857 = vadd.f32 %v651, %v793
    %v858 = vadd.f32 %v652, %v794
    %v859 = vadd.f32 %v653, %v795
    %v860 = vadd.f32 %v654, %v796
    %v861 = vadd.f32 %v655, %v797
    %v862 = vadd.f32 %v656, %v798
    %v863 = vadd.f32 %v657, %v799
    %v864 = vadd.f32 %v658, %v800
    %v865 = vadd.f32 %v659, %v801
    %v866 = vadd.f32 %v660, %v802
    %v867 = vadd.f32 %v661, %v803
    %v868 = vadd.f32 %v662, %v804
    %v869 = vadd.f32 %v663, %v805
    %v870 = vadd.f32 %v664, %v806
    %v871 = vadd.f32 %v665, %v807
    %v872 = vadd.f32 %v666, %v808
    %v873 = vadd.f32 %v667, %v809
    %v874 = vadd.f32 %v668, %v810
    %v875 = vadd.f32 %v669, %v811
    %v876 = vadd.f32 %v670, %v812
    %v877 = vadd.f32 %v671, %v813
    %v878 = vadd.f32 %v672, %v814
    %v879 = vadd.f32 %v673, %v815
    %v880 = vadd.f32 %v674, %v816
    %v881 = vadd.f32 %v675, %v817
    %v882 = vadd.f32 %v676, %v818
    %v883 = vadd.f32 %v677, %v819
    %v884 = vadd.f32 %v678, %v820
    %v885 = vadd.f32 %v679, %v821
    %v886 = vadd.f32 %v680, %v822
    %v887 = vadd.f32 %v681, %v823
    %v888 = vadd.f32 %v682, %v824
    %v889 = vadd.f32 %v683, %v825
    %v890 = vadd.f32 %v684, %v826
    %v891 = vadd.f32 %v685, %v827
    %v892 = vadd.f32 %v686, %v828
    %v893 = vadd.f32 %v687, %v829
    %v894 = vadd.f32 %v688, %v830
    %v895 = vadd.f32 %v689, %v831
    %v896 = vadd.f32 %v690, %v832
    %v897 = vadd.f32 %v691, %v833
    %v898 = vadd.f32 %v692, %v834
    %v899 = vadd.f32 %v693, %v835
    %v900 = vadd.f32 %v694, %v836
    %v901 = vadd.f32 %v695, %v837
    %v902 = vadd.f32 %v696, %v838
    %v903 = vadd.f32 %v697, %v839
    %v904 = vadd.f32 %v698, %v840
    %v905 = vadd.f32 %v699, %v841
    %v906 = vadd.f32 %v700, %v842
    %v907 = vadd.f32 %v701, %v843
    %v908 = vadd.f32 %v702, %v844
    %v909 = vadd.f32 %v703, %v845
    %v910 = vadd.f32 %v704, %v846
    %v911 = vadd.f32 %v705, %v847
    %v912 = vadd.f32 %v706, %v848
    %v913 = vadd.f32 %v707, %v849
    %v914 = vadd.f32 %v708, %v850
    %v915 = vadd.f32 %v709, %v851
    %v916 = vadd.f32 %v710, %v852
    %v917 = vadd.f32 %v711, %v853
    %v918 = vadd.f32 %v712, %v854
    %v919 = vadd.f32 %v713, %v855
    %v920 = vmax.f32 %v856, 0.0
    %v921 = vmax.f32 %v857, 0.0
    %v922 = vmax.f32 %v858, 0.0
    %v923 = vmax.f32 %v859, 0.0
    %v924 = vmax.f32 %v860, 0.0
    %v925 = vmax.f32 %v861, 0.0
    %v926 = vmax.f32 %v862, 0.0
    %v927 = vmax.f32 %v863, 0.0
    %v928 = vmax.f32 %v864, 0.0
    %v929 = vmax.f32 %v865, 0.0
    %v930 = vmax.f32 %v866, 0.0
    %v931 = vmax.f32 %v867, 0.0
    %v932 = vmax.f32 %v868, 0.0
    %v933 = vmax.f32 %v869, 0.0
    %v934 = vmax.f32 %v870, 0.0
    %v935 = vmax.f32 %v871, 0.0
    %v936 = vmax.f32 %v872, 0.0
    %v937 = vmax.f32 %v873, 0.0
    %v938 = vmax.f32 %v874, 0.0
    %v939 = vmax.f32 %v875, 0.0
    %v940 = vmax.f32 %v876, 0.0
    %v941 = vmax.f32 %v877, 0.0
    %v942 = vmax.f32 %v878, 0.0
    %v943 = vmax.f32 %v879, 0.0
    %v944 = vmax.f32 %v880, 0.0
    %v945 = vmax.f32 %v881, 0.0
    %v946 = vmax.f32 %v882, 0.0
    %v947 = vmax.f32 %v883, 0.0
    %v948 = vmax.f32 %v884, 0.0
    %v949 = vmax.f32 %v885, 0.0
    %v950 = vmax.f32 %v886, 0.0
    %v951 = vmax.f32 %v887, 0.0
    %v952 = vmax.f32 %v888, 0.0
    %v953 = vmax.f32 %v889, 0.0
    %v954 = vmax.f32 %v890, 0.0
    %v955 = vmax.f32 %v891, 0.0
    %v956 = vmax.f32 %v892, 0.0
    %v957 = vmax.f32 %v893, 0.0
    %v958 = vmax.f32 %v894, 0.0
    %v959 = vmax.f32 %v895, 0.0
    %v960 = vmax.f32 %v896, 0.0
    %v961 = vmax.f32 %v897, 0.0
    %v962 = vmax.f32 %v898, 0.0
    %v963 = vmax.f32 %v899, 0.0
    %v964 = vmax.f32 %v900, 0.0
    %v965 = vmax.f32 %v901, 0.0
    %v966 = vmax.f32 %v902, 0.0
    %v967 = vmax.f32 %v903, 0.0
    %v968 = vmax.f32 %v904, 0.0
    %v969 = vmax.f32 %v905, 0.0
    %v970 = vmax.f32 %v906, 0.0
    %v971 = vmax.f32 %v907, 0.0
    %v972 = vmax.f32 %v908, 0.0
    %v973 = vmax.f32 %v909, 0.0
    %v974 = vmax.f32 %v910, 0.0
    %v975 = vmax.f32 %v911, 0.0
    %v976 = vmax.f32 %v912, 0.0
    %v977 = vmax.f32 %v913, 0.0
    %v978 = vmax.f32 %v914, 0.0
    %v979 = vmax.f32 %v915, 0.0
    %v980 = vmax.f32 %v916, 0.0
    %v981 = vmax.f32 %v917, 0.0
    %v982 = vmax.f32 %v918, 0.0
    %v983 = vmax.f32 %v919, 0.0
    %984 = vst [vmem:[%s6] sm:$0xff] %v920
    %985 = vst [vmem:[%s6 + $0x8] sm:$0xff] %v921
    %986 = vst [vmem:[%s6 + $0x10] sm:$0xff] %v922
    %987 = vst [vmem:[%s6 + $0x18] sm:$0xff] %v923
    %988 = vst [vmem:[%s6 + $0x20] sm:$0xff] %v924
    %989 = vst [vmem:[%s6 + $0x28] sm:$0xff] %v925
    %990 = vst [vmem:[%s6 + $0x30] sm:$0xff] %v926
    %991 = vst [vmem:[%s6 + $0x38] sm:$0xff] %v927
    %992 = vst [vmem:[%s6 + $0x40] sm:$0xff] %v928
    %993 = vst [vmem:[%s6 + $0x48] sm:$0xff] %v929
    %994 = vst [vmem:[%s6 + $0x50] sm:$0xff] %v930
    %995 = vst [vmem:[%s6 + $0x58] sm:$0xff] %v931
    %996 = vst [vmem:[%s6 + $0x60] sm:$0xff] %v932
    %997 = vst [vmem:[%s6 + $0x68] sm:$0xff] %v933
    %998 = vst [vmem:[%s6 + $0x70] sm:$0xff] %v934
    %999 = vst [vmem:[%s6 + $0x78] sm:$0xff] %v935
    %1000 = vst [vmem:[%s6 + $0x80] sm:$0xff] %v936
    %1001 = vst [vmem:[%s6 + $0x88] sm:$0xff] %v937
    %1002 = vst [vmem:[%s6 + $0x90] sm:$0xff] %v938
    %1003 = vst [vmem:[%s6 + $0x98] sm:$0xff] %v939
    %1004 = vst [vmem:[%s6 + $0xa0] sm:$0xff] %v940
    %1005 = vst [vmem:[%s6 + $0xa8] sm:$0xff] %v941
    %1006 = vst [vmem:[%s6 + $0xb0] sm:$0xff] %v942
    %1007 = vst [vmem:[%s6 + $0xb8] sm:$0xff] %v943
    %1008 = vst [vmem:[%s6 + $0xc0] sm:$0xff] %v944
    %1009 = vst [vmem:[%s6 + $0xc8] sm:$0xff] %v945
    %1010 = vst [vmem:[%s6 + $0xd0] sm:$0xff] %v946
    %1011 = vst [vmem:[%s6 + $0xd8] sm:$0xff] %v947
    %1012 = vst [vmem:[%s6 + $0xe0] sm:$0xff] %v948
    %1013 = vst [vmem:[%s6 + $0xe8] sm:$0xff] %v949
    %1014 = vst [vmem:[%s6 + $0xf0] sm:$0xff] %v950
    %1015 = vst [vmem:[%s6 + $0xf8] sm:$0xff] %v951
    %1016 = vst [vmem:[%s6 + $0x100] sm:$0xff] %v952
    %1017 = vst [vmem:[%s6 + $0x108] sm:$0xff] %v953
    %1018 = vst [vmem:[%s6 + $0x110] sm:$0xff] %v954
    %1019 = vst [vmem:[%s6 + $0x118] sm:$0xff] %v955
    %1020 = vst [vmem:[%s6 + $0x120] sm:$0xff] %v956
    %1021 = vst [vmem:[%s6 + $0x128] sm:$0xff] %v957
    %1022 = vst [vmem:[%s6 + $0x130] sm:$0xff] %v958
    %1023 = vst [vmem:[%s6 + $0x138] sm:$0xff] %v959
    %1024 = vst [vmem:[%s6 + $0x140] sm:$0xff] %v960
    %1025 = vst [vmem:[%s6 + $0x148] sm:$0xff] %v961
    %1026 = vst [vmem:[%s6 + $0x150] sm:$0xff] %v962
    %1027 = vst [vmem:[%s6 + $0x158] sm:$0xff] %v963
    %1028 = vst [vmem:[%s6 + $0x160] sm:$0xff] %v964
    %1029 = vst [vmem:[%s6 + $0x168] sm:$0xff] %v965
    %1030 = vst [vmem:[%s6 + $0x170] sm:$0xff] %v966
    %1031 = vst [vmem:[%s6 + $0x178] sm:$0xff] %v967
    %1032 = vst [vmem:[%s6 + $0x180] sm:$0xff] %v968
    %1033 = vst [vmem:[%s6 + $0x188] sm:$0xff] %v969
    %1034 = vst [vmem:[%s6 + $0x190] sm:$0xff] %v970
    %1035 = vst [vmem:[%s6 + $0x198] sm:$0xff] %v971
    %1036 = vst [vmem:[%s6 + $0x1a0] sm:$0xff] %v972
    %1037 = vst [vmem:[%s6 + $0x1a8] sm:$0xff] %v973
    %1038 = vst [vmem:[%s6 + $0x1b0] sm:$0xff] %v974
    %1039 = vst [vmem:[%s6 + $0x1b8] sm:$0xff] %v975
    %1040 = vst [vmem:[%s6 + $0x1c0] sm:$0xff] %v976
    %1041 = vst [vmem:[%s6 + $0x1c8] sm:$0xff] %v977
    %1042 = vst [vmem:[%s6 + $0x1d0] sm:$0xff] %v978
    %1043 = vst [vmem:[%s6 + $0x1d8] sm:$0xff] %v979
    %1044 = vst [vmem:[%s6 + $0x1e0] sm:$0xff] %v980
    %1045 = vst [vmem:[%s6 + $0x1e8] sm:$0xff] %v981
    %1046 = vst [vmem:[%s6 + $0x1f0] sm:$0xff] %v982
    %1047 = vst [vmem:[%s6 + $0x1f8] sm:$0xff] %v983
    // Predicated region
    $region67: #{bottleneck_forward.7} parent=1 // pred_check
      _
    $region68: #{bottleneck_forward.7} parent=1 // pred_check_branch
      %1049 = sbr.rel (0) target = $region70
    $region69: #{bottleneck_forward.7} parent=1 // pred_region
      _
    $region70: #{bottleneck_forward.7} parent=1 // pred_fallthru
      _
    // Predicated region
    $region71: #{bottleneck_forward.7} parent=1 // pred_check
      _
    $region72: #{bottleneck_forward.7} parent=1 // pred_check_branch
      %1051 = sbr.rel (0) target = $region74
    $region73: #{bottleneck_forward.7} parent=1 // pred_region
      _
    $region74: #{bottleneck_forward.7} parent=1 // pred_fallthru
      _

// kernel: bottleneck_forward.6
$region0: #{bottleneck_forward.6}
  #allocation0 [shape = 'u32[]', space=smem, size = 0x4, offset = 0x4, fixed_abs, tag = 'smem constant byte address 0x4 - core index']
  #allocation1 [shape = 'u32[144,128]{1,0:T(1,128)}', space=vmem, size = 0x12000, scoped, tag = 'internal scratch']
  %s0 = inlined_call_operand.vmem [shape: bf16[512,128], index: 0, kind: input, shape index: {}]
  %s1 = inlined_call_operand.vmem [shape: f32[1,128], index: 1, kind: input, shape index: {}]
  %s2 = inlined_call_operand.vmem [shape: f32[1,128], index: 2, kind: input, shape index: {}]
  %s3 = inlined_call_operand.vmem [shape: bf16[128,128], index: 3, kind: input, shape index: {}]
  %s4 = inlined_call_operand.vmem [shape: bf16[512,128], index: 4, kind: output, shape index: {0}]
  %s5 = inlined_call_operand.vmem [shape: f32[1,1,128], index: 5, kind: output, shape index: {1}]
  %s6 = inlined_call_operand.vmem [shape: f32[1,1,128], index: 6, kind: output, shape index: {2}]
  %7 = xla_tuple %s4, %s5, %s6
  %s8 = sld [smem:[#allocation0]]
  $region42: #{bottleneck_forward.6} parent=0
    _
  %s10 = ssub.s32 1, %s8
  %s11 = scalar_select 0, %s10, %s8
  // Predicated region
  $region2: #{bottleneck_forward.6} parent=0 // pred_check
    _
  $region3: #{bottleneck_forward.6} parent=0 // pred_check_branch
    %13 = sbr.rel (0) target = $region5
  $region4: #{bottleneck_forward.6} parent=0 // pred_region
    _
  $region5: #{bottleneck_forward.6} parent=0 // pred_fallthru
    _
  // Predicated region
  $region6: #{bottleneck_forward.6} parent=0 // pred_check
    _
  $region7: #{bottleneck_forward.6} parent=0 // pred_check_branch
    %15 = sbr.rel (0) target = $region9
  $region8: #{bottleneck_forward.6} parent=0 // pred_region
    _
  $region9: #{bottleneck_forward.6} parent=0 // pred_fallthru
    _
  // Predicated region
  $region10: #{bottleneck_forward.6} parent=0 // pred_check
    _
  $region11: #{bottleneck_forward.6} parent=0 // pred_check_branch
    %17 = sbr.rel (0) target = $region13
  $region12: #{bottleneck_forward.6} parent=0 // pred_region
    _
  $region13: #{bottleneck_forward.6} parent=0 // pred_fallthru
    _
  // Predicated region
  $region14: #{bottleneck_forward.6} parent=0 // pred_check
    _
  $region15: #{bottleneck_forward.6} parent=0 // pred_check_branch
    %19 = sbr.rel (0) target = $region17
  $region16: #{bottleneck_forward.6} parent=0 // pred_region
    _
  $region17: #{bottleneck_forward.6} parent=0 // pred_fallthru
    _
  %v21 = vld [vmem:[%s0] sm:$0xf]
  %v22 = vld [vmem:[%s0 + $0x4] sm:$0xf]
  %v23 = vld [vmem:[%s0 + $0x8] sm:$0xf]
  %v24 = vld [vmem:[%s0 + $0xc] sm:$0xf]
  %v25 = vld [vmem:[%s0 + $0x10] sm:$0xf]
  %v26 = vld [vmem:[%s0 + $0x14] sm:$0xf]
  %v27 = vld [vmem:[%s0 + $0x18] sm:$0xf]
  %v28 = vld [vmem:[%s0 + $0x1c] sm:$0xf]
  %v29 = vld [vmem:[%s0 + $0x20] sm:$0xf]
  %v30 = vld [vmem:[%s0 + $0x24] sm:$0xf]
  %v31 = vld [vmem:[%s0 + $0x28] sm:$0xf]
  %v32 = vld [vmem:[%s0 + $0x2c] sm:$0xf]
  %v33 = vld [vmem:[%s0 + $0x30] sm:$0xf]
  %v34 = vld [vmem:[%s0 + $0x34] sm:$0xf]
  %v35 = vld [vmem:[%s0 + $0x38] sm:$0xf]
  %v36 = vld [vmem:[%s0 + $0x3c] sm:$0xf]
  %v37 = vld [vmem:[%s0 + $0x40] sm:$0xf]
  %v38 = vld [vmem:[%s0 + $0x44] sm:$0xf]
  %v39 = vld [vmem:[%s0 + $0x48] sm:$0xf]
  %v40 = vld [vmem:[%s0 + $0x4c] sm:$0xf]
  %v41 = vld [vmem:[%s0 + $0x50] sm:$0xf]
  %v42 = vld [vmem:[%s0 + $0x54] sm:$0xf]
  %v43 = vld [vmem:[%s0 + $0x58] sm:$0xf]
  %v44 = vld [vmem:[%s0 + $0x5c] sm:$0xf]
  %v45 = vld [vmem:[%s0 + $0x60] sm:$0xf]
  %v46 = vld [vmem:[%s0 + $0x64] sm:$0xf]
  %v47 = vld [vmem:[%s0 + $0x68] sm:$0xf]
  %v48 = vld [vmem:[%s0 + $0x6c] sm:$0xf]
  %v49 = vld [vmem:[%s0 + $0x70] sm:$0xf]
  %v50 = vld [vmem:[%s0 + $0x74] sm:$0xf]
  %v51 = vld [vmem:[%s0 + $0x78] sm:$0xf]
  %v52 = vld [vmem:[%s0 + $0x7c] sm:$0xf]
  %v53 = vld [vmem:[%s0 + $0x80] sm:$0xf]
  %v54 = vld [vmem:[%s0 + $0x84] sm:$0xf]
  %v55 = vld [vmem:[%s0 + $0x88] sm:$0xf]
  %v56 = vld [vmem:[%s0 + $0x8c] sm:$0xf]
  %v57 = vld [vmem:[%s0 + $0x90] sm:$0xf]
  %v58 = vld [vmem:[%s0 + $0x94] sm:$0xf]
  %v59 = vld [vmem:[%s0 + $0x98] sm:$0xf]
  %v60 = vld [vmem:[%s0 + $0x9c] sm:$0xf]
  %v61 = vld [vmem:[%s0 + $0xa0] sm:$0xf]
  %v62 = vld [vmem:[%s0 + $0xa4] sm:$0xf]
  %v63 = vld [vmem:[%s0 + $0xa8] sm:$0xf]
  %v64 = vld [vmem:[%s0 + $0xac] sm:$0xf]
  %v65 = vld [vmem:[%s0 + $0xb0] sm:$0xf]
  %v66 = vld [vmem:[%s0 + $0xb4] sm:$0xf]
  %v67 = vld [vmem:[%s0 + $0xb8] sm:$0xf]
  %v68 = vld [vmem:[%s0 + $0xbc] sm:$0xf]
  %v69 = vld [vmem:[%s0 + $0xc0] sm:$0xf]
  %v70 = vld [vmem:[%s0 + $0xc4] sm:$0xf]
  %v71 = vld [vmem:[%s0 + $0xc8] sm:$0xf]
  %v72 = vld [vmem:[%s0 + $0xcc] sm:$0xf]
  %v73 = vld [vmem:[%s0 + $0xd0] sm:$0xf]
  %v74 = vld [vmem:[%s0 + $0xd4] sm:$0xf]
  %v75 = vld [vmem:[%s0 + $0xd8] sm:$0xf]
  %v76 = vld [vmem:[%s0 + $0xdc] sm:$0xf]
  %v77 = vld [vmem:[%s0 + $0xe0] sm:$0xf]
  %v78 = vld [vmem:[%s0 + $0xe4] sm:$0xf]
  %v79 = vld [vmem:[%s0 + $0xe8] sm:$0xf]
  %v80 = vld [vmem:[%s0 + $0xec] sm:$0xf]
  %v81 = vld [vmem:[%s0 + $0xf0] sm:$0xf]
  %v82 = vld [vmem:[%s0 + $0xf4] sm:$0xf]
  %v83 = vld [vmem:[%s0 + $0xf8] sm:$0xf]
  %v84 = vld [vmem:[%s0 + $0xfc] sm:$0xf]
  %v85 = vunpack.c.l.bf16 %v21
  %v86 = vunpack.c.l.bf16 %v22
  %v87 = vunpack.c.l.bf16 %v23
  %v88 = vunpack.c.l.bf16 %v24
  %v89 = vunpack.c.l.bf16 %v25
  %v90 = vunpack.c.l.bf16 %v26
  %v91 = vunpack.c.l.bf16 %v27
  %v92 = vunpack.c.l.bf16 %v28
  %v93 = vunpack.c.l.bf16 %v29
  %v94 = vunpack.c.l.bf16 %v30
  %v95 = vunpack.c.l.bf16 %v31
  %v96 = vunpack.c.l.bf16 %v32
  %v97 = vunpack.c.l.bf16 %v33
  %v98 = vunpack.c.l.bf16 %v34
  %v99 = vunpack.c.l.bf16 %v35
  %v100 = vunpack.c.l.bf16 %v36
  %v101 = vunpack.c.l.bf16 %v37
  %v102 = vunpack.c.l.bf16 %v38
  %v103 = vunpack.c.l.bf16 %v39
  %v104 = vunpack.c.l.bf16 %v40
  %v105 = vunpack.c.l.bf16 %v41
  %v106 = vunpack.c.l.bf16 %v42
  %v107 = vunpack.c.l.bf16 %v43
  %v108 = vunpack.c.l.bf16 %v44
  %v109 = vunpack.c.l.bf16 %v45
  %v110 = vunpack.c.l.bf16 %v46
  %v111 = vunpack.c.l.bf16 %v47
  %v112 = vunpack.c.l.bf16 %v48
  %v113 = vunpack.c.l.bf16 %v49
  %v114 = vunpack.c.l.bf16 %v50
  %v115 = vunpack.c.l.bf16 %v51
  %v116 = vunpack.c.l.bf16 %v52
  %v117 = vunpack.c.l.bf16 %v53
  %v118 = vunpack.c.l.bf16 %v54
  %v119 = vunpack.c.l.bf16 %v55
  %v120 = vunpack.c.l.bf16 %v56
  %v121 = vunpack.c.l.bf16 %v57
  %v122 = vunpack.c.l.bf16 %v58
  %v123 = vunpack.c.l.bf16 %v59
  %v124 = vunpack.c.l.bf16 %v60
  %v125 = vunpack.c.l.bf16 %v61
  %v126 = vunpack.c.l.bf16 %v62
  %v127 = vunpack.c.l.bf16 %v63
  %v128 = vunpack.c.l.bf16 %v64
  %v129 = vunpack.c.l.bf16 %v65
  %v130 = vunpack.c.l.bf16 %v66
  %v131 = vunpack.c.l.bf16 %v67
  %v132 = vunpack.c.l.bf16 %v68
  %v133 = vunpack.c.l.bf16 %v69
  %v134 = vunpack.c.l.bf16 %v70
  %v135 = vunpack.c.l.bf16 %v71
  %v136 = vunpack.c.l.bf16 %v72
  %v137 = vunpack.c.l.bf16 %v73
  %v138 = vunpack.c.l.bf16 %v74
  %v139 = vunpack.c.l.bf16 %v75
  %v140 = vunpack.c.l.bf16 %v76
  %v141 = vunpack.c.l.bf16 %v77
  %v142 = vunpack.c.l.bf16 %v78
  %v143 = vunpack.c.l.bf16 %v79
  %v144 = vunpack.c.l.bf16 %v80
  %v145 = vunpack.c.l.bf16 %v81
  %v146 = vunpack.c.l.bf16 %v82
  %v147 = vunpack.c.l.bf16 %v83
  %v148 = vunpack.c.l.bf16 %v84
  %v149 = vld [vmem:[%s1] sm:$0x1]
  %v151 = vlaneseq
  %v152 = vshrl.u32 %v151, 7
  %v153 = vsub.s32 0, %v152
  %v154 = vrot.slane %v149, %v153
  %v156 = vmul.f32 %v85, %v154
  %v157 = vmul.f32 %v86, %v154
  %v158 = vmul.f32 %v87, %v154
  %v159 = vmul.f32 %v88, %v154
  %v160 = vmul.f32 %v89, %v154
  %v161 = vmul.f32 %v90, %v154
  %v162 = vmul.f32 %v91, %v154
  %v163 = vmul.f32 %v92, %v154
  %v164 = vmul.f32 %v93, %v154
  %v165 = vmul.f32 %v94, %v154
  %v166 = vmul.f32 %v95, %v154
  %v167 = vmul.f32 %v96, %v154
  %v168 = vmul.f32 %v97, %v154
  %v169 = vmul.f32 %v98, %v154
  %v170 = vmul.f32 %v99, %v154
  %v171 = vmul.f32 %v100, %v154
  %v172 = vmul.f32 %v101, %v154
  %v173 = vmul.f32 %v102, %v154
  %v174 = vmul.f32 %v103, %v154
  %v175 = vmul.f32 %v104, %v154
  %v176 = vmul.f32 %v105, %v154
  %v177 = vmul.f32 %v106, %v154
  %v178 = vmul.f32 %v107, %v154
  %v179 = vmul.f32 %v108, %v154
  %v180 = vmul.f32 %v109, %v154
  %v181 = vmul.f32 %v110, %v154
  %v182 = vmul.f32 %v111, %v154
  %v183 = vmul.f32 %v112, %v154
  %v184 = vmul.f32 %v113, %v154
  %v185 = vmul.f32 %v114, %v154
  %v186 = vmul.f32 %v115, %v154
  %v187 = vmul.f32 %v116, %v154
  %v188 = vmul.f32 %v117, %v154
  %v189 = vmul.f32 %v118, %v154
  %v190 = vmul.f32 %v119, %v154
  %v191 = vmul.f32 %v120, %v154
  %v192 = vmul.f32 %v121, %v154
  %v193 = vmul.f32 %v122, %v154
  %v194 = vmul.f32 %v123, %v154
  %v195 = vmul.f32 %v124, %v154
  %v196 = vmul.f32 %v125, %v154
  %v197 = vmul.f32 %v126, %v154
  %v198 = vmul.f32 %v127, %v154
  %v199 = vmul.f32 %v128, %v154
  %v200 = vmul.f32 %v129, %v154
  %v201 = vmul.f32 %v130, %v154
  %v202 = vmul.f32 %v131, %v154
  %v203 = vmul.f32 %v132, %v154
  %v204 = vmul.f32 %v133, %v154
  %v205 = vmul.f32 %v134, %v154
  %v206 = vmul.f32 %v135, %v154
  %v207 = vmul.f32 %v136, %v154
  %v208 = vmul.f32 %v137, %v154
  %v209 = vmul.f32 %v138, %v154
  %v210 = vmul.f32 %v139, %v154
  %v211 = vmul.f32 %v140, %v154
  %v212 = vmul.f32 %v141, %v154
  %v213 = vmul.f32 %v142, %v154
  %v214 = vmul.f32 %v143, %v154
  %v215 = vmul.f32 %v144, %v154
  %v216 = vmul.f32 %v145, %v154
  %v217 = vmul.f32 %v146, %v154
  %v218 = vmul.f32 %v147, %v154
  %v219 = vmul.f32 %v148, %v154
  %v220 = vld [vmem:[%s2] sm:$0x1]
  %v222 = vlaneseq
  %v223 = vshrl.u32 %v222, 7
  %v224 = vsub.s32 0, %v223
  %v225 = vrot.slane %v220, %v224
  %v227 = vadd.f32 %v156, %v225
  %v228 = vadd.f32 %v157, %v225
  %v229 = vadd.f32 %v158, %v225
  %v230 = vadd.f32 %v159, %v225
  %v231 = vadd.f32 %v160, %v225
  %v232 = vadd.f32 %v161, %v225
  %v233 = vadd.f32 %v162, %v225
  %v234 = vadd.f32 %v163, %v225
  %v235 = vadd.f32 %v164, %v225
  %v236 = vadd.f32 %v165, %v225
  %v237 = vadd.f32 %v166, %v225
  %v238 = vadd.f32 %v167, %v225
  %v239 = vadd.f32 %v168, %v225
  %v240 = vadd.f32 %v169, %v225
  %v241 = vadd.f32 %v170, %v225
  %v242 = vadd.f32 %v171, %v225
  %v243 = vadd.f32 %v172, %v225
  %v244 = vadd.f32 %v173, %v225
  %v245 = vadd.f32 %v174, %v225
  %v246 = vadd.f32 %v175, %v225
  %v247 = vadd.f32 %v176, %v225
  %v248 = vadd.f32 %v177, %v225
  %v249 = vadd.f32 %v178, %v225
  %v250 = vadd.f32 %v179, %v225
  %v251 = vadd.f32 %v180, %v225
  %v252 = vadd.f32 %v181, %v225
  %v253 = vadd.f32 %v182, %v225
  %v254 = vadd.f32 %v183, %v225
  %v255 = vadd.f32 %v184, %v225
  %v256 = vadd.f32 %v185, %v225
  %v257 = vadd.f32 %v186, %v225
  %v258 = vadd.f32 %v187, %v225
  %v259 = vadd.f32 %v188, %v225
  %v260 = vadd.f32 %v189, %v225
  %v261 = vadd.f32 %v190, %v225
  %v262 = vadd.f32 %v191, %v225
  %v263 = vadd.f32 %v192, %v225
  %v264 = vadd.f32 %v193, %v225
  %v265 = vadd.f32 %v194, %v225
  %v266 = vadd.f32 %v195, %v225
  %v267 = vadd.f32 %v196, %v225
  %v268 = vadd.f32 %v197, %v225
  %v269 = vadd.f32 %v198, %v225
  %v270 = vadd.f32 %v199, %v225
  %v271 = vadd.f32 %v200, %v225
  %v272 = vadd.f32 %v201, %v225
  %v273 = vadd.f32 %v202, %v225
  %v274 = vadd.f32 %v203, %v225
  %v275 = vadd.f32 %v204, %v225
  %v276 = vadd.f32 %v205, %v225
  %v277 = vadd.f32 %v206, %v225
  %v278 = vadd.f32 %v207, %v225
  %v279 = vadd.f32 %v208, %v225
  %v280 = vadd.f32 %v209, %v225
  %v281 = vadd.f32 %v210, %v225
  %v282 = vadd.f32 %v211, %v225
  %v283 = vadd.f32 %v212, %v225
  %v284 = vadd.f32 %v213, %v225
  %v285 = vadd.f32 %v214, %v225
  %v286 = vadd.f32 %v215, %v225
  %v287 = vadd.f32 %v216, %v225
  %v288 = vadd.f32 %v217, %v225
  %v289 = vadd.f32 %v218, %v225
  %v290 = vadd.f32 %v219, %v225
  %v291 = vmax.f32 %v227, 0.0
  %v292 = vmax.f32 %v228, 0.0
  %v293 = vmax.f32 %v229, 0.0
  %v294 = vmax.f32 %v230, 0.0
  %v295 = vmax.f32 %v231, 0.0
  %v296 = vmax.f32 %v232, 0.0
  %v297 = vmax.f32 %v233, 0.0
  %v298 = vmax.f32 %v234, 0.0
  %v299 = vmax.f32 %v235, 0.0
  %v300 = vmax.f32 %v236, 0.0
  %v301 = vmax.f32 %v237, 0.0
  %v302 = vmax.f32 %v238, 0.0
  %v303 = vmax.f32 %v239, 0.0
  %v304 = vmax.f32 %v240, 0.0
  %v305 = vmax.f32 %v241, 0.0
  %v306 = vmax.f32 %v242, 0.0
  %v307 = vmax.f32 %v243, 0.0
  %v308 = vmax.f32 %v244, 0.0
  %v309 = vmax.f32 %v245, 0.0
  %v310 = vmax.f32 %v246, 0.0
  %v311 = vmax.f32 %v247, 0.0
  %v312 = vmax.f32 %v248, 0.0
  %v313 = vmax.f32 %v249, 0.0
  %v314 = vmax.f32 %v250, 0.0
  %v315 = vmax.f32 %v251, 0.0
  %v316 = vmax.f32 %v252, 0.0
  %v317 = vmax.f32 %v253, 0.0
  %v318 = vmax.f32 %v254, 0.0
  %v319 = vmax.f32 %v255, 0.0
  %v320 = vmax.f32 %v256, 0.0
  %v321 = vmax.f32 %v257, 0.0
  %v322 = vmax.f32 %v258, 0.0
  %v323 = vmax.f32 %v259, 0.0
  %v324 = vmax.f32 %v260, 0.0
  %v325 = vmax.f32 %v261, 0.0
  %v326 = vmax.f32 %v262, 0.0
  %v327 = vmax.f32 %v263, 0.0
  %v328 = vmax.f32 %v264, 0.0
  %v329 = vmax.f32 %v265, 0.0
  %v330 = vmax.f32 %v266, 0.0
  %v331 = vmax.f32 %v267, 0.0
  %v332 = vmax.f32 %v268, 0.0
  %v333 = vmax.f32 %v269, 0.0
  %v334 = vmax.f32 %v270, 0.0
  %v335 = vmax.f32 %v271, 0.0
  %v336 = vmax.f32 %v272, 0.0
  %v337 = vmax.f32 %v273, 0.0
  %v338 = vmax.f32 %v274, 0.0
  %v339 = vmax.f32 %v275, 0.0
  %v340 = vmax.f32 %v276, 0.0
  %v341 = vmax.f32 %v277, 0.0
  %v342 = vmax.f32 %v278, 0.0
  %v343 = vmax.f32 %v279, 0.0
  %v344 = vmax.f32 %v280, 0.0
  %v345 = vmax.f32 %v281, 0.0
  %v346 = vmax.f32 %v282, 0.0
  %v347 = vmax.f32 %v283, 0.0
  %v348 = vmax.f32 %v284, 0.0
  %v349 = vmax.f32 %v285, 0.0
  %v350 = vmax.f32 %v286, 0.0
  %v351 = vmax.f32 %v287, 0.0
  %v352 = vmax.f32 %v288, 0.0
  %v353 = vmax.f32 %v289, 0.0
  %v354 = vmax.f32 %v290, 0.0
  %v355 = vpack.c.bf16 %v292, %v291
  %v356 = vpack.c.bf16 %v294, %v293
  %v357 = vpack.c.bf16 %v296, %v295
  %v358 = vpack.c.bf16 %v298, %v297
  %v359 = vpack.c.bf16 %v300, %v299
  %v360 = vpack.c.bf16 %v302, %v301
  %v361 = vpack.c.bf16 %v304, %v303
  %v362 = vpack.c.bf16 %v306, %v305
  %v363 = vpack.c.bf16 %v308, %v307
  %v364 = vpack.c.bf16 %v310, %v309
  %v365 = vpack.c.bf16 %v312, %v311
  %v366 = vpack.c.bf16 %v314, %v313
  %v367 = vpack.c.bf16 %v316, %v315
  %v368 = vpack.c.bf16 %v318, %v317
  %v369 = vpack.c.bf16 %v320, %v319
  %v370 = vpack.c.bf16 %v322, %v321
  %v371 = vpack.c.bf16 %v324, %v323
  %v372 = vpack.c.bf16 %v326, %v325
  %v373 = vpack.c.bf16 %v328, %v327
  %v374 = vpack.c.bf16 %v330, %v329
  %v375 = vpack.c.bf16 %v332, %v331
  %v376 = vpack.c.bf16 %v334, %v333
  %v377 = vpack.c.bf16 %v336, %v335
  %v378 = vpack.c.bf16 %v338, %v337
  %v379 = vpack.c.bf16 %v340, %v339
  %v380 = vpack.c.bf16 %v342, %v341
  %v381 = vpack.c.bf16 %v344, %v343
  %v382 = vpack.c.bf16 %v346, %v345
  %v383 = vpack.c.bf16 %v348, %v347
  %v384 = vpack.c.bf16 %v350, %v349
  %v385 = vpack.c.bf16 %v352, %v351
  %v386 = vpack.c.bf16 %v354, %v353
  %v387 = vld [vmem:[%s3] sm:$0xf]
  %v388 = vld [vmem:[%s3 + $0x4] sm:$0xf]
  %v389 = vld [vmem:[%s3 + $0x8] sm:$0xf]
  %v390 = vld [vmem:[%s3 + $0xc] sm:$0xf]
  %v391 = vld [vmem:[%s3 + $0x10] sm:$0xf]
  %v392 = vld [vmem:[%s3 + $0x14] sm:$0xf]
  %v393 = vld [vmem:[%s3 + $0x18] sm:$0xf]
  %v394 = vld [vmem:[%s3 + $0x1c] sm:$0xf]
  %v395 = vld [vmem:[%s3 + $0x20] sm:$0xf]
  %v396 = vld [vmem:[%s3 + $0x24] sm:$0xf]
  %v397 = vld [vmem:[%s3 + $0x28] sm:$0xf]
  %v398 = vld [vmem:[%s3 + $0x2c] sm:$0xf]
  %v399 = vld [vmem:[%s3 + $0x30] sm:$0xf]
  %v400 = vld [vmem:[%s3 + $0x34] sm:$0xf]
  %v401 = vld [vmem:[%s3 + $0x38] sm:$0xf]
  %v402 = vld [vmem:[%s3 + $0x3c] sm:$0xf]
  %v419 = vunpack.c.l.b16 %v387
  %v420 = vunpack.c.l.b16 %v388
  %v421 = vunpack.c.l.b16 %v389
  %v422 = vunpack.c.l.b16 %v390
  %v423 = vunpack.c.l.b16 %v391
  %v424 = vunpack.c.l.b16 %v392
  %v425 = vunpack.c.l.b16 %v393
  %v426 = vunpack.c.l.b16 %v394
  %v427 = vunpack.c.l.b16 %v395
  %v428 = vunpack.c.l.b16 %v396
  %v429 = vunpack.c.l.b16 %v397
  %v430 = vunpack.c.l.b16 %v398
  %v431 = vunpack.c.l.b16 %v399
  %v432 = vunpack.c.l.b16 %v400
  %v433 = vunpack.c.l.b16 %v401
  %v434 = vunpack.c.l.b16 %v402
  %v435 = vpack.c.b16 %v420, %v419
  %v436 = vpack.c.b16 %v422, %v421
  %v437 = vpack.c.b16 %v424, %v423
  %v438 = vpack.c.b16 %v426, %v425
  %v439 = vpack.c.b16 %v428, %v427
  %v440 = vpack.c.b16 %v430, %v429
  %v441 = vpack.c.b16 %v432, %v431
  %v442 = vpack.c.b16 %v434, %v433
  %451 = vmatprep.subr.bf16.mxu0 0
  %452 = vmatpush1.bf16.msra.mxu0 %v435
  %453 = vmatprep.subr.bf16.mxu0 0
  %454 = vmatpush1.bf16.msra.mxu0 %v436
  %455 = vmatprep.subr.bf16.mxu0 0
  %456 = vmatpush1.bf16.msra.mxu0 %v437
  %457 = vmatprep.subr.bf16.mxu0 0
  %458 = vmatpush1.bf16.msra.mxu0 %v438
  %459 = vmatprep.subr.bf16.mxu0 0
  %460 = vmatpush1.bf16.msra.mxu0 %v439
  %461 = vmatprep.subr.bf16.mxu0 0
  %462 = vmatpush1.bf16.msra.mxu0 %v440
  %463 = vmatprep.subr.bf16.mxu0 0
  %464 = vmatpush1.bf16.msra.mxu0 %v441
  %465 = vmatprep.subr.bf16.mxu0 0
  %466 = vmatpush1.bf16.msra.mxu0 %v442
  %467 = vmatprep.subr.bf16.mxu0 0
  %468 = vmatpush1.bf16.msra.mxu0 0
  %469 = vmatprep.subr.bf16.mxu0 0
  %470 = vmatpush1.bf16.msra.mxu0 0
  %471 = vmatprep.subr.bf16.mxu0 0
  %472 = vmatpush1.bf16.msra.mxu0 0
  %473 = vmatprep.subr.bf16.mxu0 0
  %474 = vmatpush1.bf16.msra.mxu0 0
  %475 = vmatprep.subr.bf16.mxu0 0
  %476 = vmatpush1.bf16.msra.mxu0 0
  %477 = vmatprep.subr.bf16.mxu0 0
  %478 = vmatpush1.bf16.msra.mxu0 0
  %479 = vmatprep.subr.bf16.mxu0 0
  %480 = vmatpush1.bf16.msra.mxu0 0
  %481 = vmatprep.subr.bf16.mxu0 0
  %482 = vmatpush1.bf16.msra.mxu0 0
  %483 = vmatprep.mubr.bf16.mxu0 0
  %484 = vmatmul.mubr.bf16.gmra.mrb[0].mxu0 %v355
  %v485 = vpop.f32.mrb[0].mxu0
  %v486 = vadd.f32 0.0, %v485
  %v487 = vpop.f32.mrb[0].mxu0
  %v488 = vpop.f32.mrb[0].mxu0
  %v489 = vadd.f32 0.0, %v488
  %v490 = vpop.f32.mrb[0].mxu0
  %491 = vmatprep.mubr.bf16.mxu0 0
  %492 = vmatmul.mubr.bf16.gmra.mrb[0].mxu0 %v356
  %v493 = vpop.f32.mrb[0].mxu0
  %v494 = vadd.f32 0.0, %v493
  %v495 = vpop.f32.mrb[0].mxu0
  %v496 = vpop.f32.mrb[0].mxu0
  %v497 = vadd.f32 0.0, %v496
  %v498 = vpop.f32.mrb[0].mxu0
  %499 = vmatprep.mubr.bf16.mxu0 0
  %500 = vmatmul.mubr.bf16.gmra.mrb[0].mxu0 %v357
  %v501 = vpop.f32.mrb[0].mxu0
  %v502 = vadd.f32 0.0, %v501
  %v503 = vpop.f32.mrb[0].mxu0
  %v504 = vpop.f32.mrb[0].mxu0
  %v505 = vadd.f32 0.0, %v504
  %v506 = vpop.f32.mrb[0].mxu0
  %507 = vmatprep.mubr.bf16.mxu0 0
  %508 = vmatmul.mubr.bf16.gmra.mrb[0].mxu0 %v358
  %v509 = vpop.f32.mrb[0].mxu0
  %v510 = vadd.f32 0.0, %v509
  %v511 = vpop.f32.mrb[0].mxu0
  %v512 = vpop.f32.mrb[0].mxu0
  %v513 = vadd.f32 0.0, %v512
  %v514 = vpop.f32.mrb[0].mxu0
  %515 = vmatprep.mubr.bf16.mxu0 0
  %516 = vmatmul.mubr.bf16.gmra.mrb[0].mxu0 %v359
  %v517 = vpop.f32.mrb[0].mxu0
  %v518 = vadd.f32 0.0, %v517
  %v519 = vpop.f32.mrb[0].mxu0
  %v520 = vpop.f32.mrb[0].mxu0
  %v521 = vadd.f32 0.0, %v520
  %v522 = vpop.f32.mrb[0].mxu0
  %523 = vmatprep.mubr.bf16.mxu0 0
  %524 = vmatmul.mubr.bf16.gmra.mrb[0].mxu0 %v360
  %v525 = vpop.f32.mrb[0].mxu0
  %v526 = vadd.f32 0.0, %v525
  %v527 = vpop.f32.mrb[0].mxu0
  %v528 = vpop.f32.mrb[0].mxu0
  %v529 = vadd.f32 0.0, %v528
  %v530 = vpop.f32.mrb[0].mxu0
  %531 = vmatprep.mubr.bf16.mxu0 0
  %532 = vmatmul.mubr.bf16.gmra.mrb[0].mxu0 %v361
  %v533 = vpop.f32.mrb[0].mxu0
  %v534 = vadd.f32 0.0, %v533
  %v535 = vpop.f32.mrb[0].mxu0
  %v536 = vpop.f32.mrb[0].mxu0
  %v537 = vadd.f32 0.0, %v536
  %v538 = vpop.f32.mrb[0].mxu0
  %539 = vmatprep.mubr.bf16.mxu0 0
  %540 = vmatmul.mubr.bf16.gmra.mrb[0].mxu0 %v362
  %v541 = vpop.f32.mrb[0].mxu0
  %v542 = vadd.f32 0.0, %v541
  %v543 = vpop.f32.mrb[0].mxu0
  %v544 = vpop.f32.mrb[0].mxu0
  %v545 = vadd.f32 0.0, %v544
  %v546 = vpop.f32.mrb[0].mxu0
  %547 = vmatprep.mubr.bf16.mxu0 0
  %548 = vmatmul.mubr.bf16.gmra.mrb[0].mxu0 %v363
  %v549 = vpop.f32.mrb[0].mxu0
  %v550 = vadd.f32 0.0, %v549
  %v551 = vpop.f32.mrb[0].mxu0
  %v552 = vpop.f32.mrb[0].mxu0
  %v553 = vadd.f32 0.0, %v552
  %v554 = vpop.f32.mrb[0].mxu0
  %555 = vmatprep.mubr.bf16.mxu0 0
  %556 = vmatmul.mubr.bf16.gmra.mrb[0].mxu0 %v364
  %v557 = vpop.f32.mrb[0].mxu0
  %v558 = vadd.f32 0.0, %v557
  %v559 = vpop.f32.mrb[0].mxu0
  %v560 = vpop.f32.mrb[0].mxu0
  %v561 = vadd.f32 0.0, %v560
  %v562 = vpop.f32.mrb[0].mxu0
  %563 = vmatprep.mubr.bf16.mxu0 0
  %564 = vmatmul.mubr.bf16.gmra.mrb[0].mxu0 %v365
  %v565 = vpop.f32.mrb[0].mxu0
  %v566 = vadd.f32 0.0, %v565
  %v567 = vpop.f32.mrb[0].mxu0
  %v568 = vpop.f32.mrb[0].mxu0
  %v569 = vadd.f32 0.0, %v568
  %v570 = vpop.f32.mrb[0].mxu0
  %571 = vmatprep.mubr.bf16.mxu0 0
  %572 = vmatmul.mubr.bf16.gmra.mrb[0].mxu0 %v366
  %v573 = vpop.f32.mrb[0].mxu0
  %v574 = vadd.f32 0.0, %v573
  %v575 = vpop.f32.mrb[0].mxu0
  %v576 = vpop.f32.mrb[0].mxu0
  %v577 = vadd.f32 0.0, %v576
  %v578 = vpop.f32.mrb[0].mxu0
  %579 = vmatprep.mubr.bf16.mxu0 0
  %580 = vmatmul.mubr.bf16.gmra.mrb[0].mxu0 %v367
  %v581 = vpop.f32.mrb[0].mxu0
  %v582 = vadd.f32 0.0, %v581
  %v583 = vpop.f32.mrb[0].mxu0
  %v584 = vpop.f32.mrb[0].mxu0
  %v585 = vadd.f32 0.0, %v584
  %v586 = vpop.f32.mrb[0].mxu0
  %587 = vmatprep.mubr.bf16.mxu0 0
  %588 = vmatmul.mubr.bf16.gmra.mrb[0].mxu0 %v368
  %v589 = vpop.f32.mrb[0].mxu0
  %v590 = vadd.f32 0.0, %v589
  %v591 = vpop.f32.mrb[0].mxu0
  %v592 = vpop.f32.mrb[0].mxu0
  %v593 = vadd.f32 0.0, %v592
  %v594 = vpop.f32.mrb[0].mxu0
  %595 = vmatprep.mubr.bf16.mxu0 0
  %596 = vmatmul.mubr.bf16.gmra.mrb[0].mxu0 %v369
  %v597 = vpop.f32.mrb[0].mxu0
  %v598 = vadd.f32 0.0, %v597
  %v599 = vpop.f32.mrb[0].mxu0
  %v600 = vpop.f32.mrb[0].mxu0
  %v601 = vadd.f32 0.0, %v600
  %v602 = vpop.f32.mrb[0].mxu0
  %603 = vmatprep.mubr.bf16.mxu0 0
  %604 = vmatmul.mubr.bf16.gmra.mrb[0].mxu0 %v370
  %v605 = vpop.f32.mrb[0].mxu0
  %v606 = vadd.f32 0.0, %v605
  %v607 = vpop.f32.mrb[0].mxu0
  %v608 = vpop.f32.mrb[0].mxu0
  %v609 = vadd.f32 0.0, %v608
  %v610 = vpop.f32.mrb[0].mxu0
  %611 = vmatprep.mubr.bf16.mxu0 0
  %612 = vmatmul.mubr.bf16.gmra.mrb[0].mxu0 %v371
  %v613 = vpop.f32.mrb[0].mxu0
  %v614 = vadd.f32 0.0, %v613
  %v615 = vpop.f32.mrb[0].mxu0
  %v616 = vpop.f32.mrb[0].mxu0
  %v617 = vadd.f32 0.0, %v616
  %v618 = vpop.f32.mrb[0].mxu0
  %619 = vmatprep.mubr.bf16.mxu0 0
  %620 = vmatmul.mubr.bf16.gmra.mrb[0].mxu0 %v372
  %v621 = vpop.f32.mrb[0].mxu0
  %v622 = vadd.f32 0.0, %v621
  %v623 = vpop.f32.mrb[0].mxu0
  %v624 = vpop.f32.mrb[0].mxu0
  %v625 = vadd.f32 0.0, %v624
  %v626 = vpop.f32.mrb[0].mxu0
  %627 = vmatprep.mubr.bf16.mxu0 0
  %628 = vmatmul.mubr.bf16.gmra.mrb[0].mxu0 %v373
  %v629 = vpop.f32.mrb[0].mxu0
  %v630 = vadd.f32 0.0, %v629
  %v631 = vpop.f32.mrb[0].mxu0
  %v632 = vpop.f32.mrb[0].mxu0
  %v633 = vadd.f32 0.0, %v632
  %v634 = vpop.f32.mrb[0].mxu0
  %635 = vmatprep.mubr.bf16.mxu0 0
  %636 = vmatmul.mubr.bf16.gmra.mrb[0].mxu0 %v374
  %v637 = vpop.f32.mrb[0].mxu0
  %v638 = vadd.f32 0.0, %v637
  %v639 = vpop.f32.mrb[0].mxu0
  %v640 = vpop.f32.mrb[0].mxu0
  %v641 = vadd.f32 0.0, %v640
  %v642 = vpop.f32.mrb[0].mxu0
  %643 = vmatprep.mubr.bf16.mxu0 0
  %644 = vmatmul.mubr.bf16.gmra.mrb[0].mxu0 %v375
  %v645 = vpop.f32.mrb[0].mxu0
  %v646 = vadd.f32 0.0, %v645
  %v647 = vpop.f32.mrb[0].mxu0
  %v648 = vpop.f32.mrb[0].mxu0
  %v649 = vadd.f32 0.0, %v648
  %v650 = vpop.f32.mrb[0].mxu0
  %651 = vmatprep.mubr.bf16.mxu0 0
  %652 = vmatmul.mubr.bf16.gmra.mrb[0].mxu0 %v376
  %v653 = vpop.f32.mrb[0].mxu0
  %v654 = vadd.f32 0.0, %v653
  %v655 = vpop.f32.mrb[0].mxu0
  %v656 = vpop.f32.mrb[0].mxu0
  %v657 = vadd.f32 0.0, %v656
  %v658 = vpop.f32.mrb[0].mxu0
  %659 = vmatprep.mubr.bf16.mxu0 0
  %660 = vmatmul.mubr.bf16.gmra.mrb[0].mxu0 %v377
  %v661 = vpop.f32.mrb[0].mxu0
  %v662 = vadd.f32 0.0, %v661
  %v663 = vpop.f32.mrb[0].mxu0
  %v664 = vpop.f32.mrb[0].mxu0
  %v665 = vadd.f32 0.0, %v664
  %v666 = vpop.f32.mrb[0].mxu0
  %667 = vmatprep.mubr.bf16.mxu0 0
  %668 = vmatmul.mubr.bf16.gmra.mrb[0].mxu0 %v378
  %v669 = vpop.f32.mrb[0].mxu0
  %v670 = vadd.f32 0.0, %v669
  %v671 = vpop.f32.mrb[0].mxu0
  %v672 = vpop.f32.mrb[0].mxu0
  %v673 = vadd.f32 0.0, %v672
  %v674 = vpop.f32.mrb[0].mxu0
  %675 = vmatprep.mubr.bf16.mxu0 0
  %676 = vmatmul.mubr.bf16.gmra.mrb[0].mxu0 %v379
  %v677 = vpop.f32.mrb[0].mxu0
  %v678 = vadd.f32 0.0, %v677
  %v679 = vpop.f32.mrb[0].mxu0
  %v680 = vpop.f32.mrb[0].mxu0
  %v681 = vadd.f32 0.0, %v680
  %v682 = vpop.f32.mrb[0].mxu0
  %683 = vmatprep.mubr.bf16.mxu0 0
  %684 = vmatmul.mubr.bf16.gmra.mrb[0].mxu0 %v380
  %v685 = vpop.f32.mrb[0].mxu0
  %v686 = vadd.f32 0.0, %v685
  %v687 = vpop.f32.mrb[0].mxu0
  %v688 = vpop.f32.mrb[0].mxu0
  %v689 = vadd.f32 0.0, %v688
  %v690 = vpop.f32.mrb[0].mxu0
  %691 = vmatprep.mubr.bf16.mxu0 0
  %692 = vmatmul.mubr.bf16.gmra.mrb[0].mxu0 %v381
  %v693 = vpop.f32.mrb[0].mxu0
  %v694 = vadd.f32 0.0, %v693
  %v695 = vpop.f32.mrb[0].mxu0
  %v696 = vpop.f32.mrb[0].mxu0
  %v697 = vadd.f32 0.0, %v696
  %v698 = vpop.f32.mrb[0].mxu0
  %699 = vmatprep.mubr.bf16.mxu0 0
  %700 = vmatmul.mubr.bf16.gmra.mrb[0].mxu0 %v382
  %v701 = vpop.f32.mrb[0].mxu0
  %v702 = vadd.f32 0.0, %v701
  %v703 = vpop.f32.mrb[0].mxu0
  %v704 = vpop.f32.mrb[0].mxu0
  %v705 = vadd.f32 0.0, %v704
  %v706 = vpop.f32.mrb[0].mxu0
  %707 = vmatprep.mubr.bf16.mxu0 0
  %708 = vmatmul.mubr.bf16.gmra.mrb[0].mxu0 %v383
  %v709 = vpop.f32.mrb[0].mxu0
  %v710 = vadd.f32 0.0, %v709
  %v711 = vpop.f32.mrb[0].mxu0
  %v712 = vpop.f32.mrb[0].mxu0
  %v713 = vadd.f32 0.0, %v712
  %v714 = vpop.f32.mrb[0].mxu0
  %715 = vmatprep.mubr.bf16.mxu0 0
  %716 = vmatmul.mubr.bf16.gmra.mrb[0].mxu0 %v384
  %v717 = vpop.f32.mrb[0].mxu0
  %v718 = vadd.f32 0.0, %v717
  %v719 = vpop.f32.mrb[0].mxu0
  %v720 = vpop.f32.mrb[0].mxu0
  %v721 = vadd.f32 0.0, %v720
  %v722 = vpop.f32.mrb[0].mxu0
  %723 = vmatprep.mubr.bf16.mxu0 0
  %724 = vmatmul.mubr.bf16.gmra.mrb[0].mxu0 %v385
  %v725 = vpop.f32.mrb[0].mxu0
  %v726 = vadd.f32 0.0, %v725
  %v727 = vpop.f32.mrb[0].mxu0
  %v728 = vpop.f32.mrb[0].mxu0
  %v729 = vadd.f32 0.0, %v728
  %v730 = vpop.f32.mrb[0].mxu0
  %731 = vmatprep.mubr.bf16.mxu0 0
  %732 = vmatmul.mubr.bf16.gmra.mrb[0].mxu0 %v386
  %v733 = vpop.f32.mrb[0].mxu0
  %v734 = vadd.f32 0.0, %v733
  %v735 = vpop.f32.mrb[0].mxu0
  %v736 = vpop.f32.mrb[0].mxu0
  %v737 = vadd.f32 0.0, %v736
  %v738 = vpop.f32.mrb[0].mxu0
  %739 = vdwg.mxu0
  %v740 = vpack.c.bf16 %v489, %v486
  %v741 = vpack.c.bf16 %v497, %v494
  %v742 = vpack.c.bf16 %v505, %v502
  %v743 = vpack.c.bf16 %v513, %v510
  %v744 = vpack.c.bf16 %v521, %v518
  %v745 = vpack.c.bf16 %v529, %v526
  %v746 = vpack.c.bf16 %v537, %v534
  %v747 = vpack.c.bf16 %v545, %v542
  %v748 = vpack.c.bf16 %v553, %v550
  %v749 = vpack.c.bf16 %v561, %v558
  %v750 = vpack.c.bf16 %v569, %v566
  %v751 = vpack.c.bf16 %v577, %v574
  %v752 = vpack.c.bf16 %v585, %v582
  %v753 = vpack.c.bf16 %v593, %v590
  %v754 = vpack.c.bf16 %v601, %v598
  %v755 = vpack.c.bf16 %v609, %v606
  %v756 = vpack.c.bf16 %v617, %v614
  %v757 = vpack.c.bf16 %v625, %v622
  %v758 = vpack.c.bf16 %v633, %v630
  %v759 = vpack.c.bf16 %v641, %v638
  %v760 = vpack.c.bf16 %v649, %v646
  %v761 = vpack.c.bf16 %v657, %v654
  %v762 = vpack.c.bf16 %v665, %v662
  %v763 = vpack.c.bf16 %v673, %v670
  %v764 = vpack.c.bf16 %v681, %v678
  %v765 = vpack.c.bf16 %v689, %v686
  %v766 = vpack.c.bf16 %v697, %v694
  %v767 = vpack.c.bf16 %v705, %v702
  %v768 = vpack.c.bf16 %v713, %v710
  %v769 = vpack.c.bf16 %v721, %v718
  %v770 = vpack.c.bf16 %v729, %v726
  %v771 = vpack.c.bf16 %v737, %v734
  %v804 = vunpack.c.l.b16 %v740
  %v805 = vunpack.c.h.b16 %v740
  %v806 = vunpack.c.l.b16 %v741
  %v807 = vunpack.c.h.b16 %v741
  %v808 = vunpack.c.l.b16 %v742
  %v809 = vunpack.c.h.b16 %v742
  %v810 = vunpack.c.l.b16 %v743
  %v811 = vunpack.c.h.b16 %v743
  %v812 = vunpack.c.l.b16 %v744
  %v813 = vunpack.c.h.b16 %v744
  %v814 = vunpack.c.l.b16 %v745
  %v815 = vunpack.c.h.b16 %v745
  %v816 = vunpack.c.l.b16 %v746
  %v817 = vunpack.c.h.b16 %v746
  %v818 = vunpack.c.l.b16 %v747
  %v819 = vunpack.c.h.b16 %v747
  %v820 = vunpack.c.l.b16 %v748
  %v821 = vunpack.c.h.b16 %v748
  %v822 = vunpack.c.l.b16 %v749
  %v823 = vunpack.c.h.b16 %v749
  %v824 = vunpack.c.l.b16 %v750
  %v825 = vunpack.c.h.b16 %v750
  %v826 = vunpack.c.l.b16 %v751
  %v827 = vunpack.c.h.b16 %v751
  %v828 = vunpack.c.l.b16 %v752
  %v829 = vunpack.c.h.b16 %v752
  %v830 = vunpack.c.l.b16 %v753
  %v831 = vunpack.c.h.b16 %v753
  %v832 = vunpack.c.l.b16 %v754
  %v833 = vunpack.c.h.b16 %v754
  %v834 = vunpack.c.l.b16 %v755
  %v835 = vunpack.c.h.b16 %v755
  %v836 = vunpack.c.l.b16 %v756
  %v837 = vunpack.c.h.b16 %v756
  %v838 = vunpack.c.l.b16 %v757
  %v839 = vunpack.c.h.b16 %v757
  %v840 = vunpack.c.l.b16 %v758
  %v841 = vunpack.c.h.b16 %v758
  %v842 = vunpack.c.l.b16 %v759
  %v843 = vunpack.c.h.b16 %v759
  %v844 = vunpack.c.l.b16 %v760
  %v845 = vunpack.c.h.b16 %v760
  %v846 = vunpack.c.l.b16 %v761
  %v847 = vunpack.c.h.b16 %v761
  %v848 = vunpack.c.l.b16 %v762
  %v849 = vunpack.c.h.b16 %v762
  %v850 = vunpack.c.l.b16 %v763
  %v851 = vunpack.c.h.b16 %v763
  %v852 = vunpack.c.l.b16 %v764
  %v853 = vunpack.c.h.b16 %v764
  %v854 = vunpack.c.l.b16 %v765
  %v855 = vunpack.c.h.b16 %v765
  %v856 = vunpack.c.l.b16 %v766
  %v857 = vunpack.c.h.b16 %v766
  %v858 = vunpack.c.l.b16 %v767
  %v859 = vunpack.c.h.b16 %v767
  %v860 = vunpack.c.l.b16 %v768
  %v861 = vunpack.c.h.b16 %v768
  %v862 = vunpack.c.l.b16 %v769
  %v863 = vunpack.c.h.b16 %v769
  %v864 = vunpack.c.l.b16 %v770
  %v865 = vunpack.c.h.b16 %v770
  %v866 = vunpack.c.l.b16 %v771
  %v867 = vunpack.c.h.b16 %v771
  %v868 = vpack.c.b16 %v804, %v804
  %v869 = vpack.c.b16 %v805, %v805
  %v870 = vpack.c.b16 %v806, %v806
  %v871 = vpack.c.b16 %v807, %v807
  %v872 = vpack.c.b16 %v808, %v808
  %v873 = vpack.c.b16 %v809, %v809
  %v874 = vpack.c.b16 %v810, %v810
  %v875 = vpack.c.b16 %v811, %v811
  %v876 = vpack.c.b16 %v812, %v812
  %v877 = vpack.c.b16 %v813, %v813
  %v878 = vpack.c.b16 %v814, %v814
  %v879 = vpack.c.b16 %v815, %v815
  %v880 = vpack.c.b16 %v816, %v816
  %v881 = vpack.c.b16 %v817, %v817
  %v882 = vpack.c.b16 %v818, %v818
  %v883 = vpack.c.b16 %v819, %v819
  %v884 = vpack.c.b16 %v820, %v820
  %v885 = vpack.c.b16 %v821, %v821
  %v886 = vpack.c.b16 %v822, %v822
  %v887 = vpack.c.b16 %v823, %v823
  %v888 = vpack.c.b16 %v824, %v824
  %v889 = vpack.c.b16 %v825, %v825
  %v890 = vpack.c.b16 %v826, %v826
  %v891 = vpack.c.b16 %v827, %v827
  %v892 = vpack.c.b16 %v828, %v828
  %v893 = vpack.c.b16 %v829, %v829
  %v894 = vpack.c.b16 %v830, %v830
  %v895 = vpack.c.b16 %v831, %v831
  %v896 = vpack.c.b16 %v832, %v832
  %v897 = vpack.c.b16 %v833, %v833
  %v898 = vpack.c.b16 %v834, %v834
  %v899 = vpack.c.b16 %v835, %v835
  %v900 = vpack.c.b16 %v836, %v836
  %v901 = vpack.c.b16 %v837, %v837
  %v902 = vpack.c.b16 %v838, %v838
  %v903 = vpack.c.b16 %v839, %v839
  %v904 = vpack.c.b16 %v840, %v840
  %v905 = vpack.c.b16 %v841, %v841
  %v906 = vpack.c.b16 %v842, %v842
  %v907 = vpack.c.b16 %v843, %v843
  %v908 = vpack.c.b16 %v844, %v844
  %v909 = vpack.c.b16 %v845, %v845
  %v910 = vpack.c.b16 %v846, %v846
  %v911 = vpack.c.b16 %v847, %v847
  %v912 = vpack.c.b16 %v848, %v848
  %v913 = vpack.c.b16 %v849, %v849
  %v914 = vpack.c.b16 %v850, %v850
  %v915 = vpack.c.b16 %v851, %v851
  %v916 = vpack.c.b16 %v852, %v852
  %v917 = vpack.c.b16 %v853, %v853
  %v918 = vpack.c.b16 %v854, %v854
  %v919 = vpack.c.b16 %v855, %v855
  %v920 = vpack.c.b16 %v856, %v856
  %v921 = vpack.c.b16 %v857, %v857
  %v922 = vpack.c.b16 %v858, %v858
  %v923 = vpack.c.b16 %v859, %v859
  %v924 = vpack.c.b16 %v860, %v860
  %v925 = vpack.c.b16 %v861, %v861
  %v926 = vpack.c.b16 %v862, %v862
  %v927 = vpack.c.b16 %v863, %v863
  %v928 = vpack.c.b16 %v864, %v864
  %v929 = vpack.c.b16 %v865, %v865
  %v930 = vpack.c.b16 %v866, %v866
  %v931 = vpack.c.b16 %v867, %v867
  %996 = vst [vmem:[%s4] sm:$0xf] %v868
  %997 = vst [vmem:[%s4 + $0x4] sm:$0xf] %v869
  %998 = vst [vmem:[%s4 + $0x8] sm:$0xf] %v870
  %999 = vst [vmem:[%s4 + $0xc] sm:$0xf] %v871
  %1000 = vst [vmem:[%s4 + $0x10] sm:$0xf] %v872
  %1001 = vst [vmem:[%s4 + $0x14] sm:$0xf] %v873
  %1002 = vst [vmem:[%s4 + $0x18] sm:$0xf] %v874
  %1003 = vst [vmem:[%s4 + $0x1c] sm:$0xf] %v875
  %1004 = vst [vmem:[%s4 + $0x20] sm:$0xf] %v876
  %1005 = vst [vmem:[%s4 + $0x24] sm:$0xf] %v877
  %1006 = vst [vmem:[%s4 + $0x28] sm:$0xf] %v878
  %1007 = vst [vmem:[%s4 + $0x2c] sm:$0xf] %v879
  %1008 = vst [vmem:[%s4 + $0x30] sm:$0xf] %v880
  %1009 = vst [vmem:[%s4 + $0x34] sm:$0xf] %v881
  %1010 = vst [vmem:[%s4 + $0x38] sm:$0xf] %v882
  %1011 = vst [vmem:[%s4 + $0x3c] sm:$0xf] %v883
  %1012 = vst [vmem:[%s4 + $0x40] sm:$0xf] %v884
  %1013 = vst [vmem:[%s4 + $0x44] sm:$0xf] %v885
  %1014 = vst [vmem:[%s4 + $0x48] sm:$0xf] %v886
  %1015 = vst [vmem:[%s4 + $0x4c] sm:$0xf] %v887
  %1016 = vst [vmem:[%s4 + $0x50] sm:$0xf] %v888
  %1017 = vst [vmem:[%s4 + $0x54] sm:$0xf] %v889
  %1018 = vst [vmem:[%s4 + $0x58] sm:$0xf] %v890
  %1019 = vst [vmem:[%s4 + $0x5c] sm:$0xf] %v891
  %1020 = vst [vmem:[%s4 + $0x60] sm:$0xf] %v892
  %1021 = vst [vmem:[%s4 + $0x64] sm:$0xf] %v893
  %1022 = vst [vmem:[%s4 + $0x68] sm:$0xf] %v894
  %1023 = vst [vmem:[%s4 + $0x6c] sm:$0xf] %v895
  %1024 = vst [vmem:[%s4 + $0x70] sm:$0xf] %v896
  %1025 = vst [vmem:[%s4 + $0x74] sm:$0xf] %v897
  %1026 = vst [vmem:[%s4 + $0x78] sm:$0xf] %v898
  %1027 = vst [vmem:[%s4 + $0x7c] sm:$0xf] %v899
  %1028 = vst [vmem:[%s4 + $0x80] sm:$0xf] %v900
  %1029 = vst [vmem:[%s4 + $0x84] sm:$0xf] %v901
  %1030 = vst [vmem:[%s4 + $0x88] sm:$0xf] %v902
  %1031 = vst [vmem:[%s4 + $0x8c] sm:$0xf] %v903
  %1032 = vst [vmem:[%s4 + $0x90] sm:$0xf] %v904
  %1033 = vst [vmem:[%s4 + $0x94] sm:$0xf] %v905
  %1034 = vst [vmem:[%s4 + $0x98] sm:$0xf] %v906
  %1035 = vst [vmem:[%s4 + $0x9c] sm:$0xf] %v907
  %1036 = vst [vmem:[%s4 + $0xa0] sm:$0xf] %v908
  %1037 = vst [vmem:[%s4 + $0xa4] sm:$0xf] %v909
  %1038 = vst [vmem:[%s4 + $0xa8] sm:$0xf] %v910
  %1039 = vst [vmem:[%s4 + $0xac] sm:$0xf] %v911
  %1040 = vst [vmem:[%s4 + $0xb0] sm:$0xf] %v912
  %1041 = vst [vmem:[%s4 + $0xb4] sm:$0xf] %v913
  %1042 = vst [vmem:[%s4 + $0xb8] sm:$0xf] %v914
  %1043 = vst [vmem:[%s4 + $0xbc] sm:$0xf] %v915
  %1044 = vst [vmem:[%s4 + $0xc0] sm:$0xf] %v916
  %1045 = vst [vmem:[%s4 + $0xc4] sm:$0xf] %v917
  %1046 = vst [vmem:[%s4 + $0xc8] sm:$0xf] %v918
  %1047 = vst [vmem:[%s4 + $0xcc] sm:$0xf] %v919
  %1048 = vst [vmem:[%s4 + $0xd0] sm:$0xf] %v920
  %1049 = vst [vmem:[%s4 + $0xd4] sm:$0xf] %v921
  %1050 = vst [vmem:[%s4 + $0xd8] sm:$0xf] %v922
  %1051 = vst [vmem:[%s4 + $0xdc] sm:$0xf] %v923
  %1052 = vst [vmem:[%s4 + $0xe0] sm:$0xf] %v924
  %1053 = vst [vmem:[%s4 + $0xe4] sm:$0xf] %v925
  %1054 = vst [vmem:[%s4 + $0xe8] sm:$0xf] %v926
  %1055 = vst [vmem:[%s4 + $0xec] sm:$0xf] %v927
  %1056 = vst [vmem:[%s4 + $0xf0] sm:$0xf] %v928
  %1057 = vst [vmem:[%s4 + $0xf4] sm:$0xf] %v929
  %1058 = vst [vmem:[%s4 + $0xf8] sm:$0xf] %v930
  %1059 = vst [vmem:[%s4 + $0xfc] sm:$0xf] %v931
  %v1060 = vadd.f32 %v486, %v489
  %v1061 = vadd.f32 %v1060, %v494
  %v1062 = vadd.f32 %v1061, %v497
  %v1063 = vadd.f32 %v1062, %v502
  %v1064 = vadd.f32 %v1063, %v505
  %v1065 = vadd.f32 %v1064, %v510
  %v1066 = vadd.f32 %v1065, %v513
  %v1067 = vadd.f32 %v1066, %v518
  %v1068 = vadd.f32 %v1067, %v521
  %v1069 = vadd.f32 %v1068, %v526
  %v1070 = vadd.f32 %v1069, %v529
  %v1071 = vadd.f32 %v1070, %v534
  %v1072 = vadd.f32 %v1071, %v537
  %v1073 = vadd.f32 %v1072, %v542
  %v1074 = vadd.f32 %v1073, %v545
  %v1075 = vadd.f32 %v1074, %v550
  %v1076 = vadd.f32 %v1075, %v553
  %v1077 = vadd.f32 %v1076, %v558
  %v1078 = vadd.f32 %v1077, %v561
  %v1079 = vadd.f32 %v1078, %v566
  %v1080 = vadd.f32 %v1079, %v569
  %v1081 = vadd.f32 %v1080, %v574
  %v1082 = vadd.f32 %v1081, %v577
  %v1083 = vadd.f32 %v1082, %v582
  %v1084 = vadd.f32 %v1083, %v585
  %v1085 = vadd.f32 %v1084, %v590
  %v1086 = vadd.f32 %v1085, %v593
  %v1087 = vadd.f32 %v1086, %v598
  %v1088 = vadd.f32 %v1087, %v601
  %v1089 = vadd.f32 %v1088, %v606
  %v1090 = vadd.f32 %v1089, %v609
  %v1091 = vadd.f32 %v1090, %v614
  %v1092 = vadd.f32 %v1091, %v617
  %v1093 = vadd.f32 %v1092, %v622
  %v1094 = vadd.f32 %v1093, %v625
  %v1095 = vadd.f32 %v1094, %v630
  %v1096 = vadd.f32 %v1095, %v633
  %v1097 = vadd.f32 %v1096, %v638
  %v1098 = vadd.f32 %v1097, %v641
  %v1099 = vadd.f32 %v1098, %v646
  %v1100 = vadd.f32 %v1099, %v649
  %v1101 = vadd.f32 %v1100, %v654
  %v1102 = vadd.f32 %v1101, %v657
  %v1103 = vadd.f32 %v1102, %v662
  %v1104 = vadd.f32 %v1103, %v665
  %v1105 = vadd.f32 %v1104, %v670
  %v1106 = vadd.f32 %v1105, %v673
  %v1107 = vadd.f32 %v1106, %v678
  %v1108 = vadd.f32 %v1107, %v681
  %v1109 = vadd.f32 %v1108, %v686
  %v1110 = vadd.f32 %v1109, %v689
  %v1111 = vadd.f32 %v1110, %v694
  %v1112 = vadd.f32 %v1111, %v697
  %v1113 = vadd.f32 %v1112, %v702
  %v1114 = vadd.f32 %v1113, %v705
  %v1115 = vadd.f32 %v1114, %v710
  %v1116 = vadd.f32 %v1115, %v713
  %v1117 = vadd.f32 %v1116, %v718
  %v1118 = vadd.f32 %v1117, %v721
  %v1119 = vadd.f32 %v1118, %v726
  %v1120 = vadd.f32 %v1119, %v729
  %v1121 = vadd.f32 %v1120, %v734
  %v1122 = vadd.f32 %v1121, %v737
  %v1123 = vrot.slane %v1122, 4
  %v1124 = vadd.f32 %v1122, %v1123
  %v1125 = vrot.slane %v1124, 2
  %v1126 = vadd.f32 %v1124, %v1125
  %v1127 = vrot.slane %v1126, 1
  %v1128 = vadd.f32 %v1126, %v1127
  %1129 = vst [vmem:[%s5] sm:$0x1] %v1128
  %v1130 = vmul.f32 %v486, %v486
  %v1131 = vmul.f32 %v489, %v489
  %v1132 = vmul.f32 %v494, %v494
  %v1133 = vmul.f32 %v497, %v497
  %v1134 = vmul.f32 %v502, %v502
  %v1135 = vmul.f32 %v505, %v505
  %v1136 = vmul.f32 %v510, %v510
  %v1137 = vmul.f32 %v513, %v513
  %v1138 = vmul.f32 %v518, %v518
  %v1139 = vmul.f32 %v521, %v521
  %v1140 = vmul.f32 %v526, %v526
  %v1141 = vmul.f32 %v529, %v529
  %v1142 = vmul.f32 %v534, %v534
  %v1143 = vmul.f32 %v537, %v537
  %v1144 = vmul.f32 %v542, %v542
  %v1145 = vmul.f32 %v545, %v545
  %v1146 = vmul.f32 %v550, %v550
  %v1147 = vmul.f32 %v553, %v553
  %v1148 = vmul.f32 %v558, %v558
  %v1149 = vmul.f32 %v561, %v561
  %v1150 = vmul.f32 %v566, %v566
  %v1151 = vmul.f32 %v569, %v569
  %v1152 = vmul.f32 %v574, %v574
  %v1153 = vmul.f32 %v577, %v577
  %v1154 = vmul.f32 %v582, %v582
  %v1155 = vmul.f32 %v585, %v585
  %v1156 = vmul.f32 %v590, %v590
  %v1157 = vmul.f32 %v593, %v593
  %v1158 = vmul.f32 %v598, %v598
  %v1159 = vmul.f32 %v601, %v601
  %v1160 = vmul.f32 %v606, %v606
  %v1161 = vmul.f32 %v609, %v609
  %v1162 = vmul.f32 %v614, %v614
  %v1163 = vmul.f32 %v617, %v617
  %v1164 = vmul.f32 %v622, %v622
  %v1165 = vmul.f32 %v625, %v625
  %v1166 = vmul.f32 %v630, %v630
  %v1167 = vmul.f32 %v633, %v633
  %v1168 = vmul.f32 %v638, %v638
  %v1169 = vmul.f32 %v641, %v641
  %v1170 = vmul.f32 %v646, %v646
  %v1171 = vmul.f32 %v649, %v649
  %v1172 = vmul.f32 %v654, %v654
  %v1173 = vmul.f32 %v657, %v657
  %v1174 = vmul.f32 %v662, %v662
  %v1175 = vmul.f32 %v665, %v665
  %v1176 = vmul.f32 %v670, %v670
  %v1177 = vmul.f32 %v673, %v673
  %v1178 = vmul.f32 %v678, %v678
  %v1179 = vmul.f32 %v681, %v681
  %v1180 = vmul.f32 %v686, %v686
  %v1181 = vmul.f32 %v689, %v689
  %v1182 = vmul.f32 %v694, %v694
  %v1183 = vmul.f32 %v697, %v697
  %v1184 = vmul.f32 %v702, %v702
  %v1185 = vmul.f32 %v705, %v705
  %v1186 = vmul.f32 %v710, %v710
  %v1187 = vmul.f32 %v713, %v713
  %v1188 = vmul.f32 %v718, %v718
  %v1189 = vmul.f32 %v721, %v721
  %v1190 = vmul.f32 %v726, %v726
  %v1191 = vmul.f32 %v729, %v729
  %v1192 = vmul.f32 %v734, %v734
  %v1193 = vmul.f32 %v737, %v737
  %v1194 = vadd.f32 %v1130, %v1131
  %v1195 = vadd.f32 %v1194, %v1132
  %v1196 = vadd.f32 %v1195, %v1133
  %v1197 = vadd.f32 %v1196, %v1134
  %v1198 = vadd.f32 %v1197, %v1135
  %v1199 = vadd.f32 %v1198, %v1136
  %v1200 = vadd.f32 %v1199, %v1137
  %v1201 = vadd.f32 %v1200, %v1138
  %v1202 = vadd.f32 %v1201, %v1139
  %v1203 = vadd.f32 %v1202, %v1140
  %v1204 = vadd.f32 %v1203, %v1141
  %v1205 = vadd.f32 %v1204, %v1142
  %v1206 = vadd.f32 %v1205, %v1143
  %v1207 = vadd.f32 %v1206, %v1144
  %v1208 = vadd.f32 %v1207, %v1145
  %v1209 = vadd.f32 %v1208, %v1146
  %v1210 = vadd.f32 %v1209, %v1147
  %v1211 = vadd.f32 %v1210, %v1148
  %v1212 = vadd.f32 %v1211, %v1149
  %v1213 = vadd.f32 %v1212, %v1150
  %v1214 = vadd.f32 %v1213, %v1151
  %v1215 = vadd.f32 %v1214, %v1152
  %v1216 = vadd.f32 %v1215, %v1153
  %v1217 = vadd.f32 %v1216, %v1154
  %v1218 = vadd.f32 %v1217, %v1155
  %v1219 = vadd.f32 %v1218, %v1156
  %v1220 = vadd.f32 %v1219, %v1157
  %v1221 = vadd.f32 %v1220, %v1158
  %v1222 = vadd.f32 %v1221, %v1159
  %v1223 = vadd.f32 %v1222, %v1160
  %v1224 = vadd.f32 %v1223, %v1161
  %v1225 = vadd.f32 %v1224, %v1162
  %v1226 = vadd.f32 %v1225, %v1163
  %v1227 = vadd.f32 %v1226, %v1164
  %v1228 = vadd.f32 %v1227, %v1165
  %v1229 = vadd.f32 %v1228, %v1166
  %v1230 = vadd.f32 %v1229, %v1167
  %v1231 = vadd.f32 %v1230, %v1168
  %v1232 = vadd.f32 %v1231, %v1169
  %v1233 = vadd.f32 %v1232, %v1170
  %v1234 = vadd.f32 %v1233, %v1171
  %v1235 = vadd.f32 %v1234, %v1172
  %v1236 = vadd.f32 %v1235, %v1173
  %v1237 = vadd.f32 %v1236, %v1174
  %v1238 = vadd.f32 %v1237, %v1175
  %v1239 = vadd.f32 %v1238, %v1176
  %v1240 = vadd.f32 %v1239, %v1177
  %v1241 = vadd.f32 %v1240, %v1178
  %v1242 = vadd.f32 %v1241, %v1179
  %v1243 = vadd.f32 %v1242, %v1180
  %v1244 = vadd.f32 %v1243, %v1181
  %v1245 = vadd.f32 %v1244, %v1182
  %v1246 = vadd.f32 %v1245, %v1183
  %v1247 = vadd.f32 %v1246, %v1184
  %v1248 = vadd.f32 %v1247, %v1185
  %v1249 = vadd.f32 %v1248, %v1186
  %v1250 = vadd.f32 %v1249, %v1187
  %v1251 = vadd.f32 %v1250, %v1188
  %v1252 = vadd.f32 %v1251, %v1189
  %v1253 = vadd.f32 %v1252, %v1190
  %v1254 = vadd.f32 %v1253, %v1191
  %v1255 = vadd.f32 %v1254, %v1192
  %v1256 = vadd.f32 %v1255, %v1193
  %v1257 = vrot.slane %v1256, 4
  %v1258 = vadd.f32 %v1256, %v1257
  %v1259 = vrot.slane %v1258, 2
  %v1260 = vadd.f32 %v1258, %v1259
  %v1261 = vrot.slane %v1260, 1
  %v1262 = vadd.f32 %v1260, %v1261
  %1263 = vst [vmem:[%s6] sm:$0x1] %v1262
  // Predicated region
  $region18: #{bottleneck_forward.6} parent=0 // pred_check
    _
  $region19: #{bottleneck_forward.6} parent=0 // pred_check_branch
    %1265 = sbr.rel (0) target = $region21
  $region20: #{bottleneck_forward.6} parent=0 // pred_region
    _
  $region21: #{bottleneck_forward.6} parent=0 // pred_fallthru
    _
  // Predicated region
  $region22: #{bottleneck_forward.6} parent=0 // pred_check
    _
  $region23: #{bottleneck_forward.6} parent=0 // pred_check_branch
    %1267 = sbr.rel (0) target = $region25
  $region24: #{bottleneck_forward.6} parent=0 // pred_region
    _
  $region25: #{bottleneck_forward.6} parent=0 // pred_fallthru
    _
  // Predicated region
  $region26: #{bottleneck_forward.6} parent=0 // pred_check
    _
  $region27: #{bottleneck_forward.6} parent=0 // pred_check_branch
    %1269 = sbr.rel (0) target = $region29
  $region28: #{bottleneck_forward.6} parent=0 // pred_region
    _
  $region29: #{bottleneck_forward.6} parent=0 // pred_fallthru
    _
  // Predicated region
  $region30: #{bottleneck_forward.6} parent=0 // pred_check
    _
  $region31: #{bottleneck_forward.6} parent=0 // pred_check_branch
    %1271 = sbr.rel (0) target = $region33
  $region32: #{bottleneck_forward.6} parent=0 // pred_region
    _
  $region33: #{bottleneck_forward.6} parent=0 // pred_fallthru
    _
  // Predicated region
  $region34: #{bottleneck_forward.6} parent=0 // pred_check
    _
  $region35: #{bottleneck_forward.6} parent=0 // pred_check_branch
    %1273 = sbr.rel (0) target = $region37
  $region36: #{bottleneck_forward.6} parent=0 // pred_region
    _
  $region37: #{bottleneck_forward.6} parent=0 // pred_fallthru
    _
  // Predicated region
  $region38: #{bottleneck_forward.6} parent=0 // pred_check
    _
  $region39: #{bottleneck_forward.6} parent=0 // pred_check_branch
    %1275 = sbr.rel (0) target = $region41
  $region40: #{bottleneck_forward.6} parent=0 // pred_region
    _
  $region41: #{bottleneck_forward.6} parent=0 // pred_fallthru
    _

// kernel: bottleneck_forward.5
$region0: #{bottleneck_forward.5}
  #allocation0 [shape = 'u32[]', space=smem, size = 0x4, offset = 0x4, fixed_abs, tag = 'smem constant byte address 0x4 - core index']
  #allocation1 [shape = 'u32[144,128]{1,0:T(1,128)}', space=vmem, size = 0x12000, scoped, tag = 'internal scratch']
  #allocation2 [shape = 'f32[256,128]{1,0:T(8,128)}', space=vmem, size = 0x20000, scoped, tag = 'scratch operand']
  #allocation3 [shape = 'bf16[18,18,128]{2,1,0:T(8,128)(2,1)}', space=vmem, size = 0x1b000, scoped, tag = 'scratch operand']
  %s0 = inlined_call_operand.vmem [shape: bf16[2,16,16,256], index: 0, kind: input, shape index: {}]
  %s1 = inlined_call_operand.vmem [shape: f32[1,128], index: 1, kind: input, shape index: {}]
  %s2 = inlined_call_operand.vmem [shape: f32[1,128], index: 2, kind: input, shape index: {}]
  %s3 = inlined_call_operand.vmem [shape: bf16[9,128,128], index: 3, kind: input, shape index: {}]
  %s4 = inlined_call_operand.vmem [shape: bf16[2,256,128], index: 4, kind: output, shape index: {0}]
  %s5 = inlined_call_operand.vmem [shape: f32[2,1,128], index: 5, kind: output, shape index: {1}]
  %s6 = inlined_call_operand.vmem [shape: f32[2,1,128], index: 6, kind: output, shape index: {2}]
  %7 = xla_tuple %s4, %s5, %s6
  %s8 = sld [smem:[#allocation0]]
  $region106: #{bottleneck_forward.5} parent=0
    _
  %s10 = ssub.s32 1, %s8
  %s11 = scalar_select 0, %s10, %s8
  $region1: #{bottleneck_forward.5} parent=0
    #allocation4 [shape = 'u8[131072]{0}', space=vmem, size = 0x20000, scoped, tag = 'input window, operand 0']
    loop: start=0, step=1, limit=4
    $region2: #{bottleneck_forward.5} parent=1 // loop_pre_header
      _
    $region3: #{bottleneck_forward.5} parent=1 // loop_header
      %s13 = sphi 0, %s17
      %p14 = scmp.ge.s32.totalorder %s13, 4
      %s23 = sphi 0, %s25
      %s26 = sphi 0, %s23
      %s27 = sphi 0, %s26
      %s43 = sphi 0, %s27
      %s47 = sphi 0, %s47
      %s49 = sphi 0, %s47
      %s50 = sphi 0, %s49
      %s64 = sphi 0, %s50
      %s68 = sphi 0, %s68
      %s70 = sphi 0, %s68
      %s71 = sphi 0, %s70
      %s85 = sphi 0, %s71
      %s89 = sphi 0, %s89
      %s91 = sphi 0, %s89
      %s92 = sphi 0, %s91
      %s106 = sphi 0, %s92
      %s112 = sphi 0, %s114
      %s115 = sphi 0, %s112
      %s116 = sphi 0, %s115
      %s132 = sphi 0, %s116
      %s138 = sphi 0, %s140
      %s141 = sphi 0, %s138
      %s142 = sphi 0, %s141
      %s158 = sphi 0, %s142
      %s164 = sphi 0, %s166
      %s167 = sphi 0, %s164
      %s168 = sphi 0, %s167
      %s184 = sphi 0, %s168
    $region4: #{bottleneck_forward.5} parent=1 // loop_header_branch
      %16 = sbr.rel (%p14) target = $region8
    $region5: #{bottleneck_forward.5} parent=1 // loop_body
      %s18 = ssub.s32 %s13, 1
      %s19 = ssub.s32 %s13, 2
      %s20 = sadd.s32 %s13, 1
      %s21 = ssub.s32 %s13, %s20
      %p22 = scmp.eq.s32.totalorder %s21, 0
      %s24 = sadd.s32 %s23, 1
      %s25 = scalar_select %p22, %s23, %s24
      %p28 = pneg %p22
      %p29 = scmp.eq.s32.totalorder %s13, 1
      %p30 = por %p28, %p29
      %p31 = scmp.ne.s32.totalorder %s23, %s26
      %p32 = scmp.eq.s32.totalorder %s13, 0
      %p33 = por %p31, %p32
      %p34 = scmp.ne.s32.totalorder %s23, %s26
      %p35 = scmp.eq.s32.totalorder %s18, 1
      %p36 = por %p34, %p35
      %p37 = scmp.ne.s32.totalorder %s26, %s27
      %p38 = scmp.eq.s32.totalorder %s18, 0
      %p39 = por %p37, %p38
      %p40 = scmp.ne.s32.totalorder %s26, %s27
      %p41 = scmp.eq.s32.totalorder %s19, 1
      %p42 = por %p40, %p41
      %p44 = scmp.ne.s32.totalorder %s27, %s43
      %p45 = scmp.eq.s32.totalorder %s19, 0
      %p46 = por %p44, %p45
      %s48 = sadd.s32 %s47, 1
      %p51 = scmp.eq.s32.totalorder %s13, 1
      %p52 = scmp.ne.s32.totalorder %s47, %s49
      %p53 = scmp.eq.s32.totalorder %s13, 0
      %p54 = por %p52, %p53
      %p55 = scmp.ne.s32.totalorder %s47, %s49
      %p56 = scmp.eq.s32.totalorder %s18, 1
      %p57 = por %p55, %p56
      %p58 = scmp.ne.s32.totalorder %s49, %s50
      %p59 = scmp.eq.s32.totalorder %s18, 0
      %p60 = por %p58, %p59
      %p61 = scmp.ne.s32.totalorder %s49, %s50
      %p62 = scmp.eq.s32.totalorder %s19, 1
      %p63 = por %p61, %p62
      %p65 = scmp.ne.s32.totalorder %s50, %s64
      %p66 = scmp.eq.s32.totalorder %s19, 0
      %p67 = por %p65, %p66
      %s69 = sadd.s32 %s68, 1
      %p72 = scmp.eq.s32.totalorder %s13, 1
      %p73 = scmp.ne.s32.totalorder %s68, %s70
      %p74 = scmp.eq.s32.totalorder %s13, 0
      %p75 = por %p73, %p74
      %p76 = scmp.ne.s32.totalorder %s68, %s70
      %p77 = scmp.eq.s32.totalorder %s18, 1
      %p78 = por %p76, %p77
      %p79 = scmp.ne.s32.totalorder %s70, %s71
      %p80 = scmp.eq.s32.totalorder %s18, 0
      %p81 = por %p79, %p80
      %p82 = scmp.ne.s32.totalorder %s70, %s71
      %p83 = scmp.eq.s32.totalorder %s19, 1
      %p84 = por %p82, %p83
      %p86 = scmp.ne.s32.totalorder %s71, %s85
      %p87 = scmp.eq.s32.totalorder %s19, 0
      %p88 = por %p86, %p87
      %s90 = sadd.s32 %s89, 1
      %p93 = scmp.eq.s32.totalorder %s13, 1
      %p94 = scmp.ne.s32.totalorder %s89, %s91
      %p95 = scmp.eq.s32.totalorder %s13, 0
      %p96 = por %p94, %p95
      %p97 = scmp.ne.s32.totalorder %s89, %s91
      %p98 = scmp.eq.s32.totalorder %s18, 1
      %p99 = por %p97, %p98
      %p100 = scmp.ne.s32.totalorder %s91, %s92
      %p101 = scmp.eq.s32.totalorder %s18, 0
      %p102 = por %p100, %p101
      %p103 = scmp.ne.s32.totalorder %s91, %s92
      %p104 = scmp.eq.s32.totalorder %s19, 1
      %p105 = por %p103, %p104
      %p107 = scmp.ne.s32.totalorder %s92, %s106
      %p108 = scmp.eq.s32.totalorder %s19, 0
      %p109 = por %p107, %p108
      %s110 = ssub.s32 %s13, %s20
      %p111 = scmp.eq.s32.totalorder %s110, 0
      %s113 = sadd.s32 %s112, 1
      %s114 = scalar_select %p111, %s112, %s113
      %p117 = pneg %p111
      %p118 = scmp.eq.s32.totalorder %s13, 1
      %p119 = por %p117, %p118
      %p120 = scmp.ne.s32.totalorder %s112, %s115
      %p121 = scmp.eq.s32.totalorder %s13, 0
      %p122 = por %p120, %p121
      %p123 = scmp.ne.s32.totalorder %s112, %s115
      %p124 = scmp.eq.s32.totalorder %s18, 1
      %p125 = por %p123, %p124
      %p126 = scmp.ne.s32.totalorder %s115, %s116
      %p127 = scmp.eq.s32.totalorder %s18, 0
      %p128 = por %p126, %p127
      %p129 = scmp.ne.s32.totalorder %s115, %s116
      %p130 = scmp.eq.s32.totalorder %s19, 1
      %p131 = por %p129, %p130
      %p133 = scmp.ne.s32.totalorder %s116, %s132
      %p134 = scmp.eq.s32.totalorder %s19, 0
      %p135 = por %p133, %p134
      %s136 = ssub.s32 %s13, %s20
      %p137 = scmp.eq.s32.totalorder %s136, 0
      %s139 = sadd.s32 %s138, 1
      %s140 = scalar_select %p137, %s138, %s139
      %p143 = pneg %p137
      %p144 = scmp.eq.s32.totalorder %s13, 1
      %p145 = por %p143, %p144
      %p146 = scmp.ne.s32.totalorder %s138, %s141
      %p147 = scmp.eq.s32.totalorder %s13, 0
      %p148 = por %p146, %p147
      %p149 = scmp.ne.s32.totalorder %s138, %s141
      %p150 = scmp.eq.s32.totalorder %s18, 1
      %p151 = por %p149, %p150
      %p152 = scmp.ne.s32.totalorder %s141, %s142
      %p153 = scmp.eq.s32.totalorder %s18, 0
      %p154 = por %p152, %p153
      %p155 = scmp.ne.s32.totalorder %s141, %s142
      %p156 = scmp.eq.s32.totalorder %s19, 1
      %p157 = por %p155, %p156
      %p159 = scmp.ne.s32.totalorder %s142, %s158
      %p160 = scmp.eq.s32.totalorder %s19, 0
      %p161 = por %p159, %p160
      %s162 = ssub.s32 %s13, %s20
      %p163 = scmp.eq.s32.totalorder %s162, 0
      %s165 = sadd.s32 %s164, 1
      %s166 = scalar_select %p163, %s164, %s165
      %p169 = pneg %p163
      %p170 = scmp.eq.s32.totalorder %s13, 1
      %p171 = por %p169, %p170
      %p172 = scmp.ne.s32.totalorder %s164, %s167
      %p173 = scmp.eq.s32.totalorder %s13, 0
      %p174 = por %p172, %p173
      %p175 = scmp.ne.s32.totalorder %s164, %s167
      %p176 = scmp.eq.s32.totalorder %s18, 1
      %p177 = por %p175, %p176
      %p178 = scmp.ne.s32.totalorder %s167, %s168
      %p179 = scmp.eq.s32.totalorder %s18, 0
      %p180 = por %p178, %p179
      %p181 = scmp.ne.s32.totalorder %s167, %s168
      %p182 = scmp.eq.s32.totalorder %s19, 1
      %p183 = por %p181, %p182
      %p185 = scmp.ne.s32.totalorder %s168, %s184
      %p186 = scmp.eq.s32.totalorder %s19, 0
      %p187 = por %p185, %p186
      %p188 = scmp.le.s32.totalorder 1, %s13
      %p189 = scmp.lt.s32.totalorder %s13, 3
      %p190 = pnand %p188, %p189
      %p191 = pneg %p190
      // Predicated region
      $region9: #{bottleneck_forward.5} parent=5 // pred_check
        _
      $region10: #{bottleneck_forward.5} parent=5 // pred_check_branch
        %193 = sbr.rel (%p190) target = $region12
      $region11: #{bottleneck_forward.5} parent=5 // pred_region
        %s194 = ssub.s32 %s13, 1
        // Predicated region
        $region13: #{bottleneck_forward.5} parent=11 // pred_check
          %p195 = pneg %p60
        $region14: #{bottleneck_forward.5} parent=11 // pred_check_branch
          %197 = sbr.rel (%p195) target = $region16
        $region15: #{bottleneck_forward.5} parent=11 // pred_region
          _
        $region16: #{bottleneck_forward.5} parent=11 // pred_fallthru
          _
        // Predicated region
        $region17: #{bottleneck_forward.5} parent=11 // pred_check
          %p198 = pneg %p81
        $region18: #{bottleneck_forward.5} parent=11 // pred_check_branch
          %200 = sbr.rel (%p198) target = $region20
        $region19: #{bottleneck_forward.5} parent=11 // pred_region
          _
        $region20: #{bottleneck_forward.5} parent=11 // pred_fallthru
          _
        // Predicated region
        $region21: #{bottleneck_forward.5} parent=11 // pred_check
          %p201 = pneg %p102
        $region22: #{bottleneck_forward.5} parent=11 // pred_check_branch
          %203 = sbr.rel (%p201) target = $region24
        $region23: #{bottleneck_forward.5} parent=11 // pred_region
          _
        $region24: #{bottleneck_forward.5} parent=11 // pred_fallthru
          _
      $region12: #{bottleneck_forward.5} parent=5 // pred_fallthru
        _
      %p204 = scmp.lt.s32.totalorder %s13, 2
      // Predicated region
      $region25: #{bottleneck_forward.5} parent=5 // pred_check
        %p205 = pneg %p204
      $region26: #{bottleneck_forward.5} parent=5 // pred_check_branch
        %207 = sbr.rel (%p205) target = $region28
      $region27: #{bottleneck_forward.5} parent=5 // pred_region
        // Predicated region
        $region29: #{bottleneck_forward.5} parent=27 // pred_check
          %p208 = pneg %p33
        $region30: #{bottleneck_forward.5} parent=27 // pred_check_branch
          %210 = sbr.rel (%p208) target = $region32
        $region31: #{bottleneck_forward.5} parent=27 // pred_region
          %s211 = sand.u32 %s23, 1
          %s212 = sand.u32 %s23, 1
          %s213 = smul.addr %s212, 128
          %s214 = scalar_lea.vmem [#allocation4], %s213
          %s215 = smul.addr %s13, 64
          %s216 = sadd.s32 1, %s215
          %s217 = smul.addr %s216, 4
          %s218 = scalar_lea.vmem %s0, %s217
          // Predicated region
          $region33: #{bottleneck_forward.5} parent=31 // pred_check
            _
          $region34: #{bottleneck_forward.5} parent=31 // pred_check_branch
            %220 = sbr.rel (0) target = $region36
          $region35: #{bottleneck_forward.5} parent=31 // pred_region
            // Predicated region
            $region37: #{bottleneck_forward.5} parent=35 // pred_check
              _
            $region38: #{bottleneck_forward.5} parent=35 // pred_check_branch
              %222 = sbr.rel target = $region40
            $region39: #{bottleneck_forward.5} parent=35 // pred_region
              // Predicated region
              $region52: #{bottleneck_forward.5} parent=39 // pred_check
                _
              $region53: #{bottleneck_forward.5} parent=39 // pred_check_branch
                %299 = sbr.rel (0) target = $region55
              $region54: #{bottleneck_forward.5} parent=39 // pred_region
                loop: start=0, step=1, limit=1
                $region56: #{bottleneck_forward.5} parent=54 // loop_pre_header
                  _
                $region57: #{bottleneck_forward.5} parent=54 // loop_header
                  %s301 = sphi 0, %s305
                  %p302 = scmp.ge.s32.totalorder %s301, 1
                  %s306 = sphi %s218, %s218
                  %s307 = sphi %s214, %s214
                $region58: #{bottleneck_forward.5} parent=54 // loop_header_branch
                  %304 = sbr.rel (%p302) target = $region62
                $region59: #{bottleneck_forward.5} parent=54 // loop_body
                  _
                $region60: #{bottleneck_forward.5} parent=54 // loop_footer
                  %s305 = sadd.s32 1, %s301
                $region61: #{bottleneck_forward.5} parent=54 // loop_footer_branch
                  %300 = sbr.rel target = $region57
                $region62: #{bottleneck_forward.5} parent=54 // loop_exit
                  _
                loop: start=0, step=1, limit=1
                $region63: #{bottleneck_forward.5} parent=54 // loop_pre_header
                  _
                $region64: #{bottleneck_forward.5} parent=54 // loop_header
                  %s310 = sphi 0, %s314
                  %p311 = scmp.ge.s32.totalorder %s310, 1
                  %s315 = sphi %s218, %s218
                  %s316 = sphi %s214, %s214
                $region65: #{bottleneck_forward.5} parent=54 // loop_header_branch
                  %313 = sbr.rel (%p311) target = $region69
                $region66: #{bottleneck_forward.5} parent=54 // loop_body
                  %v317 = vld [vmem:[%s315] sm:$0xf]
                  %318 = vst [vmem:[%s316] sm:$0xf] %v317
                  %v319 = vld [vmem:[%s315 + $0x8] sm:$0xf]
                  %320 = vst [vmem:[%s316 + $0x4] sm:$0xf] %v319
                  %v321 = vld [vmem:[%s315 + $0x10] sm:$0xf]
                  %322 = vst [vmem:[%s316 + $0x8] sm:$0xf] %v321
                  %v323 = vld [vmem:[%s315 + $0x18] sm:$0xf]
                  %324 = vst [vmem:[%s316 + $0xc] sm:$0xf] %v323
                  %v325 = vld [vmem:[%s315 + $0x20] sm:$0xf]
                  %326 = vst [vmem:[%s316 + $0x10] sm:$0xf] %v325
                  %v327 = vld [vmem:[%s315 + $0x28] sm:$0xf]
                  %328 = vst [vmem:[%s316 + $0x14] sm:$0xf] %v327
                  %v329 = vld [vmem:[%s315 + $0x30] sm:$0xf]
                  %330 = vst [vmem:[%s316 + $0x18] sm:$0xf] %v329
                  %v331 = vld [vmem:[%s315 + $0x38] sm:$0xf]
                  %332 = vst [vmem:[%s316 + $0x1c] sm:$0xf] %v331
                  %v333 = vld [vmem:[%s315 + $0x40] sm:$0xf]
                  %334 = vst [vmem:[%s316 + $0x20] sm:$0xf] %v333
                  %v335 = vld [vmem:[%s315 + $0x48] sm:$0xf]
                  %336 = vst [vmem:[%s316 + $0x24] sm:$0xf] %v335
                  %v337 = vld [vmem:[%s315 + $0x50] sm:$0xf]
                  %338 = vst [vmem:[%s316 + $0x28] sm:$0xf] %v337
                  %v339 = vld [vmem:[%s315 + $0x58] sm:$0xf]
                  %340 = vst [vmem:[%s316 + $0x2c] sm:$0xf] %v339
                  %v341 = vld [vmem:[%s315 + $0x60] sm:$0xf]
                  %342 = vst [vmem:[%s316 + $0x30] sm:$0xf] %v341
                  %v343 = vld [vmem:[%s315 + $0x68] sm:$0xf]
                  %344 = vst [vmem:[%s316 + $0x34] sm:$0xf] %v343
                  %v345 = vld [vmem:[%s315 + $0x70] sm:$0xf]
                  %346 = vst [vmem:[%s316 + $0x38] sm:$0xf] %v345
                  %v347 = vld [vmem:[%s315 + $0x78] sm:$0xf]
                  %348 = vst [vmem:[%s316 + $0x3c] sm:$0xf] %v347
                  %v349 = vld [vmem:[%s315 + $0x80] sm:$0xf]
                  %350 = vst [vmem:[%s316 + $0x40] sm:$0xf] %v349
                  %v351 = vld [vmem:[%s315 + $0x88] sm:$0xf]
                  %352 = vst [vmem:[%s316 + $0x44] sm:$0xf] %v351
                  %v353 = vld [vmem:[%s315 + $0x90] sm:$0xf]
                  %354 = vst [vmem:[%s316 + $0x48] sm:$0xf] %v353
                  %v355 = vld [vmem:[%s315 + $0x98] sm:$0xf]
                  %356 = vst [vmem:[%s316 + $0x4c] sm:$0xf] %v355
                  %v357 = vld [vmem:[%s315 + $0xa0] sm:$0xf]
                  %358 = vst [vmem:[%s316 + $0x50] sm:$0xf] %v357
                  %v359 = vld [vmem:[%s315 + $0xa8] sm:$0xf]
                  %360 = vst [vmem:[%s316 + $0x54] sm:$0xf] %v359
                  %v361 = vld [vmem:[%s315 + $0xb0] sm:$0xf]
                  %362 = vst [vmem:[%s316 + $0x58] sm:$0xf] %v361
                  %v363 = vld [vmem:[%s315 + $0xb8] sm:$0xf]
                  %364 = vst [vmem:[%s316 + $0x5c] sm:$0xf] %v363
                  %v365 = vld [vmem:[%s315 + $0xc0] sm:$0xf]
                  %366 = vst [vmem:[%s316 + $0x60] sm:$0xf] %v365
                  %v367 = vld [vmem:[%s315 + $0xc8] sm:$0xf]
                  %368 = vst [vmem:[%s316 + $0x64] sm:$0xf] %v367
                  %v369 = vld [vmem:[%s315 + $0xd0] sm:$0xf]
                  %370 = vst [vmem:[%s316 + $0x68] sm:$0xf] %v369
                  %v371 = vld [vmem:[%s315 + $0xd8] sm:$0xf]
                  %372 = vst [vmem:[%s316 + $0x6c] sm:$0xf] %v371
                  %v373 = vld [vmem:[%s315 + $0xe0] sm:$0xf]
                  %374 = vst [vmem:[%s316 + $0x70] sm:$0xf] %v373
                  %v375 = vld [vmem:[%s315 + $0xe8] sm:$0xf]
                  %376 = vst [vmem:[%s316 + $0x74] sm:$0xf] %v375
                  %v377 = vld [vmem:[%s315 + $0xf0] sm:$0xf]
                  %378 = vst [vmem:[%s316 + $0x78] sm:$0xf] %v377
                  %v379 = vld [vmem:[%s315 + $0xf8] sm:$0xf]
                  %380 = vst [vmem:[%s316 + $0x7c] sm:$0xf] %v379
                $region67: #{bottleneck_forward.5} parent=54 // loop_footer
                  %s314 = sadd.s32 1, %s310
                $region68: #{bottleneck_forward.5} parent=54 // loop_footer_branch
                  %309 = sbr.rel target = $region64
                $region69: #{bottleneck_forward.5} parent=54 // loop_exit
                  _
              $region55: #{bottleneck_forward.5} parent=39 // pred_fallthru
                _
            $region40: #{bottleneck_forward.5} parent=35 // pred_fallthru
              _
            // Predicated region
            $region41: #{bottleneck_forward.5} parent=35 // pred_check
              _
            $region42: #{bottleneck_forward.5} parent=35 // pred_check_branch
              %224 = sbr.rel (0) target = $region44
            $region43: #{bottleneck_forward.5} parent=35 // pred_region
              loop: start=0, step=1, limit=1
              $region45: #{bottleneck_forward.5} parent=43 // loop_pre_header
                _
              $region46: #{bottleneck_forward.5} parent=43 // loop_header
                %s227 = sphi 0, %s231
                %p228 = scmp.ge.s32.totalorder %s227, 1
                %s232 = sphi %s218, %s218
                %s233 = sphi %s214, %s214
              $region47: #{bottleneck_forward.5} parent=43 // loop_header_branch
                %230 = sbr.rel (%p228) target = $region51
              $region48: #{bottleneck_forward.5} parent=43 // loop_body
                %v234 = vld [vmem:[%s232] sm:$0xf]
                %235 = vst [vmem:[%s233] sm:$0xf] %v234
                %v236 = vld [vmem:[%s232 + $0x8] sm:$0xf]
                %237 = vst [vmem:[%s233 + $0x4] sm:$0xf] %v236
                %v238 = vld [vmem:[%s232 + $0x10] sm:$0xf]
                %239 = vst [vmem:[%s233 + $0x8] sm:$0xf] %v238
                %v240 = vld [vmem:[%s232 + $0x18] sm:$0xf]
                %241 = vst [vmem:[%s233 + $0xc] sm:$0xf] %v240
                %v242 = vld [vmem:[%s232 + $0x20] sm:$0xf]
                %243 = vst [vmem:[%s233 + $0x10] sm:$0xf] %v242
                %v244 = vld [vmem:[%s232 + $0x28] sm:$0xf]
                %245 = vst [vmem:[%s233 + $0x14] sm:$0xf] %v244
                %v246 = vld [vmem:[%s232 + $0x30] sm:$0xf]
                %247 = vst [vmem:[%s233 + $0x18] sm:$0xf] %v246
                %v248 = vld [vmem:[%s232 + $0x38] sm:$0xf]
                %249 = vst [vmem:[%s233 + $0x1c] sm:$0xf] %v248
                %v250 = vld [vmem:[%s232 + $0x40] sm:$0xf]
                %251 = vst [vmem:[%s233 + $0x20] sm:$0xf] %v250
                %v252 = vld [vmem:[%s232 + $0x48] sm:$0xf]
                %253 = vst [vmem:[%s233 + $0x24] sm:$0xf] %v252
                %v254 = vld [vmem:[%s232 + $0x50] sm:$0xf]
                %255 = vst [vmem:[%s233 + $0x28] sm:$0xf] %v254
                %v256 = vld [vmem:[%s232 + $0x58] sm:$0xf]
                %257 = vst [vmem:[%s233 + $0x2c] sm:$0xf] %v256
                %v258 = vld [vmem:[%s232 + $0x60] sm:$0xf]
                %259 = vst [vmem:[%s233 + $0x30] sm:$0xf] %v258
                %v260 = vld [vmem:[%s232 + $0x68] sm:$0xf]
                %261 = vst [vmem:[%s233 + $0x34] sm:$0xf] %v260
                %v262 = vld [vmem:[%s232 + $0x70] sm:$0xf]
                %263 = vst [vmem:[%s233 + $0x38] sm:$0xf] %v262
                %v264 = vld [vmem:[%s232 + $0x78] sm:$0xf]
                %265 = vst [vmem:[%s233 + $0x3c] sm:$0xf] %v264
                %v266 = vld [vmem:[%s232 + $0x80] sm:$0xf]
                %267 = vst [vmem:[%s233 + $0x40] sm:$0xf] %v266
                %v268 = vld [vmem:[%s232 + $0x88] sm:$0xf]
                %269 = vst [vmem:[%s233 + $0x44] sm:$0xf] %v268
                %v270 = vld [vmem:[%s232 + $0x90] sm:$0xf]
                %271 = vst [vmem:[%s233 + $0x48] sm:$0xf] %v270
                %v272 = vld [vmem:[%s232 + $0x98] sm:$0xf]
                %273 = vst [vmem:[%s233 + $0x4c] sm:$0xf] %v272
                %v274 = vld [vmem:[%s232 + $0xa0] sm:$0xf]
                %275 = vst [vmem:[%s233 + $0x50] sm:$0xf] %v274
                %v276 = vld [vmem:[%s232 + $0xa8] sm:$0xf]
                %277 = vst [vmem:[%s233 + $0x54] sm:$0xf] %v276
                %v278 = vld [vmem:[%s232 + $0xb0] sm:$0xf]
                %279 = vst [vmem:[%s233 + $0x58] sm:$0xf] %v278
                %v280 = vld [vmem:[%s232 + $0xb8] sm:$0xf]
                %281 = vst [vmem:[%s233 + $0x5c] sm:$0xf] %v280
                %v282 = vld [vmem:[%s232 + $0xc0] sm:$0xf]
                %283 = vst [vmem:[%s233 + $0x60] sm:$0xf] %v282
                %v284 = vld [vmem:[%s232 + $0xc8] sm:$0xf]
                %285 = vst [vmem:[%s233 + $0x64] sm:$0xf] %v284
                %v286 = vld [vmem:[%s232 + $0xd0] sm:$0xf]
                %287 = vst [vmem:[%s233 + $0x68] sm:$0xf] %v286
                %v288 = vld [vmem:[%s232 + $0xd8] sm:$0xf]
                %289 = vst [vmem:[%s233 + $0x6c] sm:$0xf] %v288
                %v290 = vld [vmem:[%s232 + $0xe0] sm:$0xf]
                %291 = vst [vmem:[%s233 + $0x70] sm:$0xf] %v290
                %v292 = vld [vmem:[%s232 + $0xe8] sm:$0xf]
                %293 = vst [vmem:[%s233 + $0x74] sm:$0xf] %v292
                %v294 = vld [vmem:[%s232 + $0xf0] sm:$0xf]
                %295 = vst [vmem:[%s233 + $0x78] sm:$0xf] %v294
                %v296 = vld [vmem:[%s232 + $0xf8] sm:$0xf]
                %297 = vst [vmem:[%s233 + $0x7c] sm:$0xf] %v296
              $region49: #{bottleneck_forward.5} parent=43 // loop_footer
                %s231 = sadd.s32 1, %s227
              $region50: #{bottleneck_forward.5} parent=43 // loop_footer_branch
                %226 = sbr.rel target = $region46
              $region51: #{bottleneck_forward.5} parent=43 // loop_exit
                _
            $region44: #{bottleneck_forward.5} parent=35 // pred_fallthru
              _
          $region36: #{bottleneck_forward.5} parent=31 // pred_fallthru
            _
          %381 = vnop
        $region32: #{bottleneck_forward.5} parent=27 // pred_fallthru
          _
      $region28: #{bottleneck_forward.5} parent=5 // pred_fallthru
        _
      %p382 = scmp.le.s32.totalorder 1, %s13
      %p383 = scmp.lt.s32.totalorder %s13, 3
      %p384 = pnand %p382, %p383
      %p385 = pneg %p384
      // Predicated region
      $region70: #{bottleneck_forward.5} parent=5 // pred_check
        _
      $region71: #{bottleneck_forward.5} parent=5 // pred_check_branch
        %387 = sbr.rel (%p384) target = $region73
      $region72: #{bottleneck_forward.5} parent=5 // pred_region
        %s388 = ssub.s32 %s13, 1
        %s389 = sand.u32 %s26, 1
        %s390 = sand.u32 %s26, 1
        %s391 = smul.addr %s390, 128
        %s392 = scalar_lea.vmem [#allocation4], %s391
        // Predicated region
        $region74: #{bottleneck_forward.5} parent=72 // pred_check
          %p393 = pneg %p39
        $region75: #{bottleneck_forward.5} parent=72 // pred_check_branch
          %395 = sbr.rel (%p393) target = $region77
        $region76: #{bottleneck_forward.5} parent=72 // pred_region
          _
        $region77: #{bottleneck_forward.5} parent=72 // pred_fallthru
          _
        %s396 = sand.u32 %s26, 1
        %s397 = sand.u32 %s26, 1
        %s398 = smul.addr %s397, 128
        %s399 = scalar_lea.vmem [#allocation4], %s398
        %p400 = pneg %p39
        %p401 = pneg %p36
        %p402 = pneg %p60
        %p403 = pneg %p57
        %p404 = pneg %p81
        %p405 = pneg %p78
        %p406 = pneg %p102
        %p407 = pneg %p99
        %p408 = pneg %p128
        %p409 = pneg %p125
        %p410 = scmp.lt.s32.totalorder %s18, 1
        %s411 = scalar_select %p410, %s18, 1
        %s412 = smul.addr %s411, 32
        %s413 = smul.addr %s412, 4
        %s414 = scalar_lea.vmem %s4, %s413
        %p415 = pneg %p154
        %p416 = pneg %p151
        %p417 = scmp.lt.s32.totalorder %s18, 1
        %s418 = scalar_select %p417, %s18, 1
        %s419 = scalar_lea.vmem %s5, %s418
        %p420 = pneg %p180
        %p421 = pneg %p177
        %p422 = scmp.lt.s32.totalorder %s18, 1
        %s423 = scalar_select %p422, %s18, 1
        %s424 = scalar_lea.vmem %s6, %s423
        %p425 = scmp.lt.s32.totalorder %s18, 1
        %s426 = scalar_select %p425, %s18, 1
        %s427 = smul.addr %s426, 32
        %s428 = smul.addr %s427, 4
        %s429 = scalar_lea.vmem %s4, %s428
        %p430 = scmp.lt.s32.totalorder %s18, 1
        %s431 = scalar_select %p430, %s18, 1
        %s432 = scalar_lea.vmem %s5, %s431
        %p433 = scmp.lt.s32.totalorder %s18, 1
        %s434 = scalar_select %p433, %s18, 1
        %s435 = scalar_lea.vmem %s6, %s434
        %437 = vst [vmem:[#allocation3] sm:$0xf] 0
        %438 = vst [vmem:[#allocation3 + $0x4] sm:$0xf] 0
        %439 = vst [vmem:[#allocation3 + $0x8] sm:$0x1] 0
        %440 = vst [vmem:[#allocation3 + $0xc] sm:$0xf] 0
        %441 = vst [vmem:[#allocation3 + $0x10] sm:$0xf] 0
        %442 = vst [vmem:[#allocation3 + $0x14] sm:$0x1] 0
        %443 = vst [vmem:[#allocation3 + $0x18] sm:$0xf] 0
        %444 = vst [vmem:[#allocation3 + $0x1c] sm:$0xf] 0
        %445 = vst [vmem:[#allocation3 + $0x20] sm:$0x1] 0
        %446 = vst [vmem:[#allocation3 + $0x24] sm:$0xf] 0
        %447 = vst [vmem:[#allocation3 + $0x28] sm:$0xf] 0
        %448 = vst [vmem:[#allocation3 + $0x2c] sm:$0x1] 0
        %449 = vst [vmem:[#allocation3 + $0x30] sm:$0xf] 0
        %450 = vst [vmem:[#allocation3 + $0x34] sm:$0xf] 0
        %451 = vst [vmem:[#allocation3 + $0x38] sm:$0x1] 0
        %452 = vst [vmem:[#allocation3 + $0x3c] sm:$0xf] 0
        %453 = vst [vmem:[#allocation3 + $0x40] sm:$0xf] 0
        %454 = vst [vmem:[#allocation3 + $0x44] sm:$0x1] 0
        %455 = vst [vmem:[#allocation3 + $0x48] sm:$0xf] 0
        %456 = vst [vmem:[#allocation3 + $0x4c] sm:$0xf] 0
        %457 = vst [vmem:[#allocation3 + $0x50] sm:$0x1] 0
        %458 = vst [vmem:[#allocation3 + $0x54] sm:$0xf] 0
        %459 = vst [vmem:[#allocation3 + $0x58] sm:$0xf] 0
        %460 = vst [vmem:[#allocation3 + $0x5c] sm:$0x1] 0
        %461 = vst [vmem:[#allocation3 + $0x60] sm:$0xf] 0
        %462 = vst [vmem:[#allocation3 + $0x64] sm:$0xf] 0
        %463 = vst [vmem:[#allocation3 + $0x68] sm:$0x1] 0
        %464 = vst [vmem:[#allocation3 + $0x6c] sm:$0xf] 0
        %465 = vst [vmem:[#allocation3 + $0x70] sm:$0xf] 0
        %466 = vst [vmem:[#allocation3 + $0x74] sm:$0x1] 0
        %467 = vst [vmem:[#allocation3 + $0x78] sm:$0xf] 0
        %468 = vst [vmem:[#allocation3 + $0x7c] sm:$0xf] 0
        %469 = vst [vmem:[#allocation3 + $0x80] sm:$0x1] 0
        %470 = vst [vmem:[#allocation3 + $0x84] sm:$0xf] 0
        %471 = vst [vmem:[#allocation3 + $0x88] sm:$0xf] 0
        %472 = vst [vmem:[#allocation3 + $0x8c] sm:$0x1] 0
        %473 = vst [vmem:[#allocation3 + $0x90] sm:$0xf] 0
        %474 = vst [vmem:[#allocation3 + $0x94] sm:$0xf] 0
        %475 = vst [vmem:[#allocation3 + $0x98] sm:$0x1] 0
        %476 = vst [vmem:[#allocation3 + $0x9c] sm:$0xf] 0
        %477 = vst [vmem:[#allocation3 + $0xa0] sm:$0xf] 0
        %478 = vst [vmem:[#allocation3 + $0xa4] sm:$0x1] 0
        %479 = vst [vmem:[#allocation3 + $0xa8] sm:$0xf] 0
        %480 = vst [vmem:[#allocation3 + $0xac] sm:$0xf] 0
        %481 = vst [vmem:[#allocation3 + $0xb0] sm:$0x1] 0
        %482 = vst [vmem:[#allocation3 + $0xb4] sm:$0xf] 0
        %483 = vst [vmem:[#allocation3 + $0xb8] sm:$0xf] 0
        %484 = vst [vmem:[#allocation3 + $0xbc] sm:$0x1] 0
        %485 = vst [vmem:[#allocation3 + $0xc0] sm:$0xf] 0
        %486 = vst [vmem:[#allocation3 + $0xc4] sm:$0xf] 0
        %487 = vst [vmem:[#allocation3 + $0xc8] sm:$0x1] 0
        %488 = vst [vmem:[#allocation3 + $0xcc] sm:$0xf] 0
        %489 = vst [vmem:[#allocation3 + $0xd0] sm:$0xf] 0
        %490 = vst [vmem:[#allocation3 + $0xd4] sm:$0x1] 0
        %v491 = vld [vmem:[%s392] sm:$0xf]
        %v492 = vld [vmem:[%s392 + $0x4] sm:$0xf]
        %v493 = vld [vmem:[%s392 + $0x8] sm:$0xf]
        %v494 = vld [vmem:[%s392 + $0xc] sm:$0xf]
        %v495 = vld [vmem:[%s392 + $0x10] sm:$0xf]
        %v496 = vld [vmem:[%s392 + $0x14] sm:$0xf]
        %v497 = vld [vmem:[%s392 + $0x18] sm:$0xf]
        %v498 = vld [vmem:[%s392 + $0x1c] sm:$0xf]
        %v499 = vld [vmem:[%s392 + $0x20] sm:$0xf]
        %v500 = vld [vmem:[%s392 + $0x24] sm:$0xf]
        %v501 = vld [vmem:[%s392 + $0x28] sm:$0xf]
        %v502 = vld [vmem:[%s392 + $0x2c] sm:$0xf]
        %v503 = vld [vmem:[%s392 + $0x30] sm:$0xf]
        %v504 = vld [vmem:[%s392 + $0x34] sm:$0xf]
        %v505 = vld [vmem:[%s392 + $0x38] sm:$0xf]
        %v506 = vld [vmem:[%s392 + $0x3c] sm:$0xf]
        %v507 = vld [vmem:[%s392 + $0x40] sm:$0xf]
        %v508 = vld [vmem:[%s392 + $0x44] sm:$0xf]
        %v509 = vld [vmem:[%s392 + $0x48] sm:$0xf]
        %v510 = vld [vmem:[%s392 + $0x4c] sm:$0xf]
        %v511 = vld [vmem:[%s392 + $0x50] sm:$0xf]
        %v512 = vld [vmem:[%s392 + $0x54] sm:$0xf]
        %v513 = vld [vmem:[%s392 + $0x58] sm:$0xf]
        %v514 = vld [vmem:[%s392 + $0x5c] sm:$0xf]
        %v515 = vld [vmem:[%s392 + $0x60] sm:$0xf]
        %v516 = vld [vmem:[%s392 + $0x64] sm:$0xf]
        %v517 = vld [vmem:[%s392 + $0x68] sm:$0xf]
        %v518 = vld [vmem:[%s392 + $0x6c] sm:$0xf]
        %v519 = vld [vmem:[%s392 + $0x70] sm:$0xf]
        %v520 = vld [vmem:[%s392 + $0x74] sm:$0xf]
        %v521 = vld [vmem:[%s392 + $0x78] sm:$0xf]
        %v522 = vld [vmem:[%s392 + $0x7c] sm:$0xf]
        %v523 = vunpack.c.l.bf16 %v491
        %v524 = vunpack.c.l.bf16 %v492
        %v525 = vunpack.c.l.bf16 %v493
        %v526 = vunpack.c.l.bf16 %v494
        %v527 = vunpack.c.l.bf16 %v495
        %v528 = vunpack.c.l.bf16 %v496
        %v529 = vunpack.c.l.bf16 %v497
        %v530 = vunpack.c.l.bf16 %v498
        %v531 = vunpack.c.l.bf16 %v499
        %v532 = vunpack.c.l.bf16 %v500
        %v533 = vunpack.c.l.bf16 %v501
        %v534 = vunpack.c.l.bf16 %v502
        %v535 = vunpack.c.l.bf16 %v503
        %v536 = vunpack.c.l.bf16 %v504
        %v537 = vunpack.c.l.bf16 %v505
        %v538 = vunpack.c.l.bf16 %v506
        %v539 = vunpack.c.l.bf16 %v507
        %v540 = vunpack.c.l.bf16 %v508
        %v541 = vunpack.c.l.bf16 %v509
        %v542 = vunpack.c.l.bf16 %v510
        %v543 = vunpack.c.l.bf16 %v511
        %v544 = vunpack.c.l.bf16 %v512
        %v545 = vunpack.c.l.bf16 %v513
        %v546 = vunpack.c.l.bf16 %v514
        %v547 = vunpack.c.l.bf16 %v515
        %v548 = vunpack.c.l.bf16 %v516
        %v549 = vunpack.c.l.bf16 %v517
        %v550 = vunpack.c.l.bf16 %v518
        %v551 = vunpack.c.l.bf16 %v519
        %v552 = vunpack.c.l.bf16 %v520
        %v553 = vunpack.c.l.bf16 %v521
        %v554 = vunpack.c.l.bf16 %v522
        %v555 = vld [vmem:[%s1] sm:$0x1]
        %v556 = vld [vmem:[%s2] sm:$0x1]
        %v558 = vlaneseq
        %v559 = vshrl.u32 %v558, 7
        %v560 = vsub.s32 0, %v559
        %v561 = vrot.slane %v555, %v560
        %v563 = vmul.f32 %v523, %v561
        %v564 = vmul.f32 %v524, %v561
        %v565 = vmul.f32 %v525, %v561
        %v566 = vmul.f32 %v526, %v561
        %v567 = vmul.f32 %v527, %v561
        %v568 = vmul.f32 %v528, %v561
        %v569 = vmul.f32 %v529, %v561
        %v570 = vmul.f32 %v530, %v561
        %v571 = vmul.f32 %v531, %v561
        %v572 = vmul.f32 %v532, %v561
        %v573 = vmul.f32 %v533, %v561
        %v574 = vmul.f32 %v534, %v561
        %v575 = vmul.f32 %v535, %v561
        %v576 = vmul.f32 %v536, %v561
        %v577 = vmul.f32 %v537, %v561
        %v578 = vmul.f32 %v538, %v561
        %v579 = vmul.f32 %v539, %v561
        %v580 = vmul.f32 %v540, %v561
        %v581 = vmul.f32 %v541, %v561
        %v582 = vmul.f32 %v542, %v561
        %v583 = vmul.f32 %v543, %v561
        %v584 = vmul.f32 %v544, %v561
        %v585 = vmul.f32 %v545, %v561
        %v586 = vmul.f32 %v546, %v561
        %v587 = vmul.f32 %v547, %v561
        %v588 = vmul.f32 %v548, %v561
        %v589 = vmul.f32 %v549, %v561
        %v590 = vmul.f32 %v550, %v561
        %v591 = vmul.f32 %v551, %v561
        %v592 = vmul.f32 %v552, %v561
        %v593 = vmul.f32 %v553, %v561
        %v594 = vmul.f32 %v554, %v561
        %v596 = vlaneseq
        %v597 = vshrl.u32 %v596, 7
        %v598 = vsub.s32 0, %v597
        %v599 = vrot.slane %v556, %v598
        %v601 = vadd.f32 %v563, %v599
        %v602 = vadd.f32 %v564, %v599
        %v603 = vadd.f32 %v565, %v599
        %v604 = vadd.f32 %v566, %v599
        %v605 = vadd.f32 %v567, %v599
        %v606 = vadd.f32 %v568, %v599
        %v607 = vadd.f32 %v569, %v599
        %v608 = vadd.f32 %v570, %v599
        %v609 = vadd.f32 %v571, %v599
        %v610 = vadd.f32 %v572, %v599
        %v611 = vadd.f32 %v573, %v599
        %v612 = vadd.f32 %v574, %v599
        %v613 = vadd.f32 %v575, %v599
        %v614 = vadd.f32 %v576, %v599
        %v615 = vadd.f32 %v577, %v599
        %v616 = vadd.f32 %v578, %v599
        %v617 = vadd.f32 %v579, %v599
        %v618 = vadd.f32 %v580, %v599
        %v619 = vadd.f32 %v581, %v599
        %v620 = vadd.f32 %v582, %v599
        %v621 = vadd.f32 %v583, %v599
        %v622 = vadd.f32 %v584, %v599
        %v623 = vadd.f32 %v585, %v599
        %v624 = vadd.f32 %v586, %v599
        %v625 = vadd.f32 %v587, %v599
        %v626 = vadd.f32 %v588, %v599
        %v627 = vadd.f32 %v589, %v599
        %v628 = vadd.f32 %v590, %v599
        %v629 = vadd.f32 %v591, %v599
        %v630 = vadd.f32 %v592, %v599
        %v631 = vadd.f32 %v593, %v599
        %v632 = vadd.f32 %v594, %v599
        %v633 = vmax.f32 %v601, 0.0
        %v634 = vmax.f32 %v602, 0.0
        %v635 = vmax.f32 %v603, 0.0
        %v636 = vmax.f32 %v604, 0.0
        %v637 = vmax.f32 %v605, 0.0
        %v638 = vmax.f32 %v606, 0.0
        %v639 = vmax.f32 %v607, 0.0
        %v640 = vmax.f32 %v608, 0.0
        %v641 = vmax.f32 %v609, 0.0
        %v642 = vmax.f32 %v610, 0.0
        %v643 = vmax.f32 %v611, 0.0
        %v644 = vmax.f32 %v612, 0.0
        %v645 = vmax.f32 %v613, 0.0
        %v646 = vmax.f32 %v614, 0.0
        %v647 = vmax.f32 %v615, 0.0
        %v648 = vmax.f32 %v616, 0.0
        %v649 = vmax.f32 %v617, 0.0
        %v650 = vmax.f32 %v618, 0.0
        %v651 = vmax.f32 %v619, 0.0
        %v652 = vmax.f32 %v620, 0.0
        %v653 = vmax.f32 %v621, 0.0
        %v654 = vmax.f32 %v622, 0.0
        %v655 = vmax.f32 %v623, 0.0
        %v656 = vmax.f32 %v624, 0.0
        %v657 = vmax.f32 %v625, 0.0
        %v658 = vmax.f32 %v626, 0.0
        %v659 = vmax.f32 %v627, 0.0
        %v660 = vmax.f32 %v628, 0.0
        %v661 = vmax.f32 %v629, 0.0
        %v662 = vmax.f32 %v630, 0.0
        %v663 = vmax.f32 %v631, 0.0
        %v664 = vmax.f32 %v632, 0.0
        %v665 = vpack.c.bf16 %v634, %v633
        %v666 = vpack.c.bf16 %v636, %v635
        %v667 = vpack.c.bf16 %v638, %v637
        %v668 = vpack.c.bf16 %v640, %v639
        %v669 = vpack.c.bf16 %v642, %v641
        %v670 = vpack.c.bf16 %v644, %v643
        %v671 = vpack.c.bf16 %v646, %v645
        %v672 = vpack.c.bf16 %v648, %v647
        %v673 = vpack.c.bf16 %v650, %v649
        %v674 = vpack.c.bf16 %v652, %v651
        %v675 = vpack.c.bf16 %v654, %v653
        %v676 = vpack.c.bf16 %v656, %v655
        %v677 = vpack.c.bf16 %v658, %v657
        %v678 = vpack.c.bf16 %v660, %v659
        %v679 = vpack.c.bf16 %v662, %v661
        %v680 = vpack.c.bf16 %v664, %v663
        %v697 = vunpack.c.l.b16 %v665
        %v698 = vunpack.c.h.b16 %v665
        %v699 = vunpack.c.l.b16 %v666
        %v700 = vunpack.c.h.b16 %v666
        %v701 = vunpack.c.l.b16 %v667
        %v702 = vunpack.c.h.b16 %v667
        %v703 = vunpack.c.l.b16 %v668
        %v704 = vunpack.c.h.b16 %v668
        %v705 = vunpack.c.l.b16 %v669
        %v706 = vunpack.c.h.b16 %v669
        %v707 = vunpack.c.l.b16 %v670
        %v708 = vunpack.c.h.b16 %v670
        %v709 = vunpack.c.l.b16 %v671
        %v710 = vunpack.c.h.b16 %v671
        %v711 = vunpack.c.l.b16 %v672
        %v712 = vunpack.c.h.b16 %v672
        %v713 = vunpack.c.l.b16 %v673
        %v714 = vunpack.c.h.b16 %v673
        %v715 = vunpack.c.l.b16 %v674
        %v716 = vunpack.c.h.b16 %v674
        %v717 = vunpack.c.l.b16 %v675
        %v718 = vunpack.c.h.b16 %v675
        %v719 = vunpack.c.l.b16 %v676
        %v720 = vunpack.c.h.b16 %v676
        %v721 = vunpack.c.l.b16 %v677
        %v722 = vunpack.c.h.b16 %v677
        %v723 = vunpack.c.l.b16 %v678
        %v724 = vunpack.c.h.b16 %v678
        %v725 = vunpack.c.l.b16 %v679
        %v726 = vunpack.c.h.b16 %v679
        %v727 = vunpack.c.l.b16 %v680
        %v728 = vunpack.c.h.b16 %v680
        %v729 = vpack.c.b16 %v697, %v697
        %v730 = vpack.c.b16 %v698, %v698
        %v731 = vpack.c.b16 %v699, %v699
        %v732 = vpack.c.b16 %v700, %v700
        %v733 = vpack.c.b16 %v701, %v701
        %v734 = vpack.c.b16 %v702, %v702
        %v735 = vpack.c.b16 %v703, %v703
        %v736 = vpack.c.b16 %v704, %v704
        %v737 = vpack.c.b16 %v705, %v705
        %v738 = vpack.c.b16 %v706, %v706
        %v739 = vpack.c.b16 %v707, %v707
        %v740 = vpack.c.b16 %v708, %v708
        %v741 = vpack.c.b16 %v709, %v709
        %v742 = vpack.c.b16 %v710, %v710
        %v743 = vpack.c.b16 %v711, %v711
        %v744 = vpack.c.b16 %v712, %v712
        %v745 = vpack.c.b16 %v713, %v713
        %v746 = vpack.c.b16 %v714, %v714
        %v747 = vpack.c.b16 %v715, %v715
        %v748 = vpack.c.b16 %v716, %v716
        %v749 = vpack.c.b16 %v717, %v717
        %v750 = vpack.c.b16 %v718, %v718
        %v751 = vpack.c.b16 %v719, %v719
        %v752 = vpack.c.b16 %v720, %v720
        %v753 = vpack.c.b16 %v721, %v721
        %v754 = vpack.c.b16 %v722, %v722
        %v755 = vpack.c.b16 %v723, %v723
        %v756 = vpack.c.b16 %v724, %v724
        %v757 = vpack.c.b16 %v725, %v725
        %v758 = vpack.c.b16 %v726, %v726
        %v759 = vpack.c.b16 %v727, %v727
        %v760 = vpack.c.b16 %v728, %v728
        %vm761 = vsmask.f32 256
        %vm762 = vsmask.f32 4368
        %vm763 = vmor %vm761, %vm762
        %v765 = vshrl.u32 %v729, 16
        %v767 = vrot.slane %v765, 7
        %v768 = vshll.u32 %v729, 16
        %v770 = vor.u32 %v767, %v768
        %v771 = vrot.slane %v767, 4
        %v773 = vshrl.u32 %v730, 16
        %v775 = vrot.slane %v773, 7
        %v776 = vshll.u32 %v730, 16
        %v778 = vor.u32 %v775, %v776
        %v779 = vsel %vm763, %v771, %v778
        %v780 = vrot.slane %v775, 4
        %v782 = vshrl.u32 %v731, 16
        %v784 = vrot.slane %v782, 7
        %v785 = vshll.u32 %v731, 16
        %v787 = vor.u32 %v784, %v785
        %v788 = vrot.slane %v784, 4
        %v790 = vshrl.u32 %v732, 16
        %v792 = vrot.slane %v790, 7
        %v793 = vshll.u32 %v732, 16
        %v795 = vor.u32 %v792, %v793
        %v796 = vsel %vm763, %v788, %v795
        %v797 = vrot.slane %v792, 4
        %v799 = vshrl.u32 %v733, 16
        %v801 = vrot.slane %v799, 7
        %v802 = vshll.u32 %v733, 16
        %v804 = vor.u32 %v801, %v802
        %v805 = vrot.slane %v801, 4
        %v807 = vshrl.u32 %v734, 16
        %v809 = vrot.slane %v807, 7
        %v810 = vshll.u32 %v734, 16
        %v812 = vor.u32 %v809, %v810
        %v813 = vsel %vm763, %v805, %v812
        %v814 = vrot.slane %v809, 4
        %v816 = vshrl.u32 %v735, 16
        %v818 = vrot.slane %v816, 7
        %v819 = vshll.u32 %v735, 16
        %v821 = vor.u32 %v818, %v819
        %v822 = vrot.slane %v818, 4
        %v824 = vshrl.u32 %v736, 16
        %v826 = vrot.slane %v824, 7
        %v827 = vshll.u32 %v736, 16
        %v829 = vor.u32 %v826, %v827
        %v830 = vsel %vm763, %v822, %v829
        %v831 = vrot.slane %v826, 4
        %v833 = vshrl.u32 %v737, 16
        %v835 = vrot.slane %v833, 7
        %v836 = vshll.u32 %v737, 16
        %v838 = vor.u32 %v835, %v836
        %v839 = vrot.slane %v835, 4
        %v841 = vshrl.u32 %v738, 16
        %v843 = vrot.slane %v841, 7
        %v844 = vshll.u32 %v738, 16
        %v846 = vor.u32 %v843, %v844
        %v847 = vsel %vm763, %v839, %v846
        %v848 = vrot.slane %v843, 4
        %v850 = vshrl.u32 %v739, 16
        %v852 = vrot.slane %v850, 7
        %v853 = vshll.u32 %v739, 16
        %v855 = vor.u32 %v852, %v853
        %v856 = vrot.slane %v852, 4
        %v858 = vshrl.u32 %v740, 16
        %v860 = vrot.slane %v858, 7
        %v861 = vshll.u32 %v740, 16
        %v863 = vor.u32 %v860, %v861
        %v864 = vsel %vm763, %v856, %v863
        %v865 = vrot.slane %v860, 4
        %v867 = vshrl.u32 %v741, 16
        %v869 = vrot.slane %v867, 7
        %v870 = vshll.u32 %v741, 16
        %v872 = vor.u32 %v869, %v870
        %v873 = vrot.slane %v869, 4
        %v875 = vshrl.u32 %v742, 16
        %v877 = vrot.slane %v875, 7
        %v878 = vshll.u32 %v742, 16
        %v880 = vor.u32 %v877, %v878
        %v881 = vsel %vm763, %v873, %v880
        %v882 = vrot.slane %v877, 4
        %v884 = vshrl.u32 %v743, 16
        %v886 = vrot.slane %v884, 7
        %v887 = vshll.u32 %v743, 16
        %v889 = vor.u32 %v886, %v887
        %v890 = vrot.slane %v886, 4
        %v892 = vshrl.u32 %v744, 16
        %v894 = vrot.slane %v892, 7
        %v895 = vshll.u32 %v744, 16
        %v897 = vor.u32 %v894, %v895
        %v898 = vsel %vm763, %v890, %v897
        %v899 = vrot.slane %v894, 4
        %v901 = vshrl.u32 %v745, 16
        %v903 = vrot.slane %v901, 7
        %v904 = vshll.u32 %v745, 16
        %v906 = vor.u32 %v903, %v904
        %v907 = vrot.slane %v903, 4
        %v909 = vshrl.u32 %v746, 16
        %v911 = vrot.slane %v909, 7
        %v912 = vshll.u32 %v746, 16
        %v914 = vor.u32 %v911, %v912
        %v915 = vsel %vm763, %v907, %v914
        %v916 = vrot.slane %v911, 4
        %v918 = vshrl.u32 %v747, 16
        %v920 = vrot.slane %v918, 7
        %v921 = vshll.u32 %v747, 16
        %v923 = vor.u32 %v920, %v921
        %v924 = vrot.slane %v920, 4
        %v926 = vshrl.u32 %v748, 16
        %v928 = vrot.slane %v926, 7
        %v929 = vshll.u32 %v748, 16
        %v931 = vor.u32 %v928, %v929
        %v932 = vsel %vm763, %v924, %v931
        %v933 = vrot.slane %v928, 4
        %v935 = vshrl.u32 %v749, 16
        %v937 = vrot.slane %v935, 7
        %v938 = vshll.u32 %v749, 16
        %v940 = vor.u32 %v937, %v938
        %v941 = vrot.slane %v937, 4
        %v943 = vshrl.u32 %v750, 16
        %v945 = vrot.slane %v943, 7
        %v946 = vshll.u32 %v750, 16
        %v948 = vor.u32 %v945, %v946
        %v949 = vsel %vm763, %v941, %v948
        %v950 = vrot.slane %v945, 4
        %v952 = vshrl.u32 %v751, 16
        %v954 = vrot.slane %v952, 7
        %v955 = vshll.u32 %v751, 16
        %v957 = vor.u32 %v954, %v955
        %v958 = vrot.slane %v954, 4
        %v960 = vshrl.u32 %v752, 16
        %v962 = vrot.slane %v960, 7
        %v963 = vshll.u32 %v752, 16
        %v965 = vor.u32 %v962, %v963
        %v966 = vsel %vm763, %v958, %v965
        %v967 = vrot.slane %v962, 4
        %v969 = vshrl.u32 %v753, 16
        %v971 = vrot.slane %v969, 7
        %v972 = vshll.u32 %v753, 16
        %v974 = vor.u32 %v971, %v972
        %v975 = vrot.slane %v971, 4
        %v977 = vshrl.u32 %v754, 16
        %v979 = vrot.slane %v977, 7
        %v980 = vshll.u32 %v754, 16
        %v982 = vor.u32 %v979, %v980
        %v983 = vsel %vm763, %v975, %v982
        %v984 = vrot.slane %v979, 4
        %v986 = vshrl.u32 %v755, 16
        %v988 = vrot.slane %v986, 7
        %v989 = vshll.u32 %v755, 16
        %v991 = vor.u32 %v988, %v989
        %v992 = vrot.slane %v988, 4
        %v994 = vshrl.u32 %v756, 16
        %v996 = vrot.slane %v994, 7
        %v997 = vshll.u32 %v756, 16
        %v999 = vor.u32 %v996, %v997
        %v1000 = vsel %vm763, %v992, %v999
        %v1001 = vrot.slane %v996, 4
        %v1003 = vshrl.u32 %v757, 16
        %v1005 = vrot.slane %v1003, 7
        %v1006 = vshll.u32 %v757, 16
        %v1008 = vor.u32 %v1005, %v1006
        %v1009 = vrot.slane %v1005, 4
        %v1011 = vshrl.u32 %v758, 16
        %v1013 = vrot.slane %v1011, 7
        %v1014 = vshll.u32 %v758, 16
        %v1016 = vor.u32 %v1013, %v1014
        %v1017 = vsel %vm763, %v1009, %v1016
        %v1018 = vrot.slane %v1013, 4
        %v1020 = vshrl.u32 %v759, 16
        %v1022 = vrot.slane %v1020, 7
        %v1023 = vshll.u32 %v759, 16
        %v1025 = vor.u32 %v1022, %v1023
        %v1026 = vrot.slane %v1022, 4
        %v1028 = vshrl.u32 %v760, 16
        %v1030 = vrot.slane %v1028, 7
        %v1031 = vshll.u32 %v760, 16
        %v1033 = vor.u32 %v1030, %v1031
        %v1034 = vsel %vm763, %v1026, %v1033
        %v1035 = vrot.slane %v1030, 4
        %s1084 = scalar_lea.vmem [#allocation3], 12
        %vm1085 = vcmask 1043456
        %vm1086 = vsmask.f32 7938
        %vm1087 = vmand %vm1085, %vm1086
        %v1088 = vld [vmem:[%s1084] sm:$0xf]
        %v1089 = vsel %vm1087, %v770, %v1088
        %1090 = vst [vmem:[%s1084] sm:$0xf] %v1089
        %1091 = vst [vmem:[%s1084 + $0x4] sm:$0xf] %v779
        %vm1092 = vcmask 1040384
        %vm1093 = vmand %vm1092, %vm761
        %v1094 = vld [vmem:[%s1084 + $0x8] sm:$0x1]
        %v1095 = vsel %vm1093, %v780, %v1094
        %1096 = vst [vmem:[%s1084 + $0x8] sm:$0x1] %v1095
        %v1097 = vld [vmem:[%s1084 + $0xc] sm:$0xf]
        %v1098 = vsel %vm1087, %v787, %v1097
        %1099 = vst [vmem:[%s1084 + $0xc] sm:$0xf] %v1098
        %1100 = vst [vmem:[%s1084 + $0x10] sm:$0xf] %v796
        %v1101 = vld [vmem:[%s1084 + $0x14] sm:$0x1]
        %v1102 = vsel %vm1093, %v797, %v1101
        %1103 = vst [vmem:[%s1084 + $0x14] sm:$0x1] %v1102
        %v1104 = vld [vmem:[%s1084 + $0x18] sm:$0xf]
        %v1105 = vsel %vm1087, %v804, %v1104
        %1106 = vst [vmem:[%s1084 + $0x18] sm:$0xf] %v1105
        %1107 = vst [vmem:[%s1084 + $0x1c] sm:$0xf] %v813
        %v1108 = vld [vmem:[%s1084 + $0x20] sm:$0x1]
        %v1109 = vsel %vm1093, %v814, %v1108
        %1110 = vst [vmem:[%s1084 + $0x20] sm:$0x1] %v1109
        %v1111 = vld [vmem:[%s1084 + $0x24] sm:$0xf]
        %v1112 = vsel %vm1087, %v821, %v1111
        %1113 = vst [vmem:[%s1084 + $0x24] sm:$0xf] %v1112
        %1114 = vst [vmem:[%s1084 + $0x28] sm:$0xf] %v830
        %v1115 = vld [vmem:[%s1084 + $0x2c] sm:$0x1]
        %v1116 = vsel %vm1093, %v831, %v1115
        %1117 = vst [vmem:[%s1084 + $0x2c] sm:$0x1] %v1116
        %v1118 = vld [vmem:[%s1084 + $0x30] sm:$0xf]
        %v1119 = vsel %vm1087, %v838, %v1118
        %1120 = vst [vmem:[%s1084 + $0x30] sm:$0xf] %v1119
        %1121 = vst [vmem:[%s1084 + $0x34] sm:$0xf] %v847
        %v1122 = vld [vmem:[%s1084 + $0x38] sm:$0x1]
        %v1123 = vsel %vm1093, %v848, %v1122
        %1124 = vst [vmem:[%s1084 + $0x38] sm:$0x1] %v1123
        %v1125 = vld [vmem:[%s1084 + $0x3c] sm:$0xf]
        %v1126 = vsel %vm1087, %v855, %v1125
        %1127 = vst [vmem:[%s1084 + $0x3c] sm:$0xf] %v1126
        %1128 = vst [vmem:[%s1084 + $0x40] sm:$0xf] %v864
        %v1129 = vld [vmem:[%s1084 + $0x44] sm:$0x1]
        %v1130 = vsel %vm1093, %v865, %v1129
        %1131 = vst [vmem:[%s1084 + $0x44] sm:$0x1] %v1130
        %v1132 = vld [vmem:[%s1084 + $0x48] sm:$0xf]
        %v1133 = vsel %vm1087, %v872, %v1132
        %1134 = vst [vmem:[%s1084 + $0x48] sm:$0xf] %v1133
        %1135 = vst [vmem:[%s1084 + $0x4c] sm:$0xf] %v881
        %v1136 = vld [vmem:[%s1084 + $0x50] sm:$0x1]
        %v1137 = vsel %vm1093, %v882, %v1136
        %1138 = vst [vmem:[%s1084 + $0x50] sm:$0x1] %v1137
        %v1139 = vld [vmem:[%s1084 + $0x54] sm:$0xf]
        %v1140 = vsel %vm1087, %v889, %v1139
        %1141 = vst [vmem:[%s1084 + $0x54] sm:$0xf] %v1140
        %1142 = vst [vmem:[%s1084 + $0x58] sm:$0xf] %v898
        %v1143 = vld [vmem:[%s1084 + $0x5c] sm:$0x1]
        %v1144 = vsel %vm1093, %v899, %v1143
        %1145 = vst [vmem:[%s1084 + $0x5c] sm:$0x1] %v1144
        %v1146 = vld [vmem:[%s1084 + $0x60] sm:$0xf]
        %v1147 = vsel %vm1087, %v906, %v1146
        %1148 = vst [vmem:[%s1084 + $0x60] sm:$0xf] %v1147
        %1149 = vst [vmem:[%s1084 + $0x64] sm:$0xf] %v915
        %v1150 = vld [vmem:[%s1084 + $0x68] sm:$0x1]
        %v1151 = vsel %vm1093, %v916, %v1150
        %1152 = vst [vmem:[%s1084 + $0x68] sm:$0x1] %v1151
        %v1153 = vld [vmem:[%s1084 + $0x6c] sm:$0xf]
        %v1154 = vsel %vm1087, %v923, %v1153
        %1155 = vst [vmem:[%s1084 + $0x6c] sm:$0xf] %v1154
        %1156 = vst [vmem:[%s1084 + $0x70] sm:$0xf] %v932
        %v1157 = vld [vmem:[%s1084 + $0x74] sm:$0x1]
        %v1158 = vsel %vm1093, %v933, %v1157
        %1159 = vst [vmem:[%s1084 + $0x74] sm:$0x1] %v1158
        %v1160 = vld [vmem:[%s1084 + $0x78] sm:$0xf]
        %v1161 = vsel %vm1087, %v940, %v1160
        %1162 = vst [vmem:[%s1084 + $0x78] sm:$0xf] %v1161
        %1163 = vst [vmem:[%s1084 + $0x7c] sm:$0xf] %v949
        %v1164 = vld [vmem:[%s1084 + $0x80] sm:$0x1]
        %v1165 = vsel %vm1093, %v950, %v1164
        %1166 = vst [vmem:[%s1084 + $0x80] sm:$0x1] %v1165
        %v1167 = vld [vmem:[%s1084 + $0x84] sm:$0xf]
        %v1168 = vsel %vm1087, %v957, %v1167
        %1169 = vst [vmem:[%s1084 + $0x84] sm:$0xf] %v1168
        %1170 = vst [vmem:[%s1084 + $0x88] sm:$0xf] %v966
        %v1171 = vld [vmem:[%s1084 + $0x8c] sm:$0x1]
        %v1172 = vsel %vm1093, %v967, %v1171
        %1173 = vst [vmem:[%s1084 + $0x8c] sm:$0x1] %v1172
        %v1174 = vld [vmem:[%s1084 + $0x90] sm:$0xf]
        %v1175 = vsel %vm1087, %v974, %v1174
        %1176 = vst [vmem:[%s1084 + $0x90] sm:$0xf] %v1175
        %1177 = vst [vmem:[%s1084 + $0x94] sm:$0xf] %v983
        %v1178 = vld [vmem:[%s1084 + $0x98] sm:$0x1]
        %v1179 = vsel %vm1093, %v984, %v1178
        %1180 = vst [vmem:[%s1084 + $0x98] sm:$0x1] %v1179
        %v1181 = vld [vmem:[%s1084 + $0x9c] sm:$0xf]
        %v1182 = vsel %vm1087, %v991, %v1181
        %1183 = vst [vmem:[%s1084 + $0x9c] sm:$0xf] %v1182
        %1184 = vst [vmem:[%s1084 + $0xa0] sm:$0xf] %v1000
        %v1185 = vld [vmem:[%s1084 + $0xa4] sm:$0x1]
        %v1186 = vsel %vm1093, %v1001, %v1185
        %1187 = vst [vmem:[%s1084 + $0xa4] sm:$0x1] %v1186
        %v1188 = vld [vmem:[%s1084 + $0xa8] sm:$0xf]
        %v1189 = vsel %vm1087, %v1008, %v1188
        %1190 = vst [vmem:[%s1084 + $0xa8] sm:$0xf] %v1189
        %1191 = vst [vmem:[%s1084 + $0xac] sm:$0xf] %v1017
        %v1192 = vld [vmem:[%s1084 + $0xb0] sm:$0x1]
        %v1193 = vsel %vm1093, %v1018, %v1192
        %1194 = vst [vmem:[%s1084 + $0xb0] sm:$0x1] %v1193
        %v1195 = vld [vmem:[%s1084 + $0xb4] sm:$0xf]
        %v1196 = vsel %vm1087, %v1025, %v1195
        %1197 = vst [vmem:[%s1084 + $0xb4] sm:$0xf] %v1196
        %1198 = vst [vmem:[%s1084 + $0xb8] sm:$0xf] %v1034
        %v1199 = vld [vmem:[%s1084 + $0xbc] sm:$0x1]
        %v1200 = vsel %vm1093, %v1035, %v1199
        %1201 = vst [vmem:[%s1084 + $0xbc] sm:$0x1] %v1200
        %v1202 = vld [vmem:[#allocation3] sm:$0xf]
        %v1203 = vld [vmem:[#allocation3 + $0x4] sm:$0xf]
        %v1204 = vld [vmem:[#allocation3 + $0xc] sm:$0xf]
        %v1205 = vld [vmem:[#allocation3 + $0x10] sm:$0xf]
        %v1206 = vld [vmem:[#allocation3 + $0x18] sm:$0xf]
        %v1207 = vld [vmem:[#allocation3 + $0x1c] sm:$0xf]
        %v1208 = vld [vmem:[#allocation3 + $0x24] sm:$0xf]
        %v1209 = vld [vmem:[#allocation3 + $0x28] sm:$0xf]
        %v1210 = vld [vmem:[#allocation3 + $0x30] sm:$0xf]
        %v1211 = vld [vmem:[#allocation3 + $0x34] sm:$0xf]
        %v1212 = vld [vmem:[#allocation3 + $0x3c] sm:$0xf]
        %v1213 = vld [vmem:[#allocation3 + $0x40] sm:$0xf]
        %v1214 = vld [vmem:[#allocation3 + $0x48] sm:$0xf]
        %v1215 = vld [vmem:[#allocation3 + $0x4c] sm:$0xf]
        %v1216 = vld [vmem:[#allocation3 + $0x54] sm:$0xf]
        %v1217 = vld [vmem:[#allocation3 + $0x58] sm:$0xf]
        %v1218 = vld [vmem:[#allocation3 + $0x60] sm:$0xf]
        %v1219 = vld [vmem:[#allocation3 + $0x64] sm:$0xf]
        %v1220 = vld [vmem:[#allocation3 + $0x6c] sm:$0xf]
        %v1221 = vld [vmem:[#allocation3 + $0x70] sm:$0xf]
        %v1222 = vld [vmem:[#allocation3 + $0x78] sm:$0xf]
        %v1223 = vld [vmem:[#allocation3 + $0x7c] sm:$0xf]
        %v1224 = vld [vmem:[#allocation3 + $0x84] sm:$0xf]
        %v1225 = vld [vmem:[#allocation3 + $0x88] sm:$0xf]
        %v1226 = vld [vmem:[#allocation3 + $0x90] sm:$0xf]
        %v1227 = vld [vmem:[#allocation3 + $0x94] sm:$0xf]
        %v1228 = vld [vmem:[#allocation3 + $0x9c] sm:$0xf]
        %v1229 = vld [vmem:[#allocation3 + $0xa0] sm:$0xf]
        %v1230 = vld [vmem:[#allocation3 + $0xa8] sm:$0xf]
        %v1231 = vld [vmem:[#allocation3 + $0xac] sm:$0xf]
        %v1232 = vld [vmem:[#allocation3 + $0xb4] sm:$0xf]
        %v1233 = vld [vmem:[#allocation3 + $0xb8] sm:$0xf]
        %v1234 = vld [vmem:[%s3] sm:$0xf]
        %v1235 = vld [vmem:[%s3 + $0x4] sm:$0xf]
        %v1236 = vld [vmem:[%s3 + $0x8] sm:$0xf]
        %v1237 = vld [vmem:[%s3 + $0xc] sm:$0xf]
        %v1238 = vld [vmem:[%s3 + $0x10] sm:$0xf]
        %v1239 = vld [vmem:[%s3 + $0x14] sm:$0xf]
        %v1240 = vld [vmem:[%s3 + $0x18] sm:$0xf]
        %v1241 = vld [vmem:[%s3 + $0x1c] sm:$0xf]
        %v1242 = vld [vmem:[%s3 + $0x20] sm:$0xf]
        %v1243 = vld [vmem:[%s3 + $0x24] sm:$0xf]
        %v1244 = vld [vmem:[%s3 + $0x28] sm:$0xf]
        %v1245 = vld [vmem:[%s3 + $0x2c] sm:$0xf]
        %v1246 = vld [vmem:[%s3 + $0x30] sm:$0xf]
        %v1247 = vld [vmem:[%s3 + $0x34] sm:$0xf]
        %v1248 = vld [vmem:[%s3 + $0x38] sm:$0xf]
        %v1249 = vld [vmem:[%s3 + $0x3c] sm:$0xf]
        %v1282 = vunpack.c.l.b16 %v1202
        %v1283 = vunpack.c.l.b16 %v1203
        %v1284 = vunpack.c.l.b16 %v1204
        %v1285 = vunpack.c.l.b16 %v1205
        %v1286 = vunpack.c.l.b16 %v1206
        %v1287 = vunpack.c.l.b16 %v1207
        %v1288 = vunpack.c.l.b16 %v1208
        %v1289 = vunpack.c.l.b16 %v1209
        %v1290 = vunpack.c.l.b16 %v1210
        %v1291 = vunpack.c.l.b16 %v1211
        %v1292 = vunpack.c.l.b16 %v1212
        %v1293 = vunpack.c.l.b16 %v1213
        %v1294 = vunpack.c.l.b16 %v1214
        %v1295 = vunpack.c.l.b16 %v1215
        %v1296 = vunpack.c.l.b16 %v1216
        %v1297 = vunpack.c.l.b16 %v1217
        %v1298 = vunpack.c.l.b16 %v1218
        %v1299 = vunpack.c.l.b16 %v1219
        %v1300 = vunpack.c.l.b16 %v1220
        %v1301 = vunpack.c.l.b16 %v1221
        %v1302 = vunpack.c.l.b16 %v1222
        %v1303 = vunpack.c.l.b16 %v1223
        %v1304 = vunpack.c.l.b16 %v1224
        %v1305 = vunpack.c.l.b16 %v1225
        %v1306 = vunpack.c.l.b16 %v1226
        %v1307 = vunpack.c.l.b16 %v1227
        %v1308 = vunpack.c.l.b16 %v1228
        %v1309 = vunpack.c.l.b16 %v1229
        %v1310 = vunpack.c.l.b16 %v1230
        %v1311 = vunpack.c.l.b16 %v1231
        %v1312 = vunpack.c.l.b16 %v1232
        %v1313 = vunpack.c.l.b16 %v1233
        %v1314 = vpack.c.b16 %v1283, %v1282
        %v1315 = vpack.c.b16 %v1285, %v1284
        %v1316 = vpack.c.b16 %v1287, %v1286
        %v1317 = vpack.c.b16 %v1289, %v1288
        %v1318 = vpack.c.b16 %v1291, %v1290
        %v1319 = vpack.c.b16 %v1293, %v1292
        %v1320 = vpack.c.b16 %v1295, %v1294
        %v1321 = vpack.c.b16 %v1297, %v1296
        %v1322 = vpack.c.b16 %v1299, %v1298
        %v1323 = vpack.c.b16 %v1301, %v1300
        %v1324 = vpack.c.b16 %v1303, %v1302
        %v1325 = vpack.c.b16 %v1305, %v1304
        %v1326 = vpack.c.b16 %v1307, %v1306
        %v1327 = vpack.c.b16 %v1309, %v1308
        %v1328 = vpack.c.b16 %v1311, %v1310
        %v1329 = vpack.c.b16 %v1313, %v1312
        %v1362 = vunpack.c.l.b16 %v1234
        %v1363 = vunpack.c.l.b16 %v1235
        %v1364 = vunpack.c.l.b16 %v1236
        %v1365 = vunpack.c.l.b16 %v1237
        %v1366 = vunpack.c.l.b16 %v1238
        %v1367 = vunpack.c.l.b16 %v1239
        %v1368 = vunpack.c.l.b16 %v1240
        %v1369 = vunpack.c.l.b16 %v1241
        %v1370 = vunpack.c.l.b16 %v1242
        %v1371 = vunpack.c.l.b16 %v1243
        %v1372 = vunpack.c.l.b16 %v1244
        %v1373 = vunpack.c.l.b16 %v1245
        %v1374 = vunpack.c.l.b16 %v1246
        %v1375 = vunpack.c.l.b16 %v1247
        %v1376 = vunpack.c.l.b16 %v1248
        %v1377 = vunpack.c.l.b16 %v1249
        %v1378 = vpack.c.b16 %v1363, %v1362
        %v1379 = vpack.c.b16 %v1365, %v1364
        %v1380 = vpack.c.b16 %v1367, %v1366
        %v1381 = vpack.c.b16 %v1369, %v1368
        %v1382 = vpack.c.b16 %v1371, %v1370
        %v1383 = vpack.c.b16 %v1373, %v1372
        %v1384 = vpack.c.b16 %v1375, %v1374
        %v1385 = vpack.c.b16 %v1377, %v1376
        %1394 = vmatprep.subr.bf16.mxu0 0
        %1395 = vmatpush1.bf16.msra.mxu0 %v1378
        %1396 = vmatprep.subr.bf16.mxu0 0
        %1397 = vmatpush1.bf16.msra.mxu0 %v1379
        %1398 = vmatprep.subr.bf16.mxu0 0
        %1399 = vmatpush1.bf16.msra.mxu0 %v1380
        %1400 = vmatprep.subr.bf16.mxu0 0
        %1401 = vmatpush1.bf16.msra.mxu0 %v1381
        %1402 = vmatprep.subr.bf16.mxu0 0
        %1403 = vmatpush1.bf16.msra.mxu0 %v1382
        %1404 = vmatprep.subr.bf16.mxu0 0
        %1405 = vmatpush1.bf16.msra.mxu0 %v1383
        %1406 = vmatprep.subr.bf16.mxu0 0
        %1407 = vmatpush1.bf16.msra.mxu0 %v1384
        %1408 = vmatprep.subr.bf16.mxu0 0
        %1409 = vmatpush1.bf16.msra.mxu0 %v1385
        %1410 = vmatprep.subr.bf16.mxu0 0
        %1411 = vmatpush1.bf16.msra.mxu0 0
        %1412 = vmatprep.subr.bf16.mxu0 0
        %1413 = vmatpush1.bf16.msra.mxu0 0
        %1414 = vmatprep.subr.bf16.mxu0 0
        %1415 = vmatpush1.bf16.msra.mxu0 0
        %1416 = vmatprep.subr.bf16.mxu0 0
        %1417 = vmatpush1.bf16.msra.mxu0 0
        %1418 = vmatprep.subr.bf16.mxu0 0
        %1419 = vmatpush1.bf16.msra.mxu0 0
        %1420 = vmatprep.subr.bf16.mxu0 0
        %1421 = vmatpush1.bf16.msra.mxu0 0
        %1422 = vmatprep.subr.bf16.mxu0 0
        %1423 = vmatpush1.bf16.msra.mxu0 0
        %1424 = vmatprep.subr.bf16.mxu0 0
        %1425 = vmatpush1.bf16.msra.mxu0 0
        %1426 = vmatprep.mubr.bf16.mxu0 0
        %1427 = vmatmul.mubr.bf16.gmra.mrb[0].mxu0 %v1314
        %v1428 = vpop.f32.mrb[0].mxu0
        %v1429 = vadd.f32 0.0, %v1428
        %v1430 = vpop.f32.mrb[0].mxu0
        %v1431 = vpop.f32.mrb[0].mxu0
        %v1432 = vadd.f32 0.0, %v1431
        %v1433 = vpop.f32.mrb[0].mxu0
        %1434 = vmatprep.mubr.bf16.mxu0 0
        %1435 = vmatmul.mubr.bf16.gmra.mrb[0].mxu0 %v1315
        %v1436 = vpop.f32.mrb[0].mxu0
        %v1437 = vadd.f32 0.0, %v1436
        %v1438 = vpop.f32.mrb[0].mxu0
        %v1439 = vpop.f32.mrb[0].mxu0
        %v1440 = vadd.f32 0.0, %v1439
        %v1441 = vpop.f32.mrb[0].mxu0
        %1442 = vmatprep.mubr.bf16.mxu0 0
        %1443 = vmatmul.mubr.bf16.gmra.mrb[0].mxu0 %v1316
        %v1444 = vpop.f32.mrb[0].mxu0
        %v1445 = vadd.f32 0.0, %v1444
        %v1446 = vpop.f32.mrb[0].mxu0
        %v1447 = vpop.f32.mrb[0].mxu0
        %v1448 = vadd.f32 0.0, %v1447
        %v1449 = vpop.f32.mrb[0].mxu0
        %1450 = vmatprep.mubr.bf16.mxu0 0
        %1451 = vmatmul.mubr.bf16.gmra.mrb[0].mxu0 %v1317
        %v1452 = vpop.f32.mrb[0].mxu0
        %v1453 = vadd.f32 0.0, %v1452
        %v1454 = vpop.f32.mrb[0].mxu0
        %v1455 = vpop.f32.mrb[0].mxu0
        %v1456 = vadd.f32 0.0, %v1455
        %v1457 = vpop.f32.mrb[0].mxu0
        %1458 = vmatprep.mubr.bf16.mxu0 0
        %1459 = vmatmul.mubr.bf16.gmra.mrb[0].mxu0 %v1318
        %v1460 = vpop.f32.mrb[0].mxu0
        %v1461 = vadd.f32 0.0, %v1460
        %v1462 = vpop.f32.mrb[0].mxu0
        %v1463 = vpop.f32.mrb[0].mxu0
        %v1464 = vadd.f32 0.0, %v1463
        %v1465 = vpop.f32.mrb[0].mxu0
        %1466 = vmatprep.mubr.bf16.mxu0 0
        %1467 = vmatmul.mubr.bf16.gmra.mrb[0].mxu0 %v1319
        %v1468 = vpop.f32.mrb[0].mxu0
        %v1469 = vadd.f32 0.0, %v1468
        %v1470 = vpop.f32.mrb[0].mxu0
        %v1471 = vpop.f32.mrb[0].mxu0
        %v1472 = vadd.f32 0.0, %v1471
        %v1473 = vpop.f32.mrb[0].mxu0
        %1474 = vmatprep.mubr.bf16.mxu0 0
        %1475 = vmatmul.mubr.bf16.gmra.mrb[0].mxu0 %v1320
        %v1476 = vpop.f32.mrb[0].mxu0
        %v1477 = vadd.f32 0.0, %v1476
        %v1478 = vpop.f32.mrb[0].mxu0
        %v1479 = vpop.f32.mrb[0].mxu0
        %v1480 = vadd.f32 0.0, %v1479
        %v1481 = vpop.f32.mrb[0].mxu0
        %1482 = vmatprep.mubr.bf16.mxu0 0
        %1483 = vmatmul.mubr.bf16.gmra.mrb[0].mxu0 %v1321
        %v1484 = vpop.f32.mrb[0].mxu0
        %v1485 = vadd.f32 0.0, %v1484
        %v1486 = vpop.f32.mrb[0].mxu0
        %v1487 = vpop.f32.mrb[0].mxu0
        %v1488 = vadd.f32 0.0, %v1487
        %v1489 = vpop.f32.mrb[0].mxu0
        %1490 = vmatprep.mubr.bf16.mxu0 0
        %1491 = vmatmul.mubr.bf16.gmra.mrb[0].mxu0 %v1322
        %v1492 = vpop.f32.mrb[0].mxu0
        %v1493 = vadd.f32 0.0, %v1492
        %v1494 = vpop.f32.mrb[0].mxu0
        %v1495 = vpop.f32.mrb[0].mxu0
        %v1496 = vadd.f32 0.0, %v1495
        %v1497 = vpop.f32.mrb[0].mxu0
        %1498 = vmatprep.mubr.bf16.mxu0 0
        %1499 = vmatmul.mubr.bf16.gmra.mrb[0].mxu0 %v1323
        %v1500 = vpop.f32.mrb[0].mxu0
        %v1501 = vadd.f32 0.0, %v1500
        %v1502 = vpop.f32.mrb[0].mxu0
        %v1503 = vpop.f32.mrb[0].mxu0
        %v1504 = vadd.f32 0.0, %v1503
        %v1505 = vpop.f32.mrb[0].mxu0
        %1506 = vmatprep.mubr.bf16.mxu0 0
        %1507 = vmatmul.mubr.bf16.gmra.mrb[0].mxu0 %v1324
        %v1508 = vpop.f32.mrb[0].mxu0
        %v1509 = vadd.f32 0.0, %v1508
        %v1510 = vpop.f32.mrb[0].mxu0
        %v1511 = vpop.f32.mrb[0].mxu0
        %v1512 = vadd.f32 0.0, %v1511
        %v1513 = vpop.f32.mrb[0].mxu0
        %1514 = vmatprep.mubr.bf16.mxu0 0
        %1515 = vmatmul.mubr.bf16.gmra.mrb[0].mxu0 %v1325
        %v1516 = vpop.f32.mrb[0].mxu0
        %v1517 = vadd.f32 0.0, %v1516
        %v1518 = vpop.f32.mrb[0].mxu0
        %v1519 = vpop.f32.mrb[0].mxu0
        %v1520 = vadd.f32 0.0, %v1519
        %v1521 = vpop.f32.mrb[0].mxu0
        %1522 = vmatprep.mubr.bf16.mxu0 0
        %1523 = vmatmul.mubr.bf16.gmra.mrb[0].mxu0 %v1326
        %v1524 = vpop.f32.mrb[0].mxu0
        %v1525 = vadd.f32 0.0, %v1524
        %v1526 = vpop.f32.mrb[0].mxu0
        %v1527 = vpop.f32.mrb[0].mxu0
        %v1528 = vadd.f32 0.0, %v1527
        %v1529 = vpop.f32.mrb[0].mxu0
        %1530 = vmatprep.mubr.bf16.mxu0 0
        %1531 = vmatmul.mubr.bf16.gmra.mrb[0].mxu0 %v1327
        %v1532 = vpop.f32.mrb[0].mxu0
        %v1533 = vadd.f32 0.0, %v1532
        %v1534 = vpop.f32.mrb[0].mxu0
        %v1535 = vpop.f32.mrb[0].mxu0
        %v1536 = vadd.f32 0.0, %v1535
        %v1537 = vpop.f32.mrb[0].mxu0
        %1538 = vmatprep.mubr.bf16.mxu0 0
        %1539 = vmatmul.mubr.bf16.gmra.mrb[0].mxu0 %v1328
        %v1540 = vpop.f32.mrb[0].mxu0
        %v1541 = vadd.f32 0.0, %v1540
        %v1542 = vpop.f32.mrb[0].mxu0
        %v1543 = vpop.f32.mrb[0].mxu0
        %v1544 = vadd.f32 0.0, %v1543
        %v1545 = vpop.f32.mrb[0].mxu0
        %1546 = vmatprep.mubr.bf16.mxu0 0
        %1547 = vmatmul.mubr.bf16.gmra.mrb[0].mxu0 %v1329
        %v1548 = vpop.f32.mrb[0].mxu0
        %v1549 = vadd.f32 0.0, %v1548
        %v1550 = vpop.f32.mrb[0].mxu0
        %v1551 = vpop.f32.mrb[0].mxu0
        %v1552 = vadd.f32 0.0, %v1551
        %v1553 = vpop.f32.mrb[0].mxu0
        %1554 = vdwg.mxu0
        %1555 = vst [vmem:[#allocation2] sm:$0xff] %v1429
        %1556 = vst [vmem:[#allocation2 + $0x8] sm:$0xff] %v1432
        %1557 = vst [vmem:[#allocation2 + $0x10] sm:$0xff] %v1437
        %1558 = vst [vmem:[#allocation2 + $0x18] sm:$0xff] %v1440
        %1559 = vst [vmem:[#allocation2 + $0x20] sm:$0xff] %v1445
        %1560 = vst [vmem:[#allocation2 + $0x28] sm:$0xff] %v1448
        %1561 = vst [vmem:[#allocation2 + $0x30] sm:$0xff] %v1453
        %1562 = vst [vmem:[#allocation2 + $0x38] sm:$0xff] %v1456
        %1563 = vst [vmem:[#allocation2 + $0x40] sm:$0xff] %v1461
        %1564 = vst [vmem:[#allocation2 + $0x48] sm:$0xff] %v1464
        %1565 = vst [vmem:[#allocation2 + $0x50] sm:$0xff] %v1469
        %1566 = vst [vmem:[#allocation2 + $0x58] sm:$0xff] %v1472
        %1567 = vst [vmem:[#allocation2 + $0x60] sm:$0xff] %v1477
        %1568 = vst [vmem:[#allocation2 + $0x68] sm:$0xff] %v1480
        %1569 = vst [vmem:[#allocation2 + $0x70] sm:$0xff] %v1485
        %1570 = vst [vmem:[#allocation2 + $0x78] sm:$0xff] %v1488
        %1571 = vst [vmem:[#allocation2 + $0x80] sm:$0xff] %v1493
        %1572 = vst [vmem:[#allocation2 + $0x88] sm:$0xff] %v1496
        %1573 = vst [vmem:[#allocation2 + $0x90] sm:$0xff] %v1501
        %1574 = vst [vmem:[#allocation2 + $0x98] sm:$0xff] %v1504
        %1575 = vst [vmem:[#allocation2 + $0xa0] sm:$0xff] %v1509
        %1576 = vst [vmem:[#allocation2 + $0xa8] sm:$0xff] %v1512
        %1577 = vst [vmem:[#allocation2 + $0xb0] sm:$0xff] %v1517
        %1578 = vst [vmem:[#allocation2 + $0xb8] sm:$0xff] %v1520
        %1579 = vst [vmem:[#allocation2 + $0xc0] sm:$0xff] %v1525
        %1580 = vst [vmem:[#allocation2 + $0xc8] sm:$0xff] %v1528
        %1581 = vst [vmem:[#allocation2 + $0xd0] sm:$0xff] %v1533
        %1582 = vst [vmem:[#allocation2 + $0xd8] sm:$0xff] %v1536
        %1583 = vst [vmem:[#allocation2 + $0xe0] sm:$0xff] %v1541
        %1584 = vst [vmem:[#allocation2 + $0xe8] sm:$0xff] %v1544
        %1585 = vst [vmem:[#allocation2 + $0xf0] sm:$0xff] %v1549
        %1586 = vst [vmem:[#allocation2 + $0xf8] sm:$0xff] %v1552
        %v1587 = vld [vmem:[#allocation3] sm:$0xf]
        %v1588 = vld [vmem:[#allocation3 + $0x4] sm:$0xf]
        %v1589 = vld [vmem:[#allocation3 + $0x8] sm:$0x1]
        %v1590 = vld [vmem:[#allocation3 + $0xc] sm:$0xf]
        %v1591 = vld [vmem:[#allocation3 + $0x10] sm:$0xf]
        %v1592 = vld [vmem:[#allocation3 + $0x14] sm:$0x1]
        %v1593 = vld [vmem:[#allocation3 + $0x18] sm:$0xf]
        %v1594 = vld [vmem:[#allocation3 + $0x1c] sm:$0xf]
        %v1595 = vld [vmem:[#allocation3 + $0x20] sm:$0x1]
        %v1596 = vld [vmem:[#allocation3 + $0x24] sm:$0xf]
        %v1597 = vld [vmem:[#allocation3 + $0x28] sm:$0xf]
        %v1598 = vld [vmem:[#allocation3 + $0x2c] sm:$0x1]
        %v1599 = vld [vmem:[#allocation3 + $0x30] sm:$0xf]
        %v1600 = vld [vmem:[#allocation3 + $0x34] sm:$0xf]
        %v1601 = vld [vmem:[#allocation3 + $0x38] sm:$0x1]
        %v1602 = vld [vmem:[#allocation3 + $0x3c] sm:$0xf]
        %v1603 = vld [vmem:[#allocation3 + $0x40] sm:$0xf]
        %v1604 = vld [vmem:[#allocation3 + $0x44] sm:$0x1]
        %v1605 = vld [vmem:[#allocation3 + $0x48] sm:$0xf]
        %v1606 = vld [vmem:[#allocation3 + $0x4c] sm:$0xf]
        %v1607 = vld [vmem:[#allocation3 + $0x50] sm:$0x1]
        %v1608 = vld [vmem:[#allocation3 + $0x54] sm:$0xf]
        %v1609 = vld [vmem:[#allocation3 + $0x58] sm:$0xf]
        %v1610 = vld [vmem:[#allocation3 + $0x5c] sm:$0x1]
        %v1611 = vld [vmem:[#allocation3 + $0x60] sm:$0xf]
        %v1612 = vld [vmem:[#allocation3 + $0x64] sm:$0xf]
        %v1613 = vld [vmem:[#allocation3 + $0x68] sm:$0x1]
        %v1614 = vld [vmem:[#allocation3 + $0x6c] sm:$0xf]
        %v1615 = vld [vmem:[#allocation3 + $0x70] sm:$0xf]
        %v1616 = vld [vmem:[#allocation3 + $0x74] sm:$0x1]
        %v1617 = vld [vmem:[#allocation3 + $0x78] sm:$0xf]
        %v1618 = vld [vmem:[#allocation3 + $0x7c] sm:$0xf]
        %v1619 = vld [vmem:[#allocation3 + $0x80] sm:$0x1]
        %v1620 = vld [vmem:[#allocation3 + $0x84] sm:$0xf]
        %v1621 = vld [vmem:[#allocation3 + $0x88] sm:$0xf]
        %v1622 = vld [vmem:[#allocation3 + $0x8c] sm:$0x1]
        %v1623 = vld [vmem:[#allocation3 + $0x90] sm:$0xf]
        %v1624 = vld [vmem:[#allocation3 + $0x94] sm:$0xf]
        %v1625 = vld [vmem:[#allocation3 + $0x98] sm:$0x1]
        %v1626 = vld [vmem:[#allocation3 + $0x9c] sm:$0xf]
        %v1627 = vld [vmem:[#allocation3 + $0xa0] sm:$0xf]
        %v1628 = vld [vmem:[#allocation3 + $0xa4] sm:$0x1]
        %v1629 = vld [vmem:[#allocation3 + $0xa8] sm:$0xf]
        %v1630 = vld [vmem:[#allocation3 + $0xac] sm:$0xf]
        %v1631 = vld [vmem:[#allocation3 + $0xb0] sm:$0x1]
        %v1632 = vld [vmem:[#allocation3 + $0xb4] sm:$0xf]
        %v1633 = vld [vmem:[#allocation3 + $0xb8] sm:$0xf]
        %v1634 = vld [vmem:[#allocation3 + $0xbc] sm:$0x1]
        %vm1635 = vsmask.f32 3328
        %vm1636 = vsmask.f32 7440
        %vm1637 = vmor %vm1635, %vm1636
        %v1639 = vshrl.u32 %v1587, 16
        %v1641 = vrot.slane %v1639, 4
        %v1642 = vshll.u32 %v1587, 16
        %v1644 = vrot.slane %v1642, 5
        %v1645 = vor.u32 %v1641, %v1644
        %v1646 = vrot.slane %v1645, 4
        %v1648 = vshll.u32 %v1588, 16
        %v1650 = vrot.slane %v1648, 5
        %v1651 = vsel %vm1637, %v1646, %v1650
        %v1652 = vshrl.u32 %v1588, 16
        %v1654 = vrot.slane %v1652, 4
        %v1655 = vor.u32 %v1654, %v1650
        %v1656 = vrot.slane %v1655, 4
        %v1658 = vshll.u32 %v1589, 16
        %v1660 = vrot.slane %v1658, 5
        %v1661 = vsel %vm1637, %v1656, %v1660
        %v1663 = vshrl.u32 %v1590, 16
        %v1665 = vrot.slane %v1663, 4
        %v1666 = vshll.u32 %v1590, 16
        %v1668 = vrot.slane %v1666, 5
        %v1669 = vor.u32 %v1665, %v1668
        %v1670 = vrot.slane %v1669, 4
        %v1672 = vshll.u32 %v1591, 16
        %v1674 = vrot.slane %v1672, 5
        %v1675 = vsel %vm1637, %v1670, %v1674
        %v1676 = vshrl.u32 %v1591, 16
        %v1678 = vrot.slane %v1676, 4
        %v1679 = vor.u32 %v1678, %v1674
        %v1680 = vrot.slane %v1679, 4
        %v1682 = vshll.u32 %v1592, 16
        %v1684 = vrot.slane %v1682, 5
        %v1685 = vsel %vm1637, %v1680, %v1684
        %v1687 = vshrl.u32 %v1593, 16
        %v1689 = vrot.slane %v1687, 4
        %v1690 = vshll.u32 %v1593, 16
        %v1692 = vrot.slane %v1690, 5
        %v1693 = vor.u32 %v1689, %v1692
        %v1694 = vrot.slane %v1693, 4
        %v1696 = vshll.u32 %v1594, 16
        %v1698 = vrot.slane %v1696, 5
        %v1699 = vsel %vm1637, %v1694, %v1698
        %v1700 = vshrl.u32 %v1594, 16
        %v1702 = vrot.slane %v1700, 4
        %v1703 = vor.u32 %v1702, %v1698
        %v1704 = vrot.slane %v1703, 4
        %v1706 = vshll.u32 %v1595, 16
        %v1708 = vrot.slane %v1706, 5
        %v1709 = vsel %vm1637, %v1704, %v1708
        %v1711 = vshrl.u32 %v1596, 16
        %v1713 = vrot.slane %v1711, 4
        %v1714 = vshll.u32 %v1596, 16
        %v1716 = vrot.slane %v1714, 5
        %v1717 = vor.u32 %v1713, %v1716
        %v1718 = vrot.slane %v1717, 4
        %v1720 = vshll.u32 %v1597, 16
        %v1722 = vrot.slane %v1720, 5
        %v1723 = vsel %vm1637, %v1718, %v1722
        %v1724 = vshrl.u32 %v1597, 16
        %v1726 = vrot.slane %v1724, 4
        %v1727 = vor.u32 %v1726, %v1722
        %v1728 = vrot.slane %v1727, 4
        %v1730 = vshll.u32 %v1598, 16
        %v1732 = vrot.slane %v1730, 5
        %v1733 = vsel %vm1637, %v1728, %v1732
        %v1735 = vshrl.u32 %v1599, 16
        %v1737 = vrot.slane %v1735, 4
        %v1738 = vshll.u32 %v1599, 16
        %v1740 = vrot.slane %v1738, 5
        %v1741 = vor.u32 %v1737, %v1740
        %v1742 = vrot.slane %v1741, 4
        %v1744 = vshll.u32 %v1600, 16
        %v1746 = vrot.slane %v1744, 5
        %v1747 = vsel %vm1637, %v1742, %v1746
        %v1748 = vshrl.u32 %v1600, 16
        %v1750 = vrot.slane %v1748, 4
        %v1751 = vor.u32 %v1750, %v1746
        %v1752 = vrot.slane %v1751, 4
        %v1754 = vshll.u32 %v1601, 16
        %v1756 = vrot.slane %v1754, 5
        %v1757 = vsel %vm1637, %v1752, %v1756
        %v1759 = vshrl.u32 %v1602, 16
        %v1761 = vrot.slane %v1759, 4
        %v1762 = vshll.u32 %v1602, 16
        %v1764 = vrot.slane %v1762, 5
        %v1765 = vor.u32 %v1761, %v1764
        %v1766 = vrot.slane %v1765, 4
        %v1768 = vshll.u32 %v1603, 16
        %v1770 = vrot.slane %v1768, 5
        %v1771 = vsel %vm1637, %v1766, %v1770
        %v1772 = vshrl.u32 %v1603, 16
        %v1774 = vrot.slane %v1772, 4
        %v1775 = vor.u32 %v1774, %v1770
        %v1776 = vrot.slane %v1775, 4
        %v1778 = vshll.u32 %v1604, 16
        %v1780 = vrot.slane %v1778, 5
        %v1781 = vsel %vm1637, %v1776, %v1780
        %v1783 = vshrl.u32 %v1605, 16
        %v1785 = vrot.slane %v1783, 4
        %v1786 = vshll.u32 %v1605, 16
        %v1788 = vrot.slane %v1786, 5
        %v1789 = vor.u32 %v1785, %v1788
        %v1790 = vrot.slane %v1789, 4
        %v1792 = vshll.u32 %v1606, 16
        %v1794 = vrot.slane %v1792, 5
        %v1795 = vsel %vm1637, %v1790, %v1794
        %v1796 = vshrl.u32 %v1606, 16
        %v1798 = vrot.slane %v1796, 4
        %v1799 = vor.u32 %v1798, %v1794
        %v1800 = vrot.slane %v1799, 4
        %v1802 = vshll.u32 %v1607, 16
        %v1804 = vrot.slane %v1802, 5
        %v1805 = vsel %vm1637, %v1800, %v1804
        %v1807 = vshrl.u32 %v1608, 16
        %v1809 = vrot.slane %v1807, 4
        %v1810 = vshll.u32 %v1608, 16
        %v1812 = vrot.slane %v1810, 5
        %v1813 = vor.u32 %v1809, %v1812
        %v1814 = vrot.slane %v1813, 4
        %v1816 = vshll.u32 %v1609, 16
        %v1818 = vrot.slane %v1816, 5
        %v1819 = vsel %vm1637, %v1814, %v1818
        %v1820 = vshrl.u32 %v1609, 16
        %v1822 = vrot.slane %v1820, 4
        %v1823 = vor.u32 %v1822, %v1818
        %v1824 = vrot.slane %v1823, 4
        %v1826 = vshll.u32 %v1610, 16
        %v1828 = vrot.slane %v1826, 5
        %v1829 = vsel %vm1637, %v1824, %v1828
        %v1831 = vshrl.u32 %v1611, 16
        %v1833 = vrot.slane %v1831, 4
        %v1834 = vshll.u32 %v1611, 16
        %v1836 = vrot.slane %v1834, 5
        %v1837 = vor.u32 %v1833, %v1836
        %v1838 = vrot.slane %v1837, 4
        %v1840 = vshll.u32 %v1612, 16
        %v1842 = vrot.slane %v1840, 5
        %v1843 = vsel %vm1637, %v1838, %v1842
        %v1844 = vshrl.u32 %v1612, 16
        %v1846 = vrot.slane %v1844, 4
        %v1847 = vor.u32 %v1846, %v1842
        %v1848 = vrot.slane %v1847, 4
        %v1850 = vshll.u32 %v1613, 16
        %v1852 = vrot.slane %v1850, 5
        %v1853 = vsel %vm1637, %v1848, %v1852
        %v1855 = vshrl.u32 %v1614, 16
        %v1857 = vrot.slane %v1855, 4
        %v1858 = vshll.u32 %v1614, 16
        %v1860 = vrot.slane %v1858, 5
        %v1861 = vor.u32 %v1857, %v1860
        %v1862 = vrot.slane %v1861, 4
        %v1864 = vshll.u32 %v1615, 16
        %v1866 = vrot.slane %v1864, 5
        %v1867 = vsel %vm1637, %v1862, %v1866
        %v1868 = vshrl.u32 %v1615, 16
        %v1870 = vrot.slane %v1868, 4
        %v1871 = vor.u32 %v1870, %v1866
        %v1872 = vrot.slane %v1871, 4
        %v1874 = vshll.u32 %v1616, 16
        %v1876 = vrot.slane %v1874, 5
        %v1877 = vsel %vm1637, %v1872, %v1876
        %v1879 = vshrl.u32 %v1617, 16
        %v1881 = vrot.slane %v1879, 4
        %v1882 = vshll.u32 %v1617, 16
        %v1884 = vrot.slane %v1882, 5
        %v1885 = vor.u32 %v1881, %v1884
        %v1886 = vrot.slane %v1885, 4
        %v1888 = vshll.u32 %v1618, 16
        %v1890 = vrot.slane %v1888, 5
        %v1891 = vsel %vm1637, %v1886, %v1890
        %v1892 = vshrl.u32 %v1618, 16
        %v1894 = vrot.slane %v1892, 4
        %v1895 = vor.u32 %v1894, %v1890
        %v1896 = vrot.slane %v1895, 4
        %v1898 = vshll.u32 %v1619, 16
        %v1900 = vrot.slane %v1898, 5
        %v1901 = vsel %vm1637, %v1896, %v1900
        %v1903 = vshrl.u32 %v1620, 16
        %v1905 = vrot.slane %v1903, 4
        %v1906 = vshll.u32 %v1620, 16
        %v1908 = vrot.slane %v1906, 5
        %v1909 = vor.u32 %v1905, %v1908
        %v1910 = vrot.slane %v1909, 4
        %v1912 = vshll.u32 %v1621, 16
        %v1914 = vrot.slane %v1912, 5
        %v1915 = vsel %vm1637, %v1910, %v1914
        %v1916 = vshrl.u32 %v1621, 16
        %v1918 = vrot.slane %v1916, 4
        %v1919 = vor.u32 %v1918, %v1914
        %v1920 = vrot.slane %v1919, 4
        %v1922 = vshll.u32 %v1622, 16
        %v1924 = vrot.slane %v1922, 5
        %v1925 = vsel %vm1637, %v1920, %v1924
        %v1927 = vshrl.u32 %v1623, 16
        %v1929 = vrot.slane %v1927, 4
        %v1930 = vshll.u32 %v1623, 16
        %v1932 = vrot.slane %v1930, 5
        %v1933 = vor.u32 %v1929, %v1932
        %v1934 = vrot.slane %v1933, 4
        %v1936 = vshll.u32 %v1624, 16
        %v1938 = vrot.slane %v1936, 5
        %v1939 = vsel %vm1637, %v1934, %v1938
        %v1940 = vshrl.u32 %v1624, 16
        %v1942 = vrot.slane %v1940, 4
        %v1943 = vor.u32 %v1942, %v1938
        %v1944 = vrot.slane %v1943, 4
        %v1946 = vshll.u32 %v1625, 16
        %v1948 = vrot.slane %v1946, 5
        %v1949 = vsel %vm1637, %v1944, %v1948
        %v1951 = vshrl.u32 %v1626, 16
        %v1953 = vrot.slane %v1951, 4
        %v1954 = vshll.u32 %v1626, 16
        %v1956 = vrot.slane %v1954, 5
        %v1957 = vor.u32 %v1953, %v1956
        %v1958 = vrot.slane %v1957, 4
        %v1960 = vshll.u32 %v1627, 16
        %v1962 = vrot.slane %v1960, 5
        %v1963 = vsel %vm1637, %v1958, %v1962
        %v1964 = vshrl.u32 %v1627, 16
        %v1966 = vrot.slane %v1964, 4
        %v1967 = vor.u32 %v1966, %v1962
        %v1968 = vrot.slane %v1967, 4
        %v1970 = vshll.u32 %v1628, 16
        %v1972 = vrot.slane %v1970, 5
        %v1973 = vsel %vm1637, %v1968, %v1972
        %v1975 = vshrl.u32 %v1629, 16
        %v1977 = vrot.slane %v1975, 4
        %v1978 = vshll.u32 %v1629, 16
        %v1980 = vrot.slane %v1978, 5
        %v1981 = vor.u32 %v1977, %v1980
        %v1982 = vrot.slane %v1981, 4
        %v1984 = vshll.u32 %v1630, 16
        %v1986 = vrot.slane %v1984, 5
        %v1987 = vsel %vm1637, %v1982, %v1986
        %v1988 = vshrl.u32 %v1630, 16
        %v1990 = vrot.slane %v1988, 4
        %v1991 = vor.u32 %v1990, %v1986
        %v1992 = vrot.slane %v1991, 4
        %v1994 = vshll.u32 %v1631, 16
        %v1996 = vrot.slane %v1994, 5
        %v1997 = vsel %vm1637, %v1992, %v1996
        %v1999 = vshrl.u32 %v1632, 16
        %v2001 = vrot.slane %v1999, 4
        %v2002 = vshll.u32 %v1632, 16
        %v2004 = vrot.slane %v2002, 5
        %v2005 = vor.u32 %v2001, %v2004
        %v2006 = vrot.slane %v2005, 4
        %v2008 = vshll.u32 %v1633, 16
        %v2010 = vrot.slane %v2008, 5
        %v2011 = vsel %vm1637, %v2006, %v2010
        %v2012 = vshrl.u32 %v1633, 16
        %v2014 = vrot.slane %v2012, 4
        %v2015 = vor.u32 %v2014, %v2010
        %v2016 = vrot.slane %v2015, 4
        %v2018 = vshll.u32 %v1634, 16
        %v2020 = vrot.slane %v2018, 5
        %v2021 = vsel %vm1637, %v2016, %v2020
        %s2022 = scalar_lea.vmem %s3, 64
        %v2023 = vld [vmem:[%s2022] sm:$0xf]
        %v2024 = vld [vmem:[%s2022 + $0x4] sm:$0xf]
        %v2025 = vld [vmem:[%s2022 + $0x8] sm:$0xf]
        %v2026 = vld [vmem:[%s2022 + $0xc] sm:$0xf]
        %v2027 = vld [vmem:[%s2022 + $0x10] sm:$0xf]
        %v2028 = vld [vmem:[%s2022 + $0x14] sm:$0xf]
        %v2029 = vld [vmem:[%s2022 + $0x18] sm:$0xf]
        %v2030 = vld [vmem:[%s2022 + $0x1c] sm:$0xf]
        %v2031 = vld [vmem:[%s2022 + $0x20] sm:$0xf]
        %v2032 = vld [vmem:[%s2022 + $0x24] sm:$0xf]
        %v2033 = vld [vmem:[%s2022 + $0x28] sm:$0xf]
        %v2034 = vld [vmem:[%s2022 + $0x2c] sm:$0xf]
        %v2035 = vld [vmem:[%s2022 + $0x30] sm:$0xf]
        %v2036 = vld [vmem:[%s2022 + $0x34] sm:$0xf]
        %v2037 = vld [vmem:[%s2022 + $0x38] sm:$0xf]
        %v2038 = vld [vmem:[%s2022 + $0x3c] sm:$0xf]
        %v2039 = vunpack.c.l.b16 %v1651
        %v2040 = vunpack.c.l.b16 %v1661
        %v2041 = vunpack.c.l.b16 %v1675
        %v2042 = vunpack.c.l.b16 %v1685
        %v2043 = vunpack.c.l.b16 %v1699
        %v2044 = vunpack.c.l.b16 %v1709
        %v2045 = vunpack.c.l.b16 %v1723
        %v2046 = vunpack.c.l.b16 %v1733
        %v2047 = vunpack.c.l.b16 %v1747
        %v2048 = vunpack.c.l.b16 %v1757
        %v2049 = vunpack.c.l.b16 %v1771
        %v2050 = vunpack.c.l.b16 %v1781
        %v2051 = vunpack.c.l.b16 %v1795
        %v2052 = vunpack.c.l.b16 %v1805
        %v2053 = vunpack.c.l.b16 %v1819
        %v2054 = vunpack.c.l.b16 %v1829
        %v2055 = vunpack.c.l.b16 %v1843
        %v2056 = vunpack.c.l.b16 %v1853
        %v2057 = vunpack.c.l.b16 %v1867
        %v2058 = vunpack.c.l.b16 %v1877
        %v2059 = vunpack.c.l.b16 %v1891
        %v2060 = vunpack.c.l.b16 %v1901
        %v2061 = vunpack.c.l.b16 %v1915
        %v2062 = vunpack.c.l.b16 %v1925
        %v2063 = vunpack.c.l.b16 %v1939
        %v2064 = vunpack.c.l.b16 %v1949
        %v2065 = vunpack.c.l.b16 %v1963
        %v2066 = vunpack.c.l.b16 %v1973
        %v2067 = vunpack.c.l.b16 %v1987
        %v2068 = vunpack.c.l.b16 %v1997
        %v2069 = vunpack.c.l.b16 %v2011
        %v2070 = vunpack.c.l.b16 %v2021
        %v2071 = vpack.c.b16 %v2040, %v2039
        %v2072 = vpack.c.b16 %v2042, %v2041
        %v2073 = vpack.c.b16 %v2044, %v2043
        %v2074 = vpack.c.b16 %v2046, %v2045
        %v2075 = vpack.c.b16 %v2048, %v2047
        %v2076 = vpack.c.b16 %v2050, %v2049
        %v2077 = vpack.c.b16 %v2052, %v2051
        %v2078 = vpack.c.b16 %v2054, %v2053
        %v2079 = vpack.c.b16 %v2056, %v2055
        %v2080 = vpack.c.b16 %v2058, %v2057
        %v2081 = vpack.c.b16 %v2060, %v2059
        %v2082 = vpack.c.b16 %v2062, %v2061
        %v2083 = vpack.c.b16 %v2064, %v2063
        %v2084 = vpack.c.b16 %v2066, %v2065
        %v2085 = vpack.c.b16 %v2068, %v2067
        %v2086 = vpack.c.b16 %v2070, %v2069
        %v2119 = vunpack.c.l.b16 %v2023
        %v2120 = vunpack.c.l.b16 %v2024
        %v2121 = vunpack.c.l.b16 %v2025
        %v2122 = vunpack.c.l.b16 %v2026
        %v2123 = vunpack.c.l.b16 %v2027
        %v2124 = vunpack.c.l.b16 %v2028
        %v2125 = vunpack.c.l.b16 %v2029
        %v2126 = vunpack.c.l.b16 %v2030
        %v2127 = vunpack.c.l.b16 %v2031
        %v2128 = vunpack.c.l.b16 %v2032
        %v2129 = vunpack.c.l.b16 %v2033
        %v2130 = vunpack.c.l.b16 %v2034
        %v2131 = vunpack.c.l.b16 %v2035
        %v2132 = vunpack.c.l.b16 %v2036
        %v2133 = vunpack.c.l.b16 %v2037
        %v2134 = vunpack.c.l.b16 %v2038
        %v2135 = vpack.c.b16 %v2120, %v2119
        %v2136 = vpack.c.b16 %v2122, %v2121
        %v2137 = vpack.c.b16 %v2124, %v2123
        %v2138 = vpack.c.b16 %v2126, %v2125
        %v2139 = vpack.c.b16 %v2128, %v2127
        %v2140 = vpack.c.b16 %v2130, %v2129
        %v2141 = vpack.c.b16 %v2132, %v2131
        %v2142 = vpack.c.b16 %v2134, %v2133
        %2151 = vmatprep.subr.bf16.mxu0 0
        %2152 = vmatpush1.bf16.msra.mxu0 %v2135
        %2153 = vmatprep.subr.bf16.mxu0 0
        %2154 = vmatpush1.bf16.msra.mxu0 %v2136
        %2155 = vmatprep.subr.bf16.mxu0 0
        %2156 = vmatpush1.bf16.msra.mxu0 %v2137
        %2157 = vmatprep.subr.bf16.mxu0 0
        %2158 = vmatpush1.bf16.msra.mxu0 %v2138
        %2159 = vmatprep.subr.bf16.mxu0 0
        %2160 = vmatpush1.bf16.msra.mxu0 %v2139
        %2161 = vmatprep.subr.bf16.mxu0 0
        %2162 = vmatpush1.bf16.msra.mxu0 %v2140
        %2163 = vmatprep.subr.bf16.mxu0 0
        %2164 = vmatpush1.bf16.msra.mxu0 %v2141
        %2165 = vmatprep.subr.bf16.mxu0 0
        %2166 = vmatpush1.bf16.msra.mxu0 %v2142
        %2167 = vmatprep.subr.bf16.mxu0 0
        %2168 = vmatpush1.bf16.msra.mxu0 0
        %2169 = vmatprep.subr.bf16.mxu0 0
        %2170 = vmatpush1.bf16.msra.mxu0 0
        %2171 = vmatprep.subr.bf16.mxu0 0
        %2172 = vmatpush1.bf16.msra.mxu0 0
        %2173 = vmatprep.subr.bf16.mxu0 0
        %2174 = vmatpush1.bf16.msra.mxu0 0
        %2175 = vmatprep.subr.bf16.mxu0 0
        %2176 = vmatpush1.bf16.msra.mxu0 0
        %2177 = vmatprep.subr.bf16.mxu0 0
        %2178 = vmatpush1.bf16.msra.mxu0 0
        %2179 = vmatprep.subr.bf16.mxu0 0
        %2180 = vmatpush1.bf16.msra.mxu0 0
        %2181 = vmatprep.subr.bf16.mxu0 0
        %2182 = vmatpush1.bf16.msra.mxu0 0
        %2183 = vmatprep.mubr.bf16.mxu0 0
        %2184 = vmatmul.mubr.bf16.gmra.mrb[0].mxu0 %v2071
        %v2185 = vpop.f32.mrb[0].mxu0
        %v2186 = vadd.f32 0.0, %v2185
        %v2187 = vpop.f32.mrb[0].mxu0
        %v2188 = vpop.f32.mrb[0].mxu0
        %v2189 = vadd.f32 0.0, %v2188
        %v2190 = vpop.f32.mrb[0].mxu0
        %2191 = vmatprep.mubr.bf16.mxu0 0
        %2192 = vmatmul.mubr.bf16.gmra.mrb[0].mxu0 %v2072
        %v2193 = vpop.f32.mrb[0].mxu0
        %v2194 = vadd.f32 0.0, %v2193
        %v2195 = vpop.f32.mrb[0].mxu0
        %v2196 = vpop.f32.mrb[0].mxu0
        %v2197 = vadd.f32 0.0, %v2196
        %v2198 = vpop.f32.mrb[0].mxu0
        %2199 = vmatprep.mubr.bf16.mxu0 0
        %2200 = vmatmul.mubr.bf16.gmra.mrb[0].mxu0 %v2073
        %v2201 = vpop.f32.mrb[0].mxu0
        %v2202 = vadd.f32 0.0, %v2201
        %v2203 = vpop.f32.mrb[0].mxu0
        %v2204 = vpop.f32.mrb[0].mxu0
        %v2205 = vadd.f32 0.0, %v2204
        %v2206 = vpop.f32.mrb[0].mxu0
        %2207 = vmatprep.mubr.bf16.mxu0 0
        %2208 = vmatmul.mubr.bf16.gmra.mrb[0].mxu0 %v2074
        %v2209 = vpop.f32.mrb[0].mxu0
        %v2210 = vadd.f32 0.0, %v2209
        %v2211 = vpop.f32.mrb[0].mxu0
        %v2212 = vpop.f32.mrb[0].mxu0
        %v2213 = vadd.f32 0.0, %v2212
        %v2214 = vpop.f32.mrb[0].mxu0
        %2215 = vmatprep.mubr.bf16.mxu0 0
        %2216 = vmatmul.mubr.bf16.gmra.mrb[0].mxu0 %v2075
        %v2217 = vpop.f32.mrb[0].mxu0
        %v2218 = vadd.f32 0.0, %v2217
        %v2219 = vpop.f32.mrb[0].mxu0
        %v2220 = vpop.f32.mrb[0].mxu0
        %v2221 = vadd.f32 0.0, %v2220
        %v2222 = vpop.f32.mrb[0].mxu0
        %2223 = vmatprep.mubr.bf16.mxu0 0
        %2224 = vmatmul.mubr.bf16.gmra.mrb[0].mxu0 %v2076
        %v2225 = vpop.f32.mrb[0].mxu0
        %v2226 = vadd.f32 0.0, %v2225
        %v2227 = vpop.f32.mrb[0].mxu0
        %v2228 = vpop.f32.mrb[0].mxu0
        %v2229 = vadd.f32 0.0, %v2228
        %v2230 = vpop.f32.mrb[0].mxu0
        %2231 = vmatprep.mubr.bf16.mxu0 0
        %2232 = vmatmul.mubr.bf16.gmra.mrb[0].mxu0 %v2077
        %v2233 = vpop.f32.mrb[0].mxu0
        %v2234 = vadd.f32 0.0, %v2233
        %v2235 = vpop.f32.mrb[0].mxu0
        %v2236 = vpop.f32.mrb[0].mxu0
        %v2237 = vadd.f32 0.0, %v2236
        %v2238 = vpop.f32.mrb[0].mxu0
        %2239 = vmatprep.mubr.bf16.mxu0 0
        %2240 = vmatmul.mubr.bf16.gmra.mrb[0].mxu0 %v2078
        %v2241 = vpop.f32.mrb[0].mxu0
        %v2242 = vadd.f32 0.0, %v2241
        %v2243 = vpop.f32.mrb[0].mxu0
        %v2244 = vpop.f32.mrb[0].mxu0
        %v2245 = vadd.f32 0.0, %v2244
        %v2246 = vpop.f32.mrb[0].mxu0
        %2247 = vmatprep.mubr.bf16.mxu0 0
        %2248 = vmatmul.mubr.bf16.gmra.mrb[0].mxu0 %v2079
        %v2249 = vpop.f32.mrb[0].mxu0
        %v2250 = vadd.f32 0.0, %v2249
        %v2251 = vpop.f32.mrb[0].mxu0
        %v2252 = vpop.f32.mrb[0].mxu0
        %v2253 = vadd.f32 0.0, %v2252
        %v2254 = vpop.f32.mrb[0].mxu0
        %2255 = vmatprep.mubr.bf16.mxu0 0
        %2256 = vmatmul.mubr.bf16.gmra.mrb[0].mxu0 %v2080
        %v2257 = vpop.f32.mrb[0].mxu0
        %v2258 = vadd.f32 0.0, %v2257
        %v2259 = vpop.f32.mrb[0].mxu0
        %v2260 = vpop.f32.mrb[0].mxu0
        %v2261 = vadd.f32 0.0, %v2260
        %v2262 = vpop.f32.mrb[0].mxu0
        %2263 = vmatprep.mubr.bf16.mxu0 0
        %2264 = vmatmul.mubr.bf16.gmra.mrb[0].mxu0 %v2081
        %v2265 = vpop.f32.mrb[0].mxu0
        %v2266 = vadd.f32 0.0, %v2265
        %v2267 = vpop.f32.mrb[0].mxu0
        %v2268 = vpop.f32.mrb[0].mxu0
        %v2269 = vadd.f32 0.0, %v2268
        %v2270 = vpop.f32.mrb[0].mxu0
        %2271 = vmatprep.mubr.bf16.mxu0 0
        %2272 = vmatmul.mubr.bf16.gmra.mrb[0].mxu0 %v2082
        %v2273 = vpop.f32.mrb[0].mxu0
        %v2274 = vadd.f32 0.0, %v2273
        %v2275 = vpop.f32.mrb[0].mxu0
        %v2276 = vpop.f32.mrb[0].mxu0
        %v2277 = vadd.f32 0.0, %v2276
        %v2278 = vpop.f32.mrb[0].mxu0
        %2279 = vmatprep.mubr.bf16.mxu0 0
        %2280 = vmatmul.mubr.bf16.gmra.mrb[0].mxu0 %v2083
        %v2281 = vpop.f32.mrb[0].mxu0
        %v2282 = vadd.f32 0.0, %v2281
        %v2283 = vpop.f32.mrb[0].mxu0
        %v2284 = vpop.f32.mrb[0].mxu0
        %v2285 = vadd.f32 0.0, %v2284
        %v2286 = vpop.f32.mrb[0].mxu0
        %2287 = vmatprep.mubr.bf16.mxu0 0
        %2288 = vmatmul.mubr.bf16.gmra.mrb[0].mxu0 %v2084
        %v2289 = vpop.f32.mrb[0].mxu0
        %v2290 = vadd.f32 0.0, %v2289
        %v2291 = vpop.f32.mrb[0].mxu0
        %v2292 = vpop.f32.mrb[0].mxu0
        %v2293 = vadd.f32 0.0, %v2292
        %v2294 = vpop.f32.mrb[0].mxu0
        %2295 = vmatprep.mubr.bf16.mxu0 0
        %2296 = vmatmul.mubr.bf16.gmra.mrb[0].mxu0 %v2085
        %v2297 = vpop.f32.mrb[0].mxu0
        %v2298 = vadd.f32 0.0, %v2297
        %v2299 = vpop.f32.mrb[0].mxu0
        %v2300 = vpop.f32.mrb[0].mxu0
        %v2301 = vadd.f32 0.0, %v2300
        %v2302 = vpop.f32.mrb[0].mxu0
        %2303 = vmatprep.mubr.bf16.mxu0 0
        %2304 = vmatmul.mubr.bf16.gmra.mrb[0].mxu0 %v2086
        %v2305 = vpop.f32.mrb[0].mxu0
        %v2306 = vadd.f32 0.0, %v2305
        %v2307 = vpop.f32.mrb[0].mxu0
        %v2308 = vpop.f32.mrb[0].mxu0
        %v2309 = vadd.f32 0.0, %v2308
        %v2310 = vpop.f32.mrb[0].mxu0
        %2311 = vdwg.mxu0
        %v2312 = vld [vmem:[#allocation2] sm:$0xff]
        %v2313 = vld [vmem:[#allocation2 + $0x8] sm:$0xff]
        %v2314 = vld [vmem:[#allocation2 + $0x10] sm:$0xff]
        %v2315 = vld [vmem:[#allocation2 + $0x18] sm:$0xff]
        %v2316 = vld [vmem:[#allocation2 + $0x20] sm:$0xff]
        %v2317 = vld [vmem:[#allocation2 + $0x28] sm:$0xff]
        %v2318 = vld [vmem:[#allocation2 + $0x30] sm:$0xff]
        %v2319 = vld [vmem:[#allocation2 + $0x38] sm:$0xff]
        %v2320 = vld [vmem:[#allocation2 + $0x40] sm:$0xff]
        %v2321 = vld [vmem:[#allocation2 + $0x48] sm:$0xff]
        %v2322 = vld [vmem:[#allocation2 + $0x50] sm:$0xff]
        %v2323 = vld [vmem:[#allocation2 + $0x58] sm:$0xff]
        %v2324 = vld [vmem:[#allocation2 + $0x60] sm:$0xff]
        %v2325 = vld [vmem:[#allocation2 + $0x68] sm:$0xff]
        %v2326 = vld [vmem:[#allocation2 + $0x70] sm:$0xff]
        %v2327 = vld [vmem:[#allocation2 + $0x78] sm:$0xff]
        %v2328 = vld [vmem:[#allocation2 + $0x80] sm:$0xff]
        %v2329 = vld [vmem:[#allocation2 + $0x88] sm:$0xff]
        %v2330 = vld [vmem:[#allocation2 + $0x90] sm:$0xff]
        %v2331 = vld [vmem:[#allocation2 + $0x98] sm:$0xff]
        %v2332 = vld [vmem:[#allocation2 + $0xa0] sm:$0xff]
        %v2333 = vld [vmem:[#allocation2 + $0xa8] sm:$0xff]
        %v2334 = vld [vmem:[#allocation2 + $0xb0] sm:$0xff]
        %v2335 = vld [vmem:[#allocation2 + $0xb8] sm:$0xff]
        %v2336 = vld [vmem:[#allocation2 + $0xc0] sm:$0xff]
        %v2337 = vld [vmem:[#allocation2 + $0xc8] sm:$0xff]
        %v2338 = vld [vmem:[#allocation2 + $0xd0] sm:$0xff]
        %v2339 = vld [vmem:[#allocation2 + $0xd8] sm:$0xff]
        %v2340 = vld [vmem:[#allocation2 + $0xe0] sm:$0xff]
        %v2341 = vld [vmem:[#allocation2 + $0xe8] sm:$0xff]
        %v2342 = vld [vmem:[#allocation2 + $0xf0] sm:$0xff]
        %v2343 = vld [vmem:[#allocation2 + $0xf8] sm:$0xff]
        %v2344 = vadd.f32 %v2312, %v2186
        %v2345 = vadd.f32 %v2313, %v2189
        %v2346 = vadd.f32 %v2314, %v2194
        %v2347 = vadd.f32 %v2315, %v2197
        %v2348 = vadd.f32 %v2316, %v2202
        %v2349 = vadd.f32 %v2317, %v2205
        %v2350 = vadd.f32 %v2318, %v2210
        %v2351 = vadd.f32 %v2319, %v2213
        %v2352 = vadd.f32 %v2320, %v2218
        %v2353 = vadd.f32 %v2321, %v2221
        %v2354 = vadd.f32 %v2322, %v2226
        %v2355 = vadd.f32 %v2323, %v2229
        %v2356 = vadd.f32 %v2324, %v2234
        %v2357 = vadd.f32 %v2325, %v2237
        %v2358 = vadd.f32 %v2326, %v2242
        %v2359 = vadd.f32 %v2327, %v2245
        %v2360 = vadd.f32 %v2328, %v2250
        %v2361 = vadd.f32 %v2329, %v2253
        %v2362 = vadd.f32 %v2330, %v2258
        %v2363 = vadd.f32 %v2331, %v2261
        %v2364 = vadd.f32 %v2332, %v2266
        %v2365 = vadd.f32 %v2333, %v2269
        %v2366 = vadd.f32 %v2334, %v2274
        %v2367 = vadd.f32 %v2335, %v2277
        %v2368 = vadd.f32 %v2336, %v2282
        %v2369 = vadd.f32 %v2337, %v2285
        %v2370 = vadd.f32 %v2338, %v2290
        %v2371 = vadd.f32 %v2339, %v2293
        %v2372 = vadd.f32 %v2340, %v2298
        %v2373 = vadd.f32 %v2341, %v2301
        %v2374 = vadd.f32 %v2342, %v2306
        %v2375 = vadd.f32 %v2343, %v2309
        %2376 = vst [vmem:[#allocation2] sm:$0xff] %v2344
        %2377 = vst [vmem:[#allocation2 + $0x8] sm:$0xff] %v2345
        %2378 = vst [vmem:[#allocation2 + $0x10] sm:$0xff] %v2346
        %2379 = vst [vmem:[#allocation2 + $0x18] sm:$0xff] %v2347
        %2380 = vst [vmem:[#allocation2 + $0x20] sm:$0xff] %v2348
        %2381 = vst [vmem:[#allocation2 + $0x28] sm:$0xff] %v2349
        %2382 = vst [vmem:[#allocation2 + $0x30] sm:$0xff] %v2350
        %2383 = vst [vmem:[#allocation2 + $0x38] sm:$0xff] %v2351
        %2384 = vst [vmem:[#allocation2 + $0x40] sm:$0xff] %v2352
        %2385 = vst [vmem:[#allocation2 + $0x48] sm:$0xff] %v2353
        %2386 = vst [vmem:[#allocation2 + $0x50] sm:$0xff] %v2354
        %2387 = vst [vmem:[#allocation2 + $0x58] sm:$0xff] %v2355
        %2388 = vst [vmem:[#allocation2 + $0x60] sm:$0xff] %v2356
        %2389 = vst [vmem:[#allocation2 + $0x68] sm:$0xff] %v2357
        %2390 = vst [vmem:[#allocation2 + $0x70] sm:$0xff] %v2358
        %2391 = vst [vmem:[#allocation2 + $0x78] sm:$0xff] %v2359
        %2392 = vst [vmem:[#allocation2 + $0x80] sm:$0xff] %v2360
        %2393 = vst [vmem:[#allocation2 + $0x88] sm:$0xff] %v2361
        %2394 = vst [vmem:[#allocation2 + $0x90] sm:$0xff] %v2362
        %2395 = vst [vmem:[#allocation2 + $0x98] sm:$0xff] %v2363
        %2396 = vst [vmem:[#allocation2 + $0xa0] sm:$0xff] %v2364
        %2397 = vst [vmem:[#allocation2 + $0xa8] sm:$0xff] %v2365
        %2398 = vst [vmem:[#allocation2 + $0xb0] sm:$0xff] %v2366
        %2399 = vst [vmem:[#allocation2 + $0xb8] sm:$0xff] %v2367
        %2400 = vst [vmem:[#allocation2 + $0xc0] sm:$0xff] %v2368
        %2401 = vst [vmem:[#allocation2 + $0xc8] sm:$0xff] %v2369
        %2402 = vst [vmem:[#allocation2 + $0xd0] sm:$0xff] %v2370
        %2403 = vst [vmem:[#allocation2 + $0xd8] sm:$0xff] %v2371
        %2404 = vst [vmem:[#allocation2 + $0xe0] sm:$0xff] %v2372
        %2405 = vst [vmem:[#allocation2 + $0xe8] sm:$0xff] %v2373
        %2406 = vst [vmem:[#allocation2 + $0xf0] sm:$0xff] %v2374
        %2407 = vst [vmem:[#allocation2 + $0xf8] sm:$0xff] %v2375
        %v2408 = vld [vmem:[#allocation3] sm:$0xe]
        %v2409 = vld [vmem:[#allocation3 + $0x4] sm:$0xf]
        %v2410 = vld [vmem:[#allocation3 + $0x8] sm:$0x1]
        %v2411 = vld [vmem:[#allocation3 + $0xc] sm:$0xe]
        %v2412 = vld [vmem:[#allocation3 + $0x10] sm:$0xf]
        %v2413 = vld [vmem:[#allocation3 + $0x14] sm:$0x1]
        %v2414 = vld [vmem:[#allocation3 + $0x18] sm:$0xe]
        %v2415 = vld [vmem:[#allocation3 + $0x1c] sm:$0xf]
        %v2416 = vld [vmem:[#allocation3 + $0x20] sm:$0x1]
        %v2417 = vld [vmem:[#allocation3 + $0x24] sm:$0xe]
        %v2418 = vld [vmem:[#allocation3 + $0x28] sm:$0xf]
        %v2419 = vld [vmem:[#allocation3 + $0x2c] sm:$0x1]
        %v2420 = vld [vmem:[#allocation3 + $0x30] sm:$0xe]
        %v2421 = vld [vmem:[#allocation3 + $0x34] sm:$0xf]
        %v2422 = vld [vmem:[#allocation3 + $0x38] sm:$0x1]
        %v2423 = vld [vmem:[#allocation3 + $0x3c] sm:$0xe]
        %v2424 = vld [vmem:[#allocation3 + $0x40] sm:$0xf]
        %v2425 = vld [vmem:[#allocation3 + $0x44] sm:$0x1]
        %v2426 = vld [vmem:[#allocation3 + $0x48] sm:$0xe]
        %v2427 = vld [vmem:[#allocation3 + $0x4c] sm:$0xf]
        %v2428 = vld [vmem:[#allocation3 + $0x50] sm:$0x1]
        %v2429 = vld [vmem:[#allocation3 + $0x54] sm:$0xe]
        %v2430 = vld [vmem:[#allocation3 + $0x58] sm:$0xf]
        %v2431 = vld [vmem:[#allocation3 + $0x5c] sm:$0x1]
        %v2432 = vld [vmem:[#allocation3 + $0x60] sm:$0xe]
        %v2433 = vld [vmem:[#allocation3 + $0x64] sm:$0xf]
        %v2434 = vld [vmem:[#allocation3 + $0x68] sm:$0x1]
        %v2435 = vld [vmem:[#allocation3 + $0x6c] sm:$0xe]
        %v2436 = vld [vmem:[#allocation3 + $0x70] sm:$0xf]
        %v2437 = vld [vmem:[#allocation3 + $0x74] sm:$0x1]
        %v2438 = vld [vmem:[#allocation3 + $0x78] sm:$0xe]
        %v2439 = vld [vmem:[#allocation3 + $0x7c] sm:$0xf]
        %v2440 = vld [vmem:[#allocation3 + $0x80] sm:$0x1]
        %v2441 = vld [vmem:[#allocation3 + $0x84] sm:$0xe]
        %v2442 = vld [vmem:[#allocation3 + $0x88] sm:$0xf]
        %v2443 = vld [vmem:[#allocation3 + $0x8c] sm:$0x1]
        %v2444 = vld [vmem:[#allocation3 + $0x90] sm:$0xe]
        %v2445 = vld [vmem:[#allocation3 + $0x94] sm:$0xf]
        %v2446 = vld [vmem:[#allocation3 + $0x98] sm:$0x1]
        %v2447 = vld [vmem:[#allocation3 + $0x9c] sm:$0xe]
        %v2448 = vld [vmem:[#allocation3 + $0xa0] sm:$0xf]
        %v2449 = vld [vmem:[#allocation3 + $0xa4] sm:$0x1]
        %v2450 = vld [vmem:[#allocation3 + $0xa8] sm:$0xe]
        %v2451 = vld [vmem:[#allocation3 + $0xac] sm:$0xf]
        %v2452 = vld [vmem:[#allocation3 + $0xb0] sm:$0x1]
        %v2453 = vld [vmem:[#allocation3 + $0xb4] sm:$0xe]
        %v2454 = vld [vmem:[#allocation3 + $0xb8] sm:$0xf]
        %v2455 = vld [vmem:[#allocation3 + $0xbc] sm:$0x1]
        %vm2504 = vcmask 1042432
        %vm2505 = vcmask 1046532
        %vm2506 = vmor %vm2504, %vm2505
        %v2507 = vrot.slane %v2408, 5
        %v2508 = vrot.slane %v2507, 4
        %v2509 = vrot.slane %v2409, 5
        %v2510 = vsel %vm2506, %v2508, %v2509
        %v2511 = vrot.slane %v2509, 4
        %v2512 = vrot.slane %v2410, 5
        %v2513 = vsel %vm2506, %v2511, %v2512
        %v2514 = vrot.slane %v2411, 5
        %v2515 = vrot.slane %v2514, 4
        %v2516 = vrot.slane %v2412, 5
        %v2517 = vsel %vm2506, %v2515, %v2516
        %v2518 = vrot.slane %v2516, 4
        %v2519 = vrot.slane %v2413, 5
        %v2520 = vsel %vm2506, %v2518, %v2519
        %v2521 = vrot.slane %v2414, 5
        %v2522 = vrot.slane %v2521, 4
        %v2523 = vrot.slane %v2415, 5
        %v2524 = vsel %vm2506, %v2522, %v2523
        %v2525 = vrot.slane %v2523, 4
        %v2526 = vrot.slane %v2416, 5
        %v2527 = vsel %vm2506, %v2525, %v2526
        %v2528 = vrot.slane %v2417, 5
        %v2529 = vrot.slane %v2528, 4
        %v2530 = vrot.slane %v2418, 5
        %v2531 = vsel %vm2506, %v2529, %v2530
        %v2532 = vrot.slane %v2530, 4
        %v2533 = vrot.slane %v2419, 5
        %v2534 = vsel %vm2506, %v2532, %v2533
        %v2535 = vrot.slane %v2420, 5
        %v2536 = vrot.slane %v2535, 4
        %v2537 = vrot.slane %v2421, 5
        %v2538 = vsel %vm2506, %v2536, %v2537
        %v2539 = vrot.slane %v2537, 4
        %v2540 = vrot.slane %v2422, 5
        %v2541 = vsel %vm2506, %v2539, %v2540
        %v2542 = vrot.slane %v2423, 5
        %v2543 = vrot.slane %v2542, 4
        %v2544 = vrot.slane %v2424, 5
        %v2545 = vsel %vm2506, %v2543, %v2544
        %v2546 = vrot.slane %v2544, 4
        %v2547 = vrot.slane %v2425, 5
        %v2548 = vsel %vm2506, %v2546, %v2547
        %v2549 = vrot.slane %v2426, 5
        %v2550 = vrot.slane %v2549, 4
        %v2551 = vrot.slane %v2427, 5
        %v2552 = vsel %vm2506, %v2550, %v2551
        %v2553 = vrot.slane %v2551, 4
        %v2554 = vrot.slane %v2428, 5
        %v2555 = vsel %vm2506, %v2553, %v2554
        %v2556 = vrot.slane %v2429, 5
        %v2557 = vrot.slane %v2556, 4
        %v2558 = vrot.slane %v2430, 5
        %v2559 = vsel %vm2506, %v2557, %v2558
        %v2560 = vrot.slane %v2558, 4
        %v2561 = vrot.slane %v2431, 5
        %v2562 = vsel %vm2506, %v2560, %v2561
        %v2563 = vrot.slane %v2432, 5
        %v2564 = vrot.slane %v2563, 4
        %v2565 = vrot.slane %v2433, 5
        %v2566 = vsel %vm2506, %v2564, %v2565
        %v2567 = vrot.slane %v2565, 4
        %v2568 = vrot.slane %v2434, 5
        %v2569 = vsel %vm2506, %v2567, %v2568
        %v2570 = vrot.slane %v2435, 5
        %v2571 = vrot.slane %v2570, 4
        %v2572 = vrot.slane %v2436, 5
        %v2573 = vsel %vm2506, %v2571, %v2572
        %v2574 = vrot.slane %v2572, 4
        %v2575 = vrot.slane %v2437, 5
        %v2576 = vsel %vm2506, %v2574, %v2575
        %v2577 = vrot.slane %v2438, 5
        %v2578 = vrot.slane %v2577, 4
        %v2579 = vrot.slane %v2439, 5
        %v2580 = vsel %vm2506, %v2578, %v2579
        %v2581 = vrot.slane %v2579, 4
        %v2582 = vrot.slane %v2440, 5
        %v2583 = vsel %vm2506, %v2581, %v2582
        %v2584 = vrot.slane %v2441, 5
        %v2585 = vrot.slane %v2584, 4
        %v2586 = vrot.slane %v2442, 5
        %v2587 = vsel %vm2506, %v2585, %v2586
        %v2588 = vrot.slane %v2586, 4
        %v2589 = vrot.slane %v2443, 5
        %v2590 = vsel %vm2506, %v2588, %v2589
        %v2591 = vrot.slane %v2444, 5
        %v2592 = vrot.slane %v2591, 4
        %v2593 = vrot.slane %v2445, 5
        %v2594 = vsel %vm2506, %v2592, %v2593
        %v2595 = vrot.slane %v2593, 4
        %v2596 = vrot.slane %v2446, 5
        %v2597 = vsel %vm2506, %v2595, %v2596
        %v2598 = vrot.slane %v2447, 5
        %v2599 = vrot.slane %v2598, 4
        %v2600 = vrot.slane %v2448, 5
        %v2601 = vsel %vm2506, %v2599, %v2600
        %v2602 = vrot.slane %v2600, 4
        %v2603 = vrot.slane %v2449, 5
        %v2604 = vsel %vm2506, %v2602, %v2603
        %v2605 = vrot.slane %v2450, 5
        %v2606 = vrot.slane %v2605, 4
        %v2607 = vrot.slane %v2451, 5
        %v2608 = vsel %vm2506, %v2606, %v2607
        %v2609 = vrot.slane %v2607, 4
        %v2610 = vrot.slane %v2452, 5
        %v2611 = vsel %vm2506, %v2609, %v2610
        %v2612 = vrot.slane %v2453, 5
        %v2613 = vrot.slane %v2612, 4
        %v2614 = vrot.slane %v2454, 5
        %v2615 = vsel %vm2506, %v2613, %v2614
        %v2616 = vrot.slane %v2614, 4
        %v2617 = vrot.slane %v2455, 5
        %v2618 = vsel %vm2506, %v2616, %v2617
        %s2619 = scalar_lea.vmem %s3, 128
        %v2620 = vld [vmem:[%s2619] sm:$0xf]
        %v2621 = vld [vmem:[%s2619 + $0x4] sm:$0xf]
        %v2622 = vld [vmem:[%s2619 + $0x8] sm:$0xf]
        %v2623 = vld [vmem:[%s2619 + $0xc] sm:$0xf]
        %v2624 = vld [vmem:[%s2619 + $0x10] sm:$0xf]
        %v2625 = vld [vmem:[%s2619 + $0x14] sm:$0xf]
        %v2626 = vld [vmem:[%s2619 + $0x18] sm:$0xf]
        %v2627 = vld [vmem:[%s2619 + $0x1c] sm:$0xf]
        %v2628 = vld [vmem:[%s2619 + $0x20] sm:$0xf]
        %v2629 = vld [vmem:[%s2619 + $0x24] sm:$0xf]
        %v2630 = vld [vmem:[%s2619 + $0x28] sm:$0xf]
        %v2631 = vld [vmem:[%s2619 + $0x2c] sm:$0xf]
        %v2632 = vld [vmem:[%s2619 + $0x30] sm:$0xf]
        %v2633 = vld [vmem:[%s2619 + $0x34] sm:$0xf]
        %v2634 = vld [vmem:[%s2619 + $0x38] sm:$0xf]
        %v2635 = vld [vmem:[%s2619 + $0x3c] sm:$0xf]
        %v2636 = vunpack.c.l.b16 %v2510
        %v2637 = vunpack.c.l.b16 %v2513
        %v2638 = vunpack.c.l.b16 %v2517
        %v2639 = vunpack.c.l.b16 %v2520
        %v2640 = vunpack.c.l.b16 %v2524
        %v2641 = vunpack.c.l.b16 %v2527
        %v2642 = vunpack.c.l.b16 %v2531
        %v2643 = vunpack.c.l.b16 %v2534
        %v2644 = vunpack.c.l.b16 %v2538
        %v2645 = vunpack.c.l.b16 %v2541
        %v2646 = vunpack.c.l.b16 %v2545
        %v2647 = vunpack.c.l.b16 %v2548
        %v2648 = vunpack.c.l.b16 %v2552
        %v2649 = vunpack.c.l.b16 %v2555
        %v2650 = vunpack.c.l.b16 %v2559
        %v2651 = vunpack.c.l.b16 %v2562
        %v2652 = vunpack.c.l.b16 %v2566
        %v2653 = vunpack.c.l.b16 %v2569
        %v2654 = vunpack.c.l.b16 %v2573
        %v2655 = vunpack.c.l.b16 %v2576
        %v2656 = vunpack.c.l.b16 %v2580
        %v2657 = vunpack.c.l.b16 %v2583
        %v2658 = vunpack.c.l.b16 %v2587
        %v2659 = vunpack.c.l.b16 %v2590
        %v2660 = vunpack.c.l.b16 %v2594
        %v2661 = vunpack.c.l.b16 %v2597
        %v2662 = vunpack.c.l.b16 %v2601
        %v2663 = vunpack.c.l.b16 %v2604
        %v2664 = vunpack.c.l.b16 %v2608
        %v2665 = vunpack.c.l.b16 %v2611
        %v2666 = vunpack.c.l.b16 %v2615
        %v2667 = vunpack.c.l.b16 %v2618
        %v2668 = vpack.c.b16 %v2637, %v2636
        %v2669 = vpack.c.b16 %v2639, %v2638
        %v2670 = vpack.c.b16 %v2641, %v2640
        %v2671 = vpack.c.b16 %v2643, %v2642
        %v2672 = vpack.c.b16 %v2645, %v2644
        %v2673 = vpack.c.b16 %v2647, %v2646
        %v2674 = vpack.c.b16 %v2649, %v2648
        %v2675 = vpack.c.b16 %v2651, %v2650
        %v2676 = vpack.c.b16 %v2653, %v2652
        %v2677 = vpack.c.b16 %v2655, %v2654
        %v2678 = vpack.c.b16 %v2657, %v2656
        %v2679 = vpack.c.b16 %v2659, %v2658
        %v2680 = vpack.c.b16 %v2661, %v2660
        %v2681 = vpack.c.b16 %v2663, %v2662
        %v2682 = vpack.c.b16 %v2665, %v2664
        %v2683 = vpack.c.b16 %v2667, %v2666
        %v2716 = vunpack.c.l.b16 %v2620
        %v2717 = vunpack.c.l.b16 %v2621
        %v2718 = vunpack.c.l.b16 %v2622
        %v2719 = vunpack.c.l.b16 %v2623
        %v2720 = vunpack.c.l.b16 %v2624
        %v2721 = vunpack.c.l.b16 %v2625
        %v2722 = vunpack.c.l.b16 %v2626
        %v2723 = vunpack.c.l.b16 %v2627
        %v2724 = vunpack.c.l.b16 %v2628
        %v2725 = vunpack.c.l.b16 %v2629
        %v2726 = vunpack.c.l.b16 %v2630
        %v2727 = vunpack.c.l.b16 %v2631
        %v2728 = vunpack.c.l.b16 %v2632
        %v2729 = vunpack.c.l.b16 %v2633
        %v2730 = vunpack.c.l.b16 %v2634
        %v2731 = vunpack.c.l.b16 %v2635
        %v2732 = vpack.c.b16 %v2717, %v2716
        %v2733 = vpack.c.b16 %v2719, %v2718
        %v2734 = vpack.c.b16 %v2721, %v2720
        %v2735 = vpack.c.b16 %v2723, %v2722
        %v2736 = vpack.c.b16 %v2725, %v2724
        %v2737 = vpack.c.b16 %v2727, %v2726
        %v2738 = vpack.c.b16 %v2729, %v2728
        %v2739 = vpack.c.b16 %v2731, %v2730
        %2748 = vmatprep.subr.bf16.mxu0 0
        %2749 = vmatpush1.bf16.msra.mxu0 %v2732
        %2750 = vmatprep.subr.bf16.mxu0 0
        %2751 = vmatpush1.bf16.msra.mxu0 %v2733
        %2752 = vmatprep.subr.bf16.mxu0 0
        %2753 = vmatpush1.bf16.msra.mxu0 %v2734
        %2754 = vmatprep.subr.bf16.mxu0 0
        %2755 = vmatpush1.bf16.msra.mxu0 %v2735
        %2756 = vmatprep.subr.bf16.mxu0 0
        %2757 = vmatpush1.bf16.msra.mxu0 %v2736
        %2758 = vmatprep.subr.bf16.mxu0 0
        %2759 = vmatpush1.bf16.msra.mxu0 %v2737
        %2760 = vmatprep.subr.bf16.mxu0 0
        %2761 = vmatpush1.bf16.msra.mxu0 %v2738
        %2762 = vmatprep.subr.bf16.mxu0 0
        %2763 = vmatpush1.bf16.msra.mxu0 %v2739
        %2764 = vmatprep.subr.bf16.mxu0 0
        %2765 = vmatpush1.bf16.msra.mxu0 0
        %2766 = vmatprep.subr.bf16.mxu0 0
        %2767 = vmatpush1.bf16.msra.mxu0 0
        %2768 = vmatprep.subr.bf16.mxu0 0
        %2769 = vmatpush1.bf16.msra.mxu0 0
        %2770 = vmatprep.subr.bf16.mxu0 0
        %2771 = vmatpush1.bf16.msra.mxu0 0
        %2772 = vmatprep.subr.bf16.mxu0 0
        %2773 = vmatpush1.bf16.msra.mxu0 0
        %2774 = vmatprep.subr.bf16.mxu0 0
        %2775 = vmatpush1.bf16.msra.mxu0 0
        %2776 = vmatprep.subr.bf16.mxu0 0
        %2777 = vmatpush1.bf16.msra.mxu0 0
        %2778 = vmatprep.subr.bf16.mxu0 0
        %2779 = vmatpush1.bf16.msra.mxu0 0
        %2780 = vmatprep.mubr.bf16.mxu0 0
        %2781 = vmatmul.mubr.bf16.gmra.mrb[0].mxu0 %v2668
        %v2782 = vpop.f32.mrb[0].mxu0
        %v2783 = vadd.f32 0.0, %v2782
        %v2784 = vpop.f32.mrb[0].mxu0
        %v2785 = vpop.f32.mrb[0].mxu0
        %v2786 = vadd.f32 0.0, %v2785
        %v2787 = vpop.f32.mrb[0].mxu0
        %2788 = vmatprep.mubr.bf16.mxu0 0
        %2789 = vmatmul.mubr.bf16.gmra.mrb[0].mxu0 %v2669
        %v2790 = vpop.f32.mrb[0].mxu0
        %v2791 = vadd.f32 0.0, %v2790
        %v2792 = vpop.f32.mrb[0].mxu0
        %v2793 = vpop.f32.mrb[0].mxu0
        %v2794 = vadd.f32 0.0, %v2793
        %v2795 = vpop.f32.mrb[0].mxu0
        %2796 = vmatprep.mubr.bf16.mxu0 0
        %2797 = vmatmul.mubr.bf16.gmra.mrb[0].mxu0 %v2670
        %v2798 = vpop.f32.mrb[0].mxu0
        %v2799 = vadd.f32 0.0, %v2798
        %v2800 = vpop.f32.mrb[0].mxu0
        %v2801 = vpop.f32.mrb[0].mxu0
        %v2802 = vadd.f32 0.0, %v2801
        %v2803 = vpop.f32.mrb[0].mxu0
        %2804 = vmatprep.mubr.bf16.mxu0 0
        %2805 = vmatmul.mubr.bf16.gmra.mrb[0].mxu0 %v2671
        %v2806 = vpop.f32.mrb[0].mxu0
        %v2807 = vadd.f32 0.0, %v2806
        %v2808 = vpop.f32.mrb[0].mxu0
        %v2809 = vpop.f32.mrb[0].mxu0
        %v2810 = vadd.f32 0.0, %v2809
        %v2811 = vpop.f32.mrb[0].mxu0
        %2812 = vmatprep.mubr.bf16.mxu0 0
        %2813 = vmatmul.mubr.bf16.gmra.mrb[0].mxu0 %v2672
        %v2814 = vpop.f32.mrb[0].mxu0
        %v2815 = vadd.f32 0.0, %v2814
        %v2816 = vpop.f32.mrb[0].mxu0
        %v2817 = vpop.f32.mrb[0].mxu0
        %v2818 = vadd.f32 0.0, %v2817
        %v2819 = vpop.f32.mrb[0].mxu0
        %2820 = vmatprep.mubr.bf16.mxu0 0
        %2821 = vmatmul.mubr.bf16.gmra.mrb[0].mxu0 %v2673
        %v2822 = vpop.f32.mrb[0].mxu0
        %v2823 = vadd.f32 0.0, %v2822
        %v2824 = vpop.f32.mrb[0].mxu0
        %v2825 = vpop.f32.mrb[0].mxu0
        %v2826 = vadd.f32 0.0, %v2825
        %v2827 = vpop.f32.mrb[0].mxu0
        %2828 = vmatprep.mubr.bf16.mxu0 0
        %2829 = vmatmul.mubr.bf16.gmra.mrb[0].mxu0 %v2674
        %v2830 = vpop.f32.mrb[0].mxu0
        %v2831 = vadd.f32 0.0, %v2830
        %v2832 = vpop.f32.mrb[0].mxu0
        %v2833 = vpop.f32.mrb[0].mxu0
        %v2834 = vadd.f32 0.0, %v2833
        %v2835 = vpop.f32.mrb[0].mxu0
        %2836 = vmatprep.mubr.bf16.mxu0 0
        %2837 = vmatmul.mubr.bf16.gmra.mrb[0].mxu0 %v2675
        %v2838 = vpop.f32.mrb[0].mxu0
        %v2839 = vadd.f32 0.0, %v2838
        %v2840 = vpop.f32.mrb[0].mxu0
        %v2841 = vpop.f32.mrb[0].mxu0
        %v2842 = vadd.f32 0.0, %v2841
        %v2843 = vpop.f32.mrb[0].mxu0
        %2844 = vmatprep.mubr.bf16.mxu0 0
        %2845 = vmatmul.mubr.bf16.gmra.mrb[0].mxu0 %v2676
        %v2846 = vpop.f32.mrb[0].mxu0
        %v2847 = vadd.f32 0.0, %v2846
        %v2848 = vpop.f32.mrb[0].mxu0
        %v2849 = vpop.f32.mrb[0].mxu0
        %v2850 = vadd.f32 0.0, %v2849
        %v2851 = vpop.f32.mrb[0].mxu0
        %2852 = vmatprep.mubr.bf16.mxu0 0
        %2853 = vmatmul.mubr.bf16.gmra.mrb[0].mxu0 %v2677
        %v2854 = vpop.f32.mrb[0].mxu0
        %v2855 = vadd.f32 0.0, %v2854
        %v2856 = vpop.f32.mrb[0].mxu0
        %v2857 = vpop.f32.mrb[0].mxu0
        %v2858 = vadd.f32 0.0, %v2857
        %v2859 = vpop.f32.mrb[0].mxu0
        %2860 = vmatprep.mubr.bf16.mxu0 0
        %2861 = vmatmul.mubr.bf16.gmra.mrb[0].mxu0 %v2678
        %v2862 = vpop.f32.mrb[0].mxu0
        %v2863 = vadd.f32 0.0, %v2862
        %v2864 = vpop.f32.mrb[0].mxu0
        %v2865 = vpop.f32.mrb[0].mxu0
        %v2866 = vadd.f32 0.0, %v2865
        %v2867 = vpop.f32.mrb[0].mxu0
        %2868 = vmatprep.mubr.bf16.mxu0 0
        %2869 = vmatmul.mubr.bf16.gmra.mrb[0].mxu0 %v2679
        %v2870 = vpop.f32.mrb[0].mxu0
        %v2871 = vadd.f32 0.0, %v2870
        %v2872 = vpop.f32.mrb[0].mxu0
        %v2873 = vpop.f32.mrb[0].mxu0
        %v2874 = vadd.f32 0.0, %v2873
        %v2875 = vpop.f32.mrb[0].mxu0
        %2876 = vmatprep.mubr.bf16.mxu0 0
        %2877 = vmatmul.mubr.bf16.gmra.mrb[0].mxu0 %v2680
        %v2878 = vpop.f32.mrb[0].mxu0
        %v2879 = vadd.f32 0.0, %v2878
        %v2880 = vpop.f32.mrb[0].mxu0
        %v2881 = vpop.f32.mrb[0].mxu0
        %v2882 = vadd.f32 0.0, %v2881
        %v2883 = vpop.f32.mrb[0].mxu0
        %2884 = vmatprep.mubr.bf16.mxu0 0
        %2885 = vmatmul.mubr.bf16.gmra.mrb[0].mxu0 %v2681
        %v2886 = vpop.f32.mrb[0].mxu0
        %v2887 = vadd.f32 0.0, %v2886
        %v2888 = vpop.f32.mrb[0].mxu0
        %v2889 = vpop.f32.mrb[0].mxu0
        %v2890 = vadd.f32 0.0, %v2889
        %v2891 = vpop.f32.mrb[0].mxu0
        %2892 = vmatprep.mubr.bf16.mxu0 0
        %2893 = vmatmul.mubr.bf16.gmra.mrb[0].mxu0 %v2682
        %v2894 = vpop.f32.mrb[0].mxu0
        %v2895 = vadd.f32 0.0, %v2894
        %v2896 = vpop.f32.mrb[0].mxu0
        %v2897 = vpop.f32.mrb[0].mxu0
        %v2898 = vadd.f32 0.0, %v2897
        %v2899 = vpop.f32.mrb[0].mxu0
        %2900 = vmatprep.mubr.bf16.mxu0 0
        %2901 = vmatmul.mubr.bf16.gmra.mrb[0].mxu0 %v2683
        %v2902 = vpop.f32.mrb[0].mxu0
        %v2903 = vadd.f32 0.0, %v2902
        %v2904 = vpop.f32.mrb[0].mxu0
        %v2905 = vpop.f32.mrb[0].mxu0
        %v2906 = vadd.f32 0.0, %v2905
        %v2907 = vpop.f32.mrb[0].mxu0
        %2908 = vdwg.mxu0
        %v2909 = vld [vmem:[#allocation2] sm:$0xff]
        %v2910 = vld [vmem:[#allocation2 + $0x8] sm:$0xff]
        %v2911 = vld [vmem:[#allocation2 + $0x10] sm:$0xff]
        %v2912 = vld [vmem:[#allocation2 + $0x18] sm:$0xff]
        %v2913 = vld [vmem:[#allocation2 + $0x20] sm:$0xff]
        %v2914 = vld [vmem:[#allocation2 + $0x28] sm:$0xff]
        %v2915 = vld [vmem:[#allocation2 + $0x30] sm:$0xff]
        %v2916 = vld [vmem:[#allocation2 + $0x38] sm:$0xff]
        %v2917 = vld [vmem:[#allocation2 + $0x40] sm:$0xff]
        %v2918 = vld [vmem:[#allocation2 + $0x48] sm:$0xff]
        %v2919 = vld [vmem:[#allocation2 + $0x50] sm:$0xff]
        %v2920 = vld [vmem:[#allocation2 + $0x58] sm:$0xff]
        %v2921 = vld [vmem:[#allocation2 + $0x60] sm:$0xff]
        %v2922 = vld [vmem:[#allocation2 + $0x68] sm:$0xff]
        %v2923 = vld [vmem:[#allocation2 + $0x70] sm:$0xff]
        %v2924 = vld [vmem:[#allocation2 + $0x78] sm:$0xff]
        %v2925 = vld [vmem:[#allocation2 + $0x80] sm:$0xff]
        %v2926 = vld [vmem:[#allocation2 + $0x88] sm:$0xff]
        %v2927 = vld [vmem:[#allocation2 + $0x90] sm:$0xff]
        %v2928 = vld [vmem:[#allocation2 + $0x98] sm:$0xff]
        %v2929 = vld [vmem:[#allocation2 + $0xa0] sm:$0xff]
        %v2930 = vld [vmem:[#allocation2 + $0xa8] sm:$0xff]
        %v2931 = vld [vmem:[#allocation2 + $0xb0] sm:$0xff]
        %v2932 = vld [vmem:[#allocation2 + $0xb8] sm:$0xff]
        %v2933 = vld [vmem:[#allocation2 + $0xc0] sm:$0xff]
        %v2934 = vld [vmem:[#allocation2 + $0xc8] sm:$0xff]
        %v2935 = vld [vmem:[#allocation2 + $0xd0] sm:$0xff]
        %v2936 = vld [vmem:[#allocation2 + $0xd8] sm:$0xff]
        %v2937 = vld [vmem:[#allocation2 + $0xe0] sm:$0xff]
        %v2938 = vld [vmem:[#allocation2 + $0xe8] sm:$0xff]
        %v2939 = vld [vmem:[#allocation2 + $0xf0] sm:$0xff]
        %v2940 = vld [vmem:[#allocation2 + $0xf8] sm:$0xff]
        %v2941 = vadd.f32 %v2909, %v2783
        %v2942 = vadd.f32 %v2910, %v2786
        %v2943 = vadd.f32 %v2911, %v2791
        %v2944 = vadd.f32 %v2912, %v2794
        %v2945 = vadd.f32 %v2913, %v2799
        %v2946 = vadd.f32 %v2914, %v2802
        %v2947 = vadd.f32 %v2915, %v2807
        %v2948 = vadd.f32 %v2916, %v2810
        %v2949 = vadd.f32 %v2917, %v2815
        %v2950 = vadd.f32 %v2918, %v2818
        %v2951 = vadd.f32 %v2919, %v2823
        %v2952 = vadd.f32 %v2920, %v2826
        %v2953 = vadd.f32 %v2921, %v2831
        %v2954 = vadd.f32 %v2922, %v2834
        %v2955 = vadd.f32 %v2923, %v2839
        %v2956 = vadd.f32 %v2924, %v2842
        %v2957 = vadd.f32 %v2925, %v2847
        %v2958 = vadd.f32 %v2926, %v2850
        %v2959 = vadd.f32 %v2927, %v2855
        %v2960 = vadd.f32 %v2928, %v2858
        %v2961 = vadd.f32 %v2929, %v2863
        %v2962 = vadd.f32 %v2930, %v2866
        %v2963 = vadd.f32 %v2931, %v2871
        %v2964 = vadd.f32 %v2932, %v2874
        %v2965 = vadd.f32 %v2933, %v2879
        %v2966 = vadd.f32 %v2934, %v2882
        %v2967 = vadd.f32 %v2935, %v2887
        %v2968 = vadd.f32 %v2936, %v2890
        %v2969 = vadd.f32 %v2937, %v2895
        %v2970 = vadd.f32 %v2938, %v2898
        %v2971 = vadd.f32 %v2939, %v2903
        %v2972 = vadd.f32 %v2940, %v2906
        %2973 = vst [vmem:[#allocation2] sm:$0xff] %v2941
        %2974 = vst [vmem:[#allocation2 + $0x8] sm:$0xff] %v2942
        %2975 = vst [vmem:[#allocation2 + $0x10] sm:$0xff] %v2943
        %2976 = vst [vmem:[#allocation2 + $0x18] sm:$0xff] %v2944
        %2977 = vst [vmem:[#allocation2 + $0x20] sm:$0xff] %v2945
        %2978 = vst [vmem:[#allocation2 + $0x28] sm:$0xff] %v2946
        %2979 = vst [vmem:[#allocation2 + $0x30] sm:$0xff] %v2947
        %2980 = vst [vmem:[#allocation2 + $0x38] sm:$0xff] %v2948
        %2981 = vst [vmem:[#allocation2 + $0x40] sm:$0xff] %v2949
        %2982 = vst [vmem:[#allocation2 + $0x48] sm:$0xff] %v2950
        %2983 = vst [vmem:[#allocation2 + $0x50] sm:$0xff] %v2951
        %2984 = vst [vmem:[#allocation2 + $0x58] sm:$0xff] %v2952
        %2985 = vst [vmem:[#allocation2 + $0x60] sm:$0xff] %v2953
        %2986 = vst [vmem:[#allocation2 + $0x68] sm:$0xff] %v2954
        %2987 = vst [vmem:[#allocation2 + $0x70] sm:$0xff] %v2955
        %2988 = vst [vmem:[#allocation2 + $0x78] sm:$0xff] %v2956
        %2989 = vst [vmem:[#allocation2 + $0x80] sm:$0xff] %v2957
        %2990 = vst [vmem:[#allocation2 + $0x88] sm:$0xff] %v2958
        %2991 = vst [vmem:[#allocation2 + $0x90] sm:$0xff] %v2959
        %2992 = vst [vmem:[#allocation2 + $0x98] sm:$0xff] %v2960
        %2993 = vst [vmem:[#allocation2 + $0xa0] sm:$0xff] %v2961
        %2994 = vst [vmem:[#allocation2 + $0xa8] sm:$0xff] %v2962
        %2995 = vst [vmem:[#allocation2 + $0xb0] sm:$0xff] %v2963
        %2996 = vst [vmem:[#allocation2 + $0xb8] sm:$0xff] %v2964
        %2997 = vst [vmem:[#allocation2 + $0xc0] sm:$0xff] %v2965
        %2998 = vst [vmem:[#allocation2 + $0xc8] sm:$0xff] %v2966
        %2999 = vst [vmem:[#allocation2 + $0xd0] sm:$0xff] %v2967
        %3000 = vst [vmem:[#allocation2 + $0xd8] sm:$0xff] %v2968
        %3001 = vst [vmem:[#allocation2 + $0xe0] sm:$0xff] %v2969
        %3002 = vst [vmem:[#allocation2 + $0xe8] sm:$0xff] %v2970
        %3003 = vst [vmem:[#allocation2 + $0xf0] sm:$0xff] %v2971
        %3004 = vst [vmem:[#allocation2 + $0xf8] sm:$0xff] %v2972
        %v3005 = vld [vmem:[%s1084] sm:$0xf]
        %v3006 = vld [vmem:[%s1084 + $0x4] sm:$0xf]
        %v3007 = vld [vmem:[%s1084 + $0xc] sm:$0xf]
        %v3008 = vld [vmem:[%s1084 + $0x10] sm:$0xf]
        %v3009 = vld [vmem:[%s1084 + $0x18] sm:$0xf]
        %v3010 = vld [vmem:[%s1084 + $0x1c] sm:$0xf]
        %v3011 = vld [vmem:[%s1084 + $0x24] sm:$0xf]
        %v3012 = vld [vmem:[%s1084 + $0x28] sm:$0xf]
        %v3013 = vld [vmem:[%s1084 + $0x30] sm:$0xf]
        %v3014 = vld [vmem:[%s1084 + $0x34] sm:$0xf]
        %v3015 = vld [vmem:[%s1084 + $0x3c] sm:$0xf]
        %v3016 = vld [vmem:[%s1084 + $0x40] sm:$0xf]
        %v3017 = vld [vmem:[%s1084 + $0x48] sm:$0xf]
        %v3018 = vld [vmem:[%s1084 + $0x4c] sm:$0xf]
        %v3019 = vld [vmem:[%s1084 + $0x54] sm:$0xf]
        %v3020 = vld [vmem:[%s1084 + $0x58] sm:$0xf]
        %v3021 = vld [vmem:[%s1084 + $0x60] sm:$0xf]
        %v3022 = vld [vmem:[%s1084 + $0x64] sm:$0xf]
        %v3023 = vld [vmem:[%s1084 + $0x6c] sm:$0xf]
        %v3024 = vld [vmem:[%s1084 + $0x70] sm:$0xf]
        %v3025 = vld [vmem:[%s1084 + $0x78] sm:$0xf]
        %v3026 = vld [vmem:[%s1084 + $0x7c] sm:$0xf]
        %v3027 = vld [vmem:[%s1084 + $0x84] sm:$0xf]
        %v3028 = vld [vmem:[%s1084 + $0x88] sm:$0xf]
        %v3029 = vld [vmem:[%s1084 + $0x90] sm:$0xf]
        %v3030 = vld [vmem:[%s1084 + $0x94] sm:$0xf]
        %v3031 = vld [vmem:[%s1084 + $0x9c] sm:$0xf]
        %v3032 = vld [vmem:[%s1084 + $0xa0] sm:$0xf]
        %v3033 = vld [vmem:[%s1084 + $0xa8] sm:$0xf]
        %v3034 = vld [vmem:[%s1084 + $0xac] sm:$0xf]
        %v3035 = vld [vmem:[%s1084 + $0xb4] sm:$0xf]
        %v3036 = vld [vmem:[%s1084 + $0xb8] sm:$0xf]
        %s3037 = scalar_lea.vmem %s3, 192
        %v3038 = vld [vmem:[%s3037] sm:$0xf]
        %v3039 = vld [vmem:[%s3037 + $0x4] sm:$0xf]
        %v3040 = vld [vmem:[%s3037 + $0x8] sm:$0xf]
        %v3041 = vld [vmem:[%s3037 + $0xc] sm:$0xf]
        %v3042 = vld [vmem:[%s3037 + $0x10] sm:$0xf]
        %v3043 = vld [vmem:[%s3037 + $0x14] sm:$0xf]
        %v3044 = vld [vmem:[%s3037 + $0x18] sm:$0xf]
        %v3045 = vld [vmem:[%s3037 + $0x1c] sm:$0xf]
        %v3046 = vld [vmem:[%s3037 + $0x20] sm:$0xf]
        %v3047 = vld [vmem:[%s3037 + $0x24] sm:$0xf]
        %v3048 = vld [vmem:[%s3037 + $0x28] sm:$0xf]
        %v3049 = vld [vmem:[%s3037 + $0x2c] sm:$0xf]
        %v3050 = vld [vmem:[%s3037 + $0x30] sm:$0xf]
        %v3051 = vld [vmem:[%s3037 + $0x34] sm:$0xf]
        %v3052 = vld [vmem:[%s3037 + $0x38] sm:$0xf]
        %v3053 = vld [vmem:[%s3037 + $0x3c] sm:$0xf]
        %v3086 = vunpack.c.l.b16 %v3005
        %v3087 = vunpack.c.l.b16 %v3006
        %v3088 = vunpack.c.l.b16 %v3007
        %v3089 = vunpack.c.l.b16 %v3008
        %v3090 = vunpack.c.l.b16 %v3009
        %v3091 = vunpack.c.l.b16 %v3010
        %v3092 = vunpack.c.l.b16 %v3011
        %v3093 = vunpack.c.l.b16 %v3012
        %v3094 = vunpack.c.l.b16 %v3013
        %v3095 = vunpack.c.l.b16 %v3014
        %v3096 = vunpack.c.l.b16 %v3015
        %v3097 = vunpack.c.l.b16 %v3016
        %v3098 = vunpack.c.l.b16 %v3017
        %v3099 = vunpack.c.l.b16 %v3018
        %v3100 = vunpack.c.l.b16 %v3019
        %v3101 = vunpack.c.l.b16 %v3020
        %v3102 = vunpack.c.l.b16 %v3021
        %v3103 = vunpack.c.l.b16 %v3022
        %v3104 = vunpack.c.l.b16 %v3023
        %v3105 = vunpack.c.l.b16 %v3024
        %v3106 = vunpack.c.l.b16 %v3025
        %v3107 = vunpack.c.l.b16 %v3026
        %v3108 = vunpack.c.l.b16 %v3027
        %v3109 = vunpack.c.l.b16 %v3028
        %v3110 = vunpack.c.l.b16 %v3029
        %v3111 = vunpack.c.l.b16 %v3030
        %v3112 = vunpack.c.l.b16 %v3031
        %v3113 = vunpack.c.l.b16 %v3032
        %v3114 = vunpack.c.l.b16 %v3033
        %v3115 = vunpack.c.l.b16 %v3034
        %v3116 = vunpack.c.l.b16 %v3035
        %v3117 = vunpack.c.l.b16 %v3036
        %v3118 = vpack.c.b16 %v3087, %v3086
        %v3119 = vpack.c.b16 %v3089, %v3088
        %v3120 = vpack.c.b16 %v3091, %v3090
        %v3121 = vpack.c.b16 %v3093, %v3092
        %v3122 = vpack.c.b16 %v3095, %v3094
        %v3123 = vpack.c.b16 %v3097, %v3096
        %v3124 = vpack.c.b16 %v3099, %v3098
        %v3125 = vpack.c.b16 %v3101, %v3100
        %v3126 = vpack.c.b16 %v3103, %v3102
        %v3127 = vpack.c.b16 %v3105, %v3104
        %v3128 = vpack.c.b16 %v3107, %v3106
        %v3129 = vpack.c.b16 %v3109, %v3108
        %v3130 = vpack.c.b16 %v3111, %v3110
        %v3131 = vpack.c.b16 %v3113, %v3112
        %v3132 = vpack.c.b16 %v3115, %v3114
        %v3133 = vpack.c.b16 %v3117, %v3116
        %v3166 = vunpack.c.l.b16 %v3038
        %v3167 = vunpack.c.l.b16 %v3039
        %v3168 = vunpack.c.l.b16 %v3040
        %v3169 = vunpack.c.l.b16 %v3041
        %v3170 = vunpack.c.l.b16 %v3042
        %v3171 = vunpack.c.l.b16 %v3043
        %v3172 = vunpack.c.l.b16 %v3044
        %v3173 = vunpack.c.l.b16 %v3045
        %v3174 = vunpack.c.l.b16 %v3046
        %v3175 = vunpack.c.l.b16 %v3047
        %v3176 = vunpack.c.l.b16 %v3048
        %v3177 = vunpack.c.l.b16 %v3049
        %v3178 = vunpack.c.l.b16 %v3050
        %v3179 = vunpack.c.l.b16 %v3051
        %v3180 = vunpack.c.l.b16 %v3052
        %v3181 = vunpack.c.l.b16 %v3053
        %v3182 = vpack.c.b16 %v3167, %v3166
        %v3183 = vpack.c.b16 %v3169, %v3168
        %v3184 = vpack.c.b16 %v3171, %v3170
        %v3185 = vpack.c.b16 %v3173, %v3172
        %v3186 = vpack.c.b16 %v3175, %v3174
        %v3187 = vpack.c.b16 %v3177, %v3176
        %v3188 = vpack.c.b16 %v3179, %v3178
        %v3189 = vpack.c.b16 %v3181, %v3180
        %3198 = vmatprep.subr.bf16.mxu0 0
        %3199 = vmatpush1.bf16.msra.mxu0 %v3182
        %3200 = vmatprep.subr.bf16.mxu0 0
        %3201 = vmatpush1.bf16.msra.mxu0 %v3183
        %3202 = vmatprep.subr.bf16.mxu0 0
        %3203 = vmatpush1.bf16.msra.mxu0 %v3184
        %3204 = vmatprep.subr.bf16.mxu0 0
        %3205 = vmatpush1.bf16.msra.mxu0 %v3185
        %3206 = vmatprep.subr.bf16.mxu0 0
        %3207 = vmatpush1.bf16.msra.mxu0 %v3186
        %3208 = vmatprep.subr.bf16.mxu0 0
        %3209 = vmatpush1.bf16.msra.mxu0 %v3187
        %3210 = vmatprep.subr.bf16.mxu0 0
        %3211 = vmatpush1.bf16.msra.mxu0 %v3188
        %3212 = vmatprep.subr.bf16.mxu0 0
        %3213 = vmatpush1.bf16.msra.mxu0 %v3189
        %3214 = vmatprep.subr.bf16.mxu0 0
        %3215 = vmatpush1.bf16.msra.mxu0 0
        %3216 = vmatprep.subr.bf16.mxu0 0
        %3217 = vmatpush1.bf16.msra.mxu0 0
        %3218 = vmatprep.subr.bf16.mxu0 0
        %3219 = vmatpush1.bf16.msra.mxu0 0
        %3220 = vmatprep.subr.bf16.mxu0 0
        %3221 = vmatpush1.bf16.msra.mxu0 0
        %3222 = vmatprep.subr.bf16.mxu0 0
        %3223 = vmatpush1.bf16.msra.mxu0 0
        %3224 = vmatprep.subr.bf16.mxu0 0
        %3225 = vmatpush1.bf16.msra.mxu0 0
        %3226 = vmatprep.subr.bf16.mxu0 0
        %3227 = vmatpush1.bf16.msra.mxu0 0
        %3228 = vmatprep.subr.bf16.mxu0 0
        %3229 = vmatpush1.bf16.msra.mxu0 0
        %3230 = vmatprep.mubr.bf16.mxu0 0
        %3231 = vmatmul.mubr.bf16.gmra.mrb[0].mxu0 %v3118
        %v3232 = vpop.f32.mrb[0].mxu0
        %v3233 = vadd.f32 0.0, %v3232
        %v3234 = vpop.f32.mrb[0].mxu0
        %v3235 = vpop.f32.mrb[0].mxu0
        %v3236 = vadd.f32 0.0, %v3235
        %v3237 = vpop.f32.mrb[0].mxu0
        %3238 = vmatprep.mubr.bf16.mxu0 0
        %3239 = vmatmul.mubr.bf16.gmra.mrb[0].mxu0 %v3119
        %v3240 = vpop.f32.mrb[0].mxu0
        %v3241 = vadd.f32 0.0, %v3240
        %v3242 = vpop.f32.mrb[0].mxu0
        %v3243 = vpop.f32.mrb[0].mxu0
        %v3244 = vadd.f32 0.0, %v3243
        %v3245 = vpop.f32.mrb[0].mxu0
        %3246 = vmatprep.mubr.bf16.mxu0 0
        %3247 = vmatmul.mubr.bf16.gmra.mrb[0].mxu0 %v3120
        %v3248 = vpop.f32.mrb[0].mxu0
        %v3249 = vadd.f32 0.0, %v3248
        %v3250 = vpop.f32.mrb[0].mxu0
        %v3251 = vpop.f32.mrb[0].mxu0
        %v3252 = vadd.f32 0.0, %v3251
        %v3253 = vpop.f32.mrb[0].mxu0
        %3254 = vmatprep.mubr.bf16.mxu0 0
        %3255 = vmatmul.mubr.bf16.gmra.mrb[0].mxu0 %v3121
        %v3256 = vpop.f32.mrb[0].mxu0
        %v3257 = vadd.f32 0.0, %v3256
        %v3258 = vpop.f32.mrb[0].mxu0
        %v3259 = vpop.f32.mrb[0].mxu0
        %v3260 = vadd.f32 0.0, %v3259
        %v3261 = vpop.f32.mrb[0].mxu0
        %3262 = vmatprep.mubr.bf16.mxu0 0
        %3263 = vmatmul.mubr.bf16.gmra.mrb[0].mxu0 %v3122
        %v3264 = vpop.f32.mrb[0].mxu0
        %v3265 = vadd.f32 0.0, %v3264
        %v3266 = vpop.f32.mrb[0].mxu0
        %v3267 = vpop.f32.mrb[0].mxu0
        %v3268 = vadd.f32 0.0, %v3267
        %v3269 = vpop.f32.mrb[0].mxu0
        %3270 = vmatprep.mubr.bf16.mxu0 0
        %3271 = vmatmul.mubr.bf16.gmra.mrb[0].mxu0 %v3123
        %v3272 = vpop.f32.mrb[0].mxu0
        %v3273 = vadd.f32 0.0, %v3272
        %v3274 = vpop.f32.mrb[0].mxu0
        %v3275 = vpop.f32.mrb[0].mxu0
        %v3276 = vadd.f32 0.0, %v3275
        %v3277 = vpop.f32.mrb[0].mxu0
        %3278 = vmatprep.mubr.bf16.mxu0 0
        %3279 = vmatmul.mubr.bf16.gmra.mrb[0].mxu0 %v3124
        %v3280 = vpop.f32.mrb[0].mxu0
        %v3281 = vadd.f32 0.0, %v3280
        %v3282 = vpop.f32.mrb[0].mxu0
        %v3283 = vpop.f32.mrb[0].mxu0
        %v3284 = vadd.f32 0.0, %v3283
        %v3285 = vpop.f32.mrb[0].mxu0
        %3286 = vmatprep.mubr.bf16.mxu0 0
        %3287 = vmatmul.mubr.bf16.gmra.mrb[0].mxu0 %v3125
        %v3288 = vpop.f32.mrb[0].mxu0
        %v3289 = vadd.f32 0.0, %v3288
        %v3290 = vpop.f32.mrb[0].mxu0
        %v3291 = vpop.f32.mrb[0].mxu0
        %v3292 = vadd.f32 0.0, %v3291
        %v3293 = vpop.f32.mrb[0].mxu0
        %3294 = vmatprep.mubr.bf16.mxu0 0
        %3295 = vmatmul.mubr.bf16.gmra.mrb[0].mxu0 %v3126
        %v3296 = vpop.f32.mrb[0].mxu0
        %v3297 = vadd.f32 0.0, %v3296
        %v3298 = vpop.f32.mrb[0].mxu0
        %v3299 = vpop.f32.mrb[0].mxu0
        %v3300 = vadd.f32 0.0, %v3299
        %v3301 = vpop.f32.mrb[0].mxu0
        %3302 = vmatprep.mubr.bf16.mxu0 0
        %3303 = vmatmul.mubr.bf16.gmra.mrb[0].mxu0 %v3127
        %v3304 = vpop.f32.mrb[0].mxu0
        %v3305 = vadd.f32 0.0, %v3304
        %v3306 = vpop.f32.mrb[0].mxu0
        %v3307 = vpop.f32.mrb[0].mxu0
        %v3308 = vadd.f32 0.0, %v3307
        %v3309 = vpop.f32.mrb[0].mxu0
        %3310 = vmatprep.mubr.bf16.mxu0 0
        %3311 = vmatmul.mubr.bf16.gmra.mrb[0].mxu0 %v3128
        %v3312 = vpop.f32.mrb[0].mxu0
        %v3313 = vadd.f32 0.0, %v3312
        %v3314 = vpop.f32.mrb[0].mxu0
        %v3315 = vpop.f32.mrb[0].mxu0
        %v3316 = vadd.f32 0.0, %v3315
        %v3317 = vpop.f32.mrb[0].mxu0
        %3318 = vmatprep.mubr.bf16.mxu0 0
        %3319 = vmatmul.mubr.bf16.gmra.mrb[0].mxu0 %v3129
        %v3320 = vpop.f32.mrb[0].mxu0
        %v3321 = vadd.f32 0.0, %v3320
        %v3322 = vpop.f32.mrb[0].mxu0
        %v3323 = vpop.f32.mrb[0].mxu0
        %v3324 = vadd.f32 0.0, %v3323
        %v3325 = vpop.f32.mrb[0].mxu0
        %3326 = vmatprep.mubr.bf16.mxu0 0
        %3327 = vmatmul.mubr.bf16.gmra.mrb[0].mxu0 %v3130
        %v3328 = vpop.f32.mrb[0].mxu0
        %v3329 = vadd.f32 0.0, %v3328
        %v3330 = vpop.f32.mrb[0].mxu0
        %v3331 = vpop.f32.mrb[0].mxu0
        %v3332 = vadd.f32 0.0, %v3331
        %v3333 = vpop.f32.mrb[0].mxu0
        %3334 = vmatprep.mubr.bf16.mxu0 0
        %3335 = vmatmul.mubr.bf16.gmra.mrb[0].mxu0 %v3131
        %v3336 = vpop.f32.mrb[0].mxu0
        %v3337 = vadd.f32 0.0, %v3336
        %v3338 = vpop.f32.mrb[0].mxu0
        %v3339 = vpop.f32.mrb[0].mxu0
        %v3340 = vadd.f32 0.0, %v3339
        %v3341 = vpop.f32.mrb[0].mxu0
        %3342 = vmatprep.mubr.bf16.mxu0 0
        %3343 = vmatmul.mubr.bf16.gmra.mrb[0].mxu0 %v3132
        %v3344 = vpop.f32.mrb[0].mxu0
        %v3345 = vadd.f32 0.0, %v3344
        %v3346 = vpop.f32.mrb[0].mxu0
        %v3347 = vpop.f32.mrb[0].mxu0
        %v3348 = vadd.f32 0.0, %v3347
        %v3349 = vpop.f32.mrb[0].mxu0
        %3350 = vmatprep.mubr.bf16.mxu0 0
        %3351 = vmatmul.mubr.bf16.gmra.mrb[0].mxu0 %v3133
        %v3352 = vpop.f32.mrb[0].mxu0
        %v3353 = vadd.f32 0.0, %v3352
        %v3354 = vpop.f32.mrb[0].mxu0
        %v3355 = vpop.f32.mrb[0].mxu0
        %v3356 = vadd.f32 0.0, %v3355
        %v3357 = vpop.f32.mrb[0].mxu0
        %3358 = vdwg.mxu0
        %v3359 = vld [vmem:[#allocation2] sm:$0xff]
        %v3360 = vld [vmem:[#allocation2 + $0x8] sm:$0xff]
        %v3361 = vld [vmem:[#allocation2 + $0x10] sm:$0xff]
        %v3362 = vld [vmem:[#allocation2 + $0x18] sm:$0xff]
        %v3363 = vld [vmem:[#allocation2 + $0x20] sm:$0xff]
        %v3364 = vld [vmem:[#allocation2 + $0x28] sm:$0xff]
        %v3365 = vld [vmem:[#allocation2 + $0x30] sm:$0xff]
        %v3366 = vld [vmem:[#allocation2 + $0x38] sm:$0xff]
        %v3367 = vld [vmem:[#allocation2 + $0x40] sm:$0xff]
        %v3368 = vld [vmem:[#allocation2 + $0x48] sm:$0xff]
        %v3369 = vld [vmem:[#allocation2 + $0x50] sm:$0xff]
        %v3370 = vld [vmem:[#allocation2 + $0x58] sm:$0xff]
        %v3371 = vld [vmem:[#allocation2 + $0x60] sm:$0xff]
        %v3372 = vld [vmem:[#allocation2 + $0x68] sm:$0xff]
        %v3373 = vld [vmem:[#allocation2 + $0x70] sm:$0xff]
        %v3374 = vld [vmem:[#allocation2 + $0x78] sm:$0xff]
        %v3375 = vld [vmem:[#allocation2 + $0x80] sm:$0xff]
        %v3376 = vld [vmem:[#allocation2 + $0x88] sm:$0xff]
        %v3377 = vld [vmem:[#allocation2 + $0x90] sm:$0xff]
        %v3378 = vld [vmem:[#allocation2 + $0x98] sm:$0xff]
        %v3379 = vld [vmem:[#allocation2 + $0xa0] sm:$0xff]
        %v3380 = vld [vmem:[#allocation2 + $0xa8] sm:$0xff]
        %v3381 = vld [vmem:[#allocation2 + $0xb0] sm:$0xff]
        %v3382 = vld [vmem:[#allocation2 + $0xb8] sm:$0xff]
        %v3383 = vld [vmem:[#allocation2 + $0xc0] sm:$0xff]
        %v3384 = vld [vmem:[#allocation2 + $0xc8] sm:$0xff]
        %v3385 = vld [vmem:[#allocation2 + $0xd0] sm:$0xff]
        %v3386 = vld [vmem:[#allocation2 + $0xd8] sm:$0xff]
        %v3387 = vld [vmem:[#allocation2 + $0xe0] sm:$0xff]
        %v3388 = vld [vmem:[#allocation2 + $0xe8] sm:$0xff]
        %v3389 = vld [vmem:[#allocation2 + $0xf0] sm:$0xff]
        %v3390 = vld [vmem:[#allocation2 + $0xf8] sm:$0xff]
        %v3391 = vadd.f32 %v3359, %v3233
        %v3392 = vadd.f32 %v3360, %v3236
        %v3393 = vadd.f32 %v3361, %v3241
        %v3394 = vadd.f32 %v3362, %v3244
        %v3395 = vadd.f32 %v3363, %v3249
        %v3396 = vadd.f32 %v3364, %v3252
        %v3397 = vadd.f32 %v3365, %v3257
        %v3398 = vadd.f32 %v3366, %v3260
        %v3399 = vadd.f32 %v3367, %v3265
        %v3400 = vadd.f32 %v3368, %v3268
        %v3401 = vadd.f32 %v3369, %v3273
        %v3402 = vadd.f32 %v3370, %v3276
        %v3403 = vadd.f32 %v3371, %v3281
        %v3404 = vadd.f32 %v3372, %v3284
        %v3405 = vadd.f32 %v3373, %v3289
        %v3406 = vadd.f32 %v3374, %v3292
        %v3407 = vadd.f32 %v3375, %v3297
        %v3408 = vadd.f32 %v3376, %v3300
        %v3409 = vadd.f32 %v3377, %v3305
        %v3410 = vadd.f32 %v3378, %v3308
        %v3411 = vadd.f32 %v3379, %v3313
        %v3412 = vadd.f32 %v3380, %v3316
        %v3413 = vadd.f32 %v3381, %v3321
        %v3414 = vadd.f32 %v3382, %v3324
        %v3415 = vadd.f32 %v3383, %v3329
        %v3416 = vadd.f32 %v3384, %v3332
        %v3417 = vadd.f32 %v3385, %v3337
        %v3418 = vadd.f32 %v3386, %v3340
        %v3419 = vadd.f32 %v3387, %v3345
        %v3420 = vadd.f32 %v3388, %v3348
        %v3421 = vadd.f32 %v3389, %v3353
        %v3422 = vadd.f32 %v3390, %v3356
        %3423 = vst [vmem:[#allocation2] sm:$0xff] %v3391
        %3424 = vst [vmem:[#allocation2 + $0x8] sm:$0xff] %v3392
        %3425 = vst [vmem:[#allocation2 + $0x10] sm:$0xff] %v3393
        %3426 = vst [vmem:[#allocation2 + $0x18] sm:$0xff] %v3394
        %3427 = vst [vmem:[#allocation2 + $0x20] sm:$0xff] %v3395
        %3428 = vst [vmem:[#allocation2 + $0x28] sm:$0xff] %v3396
        %3429 = vst [vmem:[#allocation2 + $0x30] sm:$0xff] %v3397
        %3430 = vst [vmem:[#allocation2 + $0x38] sm:$0xff] %v3398
        %3431 = vst [vmem:[#allocation2 + $0x40] sm:$0xff] %v3399
        %3432 = vst [vmem:[#allocation2 + $0x48] sm:$0xff] %v3400
        %3433 = vst [vmem:[#allocation2 + $0x50] sm:$0xff] %v3401
        %3434 = vst [vmem:[#allocation2 + $0x58] sm:$0xff] %v3402
        %3435 = vst [vmem:[#allocation2 + $0x60] sm:$0xff] %v3403
        %3436 = vst [vmem:[#allocation2 + $0x68] sm:$0xff] %v3404
        %3437 = vst [vmem:[#allocation2 + $0x70] sm:$0xff] %v3405
        %3438 = vst [vmem:[#allocation2 + $0x78] sm:$0xff] %v3406
        %3439 = vst [vmem:[#allocation2 + $0x80] sm:$0xff] %v3407
        %3440 = vst [vmem:[#allocation2 + $0x88] sm:$0xff] %v3408
        %3441 = vst [vmem:[#allocation2 + $0x90] sm:$0xff] %v3409
        %3442 = vst [vmem:[#allocation2 + $0x98] sm:$0xff] %v3410
        %3443 = vst [vmem:[#allocation2 + $0xa0] sm:$0xff] %v3411
        %3444 = vst [vmem:[#allocation2 + $0xa8] sm:$0xff] %v3412
        %3445 = vst [vmem:[#allocation2 + $0xb0] sm:$0xff] %v3413
        %3446 = vst [vmem:[#allocation2 + $0xb8] sm:$0xff] %v3414
        %3447 = vst [vmem:[#allocation2 + $0xc0] sm:$0xff] %v3415
        %3448 = vst [vmem:[#allocation2 + $0xc8] sm:$0xff] %v3416
        %3449 = vst [vmem:[#allocation2 + $0xd0] sm:$0xff] %v3417
        %3450 = vst [vmem:[#allocation2 + $0xd8] sm:$0xff] %v3418
        %3451 = vst [vmem:[#allocation2 + $0xe0] sm:$0xff] %v3419
        %3452 = vst [vmem:[#allocation2 + $0xe8] sm:$0xff] %v3420
        %3453 = vst [vmem:[#allocation2 + $0xf0] sm:$0xff] %v3421
        %3454 = vst [vmem:[#allocation2 + $0xf8] sm:$0xff] %v3422
        %v3455 = vld [vmem:[%s1084] sm:$0xf]
        %v3456 = vld [vmem:[%s1084 + $0x4] sm:$0xf]
        %v3457 = vld [vmem:[%s1084 + $0x8] sm:$0x1]
        %v3458 = vld [vmem:[%s1084 + $0xc] sm:$0xf]
        %v3459 = vld [vmem:[%s1084 + $0x10] sm:$0xf]
        %v3460 = vld [vmem:[%s1084 + $0x14] sm:$0x1]
        %v3461 = vld [vmem:[%s1084 + $0x18] sm:$0xf]
        %v3462 = vld [vmem:[%s1084 + $0x1c] sm:$0xf]
        %v3463 = vld [vmem:[%s1084 + $0x20] sm:$0x1]
        %v3464 = vld [vmem:[%s1084 + $0x24] sm:$0xf]
        %v3465 = vld [vmem:[%s1084 + $0x28] sm:$0xf]
        %v3466 = vld [vmem:[%s1084 + $0x2c] sm:$0x1]
        %v3467 = vld [vmem:[%s1084 + $0x30] sm:$0xf]
        %v3468 = vld [vmem:[%s1084 + $0x34] sm:$0xf]
        %v3469 = vld [vmem:[%s1084 + $0x38] sm:$0x1]
        %v3470 = vld [vmem:[%s1084 + $0x3c] sm:$0xf]
        %v3471 = vld [vmem:[%s1084 + $0x40] sm:$0xf]
        %v3472 = vld [vmem:[%s1084 + $0x44] sm:$0x1]
        %v3473 = vld [vmem:[%s1084 + $0x48] sm:$0xf]
        %v3474 = vld [vmem:[%s1084 + $0x4c] sm:$0xf]
        %v3475 = vld [vmem:[%s1084 + $0x50] sm:$0x1]
        %v3476 = vld [vmem:[%s1084 + $0x54] sm:$0xf]
        %v3477 = vld [vmem:[%s1084 + $0x58] sm:$0xf]
        %v3478 = vld [vmem:[%s1084 + $0x5c] sm:$0x1]
        %v3479 = vld [vmem:[%s1084 + $0x60] sm:$0xf]
        %v3480 = vld [vmem:[%s1084 + $0x64] sm:$0xf]
        %v3481 = vld [vmem:[%s1084 + $0x68] sm:$0x1]
        %v3482 = vld [vmem:[%s1084 + $0x6c] sm:$0xf]
        %v3483 = vld [vmem:[%s1084 + $0x70] sm:$0xf]
        %v3484 = vld [vmem:[%s1084 + $0x74] sm:$0x1]
        %v3485 = vld [vmem:[%s1084 + $0x78] sm:$0xf]
        %v3486 = vld [vmem:[%s1084 + $0x7c] sm:$0xf]
        %v3487 = vld [vmem:[%s1084 + $0x80] sm:$0x1]
        %v3488 = vld [vmem:[%s1084 + $0x84] sm:$0xf]
        %v3489 = vld [vmem:[%s1084 + $0x88] sm:$0xf]
        %v3490 = vld [vmem:[%s1084 + $0x8c] sm:$0x1]
        %v3491 = vld [vmem:[%s1084 + $0x90] sm:$0xf]
        %v3492 = vld [vmem:[%s1084 + $0x94] sm:$0xf]
        %v3493 = vld [vmem:[%s1084 + $0x98] sm:$0x1]
        %v3494 = vld [vmem:[%s1084 + $0x9c] sm:$0xf]
        %v3495 = vld [vmem:[%s1084 + $0xa0] sm:$0xf]
        %v3496 = vld [vmem:[%s1084 + $0xa4] sm:$0x1]
        %v3497 = vld [vmem:[%s1084 + $0xa8] sm:$0xf]
        %v3498 = vld [vmem:[%s1084 + $0xac] sm:$0xf]
        %v3499 = vld [vmem:[%s1084 + $0xb0] sm:$0x1]
        %v3500 = vld [vmem:[%s1084 + $0xb4] sm:$0xf]
        %v3501 = vld [vmem:[%s1084 + $0xb8] sm:$0xf]
        %v3502 = vld [vmem:[%s1084 + $0xbc] sm:$0x1]
        %v3504 = vshrl.u32 %v3455, 16
        %v3506 = vrot.slane %v3504, 4
        %v3507 = vshll.u32 %v3455, 16
        %v3509 = vrot.slane %v3507, 5
        %v3510 = vor.u32 %v3506, %v3509
        %v3511 = vrot.slane %v3510, 4
        %v3513 = vshll.u32 %v3456, 16
        %v3515 = vrot.slane %v3513, 5
        %v3516 = vsel %vm1637, %v3511, %v3515
        %v3517 = vshrl.u32 %v3456, 16
        %v3519 = vrot.slane %v3517, 4
        %v3520 = vor.u32 %v3519, %v3515
        %v3521 = vrot.slane %v3520, 4
        %v3523 = vshll.u32 %v3457, 16
        %v3525 = vrot.slane %v3523, 5
        %v3526 = vsel %vm1637, %v3521, %v3525
        %v3528 = vshrl.u32 %v3458, 16
        %v3530 = vrot.slane %v3528, 4
        %v3531 = vshll.u32 %v3458, 16
        %v3533 = vrot.slane %v3531, 5
        %v3534 = vor.u32 %v3530, %v3533
        %v3535 = vrot.slane %v3534, 4
        %v3537 = vshll.u32 %v3459, 16
        %v3539 = vrot.slane %v3537, 5
        %v3540 = vsel %vm1637, %v3535, %v3539
        %v3541 = vshrl.u32 %v3459, 16
        %v3543 = vrot.slane %v3541, 4
        %v3544 = vor.u32 %v3543, %v3539
        %v3545 = vrot.slane %v3544, 4
        %v3547 = vshll.u32 %v3460, 16
        %v3549 = vrot.slane %v3547, 5
        %v3550 = vsel %vm1637, %v3545, %v3549
        %v3552 = vshrl.u32 %v3461, 16
        %v3554 = vrot.slane %v3552, 4
        %v3555 = vshll.u32 %v3461, 16
        %v3557 = vrot.slane %v3555, 5
        %v3558 = vor.u32 %v3554, %v3557
        %v3559 = vrot.slane %v3558, 4
        %v3561 = vshll.u32 %v3462, 16
        %v3563 = vrot.slane %v3561, 5
        %v3564 = vsel %vm1637, %v3559, %v3563
        %v3565 = vshrl.u32 %v3462, 16
        %v3567 = vrot.slane %v3565, 4
        %v3568 = vor.u32 %v3567, %v3563
        %v3569 = vrot.slane %v3568, 4
        %v3571 = vshll.u32 %v3463, 16
        %v3573 = vrot.slane %v3571, 5
        %v3574 = vsel %vm1637, %v3569, %v3573
        %v3576 = vshrl.u32 %v3464, 16
        %v3578 = vrot.slane %v3576, 4
        %v3579 = vshll.u32 %v3464, 16
        %v3581 = vrot.slane %v3579, 5
        %v3582 = vor.u32 %v3578, %v3581
        %v3583 = vrot.slane %v3582, 4
        %v3585 = vshll.u32 %v3465, 16
        %v3587 = vrot.slane %v3585, 5
        %v3588 = vsel %vm1637, %v3583, %v3587
        %v3589 = vshrl.u32 %v3465, 16
        %v3591 = vrot.slane %v3589, 4
        %v3592 = vor.u32 %v3591, %v3587
        %v3593 = vrot.slane %v3592, 4
        %v3595 = vshll.u32 %v3466, 16
        %v3597 = vrot.slane %v3595, 5
        %v3598 = vsel %vm1637, %v3593, %v3597
        %v3600 = vshrl.u32 %v3467, 16
        %v3602 = vrot.slane %v3600, 4
        %v3603 = vshll.u32 %v3467, 16
        %v3605 = vrot.slane %v3603, 5
        %v3606 = vor.u32 %v3602, %v3605
        %v3607 = vrot.slane %v3606, 4
        %v3609 = vshll.u32 %v3468, 16
        %v3611 = vrot.slane %v3609, 5
        %v3612 = vsel %vm1637, %v3607, %v3611
        %v3613 = vshrl.u32 %v3468, 16
        %v3615 = vrot.slane %v3613, 4
        %v3616 = vor.u32 %v3615, %v3611
        %v3617 = vrot.slane %v3616, 4
        %v3619 = vshll.u32 %v3469, 16
        %v3621 = vrot.slane %v3619, 5
        %v3622 = vsel %vm1637, %v3617, %v3621
        %v3624 = vshrl.u32 %v3470, 16
        %v3626 = vrot.slane %v3624, 4
        %v3627 = vshll.u32 %v3470, 16
        %v3629 = vrot.slane %v3627, 5
        %v3630 = vor.u32 %v3626, %v3629
        %v3631 = vrot.slane %v3630, 4
        %v3633 = vshll.u32 %v3471, 16
        %v3635 = vrot.slane %v3633, 5
        %v3636 = vsel %vm1637, %v3631, %v3635
        %v3637 = vshrl.u32 %v3471, 16
        %v3639 = vrot.slane %v3637, 4
        %v3640 = vor.u32 %v3639, %v3635
        %v3641 = vrot.slane %v3640, 4
        %v3643 = vshll.u32 %v3472, 16
        %v3645 = vrot.slane %v3643, 5
        %v3646 = vsel %vm1637, %v3641, %v3645
        %v3648 = vshrl.u32 %v3473, 16
        %v3650 = vrot.slane %v3648, 4
        %v3651 = vshll.u32 %v3473, 16
        %v3653 = vrot.slane %v3651, 5
        %v3654 = vor.u32 %v3650, %v3653
        %v3655 = vrot.slane %v3654, 4
        %v3657 = vshll.u32 %v3474, 16
        %v3659 = vrot.slane %v3657, 5
        %v3660 = vsel %vm1637, %v3655, %v3659
        %v3661 = vshrl.u32 %v3474, 16
        %v3663 = vrot.slane %v3661, 4
        %v3664 = vor.u32 %v3663, %v3659
        %v3665 = vrot.slane %v3664, 4
        %v3667 = vshll.u32 %v3475, 16
        %v3669 = vrot.slane %v3667, 5
        %v3670 = vsel %vm1637, %v3665, %v3669
        %v3672 = vshrl.u32 %v3476, 16
        %v3674 = vrot.slane %v3672, 4
        %v3675 = vshll.u32 %v3476, 16
        %v3677 = vrot.slane %v3675, 5
        %v3678 = vor.u32 %v3674, %v3677
        %v3679 = vrot.slane %v3678, 4
        %v3681 = vshll.u32 %v3477, 16
        %v3683 = vrot.slane %v3681, 5
        %v3684 = vsel %vm1637, %v3679, %v3683
        %v3685 = vshrl.u32 %v3477, 16
        %v3687 = vrot.slane %v3685, 4
        %v3688 = vor.u32 %v3687, %v3683
        %v3689 = vrot.slane %v3688, 4
        %v3691 = vshll.u32 %v3478, 16
        %v3693 = vrot.slane %v3691, 5
        %v3694 = vsel %vm1637, %v3689, %v3693
        %v3696 = vshrl.u32 %v3479, 16
        %v3698 = vrot.slane %v3696, 4
        %v3699 = vshll.u32 %v3479, 16
        %v3701 = vrot.slane %v3699, 5
        %v3702 = vor.u32 %v3698, %v3701
        %v3703 = vrot.slane %v3702, 4
        %v3705 = vshll.u32 %v3480, 16
        %v3707 = vrot.slane %v3705, 5
        %v3708 = vsel %vm1637, %v3703, %v3707
        %v3709 = vshrl.u32 %v3480, 16
        %v3711 = vrot.slane %v3709, 4
        %v3712 = vor.u32 %v3711, %v3707
        %v3713 = vrot.slane %v3712, 4
        %v3715 = vshll.u32 %v3481, 16
        %v3717 = vrot.slane %v3715, 5
        %v3718 = vsel %vm1637, %v3713, %v3717
        %v3720 = vshrl.u32 %v3482, 16
        %v3722 = vrot.slane %v3720, 4
        %v3723 = vshll.u32 %v3482, 16
        %v3725 = vrot.slane %v3723, 5
        %v3726 = vor.u32 %v3722, %v3725
        %v3727 = vrot.slane %v3726, 4
        %v3729 = vshll.u32 %v3483, 16
        %v3731 = vrot.slane %v3729, 5
        %v3732 = vsel %vm1637, %v3727, %v3731
        %v3733 = vshrl.u32 %v3483, 16
        %v3735 = vrot.slane %v3733, 4
        %v3736 = vor.u32 %v3735, %v3731
        %v3737 = vrot.slane %v3736, 4
        %v3739 = vshll.u32 %v3484, 16
        %v3741 = vrot.slane %v3739, 5
        %v3742 = vsel %vm1637, %v3737, %v3741
        %v3744 = vshrl.u32 %v3485, 16
        %v3746 = vrot.slane %v3744, 4
        %v3747 = vshll.u32 %v3485, 16
        %v3749 = vrot.slane %v3747, 5
        %v3750 = vor.u32 %v3746, %v3749
        %v3751 = vrot.slane %v3750, 4
        %v3753 = vshll.u32 %v3486, 16
        %v3755 = vrot.slane %v3753, 5
        %v3756 = vsel %vm1637, %v3751, %v3755
        %v3757 = vshrl.u32 %v3486, 16
        %v3759 = vrot.slane %v3757, 4
        %v3760 = vor.u32 %v3759, %v3755
        %v3761 = vrot.slane %v3760, 4
        %v3763 = vshll.u32 %v3487, 16
        %v3765 = vrot.slane %v3763, 5
        %v3766 = vsel %vm1637, %v3761, %v3765
        %v3768 = vshrl.u32 %v3488, 16
        %v3770 = vrot.slane %v3768, 4
        %v3771 = vshll.u32 %v3488, 16
        %v3773 = vrot.slane %v3771, 5
        %v3774 = vor.u32 %v3770, %v3773
        %v3775 = vrot.slane %v3774, 4
        %v3777 = vshll.u32 %v3489, 16
        %v3779 = vrot.slane %v3777, 5
        %v3780 = vsel %vm1637, %v3775, %v3779
        %v3781 = vshrl.u32 %v3489, 16
        %v3783 = vrot.slane %v3781, 4
        %v3784 = vor.u32 %v3783, %v3779
        %v3785 = vrot.slane %v3784, 4
        %v3787 = vshll.u32 %v3490, 16
        %v3789 = vrot.slane %v3787, 5
        %v3790 = vsel %vm1637, %v3785, %v3789
        %v3792 = vshrl.u32 %v3491, 16
        %v3794 = vrot.slane %v3792, 4
        %v3795 = vshll.u32 %v3491, 16
        %v3797 = vrot.slane %v3795, 5
        %v3798 = vor.u32 %v3794, %v3797
        %v3799 = vrot.slane %v3798, 4
        %v3801 = vshll.u32 %v3492, 16
        %v3803 = vrot.slane %v3801, 5
        %v3804 = vsel %vm1637, %v3799, %v3803
        %v3805 = vshrl.u32 %v3492, 16
        %v3807 = vrot.slane %v3805, 4
        %v3808 = vor.u32 %v3807, %v3803
        %v3809 = vrot.slane %v3808, 4
        %v3811 = vshll.u32 %v3493, 16
        %v3813 = vrot.slane %v3811, 5
        %v3814 = vsel %vm1637, %v3809, %v3813
        %v3816 = vshrl.u32 %v3494, 16
        %v3818 = vrot.slane %v3816, 4
        %v3819 = vshll.u32 %v3494, 16
        %v3821 = vrot.slane %v3819, 5
        %v3822 = vor.u32 %v3818, %v3821
        %v3823 = vrot.slane %v3822, 4
        %v3825 = vshll.u32 %v3495, 16
        %v3827 = vrot.slane %v3825, 5
        %v3828 = vsel %vm1637, %v3823, %v3827
        %v3829 = vshrl.u32 %v3495, 16
        %v3831 = vrot.slane %v3829, 4
        %v3832 = vor.u32 %v3831, %v3827
        %v3833 = vrot.slane %v3832, 4
        %v3835 = vshll.u32 %v3496, 16
        %v3837 = vrot.slane %v3835, 5
        %v3838 = vsel %vm1637, %v3833, %v3837
        %v3840 = vshrl.u32 %v3497, 16
        %v3842 = vrot.slane %v3840, 4
        %v3843 = vshll.u32 %v3497, 16
        %v3845 = vrot.slane %v3843, 5
        %v3846 = vor.u32 %v3842, %v3845
        %v3847 = vrot.slane %v3846, 4
        %v3849 = vshll.u32 %v3498, 16
        %v3851 = vrot.slane %v3849, 5
        %v3852 = vsel %vm1637, %v3847, %v3851
        %v3853 = vshrl.u32 %v3498, 16
        %v3855 = vrot.slane %v3853, 4
        %v3856 = vor.u32 %v3855, %v3851
        %v3857 = vrot.slane %v3856, 4
        %v3859 = vshll.u32 %v3499, 16
        %v3861 = vrot.slane %v3859, 5
        %v3862 = vsel %vm1637, %v3857, %v3861
        %v3864 = vshrl.u32 %v3500, 16
        %v3866 = vrot.slane %v3864, 4
        %v3867 = vshll.u32 %v3500, 16
        %v3869 = vrot.slane %v3867, 5
        %v3870 = vor.u32 %v3866, %v3869
        %v3871 = vrot.slane %v3870, 4
        %v3873 = vshll.u32 %v3501, 16
        %v3875 = vrot.slane %v3873, 5
        %v3876 = vsel %vm1637, %v3871, %v3875
        %v3877 = vshrl.u32 %v3501, 16
        %v3879 = vrot.slane %v3877, 4
        %v3880 = vor.u32 %v3879, %v3875
        %v3881 = vrot.slane %v3880, 4
        %v3883 = vshll.u32 %v3502, 16
        %v3885 = vrot.slane %v3883, 5
        %v3886 = vsel %vm1637, %v3881, %v3885
        %s3887 = scalar_lea.vmem %s3, 256
        %v3888 = vld [vmem:[%s3887] sm:$0xf]
        %v3889 = vld [vmem:[%s3887 + $0x4] sm:$0xf]
        %v3890 = vld [vmem:[%s3887 + $0x8] sm:$0xf]
        %v3891 = vld [vmem:[%s3887 + $0xc] sm:$0xf]
        %v3892 = vld [vmem:[%s3887 + $0x10] sm:$0xf]
        %v3893 = vld [vmem:[%s3887 + $0x14] sm:$0xf]
        %v3894 = vld [vmem:[%s3887 + $0x18] sm:$0xf]
        %v3895 = vld [vmem:[%s3887 + $0x1c] sm:$0xf]
        %v3896 = vld [vmem:[%s3887 + $0x20] sm:$0xf]
        %v3897 = vld [vmem:[%s3887 + $0x24] sm:$0xf]
        %v3898 = vld [vmem:[%s3887 + $0x28] sm:$0xf]
        %v3899 = vld [vmem:[%s3887 + $0x2c] sm:$0xf]
        %v3900 = vld [vmem:[%s3887 + $0x30] sm:$0xf]
        %v3901 = vld [vmem:[%s3887 + $0x34] sm:$0xf]
        %v3902 = vld [vmem:[%s3887 + $0x38] sm:$0xf]
        %v3903 = vld [vmem:[%s3887 + $0x3c] sm:$0xf]
        %v3904 = vunpack.c.l.b16 %v3516
        %v3905 = vunpack.c.l.b16 %v3526
        %v3906 = vunpack.c.l.b16 %v3540
        %v3907 = vunpack.c.l.b16 %v3550
        %v3908 = vunpack.c.l.b16 %v3564
        %v3909 = vunpack.c.l.b16 %v3574
        %v3910 = vunpack.c.l.b16 %v3588
        %v3911 = vunpack.c.l.b16 %v3598
        %v3912 = vunpack.c.l.b16 %v3612
        %v3913 = vunpack.c.l.b16 %v3622
        %v3914 = vunpack.c.l.b16 %v3636
        %v3915 = vunpack.c.l.b16 %v3646
        %v3916 = vunpack.c.l.b16 %v3660
        %v3917 = vunpack.c.l.b16 %v3670
        %v3918 = vunpack.c.l.b16 %v3684
        %v3919 = vunpack.c.l.b16 %v3694
        %v3920 = vunpack.c.l.b16 %v3708
        %v3921 = vunpack.c.l.b16 %v3718
        %v3922 = vunpack.c.l.b16 %v3732
        %v3923 = vunpack.c.l.b16 %v3742
        %v3924 = vunpack.c.l.b16 %v3756
        %v3925 = vunpack.c.l.b16 %v3766
        %v3926 = vunpack.c.l.b16 %v3780
        %v3927 = vunpack.c.l.b16 %v3790
        %v3928 = vunpack.c.l.b16 %v3804
        %v3929 = vunpack.c.l.b16 %v3814
        %v3930 = vunpack.c.l.b16 %v3828
        %v3931 = vunpack.c.l.b16 %v3838
        %v3932 = vunpack.c.l.b16 %v3852
        %v3933 = vunpack.c.l.b16 %v3862
        %v3934 = vunpack.c.l.b16 %v3876
        %v3935 = vunpack.c.l.b16 %v3886
        %v3936 = vpack.c.b16 %v3905, %v3904
        %v3937 = vpack.c.b16 %v3907, %v3906
        %v3938 = vpack.c.b16 %v3909, %v3908
        %v3939 = vpack.c.b16 %v3911, %v3910
        %v3940 = vpack.c.b16 %v3913, %v3912
        %v3941 = vpack.c.b16 %v3915, %v3914
        %v3942 = vpack.c.b16 %v3917, %v3916
        %v3943 = vpack.c.b16 %v3919, %v3918
        %v3944 = vpack.c.b16 %v3921, %v3920
        %v3945 = vpack.c.b16 %v3923, %v3922
        %v3946 = vpack.c.b16 %v3925, %v3924
        %v3947 = vpack.c.b16 %v3927, %v3926
        %v3948 = vpack.c.b16 %v3929, %v3928
        %v3949 = vpack.c.b16 %v3931, %v3930
        %v3950 = vpack.c.b16 %v3933, %v3932
        %v3951 = vpack.c.b16 %v3935, %v3934
        %v3984 = vunpack.c.l.b16 %v3888
        %v3985 = vunpack.c.l.b16 %v3889
        %v3986 = vunpack.c.l.b16 %v3890
        %v3987 = vunpack.c.l.b16 %v3891
        %v3988 = vunpack.c.l.b16 %v3892
        %v3989 = vunpack.c.l.b16 %v3893
        %v3990 = vunpack.c.l.b16 %v3894
        %v3991 = vunpack.c.l.b16 %v3895
        %v3992 = vunpack.c.l.b16 %v3896
        %v3993 = vunpack.c.l.b16 %v3897
        %v3994 = vunpack.c.l.b16 %v3898
        %v3995 = vunpack.c.l.b16 %v3899
        %v3996 = vunpack.c.l.b16 %v3900
        %v3997 = vunpack.c.l.b16 %v3901
        %v3998 = vunpack.c.l.b16 %v3902
        %v3999 = vunpack.c.l.b16 %v3903
        %v4000 = vpack.c.b16 %v3985, %v3984
        %v4001 = vpack.c.b16 %v3987, %v3986
        %v4002 = vpack.c.b16 %v3989, %v3988
        %v4003 = vpack.c.b16 %v3991, %v3990
        %v4004 = vpack.c.b16 %v3993, %v3992
        %v4005 = vpack.c.b16 %v3995, %v3994
        %v4006 = vpack.c.b16 %v3997, %v3996
        %v4007 = vpack.c.b16 %v3999, %v3998
        %4016 = vmatprep.subr.bf16.mxu0 0
        %4017 = vmatpush1.bf16.msra.mxu0 %v4000
        %4018 = vmatprep.subr.bf16.mxu0 0
        %4019 = vmatpush1.bf16.msra.mxu0 %v4001
        %4020 = vmatprep.subr.bf16.mxu0 0
        %4021 = vmatpush1.bf16.msra.mxu0 %v4002
        %4022 = vmatprep.subr.bf16.mxu0 0
        %4023 = vmatpush1.bf16.msra.mxu0 %v4003
        %4024 = vmatprep.subr.bf16.mxu0 0
        %4025 = vmatpush1.bf16.msra.mxu0 %v4004
        %4026 = vmatprep.subr.bf16.mxu0 0
        %4027 = vmatpush1.bf16.msra.mxu0 %v4005
        %4028 = vmatprep.subr.bf16.mxu0 0
        %4029 = vmatpush1.bf16.msra.mxu0 %v4006
        %4030 = vmatprep.subr.bf16.mxu0 0
        %4031 = vmatpush1.bf16.msra.mxu0 %v4007
        %4032 = vmatprep.subr.bf16.mxu0 0
        %4033 = vmatpush1.bf16.msra.mxu0 0
        %4034 = vmatprep.subr.bf16.mxu0 0
        %4035 = vmatpush1.bf16.msra.mxu0 0
        %4036 = vmatprep.subr.bf16.mxu0 0
        %4037 = vmatpush1.bf16.msra.mxu0 0
        %4038 = vmatprep.subr.bf16.mxu0 0
        %4039 = vmatpush1.bf16.msra.mxu0 0
        %4040 = vmatprep.subr.bf16.mxu0 0
        %4041 = vmatpush1.bf16.msra.mxu0 0
        %4042 = vmatprep.subr.bf16.mxu0 0
        %4043 = vmatpush1.bf16.msra.mxu0 0
        %4044 = vmatprep.subr.bf16.mxu0 0
        %4045 = vmatpush1.bf16.msra.mxu0 0
        %4046 = vmatprep.subr.bf16.mxu0 0
        %4047 = vmatpush1.bf16.msra.mxu0 0
        %4048 = vmatprep.mubr.bf16.mxu0 0
        %4049 = vmatmul.mubr.bf16.gmra.mrb[0].mxu0 %v3936
        %v4050 = vpop.f32.mrb[0].mxu0
        %v4051 = vadd.f32 0.0, %v4050
        %v4052 = vpop.f32.mrb[0].mxu0
        %v4053 = vpop.f32.mrb[0].mxu0
        %v4054 = vadd.f32 0.0, %v4053
        %v4055 = vpop.f32.mrb[0].mxu0
        %4056 = vmatprep.mubr.bf16.mxu0 0
        %4057 = vmatmul.mubr.bf16.gmra.mrb[0].mxu0 %v3937
        %v4058 = vpop.f32.mrb[0].mxu0
        %v4059 = vadd.f32 0.0, %v4058
        %v4060 = vpop.f32.mrb[0].mxu0
        %v4061 = vpop.f32.mrb[0].mxu0
        %v4062 = vadd.f32 0.0, %v4061
        %v4063 = vpop.f32.mrb[0].mxu0
        %4064 = vmatprep.mubr.bf16.mxu0 0
        %4065 = vmatmul.mubr.bf16.gmra.mrb[0].mxu0 %v3938
        %v4066 = vpop.f32.mrb[0].mxu0
        %v4067 = vadd.f32 0.0, %v4066
        %v4068 = vpop.f32.mrb[0].mxu0
        %v4069 = vpop.f32.mrb[0].mxu0
        %v4070 = vadd.f32 0.0, %v4069
        %v4071 = vpop.f32.mrb[0].mxu0
        %4072 = vmatprep.mubr.bf16.mxu0 0
        %4073 = vmatmul.mubr.bf16.gmra.mrb[0].mxu0 %v3939
        %v4074 = vpop.f32.mrb[0].mxu0
        %v4075 = vadd.f32 0.0, %v4074
        %v4076 = vpop.f32.mrb[0].mxu0
        %v4077 = vpop.f32.mrb[0].mxu0
        %v4078 = vadd.f32 0.0, %v4077
        %v4079 = vpop.f32.mrb[0].mxu0
        %4080 = vmatprep.mubr.bf16.mxu0 0
        %4081 = vmatmul.mubr.bf16.gmra.mrb[0].mxu0 %v3940
        %v4082 = vpop.f32.mrb[0].mxu0
        %v4083 = vadd.f32 0.0, %v4082
        %v4084 = vpop.f32.mrb[0].mxu0
        %v4085 = vpop.f32.mrb[0].mxu0
        %v4086 = vadd.f32 0.0, %v4085
        %v4087 = vpop.f32.mrb[0].mxu0
        %4088 = vmatprep.mubr.bf16.mxu0 0
        %4089 = vmatmul.mubr.bf16.gmra.mrb[0].mxu0 %v3941
        %v4090 = vpop.f32.mrb[0].mxu0
        %v4091 = vadd.f32 0.0, %v4090
        %v4092 = vpop.f32.mrb[0].mxu0
        %v4093 = vpop.f32.mrb[0].mxu0
        %v4094 = vadd.f32 0.0, %v4093
        %v4095 = vpop.f32.mrb[0].mxu0
        %4096 = vmatprep.mubr.bf16.mxu0 0
        %4097 = vmatmul.mubr.bf16.gmra.mrb[0].mxu0 %v3942
        %v4098 = vpop.f32.mrb[0].mxu0
        %v4099 = vadd.f32 0.0, %v4098
        %v4100 = vpop.f32.mrb[0].mxu0
        %v4101 = vpop.f32.mrb[0].mxu0
        %v4102 = vadd.f32 0.0, %v4101
        %v4103 = vpop.f32.mrb[0].mxu0
        %4104 = vmatprep.mubr.bf16.mxu0 0
        %4105 = vmatmul.mubr.bf16.gmra.mrb[0].mxu0 %v3943
        %v4106 = vpop.f32.mrb[0].mxu0
        %v4107 = vadd.f32 0.0, %v4106
        %v4108 = vpop.f32.mrb[0].mxu0
        %v4109 = vpop.f32.mrb[0].mxu0
        %v4110 = vadd.f32 0.0, %v4109
        %v4111 = vpop.f32.mrb[0].mxu0
        %4112 = vmatprep.mubr.bf16.mxu0 0
        %4113 = vmatmul.mubr.bf16.gmra.mrb[0].mxu0 %v3944
        %v4114 = vpop.f32.mrb[0].mxu0
        %v4115 = vadd.f32 0.0, %v4114
        %v4116 = vpop.f32.mrb[0].mxu0
        %v4117 = vpop.f32.mrb[0].mxu0
        %v4118 = vadd.f32 0.0, %v4117
        %v4119 = vpop.f32.mrb[0].mxu0
        %4120 = vmatprep.mubr.bf16.mxu0 0
        %4121 = vmatmul.mubr.bf16.gmra.mrb[0].mxu0 %v3945
        %v4122 = vpop.f32.mrb[0].mxu0
        %v4123 = vadd.f32 0.0, %v4122
        %v4124 = vpop.f32.mrb[0].mxu0
        %v4125 = vpop.f32.mrb[0].mxu0
        %v4126 = vadd.f32 0.0, %v4125
        %v4127 = vpop.f32.mrb[0].mxu0
        %4128 = vmatprep.mubr.bf16.mxu0 0
        %4129 = vmatmul.mubr.bf16.gmra.mrb[0].mxu0 %v3946
        %v4130 = vpop.f32.mrb[0].mxu0
        %v4131 = vadd.f32 0.0, %v4130
        %v4132 = vpop.f32.mrb[0].mxu0
        %v4133 = vpop.f32.mrb[0].mxu0
        %v4134 = vadd.f32 0.0, %v4133
        %v4135 = vpop.f32.mrb[0].mxu0
        %4136 = vmatprep.mubr.bf16.mxu0 0
        %4137 = vmatmul.mubr.bf16.gmra.mrb[0].mxu0 %v3947
        %v4138 = vpop.f32.mrb[0].mxu0
        %v4139 = vadd.f32 0.0, %v4138
        %v4140 = vpop.f32.mrb[0].mxu0
        %v4141 = vpop.f32.mrb[0].mxu0
        %v4142 = vadd.f32 0.0, %v4141
        %v4143 = vpop.f32.mrb[0].mxu0
        %4144 = vmatprep.mubr.bf16.mxu0 0
        %4145 = vmatmul.mubr.bf16.gmra.mrb[0].mxu0 %v3948
        %v4146 = vpop.f32.mrb[0].mxu0
        %v4147 = vadd.f32 0.0, %v4146
        %v4148 = vpop.f32.mrb[0].mxu0
        %v4149 = vpop.f32.mrb[0].mxu0
        %v4150 = vadd.f32 0.0, %v4149
        %v4151 = vpop.f32.mrb[0].mxu0
        %4152 = vmatprep.mubr.bf16.mxu0 0
        %4153 = vmatmul.mubr.bf16.gmra.mrb[0].mxu0 %v3949
        %v4154 = vpop.f32.mrb[0].mxu0
        %v4155 = vadd.f32 0.0, %v4154
        %v4156 = vpop.f32.mrb[0].mxu0
        %v4157 = vpop.f32.mrb[0].mxu0
        %v4158 = vadd.f32 0.0, %v4157
        %v4159 = vpop.f32.mrb[0].mxu0
        %4160 = vmatprep.mubr.bf16.mxu0 0
        %4161 = vmatmul.mubr.bf16.gmra.mrb[0].mxu0 %v3950
        %v4162 = vpop.f32.mrb[0].mxu0
        %v4163 = vadd.f32 0.0, %v4162
        %v4164 = vpop.f32.mrb[0].mxu0
        %v4165 = vpop.f32.mrb[0].mxu0
        %v4166 = vadd.f32 0.0, %v4165
        %v4167 = vpop.f32.mrb[0].mxu0
        %4168 = vmatprep.mubr.bf16.mxu0 0
        %4169 = vmatmul.mubr.bf16.gmra.mrb[0].mxu0 %v3951
        %v4170 = vpop.f32.mrb[0].mxu0
        %v4171 = vadd.f32 0.0, %v4170
        %v4172 = vpop.f32.mrb[0].mxu0
        %v4173 = vpop.f32.mrb[0].mxu0
        %v4174 = vadd.f32 0.0, %v4173
        %v4175 = vpop.f32.mrb[0].mxu0
        %4176 = vdwg.mxu0
        %v4177 = vld [vmem:[#allocation2] sm:$0xff]
        %v4178 = vld [vmem:[#allocation2 + $0x8] sm:$0xff]
        %v4179 = vld [vmem:[#allocation2 + $0x10] sm:$0xff]
        %v4180 = vld [vmem:[#allocation2 + $0x18] sm:$0xff]
        %v4181 = vld [vmem:[#allocation2 + $0x20] sm:$0xff]
        %v4182 = vld [vmem:[#allocation2 + $0x28] sm:$0xff]
        %v4183 = vld [vmem:[#allocation2 + $0x30] sm:$0xff]
        %v4184 = vld [vmem:[#allocation2 + $0x38] sm:$0xff]
        %v4185 = vld [vmem:[#allocation2 + $0x40] sm:$0xff]
        %v4186 = vld [vmem:[#allocation2 + $0x48] sm:$0xff]
        %v4187 = vld [vmem:[#allocation2 + $0x50] sm:$0xff]
        %v4188 = vld [vmem:[#allocation2 + $0x58] sm:$0xff]
        %v4189 = vld [vmem:[#allocation2 + $0x60] sm:$0xff]
        %v4190 = vld [vmem:[#allocation2 + $0x68] sm:$0xff]
        %v4191 = vld [vmem:[#allocation2 + $0x70] sm:$0xff]
        %v4192 = vld [vmem:[#allocation2 + $0x78] sm:$0xff]
        %v4193 = vld [vmem:[#allocation2 + $0x80] sm:$0xff]
        %v4194 = vld [vmem:[#allocation2 + $0x88] sm:$0xff]
        %v4195 = vld [vmem:[#allocation2 + $0x90] sm:$0xff]
        %v4196 = vld [vmem:[#allocation2 + $0x98] sm:$0xff]
        %v4197 = vld [vmem:[#allocation2 + $0xa0] sm:$0xff]
        %v4198 = vld [vmem:[#allocation2 + $0xa8] sm:$0xff]
        %v4199 = vld [vmem:[#allocation2 + $0xb0] sm:$0xff]
        %v4200 = vld [vmem:[#allocation2 + $0xb8] sm:$0xff]
        %v4201 = vld [vmem:[#allocation2 + $0xc0] sm:$0xff]
        %v4202 = vld [vmem:[#allocation2 + $0xc8] sm:$0xff]
        %v4203 = vld [vmem:[#allocation2 + $0xd0] sm:$0xff]
        %v4204 = vld [vmem:[#allocation2 + $0xd8] sm:$0xff]
        %v4205 = vld [vmem:[#allocation2 + $0xe0] sm:$0xff]
        %v4206 = vld [vmem:[#allocation2 + $0xe8] sm:$0xff]
        %v4207 = vld [vmem:[#allocation2 + $0xf0] sm:$0xff]
        %v4208 = vld [vmem:[#allocation2 + $0xf8] sm:$0xff]
        %v4209 = vadd.f32 %v4177, %v4051
        %v4210 = vadd.f32 %v4178, %v4054
        %v4211 = vadd.f32 %v4179, %v4059
        %v4212 = vadd.f32 %v4180, %v4062
        %v4213 = vadd.f32 %v4181, %v4067
        %v4214 = vadd.f32 %v4182, %v4070
        %v4215 = vadd.f32 %v4183, %v4075
        %v4216 = vadd.f32 %v4184, %v4078
        %v4217 = vadd.f32 %v4185, %v4083
        %v4218 = vadd.f32 %v4186, %v4086
        %v4219 = vadd.f32 %v4187, %v4091
        %v4220 = vadd.f32 %v4188, %v4094
        %v4221 = vadd.f32 %v4189, %v4099
        %v4222 = vadd.f32 %v4190, %v4102
        %v4223 = vadd.f32 %v4191, %v4107
        %v4224 = vadd.f32 %v4192, %v4110
        %v4225 = vadd.f32 %v4193, %v4115
        %v4226 = vadd.f32 %v4194, %v4118
        %v4227 = vadd.f32 %v4195, %v4123
        %v4228 = vadd.f32 %v4196, %v4126
        %v4229 = vadd.f32 %v4197, %v4131
        %v4230 = vadd.f32 %v4198, %v4134
        %v4231 = vadd.f32 %v4199, %v4139
        %v4232 = vadd.f32 %v4200, %v4142
        %v4233 = vadd.f32 %v4201, %v4147
        %v4234 = vadd.f32 %v4202, %v4150
        %v4235 = vadd.f32 %v4203, %v4155
        %v4236 = vadd.f32 %v4204, %v4158
        %v4237 = vadd.f32 %v4205, %v4163
        %v4238 = vadd.f32 %v4206, %v4166
        %v4239 = vadd.f32 %v4207, %v4171
        %v4240 = vadd.f32 %v4208, %v4174
        %4241 = vst [vmem:[#allocation2] sm:$0xff] %v4209
        %4242 = vst [vmem:[#allocation2 + $0x8] sm:$0xff] %v4210
        %4243 = vst [vmem:[#allocation2 + $0x10] sm:$0xff] %v4211
        %4244 = vst [vmem:[#allocation2 + $0x18] sm:$0xff] %v4212
        %4245 = vst [vmem:[#allocation2 + $0x20] sm:$0xff] %v4213
        %4246 = vst [vmem:[#allocation2 + $0x28] sm:$0xff] %v4214
        %4247 = vst [vmem:[#allocation2 + $0x30] sm:$0xff] %v4215
        %4248 = vst [vmem:[#allocation2 + $0x38] sm:$0xff] %v4216
        %4249 = vst [vmem:[#allocation2 + $0x40] sm:$0xff] %v4217
        %4250 = vst [vmem:[#allocation2 + $0x48] sm:$0xff] %v4218
        %4251 = vst [vmem:[#allocation2 + $0x50] sm:$0xff] %v4219
        %4252 = vst [vmem:[#allocation2 + $0x58] sm:$0xff] %v4220
        %4253 = vst [vmem:[#allocation2 + $0x60] sm:$0xff] %v4221
        %4254 = vst [vmem:[#allocation2 + $0x68] sm:$0xff] %v4222
        %4255 = vst [vmem:[#allocation2 + $0x70] sm:$0xff] %v4223
        %4256 = vst [vmem:[#allocation2 + $0x78] sm:$0xff] %v4224
        %4257 = vst [vmem:[#allocation2 + $0x80] sm:$0xff] %v4225
        %4258 = vst [vmem:[#allocation2 + $0x88] sm:$0xff] %v4226
        %4259 = vst [vmem:[#allocation2 + $0x90] sm:$0xff] %v4227
        %4260 = vst [vmem:[#allocation2 + $0x98] sm:$0xff] %v4228
        %4261 = vst [vmem:[#allocation2 + $0xa0] sm:$0xff] %v4229
        %4262 = vst [vmem:[#allocation2 + $0xa8] sm:$0xff] %v4230
        %4263 = vst [vmem:[#allocation2 + $0xb0] sm:$0xff] %v4231
        %4264 = vst [vmem:[#allocation2 + $0xb8] sm:$0xff] %v4232
        %4265 = vst [vmem:[#allocation2 + $0xc0] sm:$0xff] %v4233
        %4266 = vst [vmem:[#allocation2 + $0xc8] sm:$0xff] %v4234
        %4267 = vst [vmem:[#allocation2 + $0xd0] sm:$0xff] %v4235
        %4268 = vst [vmem:[#allocation2 + $0xd8] sm:$0xff] %v4236
        %4269 = vst [vmem:[#allocation2 + $0xe0] sm:$0xff] %v4237
        %4270 = vst [vmem:[#allocation2 + $0xe8] sm:$0xff] %v4238
        %4271 = vst [vmem:[#allocation2 + $0xf0] sm:$0xff] %v4239
        %4272 = vst [vmem:[#allocation2 + $0xf8] sm:$0xff] %v4240
        %v4273 = vld [vmem:[%s1084] sm:$0xe]
        %v4274 = vld [vmem:[%s1084 + $0x4] sm:$0xf]
        %v4275 = vld [vmem:[%s1084 + $0x8] sm:$0x1]
        %v4276 = vld [vmem:[%s1084 + $0xc] sm:$0xe]
        %v4277 = vld [vmem:[%s1084 + $0x10] sm:$0xf]
        %v4278 = vld [vmem:[%s1084 + $0x14] sm:$0x1]
        %v4279 = vld [vmem:[%s1084 + $0x18] sm:$0xe]
        %v4280 = vld [vmem:[%s1084 + $0x1c] sm:$0xf]
        %v4281 = vld [vmem:[%s1084 + $0x20] sm:$0x1]
        %v4282 = vld [vmem:[%s1084 + $0x24] sm:$0xe]
        %v4283 = vld [vmem:[%s1084 + $0x28] sm:$0xf]
        %v4284 = vld [vmem:[%s1084 + $0x2c] sm:$0x1]
        %v4285 = vld [vmem:[%s1084 + $0x30] sm:$0xe]
        %v4286 = vld [vmem:[%s1084 + $0x34] sm:$0xf]
        %v4287 = vld [vmem:[%s1084 + $0x38] sm:$0x1]
        %v4288 = vld [vmem:[%s1084 + $0x3c] sm:$0xe]
        %v4289 = vld [vmem:[%s1084 + $0x40] sm:$0xf]
        %v4290 = vld [vmem:[%s1084 + $0x44] sm:$0x1]
        %v4291 = vld [vmem:[%s1084 + $0x48] sm:$0xe]
        %v4292 = vld [vmem:[%s1084 + $0x4c] sm:$0xf]
        %v4293 = vld [vmem:[%s1084 + $0x50] sm:$0x1]
        %v4294 = vld [vmem:[%s1084 + $0x54] sm:$0xe]
        %v4295 = vld [vmem:[%s1084 + $0x58] sm:$0xf]
        %v4296 = vld [vmem:[%s1084 + $0x5c] sm:$0x1]
        %v4297 = vld [vmem:[%s1084 + $0x60] sm:$0xe]
        %v4298 = vld [vmem:[%s1084 + $0x64] sm:$0xf]
        %v4299 = vld [vmem:[%s1084 + $0x68] sm:$0x1]
        %v4300 = vld [vmem:[%s1084 + $0x6c] sm:$0xe]
        %v4301 = vld [vmem:[%s1084 + $0x70] sm:$0xf]
        %v4302 = vld [vmem:[%s1084 + $0x74] sm:$0x1]
        %v4303 = vld [vmem:[%s1084 + $0x78] sm:$0xe]
        %v4304 = vld [vmem:[%s1084 + $0x7c] sm:$0xf]
        %v4305 = vld [vmem:[%s1084 + $0x80] sm:$0x1]
        %v4306 = vld [vmem:[%s1084 + $0x84] sm:$0xe]
        %v4307 = vld [vmem:[%s1084 + $0x88] sm:$0xf]
        %v4308 = vld [vmem:[%s1084 + $0x8c] sm:$0x1]
        %v4309 = vld [vmem:[%s1084 + $0x90] sm:$0xe]
        %v4310 = vld [vmem:[%s1084 + $0x94] sm:$0xf]
        %v4311 = vld [vmem:[%s1084 + $0x98] sm:$0x1]
        %v4312 = vld [vmem:[%s1084 + $0x9c] sm:$0xe]
        %v4313 = vld [vmem:[%s1084 + $0xa0] sm:$0xf]
        %v4314 = vld [vmem:[%s1084 + $0xa4] sm:$0x1]
        %v4315 = vld [vmem:[%s1084 + $0xa8] sm:$0xe]
        %v4316 = vld [vmem:[%s1084 + $0xac] sm:$0xf]
        %v4317 = vld [vmem:[%s1084 + $0xb0] sm:$0x1]
        %v4318 = vld [vmem:[%s1084 + $0xb4] sm:$0xe]
        %v4319 = vld [vmem:[%s1084 + $0xb8] sm:$0xf]
        %v4320 = vld [vmem:[%s1084 + $0xbc] sm:$0x1]
        %v4369 = vrot.slane %v4273, 5
        %v4370 = vrot.slane %v4369, 4
        %v4371 = vrot.slane %v4274, 5
        %v4372 = vsel %vm2506, %v4370, %v4371
        %v4373 = vrot.slane %v4371, 4
        %v4374 = vrot.slane %v4275, 5
        %v4375 = vsel %vm2506, %v4373, %v4374
        %v4376 = vrot.slane %v4276, 5
        %v4377 = vrot.slane %v4376, 4
        %v4378 = vrot.slane %v4277, 5
        %v4379 = vsel %vm2506, %v4377, %v4378
        %v4380 = vrot.slane %v4378, 4
        %v4381 = vrot.slane %v4278, 5
        %v4382 = vsel %vm2506, %v4380, %v4381
        %v4383 = vrot.slane %v4279, 5
        %v4384 = vrot.slane %v4383, 4
        %v4385 = vrot.slane %v4280, 5
        %v4386 = vsel %vm2506, %v4384, %v4385
        %v4387 = vrot.slane %v4385, 4
        %v4388 = vrot.slane %v4281, 5
        %v4389 = vsel %vm2506, %v4387, %v4388
        %v4390 = vrot.slane %v4282, 5
        %v4391 = vrot.slane %v4390, 4
        %v4392 = vrot.slane %v4283, 5
        %v4393 = vsel %vm2506, %v4391, %v4392
        %v4394 = vrot.slane %v4392, 4
        %v4395 = vrot.slane %v4284, 5
        %v4396 = vsel %vm2506, %v4394, %v4395
        %v4397 = vrot.slane %v4285, 5
        %v4398 = vrot.slane %v4397, 4
        %v4399 = vrot.slane %v4286, 5
        %v4400 = vsel %vm2506, %v4398, %v4399
        %v4401 = vrot.slane %v4399, 4
        %v4402 = vrot.slane %v4287, 5
        %v4403 = vsel %vm2506, %v4401, %v4402
        %v4404 = vrot.slane %v4288, 5
        %v4405 = vrot.slane %v4404, 4
        %v4406 = vrot.slane %v4289, 5
        %v4407 = vsel %vm2506, %v4405, %v4406
        %v4408 = vrot.slane %v4406, 4
        %v4409 = vrot.slane %v4290, 5
        %v4410 = vsel %vm2506, %v4408, %v4409
        %v4411 = vrot.slane %v4291, 5
        %v4412 = vrot.slane %v4411, 4
        %v4413 = vrot.slane %v4292, 5
        %v4414 = vsel %vm2506, %v4412, %v4413
        %v4415 = vrot.slane %v4413, 4
        %v4416 = vrot.slane %v4293, 5
        %v4417 = vsel %vm2506, %v4415, %v4416
        %v4418 = vrot.slane %v4294, 5
        %v4419 = vrot.slane %v4418, 4
        %v4420 = vrot.slane %v4295, 5
        %v4421 = vsel %vm2506, %v4419, %v4420
        %v4422 = vrot.slane %v4420, 4
        %v4423 = vrot.slane %v4296, 5
        %v4424 = vsel %vm2506, %v4422, %v4423
        %v4425 = vrot.slane %v4297, 5
        %v4426 = vrot.slane %v4425, 4
        %v4427 = vrot.slane %v4298, 5
        %v4428 = vsel %vm2506, %v4426, %v4427
        %v4429 = vrot.slane %v4427, 4
        %v4430 = vrot.slane %v4299, 5
        %v4431 = vsel %vm2506, %v4429, %v4430
        %v4432 = vrot.slane %v4300, 5
        %v4433 = vrot.slane %v4432, 4
        %v4434 = vrot.slane %v4301, 5
        %v4435 = vsel %vm2506, %v4433, %v4434
        %v4436 = vrot.slane %v4434, 4
        %v4437 = vrot.slane %v4302, 5
        %v4438 = vsel %vm2506, %v4436, %v4437
        %v4439 = vrot.slane %v4303, 5
        %v4440 = vrot.slane %v4439, 4
        %v4441 = vrot.slane %v4304, 5
        %v4442 = vsel %vm2506, %v4440, %v4441
        %v4443 = vrot.slane %v4441, 4
        %v4444 = vrot.slane %v4305, 5
        %v4445 = vsel %vm2506, %v4443, %v4444
        %v4446 = vrot.slane %v4306, 5
        %v4447 = vrot.slane %v4446, 4
        %v4448 = vrot.slane %v4307, 5
        %v4449 = vsel %vm2506, %v4447, %v4448
        %v4450 = vrot.slane %v4448, 4
        %v4451 = vrot.slane %v4308, 5
        %v4452 = vsel %vm2506, %v4450, %v4451
        %v4453 = vrot.slane %v4309, 5
        %v4454 = vrot.slane %v4453, 4
        %v4455 = vrot.slane %v4310, 5
        %v4456 = vsel %vm2506, %v4454, %v4455
        %v4457 = vrot.slane %v4455, 4
        %v4458 = vrot.slane %v4311, 5
        %v4459 = vsel %vm2506, %v4457, %v4458
        %v4460 = vrot.slane %v4312, 5
        %v4461 = vrot.slane %v4460, 4
        %v4462 = vrot.slane %v4313, 5
        %v4463 = vsel %vm2506, %v4461, %v4462
        %v4464 = vrot.slane %v4462, 4
        %v4465 = vrot.slane %v4314, 5
        %v4466 = vsel %vm2506, %v4464, %v4465
        %v4467 = vrot.slane %v4315, 5
        %v4468 = vrot.slane %v4467, 4
        %v4469 = vrot.slane %v4316, 5
        %v4470 = vsel %vm2506, %v4468, %v4469
        %v4471 = vrot.slane %v4469, 4
        %v4472 = vrot.slane %v4317, 5
        %v4473 = vsel %vm2506, %v4471, %v4472
        %v4474 = vrot.slane %v4318, 5
        %v4475 = vrot.slane %v4474, 4
        %v4476 = vrot.slane %v4319, 5
        %v4477 = vsel %vm2506, %v4475, %v4476
        %v4478 = vrot.slane %v4476, 4
        %v4479 = vrot.slane %v4320, 5
        %v4480 = vsel %vm2506, %v4478, %v4479
        %s4481 = scalar_lea.vmem %s3, 320
        %v4482 = vld [vmem:[%s4481] sm:$0xf]
        %v4483 = vld [vmem:[%s4481 + $0x4] sm:$0xf]
        %v4484 = vld [vmem:[%s4481 + $0x8] sm:$0xf]
        %v4485 = vld [vmem:[%s4481 + $0xc] sm:$0xf]
        %v4486 = vld [vmem:[%s4481 + $0x10] sm:$0xf]
        %v4487 = vld [vmem:[%s4481 + $0x14] sm:$0xf]
        %v4488 = vld [vmem:[%s4481 + $0x18] sm:$0xf]
        %v4489 = vld [vmem:[%s4481 + $0x1c] sm:$0xf]
        %v4490 = vld [vmem:[%s4481 + $0x20] sm:$0xf]
        %v4491 = vld [vmem:[%s4481 + $0x24] sm:$0xf]
        %v4492 = vld [vmem:[%s4481 + $0x28] sm:$0xf]
        %v4493 = vld [vmem:[%s4481 + $0x2c] sm:$0xf]
        %v4494 = vld [vmem:[%s4481 + $0x30] sm:$0xf]
        %v4495 = vld [vmem:[%s4481 + $0x34] sm:$0xf]
        %v4496 = vld [vmem:[%s4481 + $0x38] sm:$0xf]
        %v4497 = vld [vmem:[%s4481 + $0x3c] sm:$0xf]
        %v4498 = vunpack.c.l.b16 %v4372
        %v4499 = vunpack.c.l.b16 %v4375
        %v4500 = vunpack.c.l.b16 %v4379
        %v4501 = vunpack.c.l.b16 %v4382
        %v4502 = vunpack.c.l.b16 %v4386
        %v4503 = vunpack.c.l.b16 %v4389
        %v4504 = vunpack.c.l.b16 %v4393
        %v4505 = vunpack.c.l.b16 %v4396
        %v4506 = vunpack.c.l.b16 %v4400
        %v4507 = vunpack.c.l.b16 %v4403
        %v4508 = vunpack.c.l.b16 %v4407
        %v4509 = vunpack.c.l.b16 %v4410
        %v4510 = vunpack.c.l.b16 %v4414
        %v4511 = vunpack.c.l.b16 %v4417
        %v4512 = vunpack.c.l.b16 %v4421
        %v4513 = vunpack.c.l.b16 %v4424
        %v4514 = vunpack.c.l.b16 %v4428
        %v4515 = vunpack.c.l.b16 %v4431
        %v4516 = vunpack.c.l.b16 %v4435
        %v4517 = vunpack.c.l.b16 %v4438
        %v4518 = vunpack.c.l.b16 %v4442
        %v4519 = vunpack.c.l.b16 %v4445
        %v4520 = vunpack.c.l.b16 %v4449
        %v4521 = vunpack.c.l.b16 %v4452
        %v4522 = vunpack.c.l.b16 %v4456
        %v4523 = vunpack.c.l.b16 %v4459
        %v4524 = vunpack.c.l.b16 %v4463
        %v4525 = vunpack.c.l.b16 %v4466
        %v4526 = vunpack.c.l.b16 %v4470
        %v4527 = vunpack.c.l.b16 %v4473
        %v4528 = vunpack.c.l.b16 %v4477
        %v4529 = vunpack.c.l.b16 %v4480
        %v4530 = vpack.c.b16 %v4499, %v4498
        %v4531 = vpack.c.b16 %v4501, %v4500
        %v4532 = vpack.c.b16 %v4503, %v4502
        %v4533 = vpack.c.b16 %v4505, %v4504
        %v4534 = vpack.c.b16 %v4507, %v4506
        %v4535 = vpack.c.b16 %v4509, %v4508
        %v4536 = vpack.c.b16 %v4511, %v4510
        %v4537 = vpack.c.b16 %v4513, %v4512
        %v4538 = vpack.c.b16 %v4515, %v4514
        %v4539 = vpack.c.b16 %v4517, %v4516
        %v4540 = vpack.c.b16 %v4519, %v4518
        %v4541 = vpack.c.b16 %v4521, %v4520
        %v4542 = vpack.c.b16 %v4523, %v4522
        %v4543 = vpack.c.b16 %v4525, %v4524
        %v4544 = vpack.c.b16 %v4527, %v4526
        %v4545 = vpack.c.b16 %v4529, %v4528
        %v4578 = vunpack.c.l.b16 %v4482
        %v4579 = vunpack.c.l.b16 %v4483
        %v4580 = vunpack.c.l.b16 %v4484
        %v4581 = vunpack.c.l.b16 %v4485
        %v4582 = vunpack.c.l.b16 %v4486
        %v4583 = vunpack.c.l.b16 %v4487
        %v4584 = vunpack.c.l.b16 %v4488
        %v4585 = vunpack.c.l.b16 %v4489
        %v4586 = vunpack.c.l.b16 %v4490
        %v4587 = vunpack.c.l.b16 %v4491
        %v4588 = vunpack.c.l.b16 %v4492
        %v4589 = vunpack.c.l.b16 %v4493
        %v4590 = vunpack.c.l.b16 %v4494
        %v4591 = vunpack.c.l.b16 %v4495
        %v4592 = vunpack.c.l.b16 %v4496
        %v4593 = vunpack.c.l.b16 %v4497
        %v4594 = vpack.c.b16 %v4579, %v4578
        %v4595 = vpack.c.b16 %v4581, %v4580
        %v4596 = vpack.c.b16 %v4583, %v4582
        %v4597 = vpack.c.b16 %v4585, %v4584
        %v4598 = vpack.c.b16 %v4587, %v4586
        %v4599 = vpack.c.b16 %v4589, %v4588
        %v4600 = vpack.c.b16 %v4591, %v4590
        %v4601 = vpack.c.b16 %v4593, %v4592
        %4610 = vmatprep.subr.bf16.mxu0 0
        %4611 = vmatpush1.bf16.msra.mxu0 %v4594
        %4612 = vmatprep.subr.bf16.mxu0 0
        %4613 = vmatpush1.bf16.msra.mxu0 %v4595
        %4614 = vmatprep.subr.bf16.mxu0 0
        %4615 = vmatpush1.bf16.msra.mxu0 %v4596
        %4616 = vmatprep.subr.bf16.mxu0 0
        %4617 = vmatpush1.bf16.msra.mxu0 %v4597
        %4618 = vmatprep.subr.bf16.mxu0 0
        %4619 = vmatpush1.bf16.msra.mxu0 %v4598
        %4620 = vmatprep.subr.bf16.mxu0 0
        %4621 = vmatpush1.bf16.msra.mxu0 %v4599
        %4622 = vmatprep.subr.bf16.mxu0 0
        %4623 = vmatpush1.bf16.msra.mxu0 %v4600
        %4624 = vmatprep.subr.bf16.mxu0 0
        %4625 = vmatpush1.bf16.msra.mxu0 %v4601
        %4626 = vmatprep.subr.bf16.mxu0 0
        %4627 = vmatpush1.bf16.msra.mxu0 0
        %4628 = vmatprep.subr.bf16.mxu0 0
        %4629 = vmatpush1.bf16.msra.mxu0 0
        %4630 = vmatprep.subr.bf16.mxu0 0
        %4631 = vmatpush1.bf16.msra.mxu0 0
        %4632 = vmatprep.subr.bf16.mxu0 0
        %4633 = vmatpush1.bf16.msra.mxu0 0
        %4634 = vmatprep.subr.bf16.mxu0 0
        %4635 = vmatpush1.bf16.msra.mxu0 0
        %4636 = vmatprep.subr.bf16.mxu0 0
        %4637 = vmatpush1.bf16.msra.mxu0 0
        %4638 = vmatprep.subr.bf16.mxu0 0
        %4639 = vmatpush1.bf16.msra.mxu0 0
        %4640 = vmatprep.subr.bf16.mxu0 0
        %4641 = vmatpush1.bf16.msra.mxu0 0
        %4642 = vmatprep.mubr.bf16.mxu0 0
        %4643 = vmatmul.mubr.bf16.gmra.mrb[0].mxu0 %v4530
        %v4644 = vpop.f32.mrb[0].mxu0
        %v4645 = vadd.f32 0.0, %v4644
        %v4646 = vpop.f32.mrb[0].mxu0
        %v4647 = vpop.f32.mrb[0].mxu0
        %v4648 = vadd.f32 0.0, %v4647
        %v4649 = vpop.f32.mrb[0].mxu0
        %4650 = vmatprep.mubr.bf16.mxu0 0
        %4651 = vmatmul.mubr.bf16.gmra.mrb[0].mxu0 %v4531
        %v4652 = vpop.f32.mrb[0].mxu0
        %v4653 = vadd.f32 0.0, %v4652
        %v4654 = vpop.f32.mrb[0].mxu0
        %v4655 = vpop.f32.mrb[0].mxu0
        %v4656 = vadd.f32 0.0, %v4655
        %v4657 = vpop.f32.mrb[0].mxu0
        %4658 = vmatprep.mubr.bf16.mxu0 0
        %4659 = vmatmul.mubr.bf16.gmra.mrb[0].mxu0 %v4532
        %v4660 = vpop.f32.mrb[0].mxu0
        %v4661 = vadd.f32 0.0, %v4660
        %v4662 = vpop.f32.mrb[0].mxu0
        %v4663 = vpop.f32.mrb[0].mxu0
        %v4664 = vadd.f32 0.0, %v4663
        %v4665 = vpop.f32.mrb[0].mxu0
        %4666 = vmatprep.mubr.bf16.mxu0 0
        %4667 = vmatmul.mubr.bf16.gmra.mrb[0].mxu0 %v4533
        %v4668 = vpop.f32.mrb[0].mxu0
        %v4669 = vadd.f32 0.0, %v4668
        %v4670 = vpop.f32.mrb[0].mxu0
        %v4671 = vpop.f32.mrb[0].mxu0
        %v4672 = vadd.f32 0.0, %v4671
        %v4673 = vpop.f32.mrb[0].mxu0
        %4674 = vmatprep.mubr.bf16.mxu0 0
        %4675 = vmatmul.mubr.bf16.gmra.mrb[0].mxu0 %v4534
        %v4676 = vpop.f32.mrb[0].mxu0
        %v4677 = vadd.f32 0.0, %v4676
        %v4678 = vpop.f32.mrb[0].mxu0
        %v4679 = vpop.f32.mrb[0].mxu0
        %v4680 = vadd.f32 0.0, %v4679
        %v4681 = vpop.f32.mrb[0].mxu0
        %4682 = vmatprep.mubr.bf16.mxu0 0
        %4683 = vmatmul.mubr.bf16.gmra.mrb[0].mxu0 %v4535
        %v4684 = vpop.f32.mrb[0].mxu0
        %v4685 = vadd.f32 0.0, %v4684
        %v4686 = vpop.f32.mrb[0].mxu0
        %v4687 = vpop.f32.mrb[0].mxu0
        %v4688 = vadd.f32 0.0, %v4687
        %v4689 = vpop.f32.mrb[0].mxu0
        %4690 = vmatprep.mubr.bf16.mxu0 0
        %4691 = vmatmul.mubr.bf16.gmra.mrb[0].mxu0 %v4536
        %v4692 = vpop.f32.mrb[0].mxu0
        %v4693 = vadd.f32 0.0, %v4692
        %v4694 = vpop.f32.mrb[0].mxu0
        %v4695 = vpop.f32.mrb[0].mxu0
        %v4696 = vadd.f32 0.0, %v4695
        %v4697 = vpop.f32.mrb[0].mxu0
        %4698 = vmatprep.mubr.bf16.mxu0 0
        %4699 = vmatmul.mubr.bf16.gmra.mrb[0].mxu0 %v4537
        %v4700 = vpop.f32.mrb[0].mxu0
        %v4701 = vadd.f32 0.0, %v4700
        %v4702 = vpop.f32.mrb[0].mxu0
        %v4703 = vpop.f32.mrb[0].mxu0
        %v4704 = vadd.f32 0.0, %v4703
        %v4705 = vpop.f32.mrb[0].mxu0
        %4706 = vmatprep.mubr.bf16.mxu0 0
        %4707 = vmatmul.mubr.bf16.gmra.mrb[0].mxu0 %v4538
        %v4708 = vpop.f32.mrb[0].mxu0
        %v4709 = vadd.f32 0.0, %v4708
        %v4710 = vpop.f32.mrb[0].mxu0
        %v4711 = vpop.f32.mrb[0].mxu0
        %v4712 = vadd.f32 0.0, %v4711
        %v4713 = vpop.f32.mrb[0].mxu0
        %4714 = vmatprep.mubr.bf16.mxu0 0
        %4715 = vmatmul.mubr.bf16.gmra.mrb[0].mxu0 %v4539
        %v4716 = vpop.f32.mrb[0].mxu0
        %v4717 = vadd.f32 0.0, %v4716
        %v4718 = vpop.f32.mrb[0].mxu0
        %v4719 = vpop.f32.mrb[0].mxu0
        %v4720 = vadd.f32 0.0, %v4719
        %v4721 = vpop.f32.mrb[0].mxu0
        %4722 = vmatprep.mubr.bf16.mxu0 0
        %4723 = vmatmul.mubr.bf16.gmra.mrb[0].mxu0 %v4540
        %v4724 = vpop.f32.mrb[0].mxu0
        %v4725 = vadd.f32 0.0, %v4724
        %v4726 = vpop.f32.mrb[0].mxu0
        %v4727 = vpop.f32.mrb[0].mxu0
        %v4728 = vadd.f32 0.0, %v4727
        %v4729 = vpop.f32.mrb[0].mxu0
        %4730 = vmatprep.mubr.bf16.mxu0 0
        %4731 = vmatmul.mubr.bf16.gmra.mrb[0].mxu0 %v4541
        %v4732 = vpop.f32.mrb[0].mxu0
        %v4733 = vadd.f32 0.0, %v4732
        %v4734 = vpop.f32.mrb[0].mxu0
        %v4735 = vpop.f32.mrb[0].mxu0
        %v4736 = vadd.f32 0.0, %v4735
        %v4737 = vpop.f32.mrb[0].mxu0
        %4738 = vmatprep.mubr.bf16.mxu0 0
        %4739 = vmatmul.mubr.bf16.gmra.mrb[0].mxu0 %v4542
        %v4740 = vpop.f32.mrb[0].mxu0
        %v4741 = vadd.f32 0.0, %v4740
        %v4742 = vpop.f32.mrb[0].mxu0
        %v4743 = vpop.f32.mrb[0].mxu0
        %v4744 = vadd.f32 0.0, %v4743
        %v4745 = vpop.f32.mrb[0].mxu0
        %4746 = vmatprep.mubr.bf16.mxu0 0
        %4747 = vmatmul.mubr.bf16.gmra.mrb[0].mxu0 %v4543
        %v4748 = vpop.f32.mrb[0].mxu0
        %v4749 = vadd.f32 0.0, %v4748
        %v4750 = vpop.f32.mrb[0].mxu0
        %v4751 = vpop.f32.mrb[0].mxu0
        %v4752 = vadd.f32 0.0, %v4751
        %v4753 = vpop.f32.mrb[0].mxu0
        %4754 = vmatprep.mubr.bf16.mxu0 0
        %4755 = vmatmul.mubr.bf16.gmra.mrb[0].mxu0 %v4544
        %v4756 = vpop.f32.mrb[0].mxu0
        %v4757 = vadd.f32 0.0, %v4756
        %v4758 = vpop.f32.mrb[0].mxu0
        %v4759 = vpop.f32.mrb[0].mxu0
        %v4760 = vadd.f32 0.0, %v4759
        %v4761 = vpop.f32.mrb[0].mxu0
        %4762 = vmatprep.mubr.bf16.mxu0 0
        %4763 = vmatmul.mubr.bf16.gmra.mrb[0].mxu0 %v4545
        %v4764 = vpop.f32.mrb[0].mxu0
        %v4765 = vadd.f32 0.0, %v4764
        %v4766 = vpop.f32.mrb[0].mxu0
        %v4767 = vpop.f32.mrb[0].mxu0
        %v4768 = vadd.f32 0.0, %v4767
        %v4769 = vpop.f32.mrb[0].mxu0
        %4770 = vdwg.mxu0
        %v4771 = vld [vmem:[#allocation2] sm:$0xff]
        %v4772 = vld [vmem:[#allocation2 + $0x8] sm:$0xff]
        %v4773 = vld [vmem:[#allocation2 + $0x10] sm:$0xff]
        %v4774 = vld [vmem:[#allocation2 + $0x18] sm:$0xff]
        %v4775 = vld [vmem:[#allocation2 + $0x20] sm:$0xff]
        %v4776 = vld [vmem:[#allocation2 + $0x28] sm:$0xff]
        %v4777 = vld [vmem:[#allocation2 + $0x30] sm:$0xff]
        %v4778 = vld [vmem:[#allocation2 + $0x38] sm:$0xff]
        %v4779 = vld [vmem:[#allocation2 + $0x40] sm:$0xff]
        %v4780 = vld [vmem:[#allocation2 + $0x48] sm:$0xff]
        %v4781 = vld [vmem:[#allocation2 + $0x50] sm:$0xff]
        %v4782 = vld [vmem:[#allocation2 + $0x58] sm:$0xff]
        %v4783 = vld [vmem:[#allocation2 + $0x60] sm:$0xff]
        %v4784 = vld [vmem:[#allocation2 + $0x68] sm:$0xff]
        %v4785 = vld [vmem:[#allocation2 + $0x70] sm:$0xff]
        %v4786 = vld [vmem:[#allocation2 + $0x78] sm:$0xff]
        %v4787 = vld [vmem:[#allocation2 + $0x80] sm:$0xff]
        %v4788 = vld [vmem:[#allocation2 + $0x88] sm:$0xff]
        %v4789 = vld [vmem:[#allocation2 + $0x90] sm:$0xff]
        %v4790 = vld [vmem:[#allocation2 + $0x98] sm:$0xff]
        %v4791 = vld [vmem:[#allocation2 + $0xa0] sm:$0xff]
        %v4792 = vld [vmem:[#allocation2 + $0xa8] sm:$0xff]
        %v4793 = vld [vmem:[#allocation2 + $0xb0] sm:$0xff]
        %v4794 = vld [vmem:[#allocation2 + $0xb8] sm:$0xff]
        %v4795 = vld [vmem:[#allocation2 + $0xc0] sm:$0xff]
        %v4796 = vld [vmem:[#allocation2 + $0xc8] sm:$0xff]
        %v4797 = vld [vmem:[#allocation2 + $0xd0] sm:$0xff]
        %v4798 = vld [vmem:[#allocation2 + $0xd8] sm:$0xff]
        %v4799 = vld [vmem:[#allocation2 + $0xe0] sm:$0xff]
        %v4800 = vld [vmem:[#allocation2 + $0xe8] sm:$0xff]
        %v4801 = vld [vmem:[#allocation2 + $0xf0] sm:$0xff]
        %v4802 = vld [vmem:[#allocation2 + $0xf8] sm:$0xff]
        %v4803 = vadd.f32 %v4771, %v4645
        %v4804 = vadd.f32 %v4772, %v4648
        %v4805 = vadd.f32 %v4773, %v4653
        %v4806 = vadd.f32 %v4774, %v4656
        %v4807 = vadd.f32 %v4775, %v4661
        %v4808 = vadd.f32 %v4776, %v4664
        %v4809 = vadd.f32 %v4777, %v4669
        %v4810 = vadd.f32 %v4778, %v4672
        %v4811 = vadd.f32 %v4779, %v4677
        %v4812 = vadd.f32 %v4780, %v4680
        %v4813 = vadd.f32 %v4781, %v4685
        %v4814 = vadd.f32 %v4782, %v4688
        %v4815 = vadd.f32 %v4783, %v4693
        %v4816 = vadd.f32 %v4784, %v4696
        %v4817 = vadd.f32 %v4785, %v4701
        %v4818 = vadd.f32 %v4786, %v4704
        %v4819 = vadd.f32 %v4787, %v4709
        %v4820 = vadd.f32 %v4788, %v4712
        %v4821 = vadd.f32 %v4789, %v4717
        %v4822 = vadd.f32 %v4790, %v4720
        %v4823 = vadd.f32 %v4791, %v4725
        %v4824 = vadd.f32 %v4792, %v4728
        %v4825 = vadd.f32 %v4793, %v4733
        %v4826 = vadd.f32 %v4794, %v4736
        %v4827 = vadd.f32 %v4795, %v4741
        %v4828 = vadd.f32 %v4796, %v4744
        %v4829 = vadd.f32 %v4797, %v4749
        %v4830 = vadd.f32 %v4798, %v4752
        %v4831 = vadd.f32 %v4799, %v4757
        %v4832 = vadd.f32 %v4800, %v4760
        %v4833 = vadd.f32 %v4801, %v4765
        %v4834 = vadd.f32 %v4802, %v4768
        %4835 = vst [vmem:[#allocation2] sm:$0xff] %v4803
        %4836 = vst [vmem:[#allocation2 + $0x8] sm:$0xff] %v4804
        %4837 = vst [vmem:[#allocation2 + $0x10] sm:$0xff] %v4805
        %4838 = vst [vmem:[#allocation2 + $0x18] sm:$0xff] %v4806
        %4839 = vst [vmem:[#allocation2 + $0x20] sm:$0xff] %v4807
        %4840 = vst [vmem:[#allocation2 + $0x28] sm:$0xff] %v4808
        %4841 = vst [vmem:[#allocation2 + $0x30] sm:$0xff] %v4809
        %4842 = vst [vmem:[#allocation2 + $0x38] sm:$0xff] %v4810
        %4843 = vst [vmem:[#allocation2 + $0x40] sm:$0xff] %v4811
        %4844 = vst [vmem:[#allocation2 + $0x48] sm:$0xff] %v4812
        %4845 = vst [vmem:[#allocation2 + $0x50] sm:$0xff] %v4813
        %4846 = vst [vmem:[#allocation2 + $0x58] sm:$0xff] %v4814
        %4847 = vst [vmem:[#allocation2 + $0x60] sm:$0xff] %v4815
        %4848 = vst [vmem:[#allocation2 + $0x68] sm:$0xff] %v4816
        %4849 = vst [vmem:[#allocation2 + $0x70] sm:$0xff] %v4817
        %4850 = vst [vmem:[#allocation2 + $0x78] sm:$0xff] %v4818
        %4851 = vst [vmem:[#allocation2 + $0x80] sm:$0xff] %v4819
        %4852 = vst [vmem:[#allocation2 + $0x88] sm:$0xff] %v4820
        %4853 = vst [vmem:[#allocation2 + $0x90] sm:$0xff] %v4821
        %4854 = vst [vmem:[#allocation2 + $0x98] sm:$0xff] %v4822
        %4855 = vst [vmem:[#allocation2 + $0xa0] sm:$0xff] %v4823
        %4856 = vst [vmem:[#allocation2 + $0xa8] sm:$0xff] %v4824
        %4857 = vst [vmem:[#allocation2 + $0xb0] sm:$0xff] %v4825
        %4858 = vst [vmem:[#allocation2 + $0xb8] sm:$0xff] %v4826
        %4859 = vst [vmem:[#allocation2 + $0xc0] sm:$0xff] %v4827
        %4860 = vst [vmem:[#allocation2 + $0xc8] sm:$0xff] %v4828
        %4861 = vst [vmem:[#allocation2 + $0xd0] sm:$0xff] %v4829
        %4862 = vst [vmem:[#allocation2 + $0xd8] sm:$0xff] %v4830
        %4863 = vst [vmem:[#allocation2 + $0xe0] sm:$0xff] %v4831
        %4864 = vst [vmem:[#allocation2 + $0xe8] sm:$0xff] %v4832
        %4865 = vst [vmem:[#allocation2 + $0xf0] sm:$0xff] %v4833
        %4866 = vst [vmem:[#allocation2 + $0xf8] sm:$0xff] %v4834
        %s4867 = scalar_lea.vmem [#allocation3], 24
        %v4868 = vld [vmem:[%s4867] sm:$0xf]
        %v4869 = vld [vmem:[%s4867 + $0x4] sm:$0xf]
        %v4870 = vld [vmem:[%s4867 + $0xc] sm:$0xf]
        %v4871 = vld [vmem:[%s4867 + $0x10] sm:$0xf]
        %v4872 = vld [vmem:[%s4867 + $0x18] sm:$0xf]
        %v4873 = vld [vmem:[%s4867 + $0x1c] sm:$0xf]
        %v4874 = vld [vmem:[%s4867 + $0x24] sm:$0xf]
        %v4875 = vld [vmem:[%s4867 + $0x28] sm:$0xf]
        %v4876 = vld [vmem:[%s4867 + $0x30] sm:$0xf]
        %v4877 = vld [vmem:[%s4867 + $0x34] sm:$0xf]
        %v4878 = vld [vmem:[%s4867 + $0x3c] sm:$0xf]
        %v4879 = vld [vmem:[%s4867 + $0x40] sm:$0xf]
        %v4880 = vld [vmem:[%s4867 + $0x48] sm:$0xf]
        %v4881 = vld [vmem:[%s4867 + $0x4c] sm:$0xf]
        %v4882 = vld [vmem:[%s4867 + $0x54] sm:$0xf]
        %v4883 = vld [vmem:[%s4867 + $0x58] sm:$0xf]
        %v4884 = vld [vmem:[%s4867 + $0x60] sm:$0xf]
        %v4885 = vld [vmem:[%s4867 + $0x64] sm:$0xf]
        %v4886 = vld [vmem:[%s4867 + $0x6c] sm:$0xf]
        %v4887 = vld [vmem:[%s4867 + $0x70] sm:$0xf]
        %v4888 = vld [vmem:[%s4867 + $0x78] sm:$0xf]
        %v4889 = vld [vmem:[%s4867 + $0x7c] sm:$0xf]
        %v4890 = vld [vmem:[%s4867 + $0x84] sm:$0xf]
        %v4891 = vld [vmem:[%s4867 + $0x88] sm:$0xf]
        %v4892 = vld [vmem:[%s4867 + $0x90] sm:$0xf]
        %v4893 = vld [vmem:[%s4867 + $0x94] sm:$0xf]
        %v4894 = vld [vmem:[%s4867 + $0x9c] sm:$0xf]
        %v4895 = vld [vmem:[%s4867 + $0xa0] sm:$0xf]
        %v4896 = vld [vmem:[%s4867 + $0xa8] sm:$0xf]
        %v4897 = vld [vmem:[%s4867 + $0xac] sm:$0xf]
        %v4898 = vld [vmem:[%s4867 + $0xb4] sm:$0xf]
        %v4899 = vld [vmem:[%s4867 + $0xb8] sm:$0xf]
        %s4900 = scalar_lea.vmem %s3, 384
        %v4901 = vld [vmem:[%s4900] sm:$0xf]
        %v4902 = vld [vmem:[%s4900 + $0x4] sm:$0xf]
        %v4903 = vld [vmem:[%s4900 + $0x8] sm:$0xf]
        %v4904 = vld [vmem:[%s4900 + $0xc] sm:$0xf]
        %v4905 = vld [vmem:[%s4900 + $0x10] sm:$0xf]
        %v4906 = vld [vmem:[%s4900 + $0x14] sm:$0xf]
        %v4907 = vld [vmem:[%s4900 + $0x18] sm:$0xf]
        %v4908 = vld [vmem:[%s4900 + $0x1c] sm:$0xf]
        %v4909 = vld [vmem:[%s4900 + $0x20] sm:$0xf]
        %v4910 = vld [vmem:[%s4900 + $0x24] sm:$0xf]
        %v4911 = vld [vmem:[%s4900 + $0x28] sm:$0xf]
        %v4912 = vld [vmem:[%s4900 + $0x2c] sm:$0xf]
        %v4913 = vld [vmem:[%s4900 + $0x30] sm:$0xf]
        %v4914 = vld [vmem:[%s4900 + $0x34] sm:$0xf]
        %v4915 = vld [vmem:[%s4900 + $0x38] sm:$0xf]
        %v4916 = vld [vmem:[%s4900 + $0x3c] sm:$0xf]
        %v4949 = vunpack.c.l.b16 %v4868
        %v4950 = vunpack.c.l.b16 %v4869
        %v4951 = vunpack.c.l.b16 %v4870
        %v4952 = vunpack.c.l.b16 %v4871
        %v4953 = vunpack.c.l.b16 %v4872
        %v4954 = vunpack.c.l.b16 %v4873
        %v4955 = vunpack.c.l.b16 %v4874
        %v4956 = vunpack.c.l.b16 %v4875
        %v4957 = vunpack.c.l.b16 %v4876
        %v4958 = vunpack.c.l.b16 %v4877
        %v4959 = vunpack.c.l.b16 %v4878
        %v4960 = vunpack.c.l.b16 %v4879
        %v4961 = vunpack.c.l.b16 %v4880
        %v4962 = vunpack.c.l.b16 %v4881
        %v4963 = vunpack.c.l.b16 %v4882
        %v4964 = vunpack.c.l.b16 %v4883
        %v4965 = vunpack.c.l.b16 %v4884
        %v4966 = vunpack.c.l.b16 %v4885
        %v4967 = vunpack.c.l.b16 %v4886
        %v4968 = vunpack.c.l.b16 %v4887
        %v4969 = vunpack.c.l.b16 %v4888
        %v4970 = vunpack.c.l.b16 %v4889
        %v4971 = vunpack.c.l.b16 %v4890
        %v4972 = vunpack.c.l.b16 %v4891
        %v4973 = vunpack.c.l.b16 %v4892
        %v4974 = vunpack.c.l.b16 %v4893
        %v4975 = vunpack.c.l.b16 %v4894
        %v4976 = vunpack.c.l.b16 %v4895
        %v4977 = vunpack.c.l.b16 %v4896
        %v4978 = vunpack.c.l.b16 %v4897
        %v4979 = vunpack.c.l.b16 %v4898
        %v4980 = vunpack.c.l.b16 %v4899
        %v4981 = vpack.c.b16 %v4950, %v4949
        %v4982 = vpack.c.b16 %v4952, %v4951
        %v4983 = vpack.c.b16 %v4954, %v4953
        %v4984 = vpack.c.b16 %v4956, %v4955
        %v4985 = vpack.c.b16 %v4958, %v4957
        %v4986 = vpack.c.b16 %v4960, %v4959
        %v4987 = vpack.c.b16 %v4962, %v4961
        %v4988 = vpack.c.b16 %v4964, %v4963
        %v4989 = vpack.c.b16 %v4966, %v4965
        %v4990 = vpack.c.b16 %v4968, %v4967
        %v4991 = vpack.c.b16 %v4970, %v4969
        %v4992 = vpack.c.b16 %v4972, %v4971
        %v4993 = vpack.c.b16 %v4974, %v4973
        %v4994 = vpack.c.b16 %v4976, %v4975
        %v4995 = vpack.c.b16 %v4978, %v4977
        %v4996 = vpack.c.b16 %v4980, %v4979
        %v5029 = vunpack.c.l.b16 %v4901
        %v5030 = vunpack.c.l.b16 %v4902
        %v5031 = vunpack.c.l.b16 %v4903
        %v5032 = vunpack.c.l.b16 %v4904
        %v5033 = vunpack.c.l.b16 %v4905
        %v5034 = vunpack.c.l.b16 %v4906
        %v5035 = vunpack.c.l.b16 %v4907
        %v5036 = vunpack.c.l.b16 %v4908
        %v5037 = vunpack.c.l.b16 %v4909
        %v5038 = vunpack.c.l.b16 %v4910
        %v5039 = vunpack.c.l.b16 %v4911
        %v5040 = vunpack.c.l.b16 %v4912
        %v5041 = vunpack.c.l.b16 %v4913
        %v5042 = vunpack.c.l.b16 %v4914
        %v5043 = vunpack.c.l.b16 %v4915
        %v5044 = vunpack.c.l.b16 %v4916
        %v5045 = vpack.c.b16 %v5030, %v5029
        %v5046 = vpack.c.b16 %v5032, %v5031
        %v5047 = vpack.c.b16 %v5034, %v5033
        %v5048 = vpack.c.b16 %v5036, %v5035
        %v5049 = vpack.c.b16 %v5038, %v5037
        %v5050 = vpack.c.b16 %v5040, %v5039
        %v5051 = vpack.c.b16 %v5042, %v5041
        %v5052 = vpack.c.b16 %v5044, %v5043
        %5061 = vmatprep.subr.bf16.mxu0 0
        %5062 = vmatpush1.bf16.msra.mxu0 %v5045
        %5063 = vmatprep.subr.bf16.mxu0 0
        %5064 = vmatpush1.bf16.msra.mxu0 %v5046
        %5065 = vmatprep.subr.bf16.mxu0 0
        %5066 = vmatpush1.bf16.msra.mxu0 %v5047
        %5067 = vmatprep.subr.bf16.mxu0 0
        %5068 = vmatpush1.bf16.msra.mxu0 %v5048
        %5069 = vmatprep.subr.bf16.mxu0 0
        %5070 = vmatpush1.bf16.msra.mxu0 %v5049
        %5071 = vmatprep.subr.bf16.mxu0 0
        %5072 = vmatpush1.bf16.msra.mxu0 %v5050
        %5073 = vmatprep.subr.bf16.mxu0 0
        %5074 = vmatpush1.bf16.msra.mxu0 %v5051
        %5075 = vmatprep.subr.bf16.mxu0 0
        %5076 = vmatpush1.bf16.msra.mxu0 %v5052
        %5077 = vmatprep.subr.bf16.mxu0 0
        %5078 = vmatpush1.bf16.msra.mxu0 0
        %5079 = vmatprep.subr.bf16.mxu0 0
        %5080 = vmatpush1.bf16.msra.mxu0 0
        %5081 = vmatprep.subr.bf16.mxu0 0
        %5082 = vmatpush1.bf16.msra.mxu0 0
        %5083 = vmatprep.subr.bf16.mxu0 0
        %5084 = vmatpush1.bf16.msra.mxu0 0
        %5085 = vmatprep.subr.bf16.mxu0 0
        %5086 = vmatpush1.bf16.msra.mxu0 0
        %5087 = vmatprep.subr.bf16.mxu0 0
        %5088 = vmatpush1.bf16.msra.mxu0 0
        %5089 = vmatprep.subr.bf16.mxu0 0
        %5090 = vmatpush1.bf16.msra.mxu0 0
        %5091 = vmatprep.subr.bf16.mxu0 0
        %5092 = vmatpush1.bf16.msra.mxu0 0
        %5093 = vmatprep.mubr.bf16.mxu0 0
        %5094 = vmatmul.mubr.bf16.gmra.mrb[0].mxu0 %v4981
        %v5095 = vpop.f32.mrb[0].mxu0
        %v5096 = vadd.f32 0.0, %v5095
        %v5097 = vpop.f32.mrb[0].mxu0
        %v5098 = vpop.f32.mrb[0].mxu0
        %v5099 = vadd.f32 0.0, %v5098
        %v5100 = vpop.f32.mrb[0].mxu0
        %5101 = vmatprep.mubr.bf16.mxu0 0
        %5102 = vmatmul.mubr.bf16.gmra.mrb[0].mxu0 %v4982
        %v5103 = vpop.f32.mrb[0].mxu0
        %v5104 = vadd.f32 0.0, %v5103
        %v5105 = vpop.f32.mrb[0].mxu0
        %v5106 = vpop.f32.mrb[0].mxu0
        %v5107 = vadd.f32 0.0, %v5106
        %v5108 = vpop.f32.mrb[0].mxu0
        %5109 = vmatprep.mubr.bf16.mxu0 0
        %5110 = vmatmul.mubr.bf16.gmra.mrb[0].mxu0 %v4983
        %v5111 = vpop.f32.mrb[0].mxu0
        %v5112 = vadd.f32 0.0, %v5111
        %v5113 = vpop.f32.mrb[0].mxu0
        %v5114 = vpop.f32.mrb[0].mxu0
        %v5115 = vadd.f32 0.0, %v5114
        %v5116 = vpop.f32.mrb[0].mxu0
        %5117 = vmatprep.mubr.bf16.mxu0 0
        %5118 = vmatmul.mubr.bf16.gmra.mrb[0].mxu0 %v4984
        %v5119 = vpop.f32.mrb[0].mxu0
        %v5120 = vadd.f32 0.0, %v5119
        %v5121 = vpop.f32.mrb[0].mxu0
        %v5122 = vpop.f32.mrb[0].mxu0
        %v5123 = vadd.f32 0.0, %v5122
        %v5124 = vpop.f32.mrb[0].mxu0
        %5125 = vmatprep.mubr.bf16.mxu0 0
        %5126 = vmatmul.mubr.bf16.gmra.mrb[0].mxu0 %v4985
        %v5127 = vpop.f32.mrb[0].mxu0
        %v5128 = vadd.f32 0.0, %v5127
        %v5129 = vpop.f32.mrb[0].mxu0
        %v5130 = vpop.f32.mrb[0].mxu0
        %v5131 = vadd.f32 0.0, %v5130
        %v5132 = vpop.f32.mrb[0].mxu0
        %5133 = vmatprep.mubr.bf16.mxu0 0
        %5134 = vmatmul.mubr.bf16.gmra.mrb[0].mxu0 %v4986
        %v5135 = vpop.f32.mrb[0].mxu0
        %v5136 = vadd.f32 0.0, %v5135
        %v5137 = vpop.f32.mrb[0].mxu0
        %v5138 = vpop.f32.mrb[0].mxu0
        %v5139 = vadd.f32 0.0, %v5138
        %v5140 = vpop.f32.mrb[0].mxu0
        %5141 = vmatprep.mubr.bf16.mxu0 0
        %5142 = vmatmul.mubr.bf16.gmra.mrb[0].mxu0 %v4987
        %v5143 = vpop.f32.mrb[0].mxu0
        %v5144 = vadd.f32 0.0, %v5143
        %v5145 = vpop.f32.mrb[0].mxu0
        %v5146 = vpop.f32.mrb[0].mxu0
        %v5147 = vadd.f32 0.0, %v5146
        %v5148 = vpop.f32.mrb[0].mxu0
        %5149 = vmatprep.mubr.bf16.mxu0 0
        %5150 = vmatmul.mubr.bf16.gmra.mrb[0].mxu0 %v4988
        %v5151 = vpop.f32.mrb[0].mxu0
        %v5152 = vadd.f32 0.0, %v5151
        %v5153 = vpop.f32.mrb[0].mxu0
        %v5154 = vpop.f32.mrb[0].mxu0
        %v5155 = vadd.f32 0.0, %v5154
        %v5156 = vpop.f32.mrb[0].mxu0
        %5157 = vmatprep.mubr.bf16.mxu0 0
        %5158 = vmatmul.mubr.bf16.gmra.mrb[0].mxu0 %v4989
        %v5159 = vpop.f32.mrb[0].mxu0
        %v5160 = vadd.f32 0.0, %v5159
        %v5161 = vpop.f32.mrb[0].mxu0
        %v5162 = vpop.f32.mrb[0].mxu0
        %v5163 = vadd.f32 0.0, %v5162
        %v5164 = vpop.f32.mrb[0].mxu0
        %5165 = vmatprep.mubr.bf16.mxu0 0
        %5166 = vmatmul.mubr.bf16.gmra.mrb[0].mxu0 %v4990
        %v5167 = vpop.f32.mrb[0].mxu0
        %v5168 = vadd.f32 0.0, %v5167
        %v5169 = vpop.f32.mrb[0].mxu0
        %v5170 = vpop.f32.mrb[0].mxu0
        %v5171 = vadd.f32 0.0, %v5170
        %v5172 = vpop.f32.mrb[0].mxu0
        %5173 = vmatprep.mubr.bf16.mxu0 0
        %5174 = vmatmul.mubr.bf16.gmra.mrb[0].mxu0 %v4991
        %v5175 = vpop.f32.mrb[0].mxu0
        %v5176 = vadd.f32 0.0, %v5175
        %v5177 = vpop.f32.mrb[0].mxu0
        %v5178 = vpop.f32.mrb[0].mxu0
        %v5179 = vadd.f32 0.0, %v5178
        %v5180 = vpop.f32.mrb[0].mxu0
        %5181 = vmatprep.mubr.bf16.mxu0 0
        %5182 = vmatmul.mubr.bf16.gmra.mrb[0].mxu0 %v4992
        %v5183 = vpop.f32.mrb[0].mxu0
        %v5184 = vadd.f32 0.0, %v5183
        %v5185 = vpop.f32.mrb[0].mxu0
        %v5186 = vpop.f32.mrb[0].mxu0
        %v5187 = vadd.f32 0.0, %v5186
        %v5188 = vpop.f32.mrb[0].mxu0
        %5189 = vmatprep.mubr.bf16.mxu0 0
        %5190 = vmatmul.mubr.bf16.gmra.mrb[0].mxu0 %v4993
        %v5191 = vpop.f32.mrb[0].mxu0
        %v5192 = vadd.f32 0.0, %v5191
        %v5193 = vpop.f32.mrb[0].mxu0
        %v5194 = vpop.f32.mrb[0].mxu0
        %v5195 = vadd.f32 0.0, %v5194
        %v5196 = vpop.f32.mrb[0].mxu0
        %5197 = vmatprep.mubr.bf16.mxu0 0
        %5198 = vmatmul.mubr.bf16.gmra.mrb[0].mxu0 %v4994
        %v5199 = vpop.f32.mrb[0].mxu0
        %v5200 = vadd.f32 0.0, %v5199
        %v5201 = vpop.f32.mrb[0].mxu0
        %v5202 = vpop.f32.mrb[0].mxu0
        %v5203 = vadd.f32 0.0, %v5202
        %v5204 = vpop.f32.mrb[0].mxu0
        %5205 = vmatprep.mubr.bf16.mxu0 0
        %5206 = vmatmul.mubr.bf16.gmra.mrb[0].mxu0 %v4995
        %v5207 = vpop.f32.mrb[0].mxu0
        %v5208 = vadd.f32 0.0, %v5207
        %v5209 = vpop.f32.mrb[0].mxu0
        %v5210 = vpop.f32.mrb[0].mxu0
        %v5211 = vadd.f32 0.0, %v5210
        %v5212 = vpop.f32.mrb[0].mxu0
        %5213 = vmatprep.mubr.bf16.mxu0 0
        %5214 = vmatmul.mubr.bf16.gmra.mrb[0].mxu0 %v4996
        %v5215 = vpop.f32.mrb[0].mxu0
        %v5216 = vadd.f32 0.0, %v5215
        %v5217 = vpop.f32.mrb[0].mxu0
        %v5218 = vpop.f32.mrb[0].mxu0
        %v5219 = vadd.f32 0.0, %v5218
        %v5220 = vpop.f32.mrb[0].mxu0
        %5221 = vdwg.mxu0
        %v5222 = vld [vmem:[#allocation2] sm:$0xff]
        %v5223 = vld [vmem:[#allocation2 + $0x8] sm:$0xff]
        %v5224 = vld [vmem:[#allocation2 + $0x10] sm:$0xff]
        %v5225 = vld [vmem:[#allocation2 + $0x18] sm:$0xff]
        %v5226 = vld [vmem:[#allocation2 + $0x20] sm:$0xff]
        %v5227 = vld [vmem:[#allocation2 + $0x28] sm:$0xff]
        %v5228 = vld [vmem:[#allocation2 + $0x30] sm:$0xff]
        %v5229 = vld [vmem:[#allocation2 + $0x38] sm:$0xff]
        %v5230 = vld [vmem:[#allocation2 + $0x40] sm:$0xff]
        %v5231 = vld [vmem:[#allocation2 + $0x48] sm:$0xff]
        %v5232 = vld [vmem:[#allocation2 + $0x50] sm:$0xff]
        %v5233 = vld [vmem:[#allocation2 + $0x58] sm:$0xff]
        %v5234 = vld [vmem:[#allocation2 + $0x60] sm:$0xff]
        %v5235 = vld [vmem:[#allocation2 + $0x68] sm:$0xff]
        %v5236 = vld [vmem:[#allocation2 + $0x70] sm:$0xff]
        %v5237 = vld [vmem:[#allocation2 + $0x78] sm:$0xff]
        %v5238 = vld [vmem:[#allocation2 + $0x80] sm:$0xff]
        %v5239 = vld [vmem:[#allocation2 + $0x88] sm:$0xff]
        %v5240 = vld [vmem:[#allocation2 + $0x90] sm:$0xff]
        %v5241 = vld [vmem:[#allocation2 + $0x98] sm:$0xff]
        %v5242 = vld [vmem:[#allocation2 + $0xa0] sm:$0xff]
        %v5243 = vld [vmem:[#allocation2 + $0xa8] sm:$0xff]
        %v5244 = vld [vmem:[#allocation2 + $0xb0] sm:$0xff]
        %v5245 = vld [vmem:[#allocation2 + $0xb8] sm:$0xff]
        %v5246 = vld [vmem:[#allocation2 + $0xc0] sm:$0xff]
        %v5247 = vld [vmem:[#allocation2 + $0xc8] sm:$0xff]
        %v5248 = vld [vmem:[#allocation2 + $0xd0] sm:$0xff]
        %v5249 = vld [vmem:[#allocation2 + $0xd8] sm:$0xff]
        %v5250 = vld [vmem:[#allocation2 + $0xe0] sm:$0xff]
        %v5251 = vld [vmem:[#allocation2 + $0xe8] sm:$0xff]
        %v5252 = vld [vmem:[#allocation2 + $0xf0] sm:$0xff]
        %v5253 = vld [vmem:[#allocation2 + $0xf8] sm:$0xff]
        %v5254 = vadd.f32 %v5222, %v5096
        %v5255 = vadd.f32 %v5223, %v5099
        %v5256 = vadd.f32 %v5224, %v5104
        %v5257 = vadd.f32 %v5225, %v5107
        %v5258 = vadd.f32 %v5226, %v5112
        %v5259 = vadd.f32 %v5227, %v5115
        %v5260 = vadd.f32 %v5228, %v5120
        %v5261 = vadd.f32 %v5229, %v5123
        %v5262 = vadd.f32 %v5230, %v5128
        %v5263 = vadd.f32 %v5231, %v5131
        %v5264 = vadd.f32 %v5232, %v5136
        %v5265 = vadd.f32 %v5233, %v5139
        %v5266 = vadd.f32 %v5234, %v5144
        %v5267 = vadd.f32 %v5235, %v5147
        %v5268 = vadd.f32 %v5236, %v5152
        %v5269 = vadd.f32 %v5237, %v5155
        %v5270 = vadd.f32 %v5238, %v5160
        %v5271 = vadd.f32 %v5239, %v5163
        %v5272 = vadd.f32 %v5240, %v5168
        %v5273 = vadd.f32 %v5241, %v5171
        %v5274 = vadd.f32 %v5242, %v5176
        %v5275 = vadd.f32 %v5243, %v5179
        %v5276 = vadd.f32 %v5244, %v5184
        %v5277 = vadd.f32 %v5245, %v5187
        %v5278 = vadd.f32 %v5246, %v5192
        %v5279 = vadd.f32 %v5247, %v5195
        %v5280 = vadd.f32 %v5248, %v5200
        %v5281 = vadd.f32 %v5249, %v5203
        %v5282 = vadd.f32 %v5250, %v5208
        %v5283 = vadd.f32 %v5251, %v5211
        %v5284 = vadd.f32 %v5252, %v5216
        %v5285 = vadd.f32 %v5253, %v5219
        %5286 = vst [vmem:[#allocation2] sm:$0xff] %v5254
        %5287 = vst [vmem:[#allocation2 + $0x8] sm:$0xff] %v5255
        %5288 = vst [vmem:[#allocation2 + $0x10] sm:$0xff] %v5256
        %5289 = vst [vmem:[#allocation2 + $0x18] sm:$0xff] %v5257
        %5290 = vst [vmem:[#allocation2 + $0x20] sm:$0xff] %v5258
        %5291 = vst [vmem:[#allocation2 + $0x28] sm:$0xff] %v5259
        %5292 = vst [vmem:[#allocation2 + $0x30] sm:$0xff] %v5260
        %5293 = vst [vmem:[#allocation2 + $0x38] sm:$0xff] %v5261
        %5294 = vst [vmem:[#allocation2 + $0x40] sm:$0xff] %v5262
        %5295 = vst [vmem:[#allocation2 + $0x48] sm:$0xff] %v5263
        %5296 = vst [vmem:[#allocation2 + $0x50] sm:$0xff] %v5264
        %5297 = vst [vmem:[#allocation2 + $0x58] sm:$0xff] %v5265
        %5298 = vst [vmem:[#allocation2 + $0x60] sm:$0xff] %v5266
        %5299 = vst [vmem:[#allocation2 + $0x68] sm:$0xff] %v5267
        %5300 = vst [vmem:[#allocation2 + $0x70] sm:$0xff] %v5268
        %5301 = vst [vmem:[#allocation2 + $0x78] sm:$0xff] %v5269
        %5302 = vst [vmem:[#allocation2 + $0x80] sm:$0xff] %v5270
        %5303 = vst [vmem:[#allocation2 + $0x88] sm:$0xff] %v5271
        %5304 = vst [vmem:[#allocation2 + $0x90] sm:$0xff] %v5272
        %5305 = vst [vmem:[#allocation2 + $0x98] sm:$0xff] %v5273
        %5306 = vst [vmem:[#allocation2 + $0xa0] sm:$0xff] %v5274
        %5307 = vst [vmem:[#allocation2 + $0xa8] sm:$0xff] %v5275
        %5308 = vst [vmem:[#allocation2 + $0xb0] sm:$0xff] %v5276
        %5309 = vst [vmem:[#allocation2 + $0xb8] sm:$0xff] %v5277
        %5310 = vst [vmem:[#allocation2 + $0xc0] sm:$0xff] %v5278
        %5311 = vst [vmem:[#allocation2 + $0xc8] sm:$0xff] %v5279
        %5312 = vst [vmem:[#allocation2 + $0xd0] sm:$0xff] %v5280
        %5313 = vst [vmem:[#allocation2 + $0xd8] sm:$0xff] %v5281
        %5314 = vst [vmem:[#allocation2 + $0xe0] sm:$0xff] %v5282
        %5315 = vst [vmem:[#allocation2 + $0xe8] sm:$0xff] %v5283
        %5316 = vst [vmem:[#allocation2 + $0xf0] sm:$0xff] %v5284
        %5317 = vst [vmem:[#allocation2 + $0xf8] sm:$0xff] %v5285
        %v5318 = vld [vmem:[%s4867] sm:$0xf]
        %v5319 = vld [vmem:[%s4867 + $0x4] sm:$0xf]
        %v5320 = vld [vmem:[%s4867 + $0x8] sm:$0x1]
        %v5321 = vld [vmem:[%s4867 + $0xc] sm:$0xf]
        %v5322 = vld [vmem:[%s4867 + $0x10] sm:$0xf]
        %v5323 = vld [vmem:[%s4867 + $0x14] sm:$0x1]
        %v5324 = vld [vmem:[%s4867 + $0x18] sm:$0xf]
        %v5325 = vld [vmem:[%s4867 + $0x1c] sm:$0xf]
        %v5326 = vld [vmem:[%s4867 + $0x20] sm:$0x1]
        %v5327 = vld [vmem:[%s4867 + $0x24] sm:$0xf]
        %v5328 = vld [vmem:[%s4867 + $0x28] sm:$0xf]
        %v5329 = vld [vmem:[%s4867 + $0x2c] sm:$0x1]
        %v5330 = vld [vmem:[%s4867 + $0x30] sm:$0xf]
        %v5331 = vld [vmem:[%s4867 + $0x34] sm:$0xf]
        %v5332 = vld [vmem:[%s4867 + $0x38] sm:$0x1]
        %v5333 = vld [vmem:[%s4867 + $0x3c] sm:$0xf]
        %v5334 = vld [vmem:[%s4867 + $0x40] sm:$0xf]
        %v5335 = vld [vmem:[%s4867 + $0x44] sm:$0x1]
        %v5336 = vld [vmem:[%s4867 + $0x48] sm:$0xf]
        %v5337 = vld [vmem:[%s4867 + $0x4c] sm:$0xf]
        %v5338 = vld [vmem:[%s4867 + $0x50] sm:$0x1]
        %v5339 = vld [vmem:[%s4867 + $0x54] sm:$0xf]
        %v5340 = vld [vmem:[%s4867 + $0x58] sm:$0xf]
        %v5341 = vld [vmem:[%s4867 + $0x5c] sm:$0x1]
        %v5342 = vld [vmem:[%s4867 + $0x60] sm:$0xf]
        %v5343 = vld [vmem:[%s4867 + $0x64] sm:$0xf]
        %v5344 = vld [vmem:[%s4867 + $0x68] sm:$0x1]
        %v5345 = vld [vmem:[%s4867 + $0x6c] sm:$0xf]
        %v5346 = vld [vmem:[%s4867 + $0x70] sm:$0xf]
        %v5347 = vld [vmem:[%s4867 + $0x74] sm:$0x1]
        %v5348 = vld [vmem:[%s4867 + $0x78] sm:$0xf]
        %v5349 = vld [vmem:[%s4867 + $0x7c] sm:$0xf]
        %v5350 = vld [vmem:[%s4867 + $0x80] sm:$0x1]
        %v5351 = vld [vmem:[%s4867 + $0x84] sm:$0xf]
        %v5352 = vld [vmem:[%s4867 + $0x88] sm:$0xf]
        %v5353 = vld [vmem:[%s4867 + $0x8c] sm:$0x1]
        %v5354 = vld [vmem:[%s4867 + $0x90] sm:$0xf]
        %v5355 = vld [vmem:[%s4867 + $0x94] sm:$0xf]
        %v5356 = vld [vmem:[%s4867 + $0x98] sm:$0x1]
        %v5357 = vld [vmem:[%s4867 + $0x9c] sm:$0xf]
        %v5358 = vld [vmem:[%s4867 + $0xa0] sm:$0xf]
        %v5359 = vld [vmem:[%s4867 + $0xa4] sm:$0x1]
        %v5360 = vld [vmem:[%s4867 + $0xa8] sm:$0xf]
        %v5361 = vld [vmem:[%s4867 + $0xac] sm:$0xf]
        %v5362 = vld [vmem:[%s4867 + $0xb0] sm:$0x1]
        %v5363 = vld [vmem:[%s4867 + $0xb4] sm:$0xf]
        %v5364 = vld [vmem:[%s4867 + $0xb8] sm:$0xf]
        %v5365 = vld [vmem:[%s4867 + $0xbc] sm:$0x1]
        %v5367 = vshrl.u32 %v5318, 16
        %v5369 = vrot.slane %v5367, 4
        %v5370 = vshll.u32 %v5318, 16
        %v5372 = vrot.slane %v5370, 5
        %v5373 = vor.u32 %v5369, %v5372
        %v5374 = vrot.slane %v5373, 4
        %v5376 = vshll.u32 %v5319, 16
        %v5378 = vrot.slane %v5376, 5
        %v5379 = vsel %vm1637, %v5374, %v5378
        %v5380 = vshrl.u32 %v5319, 16
        %v5382 = vrot.slane %v5380, 4
        %v5383 = vor.u32 %v5382, %v5378
        %v5384 = vrot.slane %v5383, 4
        %v5386 = vshll.u32 %v5320, 16
        %v5388 = vrot.slane %v5386, 5
        %v5389 = vsel %vm1637, %v5384, %v5388
        %v5391 = vshrl.u32 %v5321, 16
        %v5393 = vrot.slane %v5391, 4
        %v5394 = vshll.u32 %v5321, 16
        %v5396 = vrot.slane %v5394, 5
        %v5397 = vor.u32 %v5393, %v5396
        %v5398 = vrot.slane %v5397, 4
        %v5400 = vshll.u32 %v5322, 16
        %v5402 = vrot.slane %v5400, 5
        %v5403 = vsel %vm1637, %v5398, %v5402
        %v5404 = vshrl.u32 %v5322, 16
        %v5406 = vrot.slane %v5404, 4
        %v5407 = vor.u32 %v5406, %v5402
        %v5408 = vrot.slane %v5407, 4
        %v5410 = vshll.u32 %v5323, 16
        %v5412 = vrot.slane %v5410, 5
        %v5413 = vsel %vm1637, %v5408, %v5412
        %v5415 = vshrl.u32 %v5324, 16
        %v5417 = vrot.slane %v5415, 4
        %v5418 = vshll.u32 %v5324, 16
        %v5420 = vrot.slane %v5418, 5
        %v5421 = vor.u32 %v5417, %v5420
        %v5422 = vrot.slane %v5421, 4
        %v5424 = vshll.u32 %v5325, 16
        %v5426 = vrot.slane %v5424, 5
        %v5427 = vsel %vm1637, %v5422, %v5426
        %v5428 = vshrl.u32 %v5325, 16
        %v5430 = vrot.slane %v5428, 4
        %v5431 = vor.u32 %v5430, %v5426
        %v5432 = vrot.slane %v5431, 4
        %v5434 = vshll.u32 %v5326, 16
        %v5436 = vrot.slane %v5434, 5
        %v5437 = vsel %vm1637, %v5432, %v5436
        %v5439 = vshrl.u32 %v5327, 16
        %v5441 = vrot.slane %v5439, 4
        %v5442 = vshll.u32 %v5327, 16
        %v5444 = vrot.slane %v5442, 5
        %v5445 = vor.u32 %v5441, %v5444
        %v5446 = vrot.slane %v5445, 4
        %v5448 = vshll.u32 %v5328, 16
        %v5450 = vrot.slane %v5448, 5
        %v5451 = vsel %vm1637, %v5446, %v5450
        %v5452 = vshrl.u32 %v5328, 16
        %v5454 = vrot.slane %v5452, 4
        %v5455 = vor.u32 %v5454, %v5450
        %v5456 = vrot.slane %v5455, 4
        %v5458 = vshll.u32 %v5329, 16
        %v5460 = vrot.slane %v5458, 5
        %v5461 = vsel %vm1637, %v5456, %v5460
        %v5463 = vshrl.u32 %v5330, 16
        %v5465 = vrot.slane %v5463, 4
        %v5466 = vshll.u32 %v5330, 16
        %v5468 = vrot.slane %v5466, 5
        %v5469 = vor.u32 %v5465, %v5468
        %v5470 = vrot.slane %v5469, 4
        %v5472 = vshll.u32 %v5331, 16
        %v5474 = vrot.slane %v5472, 5
        %v5475 = vsel %vm1637, %v5470, %v5474
        %v5476 = vshrl.u32 %v5331, 16
        %v5478 = vrot.slane %v5476, 4
        %v5479 = vor.u32 %v5478, %v5474
        %v5480 = vrot.slane %v5479, 4
        %v5482 = vshll.u32 %v5332, 16
        %v5484 = vrot.slane %v5482, 5
        %v5485 = vsel %vm1637, %v5480, %v5484
        %v5487 = vshrl.u32 %v5333, 16
        %v5489 = vrot.slane %v5487, 4
        %v5490 = vshll.u32 %v5333, 16
        %v5492 = vrot.slane %v5490, 5
        %v5493 = vor.u32 %v5489, %v5492
        %v5494 = vrot.slane %v5493, 4
        %v5496 = vshll.u32 %v5334, 16
        %v5498 = vrot.slane %v5496, 5
        %v5499 = vsel %vm1637, %v5494, %v5498
        %v5500 = vshrl.u32 %v5334, 16
        %v5502 = vrot.slane %v5500, 4
        %v5503 = vor.u32 %v5502, %v5498
        %v5504 = vrot.slane %v5503, 4
        %v5506 = vshll.u32 %v5335, 16
        %v5508 = vrot.slane %v5506, 5
        %v5509 = vsel %vm1637, %v5504, %v5508
        %v5511 = vshrl.u32 %v5336, 16
        %v5513 = vrot.slane %v5511, 4
        %v5514 = vshll.u32 %v5336, 16
        %v5516 = vrot.slane %v5514, 5
        %v5517 = vor.u32 %v5513, %v5516
        %v5518 = vrot.slane %v5517, 4
        %v5520 = vshll.u32 %v5337, 16
        %v5522 = vrot.slane %v5520, 5
        %v5523 = vsel %vm1637, %v5518, %v5522
        %v5524 = vshrl.u32 %v5337, 16
        %v5526 = vrot.slane %v5524, 4
        %v5527 = vor.u32 %v5526, %v5522
        %v5528 = vrot.slane %v5527, 4
        %v5530 = vshll.u32 %v5338, 16
        %v5532 = vrot.slane %v5530, 5
        %v5533 = vsel %vm1637, %v5528, %v5532
        %v5535 = vshrl.u32 %v5339, 16
        %v5537 = vrot.slane %v5535, 4
        %v5538 = vshll.u32 %v5339, 16
        %v5540 = vrot.slane %v5538, 5
        %v5541 = vor.u32 %v5537, %v5540
        %v5542 = vrot.slane %v5541, 4
        %v5544 = vshll.u32 %v5340, 16
        %v5546 = vrot.slane %v5544, 5
        %v5547 = vsel %vm1637, %v5542, %v5546
        %v5548 = vshrl.u32 %v5340, 16
        %v5550 = vrot.slane %v5548, 4
        %v5551 = vor.u32 %v5550, %v5546
        %v5552 = vrot.slane %v5551, 4
        %v5554 = vshll.u32 %v5341, 16
        %v5556 = vrot.slane %v5554, 5
        %v5557 = vsel %vm1637, %v5552, %v5556
        %v5559 = vshrl.u32 %v5342, 16
        %v5561 = vrot.slane %v5559, 4
        %v5562 = vshll.u32 %v5342, 16
        %v5564 = vrot.slane %v5562, 5
        %v5565 = vor.u32 %v5561, %v5564
        %v5566 = vrot.slane %v5565, 4
        %v5568 = vshll.u32 %v5343, 16
        %v5570 = vrot.slane %v5568, 5
        %v5571 = vsel %vm1637, %v5566, %v5570
        %v5572 = vshrl.u32 %v5343, 16
        %v5574 = vrot.slane %v5572, 4
        %v5575 = vor.u32 %v5574, %v5570
        %v5576 = vrot.slane %v5575, 4
        %v5578 = vshll.u32 %v5344, 16
        %v5580 = vrot.slane %v5578, 5
        %v5581 = vsel %vm1637, %v5576, %v5580
        %v5583 = vshrl.u32 %v5345, 16
        %v5585 = vrot.slane %v5583, 4
        %v5586 = vshll.u32 %v5345, 16
        %v5588 = vrot.slane %v5586, 5
        %v5589 = vor.u32 %v5585, %v5588
        %v5590 = vrot.slane %v5589, 4
        %v5592 = vshll.u32 %v5346, 16
        %v5594 = vrot.slane %v5592, 5
        %v5595 = vsel %vm1637, %v5590, %v5594
        %v5596 = vshrl.u32 %v5346, 16
        %v5598 = vrot.slane %v5596, 4
        %v5599 = vor.u32 %v5598, %v5594
        %v5600 = vrot.slane %v5599, 4
        %v5602 = vshll.u32 %v5347, 16
        %v5604 = vrot.slane %v5602, 5
        %v5605 = vsel %vm1637, %v5600, %v5604
        %v5607 = vshrl.u32 %v5348, 16
        %v5609 = vrot.slane %v5607, 4
        %v5610 = vshll.u32 %v5348, 16
        %v5612 = vrot.slane %v5610, 5
        %v5613 = vor.u32 %v5609, %v5612
        %v5614 = vrot.slane %v5613, 4
        %v5616 = vshll.u32 %v5349, 16
        %v5618 = vrot.slane %v5616, 5
        %v5619 = vsel %vm1637, %v5614, %v5618
        %v5620 = vshrl.u32 %v5349, 16
        %v5622 = vrot.slane %v5620, 4
        %v5623 = vor.u32 %v5622, %v5618
        %v5624 = vrot.slane %v5623, 4
        %v5626 = vshll.u32 %v5350, 16
        %v5628 = vrot.slane %v5626, 5
        %v5629 = vsel %vm1637, %v5624, %v5628
        %v5631 = vshrl.u32 %v5351, 16
        %v5633 = vrot.slane %v5631, 4
        %v5634 = vshll.u32 %v5351, 16
        %v5636 = vrot.slane %v5634, 5
        %v5637 = vor.u32 %v5633, %v5636
        %v5638 = vrot.slane %v5637, 4
        %v5640 = vshll.u32 %v5352, 16
        %v5642 = vrot.slane %v5640, 5
        %v5643 = vsel %vm1637, %v5638, %v5642
        %v5644 = vshrl.u32 %v5352, 16
        %v5646 = vrot.slane %v5644, 4
        %v5647 = vor.u32 %v5646, %v5642
        %v5648 = vrot.slane %v5647, 4
        %v5650 = vshll.u32 %v5353, 16
        %v5652 = vrot.slane %v5650, 5
        %v5653 = vsel %vm1637, %v5648, %v5652
        %v5655 = vshrl.u32 %v5354, 16
        %v5657 = vrot.slane %v5655, 4
        %v5658 = vshll.u32 %v5354, 16
        %v5660 = vrot.slane %v5658, 5
        %v5661 = vor.u32 %v5657, %v5660
        %v5662 = vrot.slane %v5661, 4
        %v5664 = vshll.u32 %v5355, 16
        %v5666 = vrot.slane %v5664, 5
        %v5667 = vsel %vm1637, %v5662, %v5666
        %v5668 = vshrl.u32 %v5355, 16
        %v5670 = vrot.slane %v5668, 4
        %v5671 = vor.u32 %v5670, %v5666
        %v5672 = vrot.slane %v5671, 4
        %v5674 = vshll.u32 %v5356, 16
        %v5676 = vrot.slane %v5674, 5
        %v5677 = vsel %vm1637, %v5672, %v5676
        %v5679 = vshrl.u32 %v5357, 16
        %v5681 = vrot.slane %v5679, 4
        %v5682 = vshll.u32 %v5357, 16
        %v5684 = vrot.slane %v5682, 5
        %v5685 = vor.u32 %v5681, %v5684
        %v5686 = vrot.slane %v5685, 4
        %v5688 = vshll.u32 %v5358, 16
        %v5690 = vrot.slane %v5688, 5
        %v5691 = vsel %vm1637, %v5686, %v5690
        %v5692 = vshrl.u32 %v5358, 16
        %v5694 = vrot.slane %v5692, 4
        %v5695 = vor.u32 %v5694, %v5690
        %v5696 = vrot.slane %v5695, 4
        %v5698 = vshll.u32 %v5359, 16
        %v5700 = vrot.slane %v5698, 5
        %v5701 = vsel %vm1637, %v5696, %v5700
        %v5703 = vshrl.u32 %v5360, 16
        %v5705 = vrot.slane %v5703, 4
        %v5706 = vshll.u32 %v5360, 16
        %v5708 = vrot.slane %v5706, 5
        %v5709 = vor.u32 %v5705, %v5708
        %v5710 = vrot.slane %v5709, 4
        %v5712 = vshll.u32 %v5361, 16
        %v5714 = vrot.slane %v5712, 5
        %v5715 = vsel %vm1637, %v5710, %v5714
        %v5716 = vshrl.u32 %v5361, 16
        %v5718 = vrot.slane %v5716, 4
        %v5719 = vor.u32 %v5718, %v5714
        %v5720 = vrot.slane %v5719, 4
        %v5722 = vshll.u32 %v5362, 16
        %v5724 = vrot.slane %v5722, 5
        %v5725 = vsel %vm1637, %v5720, %v5724
        %v5727 = vshrl.u32 %v5363, 16
        %v5729 = vrot.slane %v5727, 4
        %v5730 = vshll.u32 %v5363, 16
        %v5732 = vrot.slane %v5730, 5
        %v5733 = vor.u32 %v5729, %v5732
        %v5734 = vrot.slane %v5733, 4
        %v5736 = vshll.u32 %v5364, 16
        %v5738 = vrot.slane %v5736, 5
        %v5739 = vsel %vm1637, %v5734, %v5738
        %v5740 = vshrl.u32 %v5364, 16
        %v5742 = vrot.slane %v5740, 4
        %v5743 = vor.u32 %v5742, %v5738
        %v5744 = vrot.slane %v5743, 4
        %v5746 = vshll.u32 %v5365, 16
        %v5748 = vrot.slane %v5746, 5
        %v5749 = vsel %vm1637, %v5744, %v5748
        %s5750 = scalar_lea.vmem %s3, 448
        %v5751 = vld [vmem:[%s5750] sm:$0xf]
        %v5752 = vld [vmem:[%s5750 + $0x4] sm:$0xf]
        %v5753 = vld [vmem:[%s5750 + $0x8] sm:$0xf]
        %v5754 = vld [vmem:[%s5750 + $0xc] sm:$0xf]
        %v5755 = vld [vmem:[%s5750 + $0x10] sm:$0xf]
        %v5756 = vld [vmem:[%s5750 + $0x14] sm:$0xf]
        %v5757 = vld [vmem:[%s5750 + $0x18] sm:$0xf]
        %v5758 = vld [vmem:[%s5750 + $0x1c] sm:$0xf]
        %v5759 = vld [vmem:[%s5750 + $0x20] sm:$0xf]
        %v5760 = vld [vmem:[%s5750 + $0x24] sm:$0xf]
        %v5761 = vld [vmem:[%s5750 + $0x28] sm:$0xf]
        %v5762 = vld [vmem:[%s5750 + $0x2c] sm:$0xf]
        %v5763 = vld [vmem:[%s5750 + $0x30] sm:$0xf]
        %v5764 = vld [vmem:[%s5750 + $0x34] sm:$0xf]
        %v5765 = vld [vmem:[%s5750 + $0x38] sm:$0xf]
        %v5766 = vld [vmem:[%s5750 + $0x3c] sm:$0xf]
        %v5767 = vunpack.c.l.b16 %v5379
        %v5768 = vunpack.c.l.b16 %v5389
        %v5769 = vunpack.c.l.b16 %v5403
        %v5770 = vunpack.c.l.b16 %v5413
        %v5771 = vunpack.c.l.b16 %v5427
        %v5772 = vunpack.c.l.b16 %v5437
        %v5773 = vunpack.c.l.b16 %v5451
        %v5774 = vunpack.c.l.b16 %v5461
        %v5775 = vunpack.c.l.b16 %v5475
        %v5776 = vunpack.c.l.b16 %v5485
        %v5777 = vunpack.c.l.b16 %v5499
        %v5778 = vunpack.c.l.b16 %v5509
        %v5779 = vunpack.c.l.b16 %v5523
        %v5780 = vunpack.c.l.b16 %v5533
        %v5781 = vunpack.c.l.b16 %v5547
        %v5782 = vunpack.c.l.b16 %v5557
        %v5783 = vunpack.c.l.b16 %v5571
        %v5784 = vunpack.c.l.b16 %v5581
        %v5785 = vunpack.c.l.b16 %v5595
        %v5786 = vunpack.c.l.b16 %v5605
        %v5787 = vunpack.c.l.b16 %v5619
        %v5788 = vunpack.c.l.b16 %v5629
        %v5789 = vunpack.c.l.b16 %v5643
        %v5790 = vunpack.c.l.b16 %v5653
        %v5791 = vunpack.c.l.b16 %v5667
        %v5792 = vunpack.c.l.b16 %v5677
        %v5793 = vunpack.c.l.b16 %v5691
        %v5794 = vunpack.c.l.b16 %v5701
        %v5795 = vunpack.c.l.b16 %v5715
        %v5796 = vunpack.c.l.b16 %v5725
        %v5797 = vunpack.c.l.b16 %v5739
        %v5798 = vunpack.c.l.b16 %v5749
        %v5799 = vpack.c.b16 %v5768, %v5767
        %v5800 = vpack.c.b16 %v5770, %v5769
        %v5801 = vpack.c.b16 %v5772, %v5771
        %v5802 = vpack.c.b16 %v5774, %v5773
        %v5803 = vpack.c.b16 %v5776, %v5775
        %v5804 = vpack.c.b16 %v5778, %v5777
        %v5805 = vpack.c.b16 %v5780, %v5779
        %v5806 = vpack.c.b16 %v5782, %v5781
        %v5807 = vpack.c.b16 %v5784, %v5783
        %v5808 = vpack.c.b16 %v5786, %v5785
        %v5809 = vpack.c.b16 %v5788, %v5787
        %v5810 = vpack.c.b16 %v5790, %v5789
        %v5811 = vpack.c.b16 %v5792, %v5791
        %v5812 = vpack.c.b16 %v5794, %v5793
        %v5813 = vpack.c.b16 %v5796, %v5795
        %v5814 = vpack.c.b16 %v5798, %v5797
        %v5847 = vunpack.c.l.b16 %v5751
        %v5848 = vunpack.c.l.b16 %v5752
        %v5849 = vunpack.c.l.b16 %v5753
        %v5850 = vunpack.c.l.b16 %v5754
        %v5851 = vunpack.c.l.b16 %v5755
        %v5852 = vunpack.c.l.b16 %v5756
        %v5853 = vunpack.c.l.b16 %v5757
        %v5854 = vunpack.c.l.b16 %v5758
        %v5855 = vunpack.c.l.b16 %v5759
        %v5856 = vunpack.c.l.b16 %v5760
        %v5857 = vunpack.c.l.b16 %v5761
        %v5858 = vunpack.c.l.b16 %v5762
        %v5859 = vunpack.c.l.b16 %v5763
        %v5860 = vunpack.c.l.b16 %v5764
        %v5861 = vunpack.c.l.b16 %v5765
        %v5862 = vunpack.c.l.b16 %v5766
        %v5863 = vpack.c.b16 %v5848, %v5847
        %v5864 = vpack.c.b16 %v5850, %v5849
        %v5865 = vpack.c.b16 %v5852, %v5851
        %v5866 = vpack.c.b16 %v5854, %v5853
        %v5867 = vpack.c.b16 %v5856, %v5855
        %v5868 = vpack.c.b16 %v5858, %v5857
        %v5869 = vpack.c.b16 %v5860, %v5859
        %v5870 = vpack.c.b16 %v5862, %v5861
        %5879 = vmatprep.subr.bf16.mxu0 0
        %5880 = vmatpush1.bf16.msra.mxu0 %v5863
        %5881 = vmatprep.subr.bf16.mxu0 0
        %5882 = vmatpush1.bf16.msra.mxu0 %v5864
        %5883 = vmatprep.subr.bf16.mxu0 0
        %5884 = vmatpush1.bf16.msra.mxu0 %v5865
        %5885 = vmatprep.subr.bf16.mxu0 0
        %5886 = vmatpush1.bf16.msra.mxu0 %v5866
        %5887 = vmatprep.subr.bf16.mxu0 0
        %5888 = vmatpush1.bf16.msra.mxu0 %v5867
        %5889 = vmatprep.subr.bf16.mxu0 0
        %5890 = vmatpush1.bf16.msra.mxu0 %v5868
        %5891 = vmatprep.subr.bf16.mxu0 0
        %5892 = vmatpush1.bf16.msra.mxu0 %v5869
        %5893 = vmatprep.subr.bf16.mxu0 0
        %5894 = vmatpush1.bf16.msra.mxu0 %v5870
        %5895 = vmatprep.subr.bf16.mxu0 0
        %5896 = vmatpush1.bf16.msra.mxu0 0
        %5897 = vmatprep.subr.bf16.mxu0 0
        %5898 = vmatpush1.bf16.msra.mxu0 0
        %5899 = vmatprep.subr.bf16.mxu0 0
        %5900 = vmatpush1.bf16.msra.mxu0 0
        %5901 = vmatprep.subr.bf16.mxu0 0
        %5902 = vmatpush1.bf16.msra.mxu0 0
        %5903 = vmatprep.subr.bf16.mxu0 0
        %5904 = vmatpush1.bf16.msra.mxu0 0
        %5905 = vmatprep.subr.bf16.mxu0 0
        %5906 = vmatpush1.bf16.msra.mxu0 0
        %5907 = vmatprep.subr.bf16.mxu0 0
        %5908 = vmatpush1.bf16.msra.mxu0 0
        %5909 = vmatprep.subr.bf16.mxu0 0
        %5910 = vmatpush1.bf16.msra.mxu0 0
        %5911 = vmatprep.mubr.bf16.mxu0 0
        %5912 = vmatmul.mubr.bf16.gmra.mrb[0].mxu0 %v5799
        %v5913 = vpop.f32.mrb[0].mxu0
        %v5914 = vadd.f32 0.0, %v5913
        %v5915 = vpop.f32.mrb[0].mxu0
        %v5916 = vpop.f32.mrb[0].mxu0
        %v5917 = vadd.f32 0.0, %v5916
        %v5918 = vpop.f32.mrb[0].mxu0
        %5919 = vmatprep.mubr.bf16.mxu0 0
        %5920 = vmatmul.mubr.bf16.gmra.mrb[0].mxu0 %v5800
        %v5921 = vpop.f32.mrb[0].mxu0
        %v5922 = vadd.f32 0.0, %v5921
        %v5923 = vpop.f32.mrb[0].mxu0
        %v5924 = vpop.f32.mrb[0].mxu0
        %v5925 = vadd.f32 0.0, %v5924
        %v5926 = vpop.f32.mrb[0].mxu0
        %5927 = vmatprep.mubr.bf16.mxu0 0
        %5928 = vmatmul.mubr.bf16.gmra.mrb[0].mxu0 %v5801
        %v5929 = vpop.f32.mrb[0].mxu0
        %v5930 = vadd.f32 0.0, %v5929
        %v5931 = vpop.f32.mrb[0].mxu0
        %v5932 = vpop.f32.mrb[0].mxu0
        %v5933 = vadd.f32 0.0, %v5932
        %v5934 = vpop.f32.mrb[0].mxu0
        %5935 = vmatprep.mubr.bf16.mxu0 0
        %5936 = vmatmul.mubr.bf16.gmra.mrb[0].mxu0 %v5802
        %v5937 = vpop.f32.mrb[0].mxu0
        %v5938 = vadd.f32 0.0, %v5937
        %v5939 = vpop.f32.mrb[0].mxu0
        %v5940 = vpop.f32.mrb[0].mxu0
        %v5941 = vadd.f32 0.0, %v5940
        %v5942 = vpop.f32.mrb[0].mxu0
        %5943 = vmatprep.mubr.bf16.mxu0 0
        %5944 = vmatmul.mubr.bf16.gmra.mrb[0].mxu0 %v5803
        %v5945 = vpop.f32.mrb[0].mxu0
        %v5946 = vadd.f32 0.0, %v5945
        %v5947 = vpop.f32.mrb[0].mxu0
        %v5948 = vpop.f32.mrb[0].mxu0
        %v5949 = vadd.f32 0.0, %v5948
        %v5950 = vpop.f32.mrb[0].mxu0
        %5951 = vmatprep.mubr.bf16.mxu0 0
        %5952 = vmatmul.mubr.bf16.gmra.mrb[0].mxu0 %v5804
        %v5953 = vpop.f32.mrb[0].mxu0
        %v5954 = vadd.f32 0.0, %v5953
        %v5955 = vpop.f32.mrb[0].mxu0
        %v5956 = vpop.f32.mrb[0].mxu0
        %v5957 = vadd.f32 0.0, %v5956
        %v5958 = vpop.f32.mrb[0].mxu0
        %5959 = vmatprep.mubr.bf16.mxu0 0
        %5960 = vmatmul.mubr.bf16.gmra.mrb[0].mxu0 %v5805
        %v5961 = vpop.f32.mrb[0].mxu0
        %v5962 = vadd.f32 0.0, %v5961
        %v5963 = vpop.f32.mrb[0].mxu0
        %v5964 = vpop.f32.mrb[0].mxu0
        %v5965 = vadd.f32 0.0, %v5964
        %v5966 = vpop.f32.mrb[0].mxu0
        %5967 = vmatprep.mubr.bf16.mxu0 0
        %5968 = vmatmul.mubr.bf16.gmra.mrb[0].mxu0 %v5806
        %v5969 = vpop.f32.mrb[0].mxu0
        %v5970 = vadd.f32 0.0, %v5969
        %v5971 = vpop.f32.mrb[0].mxu0
        %v5972 = vpop.f32.mrb[0].mxu0
        %v5973 = vadd.f32 0.0, %v5972
        %v5974 = vpop.f32.mrb[0].mxu0
        %5975 = vmatprep.mubr.bf16.mxu0 0
        %5976 = vmatmul.mubr.bf16.gmra.mrb[0].mxu0 %v5807
        %v5977 = vpop.f32.mrb[0].mxu0
        %v5978 = vadd.f32 0.0, %v5977
        %v5979 = vpop.f32.mrb[0].mxu0
        %v5980 = vpop.f32.mrb[0].mxu0
        %v5981 = vadd.f32 0.0, %v5980
        %v5982 = vpop.f32.mrb[0].mxu0
        %5983 = vmatprep.mubr.bf16.mxu0 0
        %5984 = vmatmul.mubr.bf16.gmra.mrb[0].mxu0 %v5808
        %v5985 = vpop.f32.mrb[0].mxu0
        %v5986 = vadd.f32 0.0, %v5985
        %v5987 = vpop.f32.mrb[0].mxu0
        %v5988 = vpop.f32.mrb[0].mxu0
        %v5989 = vadd.f32 0.0, %v5988
        %v5990 = vpop.f32.mrb[0].mxu0
        %5991 = vmatprep.mubr.bf16.mxu0 0
        %5992 = vmatmul.mubr.bf16.gmra.mrb[0].mxu0 %v5809
        %v5993 = vpop.f32.mrb[0].mxu0
        %v5994 = vadd.f32 0.0, %v5993
        %v5995 = vpop.f32.mrb[0].mxu0
        %v5996 = vpop.f32.mrb[0].mxu0
        %v5997 = vadd.f32 0.0, %v5996
        %v5998 = vpop.f32.mrb[0].mxu0
        %5999 = vmatprep.mubr.bf16.mxu0 0
        %6000 = vmatmul.mubr.bf16.gmra.mrb[0].mxu0 %v5810
        %v6001 = vpop.f32.mrb[0].mxu0
        %v6002 = vadd.f32 0.0, %v6001
        %v6003 = vpop.f32.mrb[0].mxu0
        %v6004 = vpop.f32.mrb[0].mxu0
        %v6005 = vadd.f32 0.0, %v6004
        %v6006 = vpop.f32.mrb[0].mxu0
        %6007 = vmatprep.mubr.bf16.mxu0 0
        %6008 = vmatmul.mubr.bf16.gmra.mrb[0].mxu0 %v5811
        %v6009 = vpop.f32.mrb[0].mxu0
        %v6010 = vadd.f32 0.0, %v6009
        %v6011 = vpop.f32.mrb[0].mxu0
        %v6012 = vpop.f32.mrb[0].mxu0
        %v6013 = vadd.f32 0.0, %v6012
        %v6014 = vpop.f32.mrb[0].mxu0
        %6015 = vmatprep.mubr.bf16.mxu0 0
        %6016 = vmatmul.mubr.bf16.gmra.mrb[0].mxu0 %v5812
        %v6017 = vpop.f32.mrb[0].mxu0
        %v6018 = vadd.f32 0.0, %v6017
        %v6019 = vpop.f32.mrb[0].mxu0
        %v6020 = vpop.f32.mrb[0].mxu0
        %v6021 = vadd.f32 0.0, %v6020
        %v6022 = vpop.f32.mrb[0].mxu0
        %6023 = vmatprep.mubr.bf16.mxu0 0
        %6024 = vmatmul.mubr.bf16.gmra.mrb[0].mxu0 %v5813
        %v6025 = vpop.f32.mrb[0].mxu0
        %v6026 = vadd.f32 0.0, %v6025
        %v6027 = vpop.f32.mrb[0].mxu0
        %v6028 = vpop.f32.mrb[0].mxu0
        %v6029 = vadd.f32 0.0, %v6028
        %v6030 = vpop.f32.mrb[0].mxu0
        %6031 = vmatprep.mubr.bf16.mxu0 0
        %6032 = vmatmul.mubr.bf16.gmra.mrb[0].mxu0 %v5814
        %v6033 = vpop.f32.mrb[0].mxu0
        %v6034 = vadd.f32 0.0, %v6033
        %v6035 = vpop.f32.mrb[0].mxu0
        %v6036 = vpop.f32.mrb[0].mxu0
        %v6037 = vadd.f32 0.0, %v6036
        %v6038 = vpop.f32.mrb[0].mxu0
        %6039 = vdwg.mxu0
        %v6040 = vld [vmem:[#allocation2] sm:$0xff]
        %v6041 = vld [vmem:[#allocation2 + $0x8] sm:$0xff]
        %v6042 = vld [vmem:[#allocation2 + $0x10] sm:$0xff]
        %v6043 = vld [vmem:[#allocation2 + $0x18] sm:$0xff]
        %v6044 = vld [vmem:[#allocation2 + $0x20] sm:$0xff]
        %v6045 = vld [vmem:[#allocation2 + $0x28] sm:$0xff]
        %v6046 = vld [vmem:[#allocation2 + $0x30] sm:$0xff]
        %v6047 = vld [vmem:[#allocation2 + $0x38] sm:$0xff]
        %v6048 = vld [vmem:[#allocation2 + $0x40] sm:$0xff]
        %v6049 = vld [vmem:[#allocation2 + $0x48] sm:$0xff]
        %v6050 = vld [vmem:[#allocation2 + $0x50] sm:$0xff]
        %v6051 = vld [vmem:[#allocation2 + $0x58] sm:$0xff]
        %v6052 = vld [vmem:[#allocation2 + $0x60] sm:$0xff]
        %v6053 = vld [vmem:[#allocation2 + $0x68] sm:$0xff]
        %v6054 = vld [vmem:[#allocation2 + $0x70] sm:$0xff]
        %v6055 = vld [vmem:[#allocation2 + $0x78] sm:$0xff]
        %v6056 = vld [vmem:[#allocation2 + $0x80] sm:$0xff]
        %v6057 = vld [vmem:[#allocation2 + $0x88] sm:$0xff]
        %v6058 = vld [vmem:[#allocation2 + $0x90] sm:$0xff]
        %v6059 = vld [vmem:[#allocation2 + $0x98] sm:$0xff]
        %v6060 = vld [vmem:[#allocation2 + $0xa0] sm:$0xff]
        %v6061 = vld [vmem:[#allocation2 + $0xa8] sm:$0xff]
        %v6062 = vld [vmem:[#allocation2 + $0xb0] sm:$0xff]
        %v6063 = vld [vmem:[#allocation2 + $0xb8] sm:$0xff]
        %v6064 = vld [vmem:[#allocation2 + $0xc0] sm:$0xff]
        %v6065 = vld [vmem:[#allocation2 + $0xc8] sm:$0xff]
        %v6066 = vld [vmem:[#allocation2 + $0xd0] sm:$0xff]
        %v6067 = vld [vmem:[#allocation2 + $0xd8] sm:$0xff]
        %v6068 = vld [vmem:[#allocation2 + $0xe0] sm:$0xff]
        %v6069 = vld [vmem:[#allocation2 + $0xe8] sm:$0xff]
        %v6070 = vld [vmem:[#allocation2 + $0xf0] sm:$0xff]
        %v6071 = vld [vmem:[#allocation2 + $0xf8] sm:$0xff]
        %v6072 = vadd.f32 %v6040, %v5914
        %v6073 = vadd.f32 %v6041, %v5917
        %v6074 = vadd.f32 %v6042, %v5922
        %v6075 = vadd.f32 %v6043, %v5925
        %v6076 = vadd.f32 %v6044, %v5930
        %v6077 = vadd.f32 %v6045, %v5933
        %v6078 = vadd.f32 %v6046, %v5938
        %v6079 = vadd.f32 %v6047, %v5941
        %v6080 = vadd.f32 %v6048, %v5946
        %v6081 = vadd.f32 %v6049, %v5949
        %v6082 = vadd.f32 %v6050, %v5954
        %v6083 = vadd.f32 %v6051, %v5957
        %v6084 = vadd.f32 %v6052, %v5962
        %v6085 = vadd.f32 %v6053, %v5965
        %v6086 = vadd.f32 %v6054, %v5970
        %v6087 = vadd.f32 %v6055, %v5973
        %v6088 = vadd.f32 %v6056, %v5978
        %v6089 = vadd.f32 %v6057, %v5981
        %v6090 = vadd.f32 %v6058, %v5986
        %v6091 = vadd.f32 %v6059, %v5989
        %v6092 = vadd.f32 %v6060, %v5994
        %v6093 = vadd.f32 %v6061, %v5997
        %v6094 = vadd.f32 %v6062, %v6002
        %v6095 = vadd.f32 %v6063, %v6005
        %v6096 = vadd.f32 %v6064, %v6010
        %v6097 = vadd.f32 %v6065, %v6013
        %v6098 = vadd.f32 %v6066, %v6018
        %v6099 = vadd.f32 %v6067, %v6021
        %v6100 = vadd.f32 %v6068, %v6026
        %v6101 = vadd.f32 %v6069, %v6029
        %v6102 = vadd.f32 %v6070, %v6034
        %v6103 = vadd.f32 %v6071, %v6037
        %6104 = vst [vmem:[#allocation2] sm:$0xff] %v6072
        %6105 = vst [vmem:[#allocation2 + $0x8] sm:$0xff] %v6073
        %6106 = vst [vmem:[#allocation2 + $0x10] sm:$0xff] %v6074
        %6107 = vst [vmem:[#allocation2 + $0x18] sm:$0xff] %v6075
        %6108 = vst [vmem:[#allocation2 + $0x20] sm:$0xff] %v6076
        %6109 = vst [vmem:[#allocation2 + $0x28] sm:$0xff] %v6077
        %6110 = vst [vmem:[#allocation2 + $0x30] sm:$0xff] %v6078
        %6111 = vst [vmem:[#allocation2 + $0x38] sm:$0xff] %v6079
        %6112 = vst [vmem:[#allocation2 + $0x40] sm:$0xff] %v6080
        %6113 = vst [vmem:[#allocation2 + $0x48] sm:$0xff] %v6081
        %6114 = vst [vmem:[#allocation2 + $0x50] sm:$0xff] %v6082
        %6115 = vst [vmem:[#allocation2 + $0x58] sm:$0xff] %v6083
        %6116 = vst [vmem:[#allocation2 + $0x60] sm:$0xff] %v6084
        %6117 = vst [vmem:[#allocation2 + $0x68] sm:$0xff] %v6085
        %6118 = vst [vmem:[#allocation2 + $0x70] sm:$0xff] %v6086
        %6119 = vst [vmem:[#allocation2 + $0x78] sm:$0xff] %v6087
        %6120 = vst [vmem:[#allocation2 + $0x80] sm:$0xff] %v6088
        %6121 = vst [vmem:[#allocation2 + $0x88] sm:$0xff] %v6089
        %6122 = vst [vmem:[#allocation2 + $0x90] sm:$0xff] %v6090
        %6123 = vst [vmem:[#allocation2 + $0x98] sm:$0xff] %v6091
        %6124 = vst [vmem:[#allocation2 + $0xa0] sm:$0xff] %v6092
        %6125 = vst [vmem:[#allocation2 + $0xa8] sm:$0xff] %v6093
        %6126 = vst [vmem:[#allocation2 + $0xb0] sm:$0xff] %v6094
        %6127 = vst [vmem:[#allocation2 + $0xb8] sm:$0xff] %v6095
        %6128 = vst [vmem:[#allocation2 + $0xc0] sm:$0xff] %v6096
        %6129 = vst [vmem:[#allocation2 + $0xc8] sm:$0xff] %v6097
        %6130 = vst [vmem:[#allocation2 + $0xd0] sm:$0xff] %v6098
        %6131 = vst [vmem:[#allocation2 + $0xd8] sm:$0xff] %v6099
        %6132 = vst [vmem:[#allocation2 + $0xe0] sm:$0xff] %v6100
        %6133 = vst [vmem:[#allocation2 + $0xe8] sm:$0xff] %v6101
        %6134 = vst [vmem:[#allocation2 + $0xf0] sm:$0xff] %v6102
        %6135 = vst [vmem:[#allocation2 + $0xf8] sm:$0xff] %v6103
        %v6136 = vld [vmem:[%s4867] sm:$0xe]
        %v6137 = vld [vmem:[%s4867 + $0x4] sm:$0xf]
        %v6138 = vld [vmem:[%s4867 + $0x8] sm:$0x1]
        %v6139 = vld [vmem:[%s4867 + $0xc] sm:$0xe]
        %v6140 = vld [vmem:[%s4867 + $0x10] sm:$0xf]
        %v6141 = vld [vmem:[%s4867 + $0x14] sm:$0x1]
        %v6142 = vld [vmem:[%s4867 + $0x18] sm:$0xe]
        %v6143 = vld [vmem:[%s4867 + $0x1c] sm:$0xf]
        %v6144 = vld [vmem:[%s4867 + $0x20] sm:$0x1]
        %v6145 = vld [vmem:[%s4867 + $0x24] sm:$0xe]
        %v6146 = vld [vmem:[%s4867 + $0x28] sm:$0xf]
        %v6147 = vld [vmem:[%s4867 + $0x2c] sm:$0x1]
        %v6148 = vld [vmem:[%s4867 + $0x30] sm:$0xe]
        %v6149 = vld [vmem:[%s4867 + $0x34] sm:$0xf]
        %v6150 = vld [vmem:[%s4867 + $0x38] sm:$0x1]
        %v6151 = vld [vmem:[%s4867 + $0x3c] sm:$0xe]
        %v6152 = vld [vmem:[%s4867 + $0x40] sm:$0xf]
        %v6153 = vld [vmem:[%s4867 + $0x44] sm:$0x1]
        %v6154 = vld [vmem:[%s4867 + $0x48] sm:$0xe]
        %v6155 = vld [vmem:[%s4867 + $0x4c] sm:$0xf]
        %v6156 = vld [vmem:[%s4867 + $0x50] sm:$0x1]
        %v6157 = vld [vmem:[%s4867 + $0x54] sm:$0xe]
        %v6158 = vld [vmem:[%s4867 + $0x58] sm:$0xf]
        %v6159 = vld [vmem:[%s4867 + $0x5c] sm:$0x1]
        %v6160 = vld [vmem:[%s4867 + $0x60] sm:$0xe]
        %v6161 = vld [vmem:[%s4867 + $0x64] sm:$0xf]
        %v6162 = vld [vmem:[%s4867 + $0x68] sm:$0x1]
        %v6163 = vld [vmem:[%s4867 + $0x6c] sm:$0xe]
        %v6164 = vld [vmem:[%s4867 + $0x70] sm:$0xf]
        %v6165 = vld [vmem:[%s4867 + $0x74] sm:$0x1]
        %v6166 = vld [vmem:[%s4867 + $0x78] sm:$0xe]
        %v6167 = vld [vmem:[%s4867 + $0x7c] sm:$0xf]
        %v6168 = vld [vmem:[%s4867 + $0x80] sm:$0x1]
        %v6169 = vld [vmem:[%s4867 + $0x84] sm:$0xe]
        %v6170 = vld [vmem:[%s4867 + $0x88] sm:$0xf]
        %v6171 = vld [vmem:[%s4867 + $0x8c] sm:$0x1]
        %v6172 = vld [vmem:[%s4867 + $0x90] sm:$0xe]
        %v6173 = vld [vmem:[%s4867 + $0x94] sm:$0xf]
        %v6174 = vld [vmem:[%s4867 + $0x98] sm:$0x1]
        %v6175 = vld [vmem:[%s4867 + $0x9c] sm:$0xe]
        %v6176 = vld [vmem:[%s4867 + $0xa0] sm:$0xf]
        %v6177 = vld [vmem:[%s4867 + $0xa4] sm:$0x1]
        %v6178 = vld [vmem:[%s4867 + $0xa8] sm:$0xe]
        %v6179 = vld [vmem:[%s4867 + $0xac] sm:$0xf]
        %v6180 = vld [vmem:[%s4867 + $0xb0] sm:$0x1]
        %v6181 = vld [vmem:[%s4867 + $0xb4] sm:$0xe]
        %v6182 = vld [vmem:[%s4867 + $0xb8] sm:$0xf]
        %v6183 = vld [vmem:[%s4867 + $0xbc] sm:$0x1]
        %v6232 = vrot.slane %v6136, 5
        %v6233 = vrot.slane %v6232, 4
        %v6234 = vrot.slane %v6137, 5
        %v6235 = vsel %vm2506, %v6233, %v6234
        %v6236 = vrot.slane %v6234, 4
        %v6237 = vrot.slane %v6138, 5
        %v6238 = vsel %vm2506, %v6236, %v6237
        %v6239 = vrot.slane %v6139, 5
        %v6240 = vrot.slane %v6239, 4
        %v6241 = vrot.slane %v6140, 5
        %v6242 = vsel %vm2506, %v6240, %v6241
        %v6243 = vrot.slane %v6241, 4
        %v6244 = vrot.slane %v6141, 5
        %v6245 = vsel %vm2506, %v6243, %v6244
        %v6246 = vrot.slane %v6142, 5
        %v6247 = vrot.slane %v6246, 4
        %v6248 = vrot.slane %v6143, 5
        %v6249 = vsel %vm2506, %v6247, %v6248
        %v6250 = vrot.slane %v6248, 4
        %v6251 = vrot.slane %v6144, 5
        %v6252 = vsel %vm2506, %v6250, %v6251
        %v6253 = vrot.slane %v6145, 5
        %v6254 = vrot.slane %v6253, 4
        %v6255 = vrot.slane %v6146, 5
        %v6256 = vsel %vm2506, %v6254, %v6255
        %v6257 = vrot.slane %v6255, 4
        %v6258 = vrot.slane %v6147, 5
        %v6259 = vsel %vm2506, %v6257, %v6258
        %v6260 = vrot.slane %v6148, 5
        %v6261 = vrot.slane %v6260, 4
        %v6262 = vrot.slane %v6149, 5
        %v6263 = vsel %vm2506, %v6261, %v6262
        %v6264 = vrot.slane %v6262, 4
        %v6265 = vrot.slane %v6150, 5
        %v6266 = vsel %vm2506, %v6264, %v6265
        %v6267 = vrot.slane %v6151, 5
        %v6268 = vrot.slane %v6267, 4
        %v6269 = vrot.slane %v6152, 5
        %v6270 = vsel %vm2506, %v6268, %v6269
        %v6271 = vrot.slane %v6269, 4
        %v6272 = vrot.slane %v6153, 5
        %v6273 = vsel %vm2506, %v6271, %v6272
        %v6274 = vrot.slane %v6154, 5
        %v6275 = vrot.slane %v6274, 4
        %v6276 = vrot.slane %v6155, 5
        %v6277 = vsel %vm2506, %v6275, %v6276
        %v6278 = vrot.slane %v6276, 4
        %v6279 = vrot.slane %v6156, 5
        %v6280 = vsel %vm2506, %v6278, %v6279
        %v6281 = vrot.slane %v6157, 5
        %v6282 = vrot.slane %v6281, 4
        %v6283 = vrot.slane %v6158, 5
        %v6284 = vsel %vm2506, %v6282, %v6283
        %v6285 = vrot.slane %v6283, 4
        %v6286 = vrot.slane %v6159, 5
        %v6287 = vsel %vm2506, %v6285, %v6286
        %v6288 = vrot.slane %v6160, 5
        %v6289 = vrot.slane %v6288, 4
        %v6290 = vrot.slane %v6161, 5
        %v6291 = vsel %vm2506, %v6289, %v6290
        %v6292 = vrot.slane %v6290, 4
        %v6293 = vrot.slane %v6162, 5
        %v6294 = vsel %vm2506, %v6292, %v6293
        %v6295 = vrot.slane %v6163, 5
        %v6296 = vrot.slane %v6295, 4
        %v6297 = vrot.slane %v6164, 5
        %v6298 = vsel %vm2506, %v6296, %v6297
        %v6299 = vrot.slane %v6297, 4
        %v6300 = vrot.slane %v6165, 5
        %v6301 = vsel %vm2506, %v6299, %v6300
        %v6302 = vrot.slane %v6166, 5
        %v6303 = vrot.slane %v6302, 4
        %v6304 = vrot.slane %v6167, 5
        %v6305 = vsel %vm2506, %v6303, %v6304
        %v6306 = vrot.slane %v6304, 4
        %v6307 = vrot.slane %v6168, 5
        %v6308 = vsel %vm2506, %v6306, %v6307
        %v6309 = vrot.slane %v6169, 5
        %v6310 = vrot.slane %v6309, 4
        %v6311 = vrot.slane %v6170, 5
        %v6312 = vsel %vm2506, %v6310, %v6311
        %v6313 = vrot.slane %v6311, 4
        %v6314 = vrot.slane %v6171, 5
        %v6315 = vsel %vm2506, %v6313, %v6314
        %v6316 = vrot.slane %v6172, 5
        %v6317 = vrot.slane %v6316, 4
        %v6318 = vrot.slane %v6173, 5
        %v6319 = vsel %vm2506, %v6317, %v6318
        %v6320 = vrot.slane %v6318, 4
        %v6321 = vrot.slane %v6174, 5
        %v6322 = vsel %vm2506, %v6320, %v6321
        %v6323 = vrot.slane %v6175, 5
        %v6324 = vrot.slane %v6323, 4
        %v6325 = vrot.slane %v6176, 5
        %v6326 = vsel %vm2506, %v6324, %v6325
        %v6327 = vrot.slane %v6325, 4
        %v6328 = vrot.slane %v6177, 5
        %v6329 = vsel %vm2506, %v6327, %v6328
        %v6330 = vrot.slane %v6178, 5
        %v6331 = vrot.slane %v6330, 4
        %v6332 = vrot.slane %v6179, 5
        %v6333 = vsel %vm2506, %v6331, %v6332
        %v6334 = vrot.slane %v6332, 4
        %v6335 = vrot.slane %v6180, 5
        %v6336 = vsel %vm2506, %v6334, %v6335
        %v6337 = vrot.slane %v6181, 5
        %v6338 = vrot.slane %v6337, 4
        %v6339 = vrot.slane %v6182, 5
        %v6340 = vsel %vm2506, %v6338, %v6339
        %v6341 = vrot.slane %v6339, 4
        %v6342 = vrot.slane %v6183, 5
        %v6343 = vsel %vm2506, %v6341, %v6342
        %s6344 = scalar_lea.vmem %s3, 512
        %v6345 = vld [vmem:[%s6344] sm:$0xf]
        %v6346 = vld [vmem:[%s6344 + $0x4] sm:$0xf]
        %v6347 = vld [vmem:[%s6344 + $0x8] sm:$0xf]
        %v6348 = vld [vmem:[%s6344 + $0xc] sm:$0xf]
        %v6349 = vld [vmem:[%s6344 + $0x10] sm:$0xf]
        %v6350 = vld [vmem:[%s6344 + $0x14] sm:$0xf]
        %v6351 = vld [vmem:[%s6344 + $0x18] sm:$0xf]
        %v6352 = vld [vmem:[%s6344 + $0x1c] sm:$0xf]
        %v6353 = vld [vmem:[%s6344 + $0x20] sm:$0xf]
        %v6354 = vld [vmem:[%s6344 + $0x24] sm:$0xf]
        %v6355 = vld [vmem:[%s6344 + $0x28] sm:$0xf]
        %v6356 = vld [vmem:[%s6344 + $0x2c] sm:$0xf]
        %v6357 = vld [vmem:[%s6344 + $0x30] sm:$0xf]
        %v6358 = vld [vmem:[%s6344 + $0x34] sm:$0xf]
        %v6359 = vld [vmem:[%s6344 + $0x38] sm:$0xf]
        %v6360 = vld [vmem:[%s6344 + $0x3c] sm:$0xf]
        %v6361 = vunpack.c.l.b16 %v6235
        %v6362 = vunpack.c.l.b16 %v6238
        %v6363 = vunpack.c.l.b16 %v6242
        %v6364 = vunpack.c.l.b16 %v6245
        %v6365 = vunpack.c.l.b16 %v6249
        %v6366 = vunpack.c.l.b16 %v6252
        %v6367 = vunpack.c.l.b16 %v6256
        %v6368 = vunpack.c.l.b16 %v6259
        %v6369 = vunpack.c.l.b16 %v6263
        %v6370 = vunpack.c.l.b16 %v6266
        %v6371 = vunpack.c.l.b16 %v6270
        %v6372 = vunpack.c.l.b16 %v6273
        %v6373 = vunpack.c.l.b16 %v6277
        %v6374 = vunpack.c.l.b16 %v6280
        %v6375 = vunpack.c.l.b16 %v6284
        %v6376 = vunpack.c.l.b16 %v6287
        %v6377 = vunpack.c.l.b16 %v6291
        %v6378 = vunpack.c.l.b16 %v6294
        %v6379 = vunpack.c.l.b16 %v6298
        %v6380 = vunpack.c.l.b16 %v6301
        %v6381 = vunpack.c.l.b16 %v6305
        %v6382 = vunpack.c.l.b16 %v6308
        %v6383 = vunpack.c.l.b16 %v6312
        %v6384 = vunpack.c.l.b16 %v6315
        %v6385 = vunpack.c.l.b16 %v6319
        %v6386 = vunpack.c.l.b16 %v6322
        %v6387 = vunpack.c.l.b16 %v6326
        %v6388 = vunpack.c.l.b16 %v6329
        %v6389 = vunpack.c.l.b16 %v6333
        %v6390 = vunpack.c.l.b16 %v6336
        %v6391 = vunpack.c.l.b16 %v6340
        %v6392 = vunpack.c.l.b16 %v6343
        %v6393 = vpack.c.b16 %v6362, %v6361
        %v6394 = vpack.c.b16 %v6364, %v6363
        %v6395 = vpack.c.b16 %v6366, %v6365
        %v6396 = vpack.c.b16 %v6368, %v6367
        %v6397 = vpack.c.b16 %v6370, %v6369
        %v6398 = vpack.c.b16 %v6372, %v6371
        %v6399 = vpack.c.b16 %v6374, %v6373
        %v6400 = vpack.c.b16 %v6376, %v6375
        %v6401 = vpack.c.b16 %v6378, %v6377
        %v6402 = vpack.c.b16 %v6380, %v6379
        %v6403 = vpack.c.b16 %v6382, %v6381
        %v6404 = vpack.c.b16 %v6384, %v6383
        %v6405 = vpack.c.b16 %v6386, %v6385
        %v6406 = vpack.c.b16 %v6388, %v6387
        %v6407 = vpack.c.b16 %v6390, %v6389
        %v6408 = vpack.c.b16 %v6392, %v6391
        %v6441 = vunpack.c.l.b16 %v6345
        %v6442 = vunpack.c.l.b16 %v6346
        %v6443 = vunpack.c.l.b16 %v6347
        %v6444 = vunpack.c.l.b16 %v6348
        %v6445 = vunpack.c.l.b16 %v6349
        %v6446 = vunpack.c.l.b16 %v6350
        %v6447 = vunpack.c.l.b16 %v6351
        %v6448 = vunpack.c.l.b16 %v6352
        %v6449 = vunpack.c.l.b16 %v6353
        %v6450 = vunpack.c.l.b16 %v6354
        %v6451 = vunpack.c.l.b16 %v6355
        %v6452 = vunpack.c.l.b16 %v6356
        %v6453 = vunpack.c.l.b16 %v6357
        %v6454 = vunpack.c.l.b16 %v6358
        %v6455 = vunpack.c.l.b16 %v6359
        %v6456 = vunpack.c.l.b16 %v6360
        %v6457 = vpack.c.b16 %v6442, %v6441
        %v6458 = vpack.c.b16 %v6444, %v6443
        %v6459 = vpack.c.b16 %v6446, %v6445
        %v6460 = vpack.c.b16 %v6448, %v6447
        %v6461 = vpack.c.b16 %v6450, %v6449
        %v6462 = vpack.c.b16 %v6452, %v6451
        %v6463 = vpack.c.b16 %v6454, %v6453
        %v6464 = vpack.c.b16 %v6456, %v6455
        %6473 = vmatprep.subr.bf16.mxu0 0
        %6474 = vmatpush1.bf16.msra.mxu0 %v6457
        %6475 = vmatprep.subr.bf16.mxu0 0
        %6476 = vmatpush1.bf16.msra.mxu0 %v6458
        %6477 = vmatprep.subr.bf16.mxu0 0
        %6478 = vmatpush1.bf16.msra.mxu0 %v6459
        %6479 = vmatprep.subr.bf16.mxu0 0
        %6480 = vmatpush1.bf16.msra.mxu0 %v6460
        %6481 = vmatprep.subr.bf16.mxu0 0
        %6482 = vmatpush1.bf16.msra.mxu0 %v6461
        %6483 = vmatprep.subr.bf16.mxu0 0
        %6484 = vmatpush1.bf16.msra.mxu0 %v6462
        %6485 = vmatprep.subr.bf16.mxu0 0
        %6486 = vmatpush1.bf16.msra.mxu0 %v6463
        %6487 = vmatprep.subr.bf16.mxu0 0
        %6488 = vmatpush1.bf16.msra.mxu0 %v6464
        %6489 = vmatprep.subr.bf16.mxu0 0
        %6490 = vmatpush1.bf16.msra.mxu0 0
        %6491 = vmatprep.subr.bf16.mxu0 0
        %6492 = vmatpush1.bf16.msra.mxu0 0
        %6493 = vmatprep.subr.bf16.mxu0 0
        %6494 = vmatpush1.bf16.msra.mxu0 0
        %6495 = vmatprep.subr.bf16.mxu0 0
        %6496 = vmatpush1.bf16.msra.mxu0 0
        %6497 = vmatprep.subr.bf16.mxu0 0
        %6498 = vmatpush1.bf16.msra.mxu0 0
        %6499 = vmatprep.subr.bf16.mxu0 0
        %6500 = vmatpush1.bf16.msra.mxu0 0
        %6501 = vmatprep.subr.bf16.mxu0 0
        %6502 = vmatpush1.bf16.msra.mxu0 0
        %6503 = vmatprep.subr.bf16.mxu0 0
        %6504 = vmatpush1.bf16.msra.mxu0 0
        %6505 = vmatprep.mubr.bf16.mxu0 0
        %6506 = vmatmul.mubr.bf16.gmra.mrb[0].mxu0 %v6393
        %v6507 = vpop.f32.mrb[0].mxu0
        %v6508 = vadd.f32 0.0, %v6507
        %v6509 = vpop.f32.mrb[0].mxu0
        %v6510 = vpop.f32.mrb[0].mxu0
        %v6511 = vadd.f32 0.0, %v6510
        %v6512 = vpop.f32.mrb[0].mxu0
        %6513 = vmatprep.mubr.bf16.mxu0 0
        %6514 = vmatmul.mubr.bf16.gmra.mrb[0].mxu0 %v6394
        %v6515 = vpop.f32.mrb[0].mxu0
        %v6516 = vadd.f32 0.0, %v6515
        %v6517 = vpop.f32.mrb[0].mxu0
        %v6518 = vpop.f32.mrb[0].mxu0
        %v6519 = vadd.f32 0.0, %v6518
        %v6520 = vpop.f32.mrb[0].mxu0
        %6521 = vmatprep.mubr.bf16.mxu0 0
        %6522 = vmatmul.mubr.bf16.gmra.mrb[0].mxu0 %v6395
        %v6523 = vpop.f32.mrb[0].mxu0
        %v6524 = vadd.f32 0.0, %v6523
        %v6525 = vpop.f32.mrb[0].mxu0
        %v6526 = vpop.f32.mrb[0].mxu0
        %v6527 = vadd.f32 0.0, %v6526
        %v6528 = vpop.f32.mrb[0].mxu0
        %6529 = vmatprep.mubr.bf16.mxu0 0
        %6530 = vmatmul.mubr.bf16.gmra.mrb[0].mxu0 %v6396
        %v6531 = vpop.f32.mrb[0].mxu0
        %v6532 = vadd.f32 0.0, %v6531
        %v6533 = vpop.f32.mrb[0].mxu0
        %v6534 = vpop.f32.mrb[0].mxu0
        %v6535 = vadd.f32 0.0, %v6534
        %v6536 = vpop.f32.mrb[0].mxu0
        %6537 = vmatprep.mubr.bf16.mxu0 0
        %6538 = vmatmul.mubr.bf16.gmra.mrb[0].mxu0 %v6397
        %v6539 = vpop.f32.mrb[0].mxu0
        %v6540 = vadd.f32 0.0, %v6539
        %v6541 = vpop.f32.mrb[0].mxu0
        %v6542 = vpop.f32.mrb[0].mxu0
        %v6543 = vadd.f32 0.0, %v6542
        %v6544 = vpop.f32.mrb[0].mxu0
        %6545 = vmatprep.mubr.bf16.mxu0 0
        %6546 = vmatmul.mubr.bf16.gmra.mrb[0].mxu0 %v6398
        %v6547 = vpop.f32.mrb[0].mxu0
        %v6548 = vadd.f32 0.0, %v6547
        %v6549 = vpop.f32.mrb[0].mxu0
        %v6550 = vpop.f32.mrb[0].mxu0
        %v6551 = vadd.f32 0.0, %v6550
        %v6552 = vpop.f32.mrb[0].mxu0
        %6553 = vmatprep.mubr.bf16.mxu0 0
        %6554 = vmatmul.mubr.bf16.gmra.mrb[0].mxu0 %v6399
        %v6555 = vpop.f32.mrb[0].mxu0
        %v6556 = vadd.f32 0.0, %v6555
        %v6557 = vpop.f32.mrb[0].mxu0
        %v6558 = vpop.f32.mrb[0].mxu0
        %v6559 = vadd.f32 0.0, %v6558
        %v6560 = vpop.f32.mrb[0].mxu0
        %6561 = vmatprep.mubr.bf16.mxu0 0
        %6562 = vmatmul.mubr.bf16.gmra.mrb[0].mxu0 %v6400
        %v6563 = vpop.f32.mrb[0].mxu0
        %v6564 = vadd.f32 0.0, %v6563
        %v6565 = vpop.f32.mrb[0].mxu0
        %v6566 = vpop.f32.mrb[0].mxu0
        %v6567 = vadd.f32 0.0, %v6566
        %v6568 = vpop.f32.mrb[0].mxu0
        %6569 = vmatprep.mubr.bf16.mxu0 0
        %6570 = vmatmul.mubr.bf16.gmra.mrb[0].mxu0 %v6401
        %v6571 = vpop.f32.mrb[0].mxu0
        %v6572 = vadd.f32 0.0, %v6571
        %v6573 = vpop.f32.mrb[0].mxu0
        %v6574 = vpop.f32.mrb[0].mxu0
        %v6575 = vadd.f32 0.0, %v6574
        %v6576 = vpop.f32.mrb[0].mxu0
        %6577 = vmatprep.mubr.bf16.mxu0 0
        %6578 = vmatmul.mubr.bf16.gmra.mrb[0].mxu0 %v6402
        %v6579 = vpop.f32.mrb[0].mxu0
        %v6580 = vadd.f32 0.0, %v6579
        %v6581 = vpop.f32.mrb[0].mxu0
        %v6582 = vpop.f32.mrb[0].mxu0
        %v6583 = vadd.f32 0.0, %v6582
        %v6584 = vpop.f32.mrb[0].mxu0
        %6585 = vmatprep.mubr.bf16.mxu0 0
        %6586 = vmatmul.mubr.bf16.gmra.mrb[0].mxu0 %v6403
        %v6587 = vpop.f32.mrb[0].mxu0
        %v6588 = vadd.f32 0.0, %v6587
        %v6589 = vpop.f32.mrb[0].mxu0
        %v6590 = vpop.f32.mrb[0].mxu0
        %v6591 = vadd.f32 0.0, %v6590
        %v6592 = vpop.f32.mrb[0].mxu0
        %6593 = vmatprep.mubr.bf16.mxu0 0
        %6594 = vmatmul.mubr.bf16.gmra.mrb[0].mxu0 %v6404
        %v6595 = vpop.f32.mrb[0].mxu0
        %v6596 = vadd.f32 0.0, %v6595
        %v6597 = vpop.f32.mrb[0].mxu0
        %v6598 = vpop.f32.mrb[0].mxu0
        %v6599 = vadd.f32 0.0, %v6598
        %v6600 = vpop.f32.mrb[0].mxu0
        %6601 = vmatprep.mubr.bf16.mxu0 0
        %6602 = vmatmul.mubr.bf16.gmra.mrb[0].mxu0 %v6405
        %v6603 = vpop.f32.mrb[0].mxu0
        %v6604 = vadd.f32 0.0, %v6603
        %v6605 = vpop.f32.mrb[0].mxu0
        %v6606 = vpop.f32.mrb[0].mxu0
        %v6607 = vadd.f32 0.0, %v6606
        %v6608 = vpop.f32.mrb[0].mxu0
        %6609 = vmatprep.mubr.bf16.mxu0 0
        %6610 = vmatmul.mubr.bf16.gmra.mrb[0].mxu0 %v6406
        %v6611 = vpop.f32.mrb[0].mxu0
        %v6612 = vadd.f32 0.0, %v6611
        %v6613 = vpop.f32.mrb[0].mxu0
        %v6614 = vpop.f32.mrb[0].mxu0
        %v6615 = vadd.f32 0.0, %v6614
        %v6616 = vpop.f32.mrb[0].mxu0
        %6617 = vmatprep.mubr.bf16.mxu0 0
        %6618 = vmatmul.mubr.bf16.gmra.mrb[0].mxu0 %v6407
        %v6619 = vpop.f32.mrb[0].mxu0
        %v6620 = vadd.f32 0.0, %v6619
        %v6621 = vpop.f32.mrb[0].mxu0
        %v6622 = vpop.f32.mrb[0].mxu0
        %v6623 = vadd.f32 0.0, %v6622
        %v6624 = vpop.f32.mrb[0].mxu0
        %6625 = vmatprep.mubr.bf16.mxu0 0
        %6626 = vmatmul.mubr.bf16.gmra.mrb[0].mxu0 %v6408
        %v6627 = vpop.f32.mrb[0].mxu0
        %v6628 = vadd.f32 0.0, %v6627
        %v6629 = vpop.f32.mrb[0].mxu0
        %v6630 = vpop.f32.mrb[0].mxu0
        %v6631 = vadd.f32 0.0, %v6630
        %v6632 = vpop.f32.mrb[0].mxu0
        %6633 = vdwg.mxu0
        %v6634 = vld [vmem:[#allocation2] sm:$0xff]
        %v6635 = vld [vmem:[#allocation2 + $0x8] sm:$0xff]
        %v6636 = vld [vmem:[#allocation2 + $0x10] sm:$0xff]
        %v6637 = vld [vmem:[#allocation2 + $0x18] sm:$0xff]
        %v6638 = vld [vmem:[#allocation2 + $0x20] sm:$0xff]
        %v6639 = vld [vmem:[#allocation2 + $0x28] sm:$0xff]
        %v6640 = vld [vmem:[#allocation2 + $0x30] sm:$0xff]
        %v6641 = vld [vmem:[#allocation2 + $0x38] sm:$0xff]
        %v6642 = vld [vmem:[#allocation2 + $0x40] sm:$0xff]
        %v6643 = vld [vmem:[#allocation2 + $0x48] sm:$0xff]
        %v6644 = vld [vmem:[#allocation2 + $0x50] sm:$0xff]
        %v6645 = vld [vmem:[#allocation2 + $0x58] sm:$0xff]
        %v6646 = vld [vmem:[#allocation2 + $0x60] sm:$0xff]
        %v6647 = vld [vmem:[#allocation2 + $0x68] sm:$0xff]
        %v6648 = vld [vmem:[#allocation2 + $0x70] sm:$0xff]
        %v6649 = vld [vmem:[#allocation2 + $0x78] sm:$0xff]
        %v6650 = vld [vmem:[#allocation2 + $0x80] sm:$0xff]
        %v6651 = vld [vmem:[#allocation2 + $0x88] sm:$0xff]
        %v6652 = vld [vmem:[#allocation2 + $0x90] sm:$0xff]
        %v6653 = vld [vmem:[#allocation2 + $0x98] sm:$0xff]
        %v6654 = vld [vmem:[#allocation2 + $0xa0] sm:$0xff]
        %v6655 = vld [vmem:[#allocation2 + $0xa8] sm:$0xff]
        %v6656 = vld [vmem:[#allocation2 + $0xb0] sm:$0xff]
        %v6657 = vld [vmem:[#allocation2 + $0xb8] sm:$0xff]
        %v6658 = vld [vmem:[#allocation2 + $0xc0] sm:$0xff]
        %v6659 = vld [vmem:[#allocation2 + $0xc8] sm:$0xff]
        %v6660 = vld [vmem:[#allocation2 + $0xd0] sm:$0xff]
        %v6661 = vld [vmem:[#allocation2 + $0xd8] sm:$0xff]
        %v6662 = vld [vmem:[#allocation2 + $0xe0] sm:$0xff]
        %v6663 = vld [vmem:[#allocation2 + $0xe8] sm:$0xff]
        %v6664 = vld [vmem:[#allocation2 + $0xf0] sm:$0xff]
        %v6665 = vld [vmem:[#allocation2 + $0xf8] sm:$0xff]
        %v6666 = vadd.f32 %v6634, %v6508
        %v6667 = vadd.f32 %v6635, %v6511
        %v6668 = vadd.f32 %v6636, %v6516
        %v6669 = vadd.f32 %v6637, %v6519
        %v6670 = vadd.f32 %v6638, %v6524
        %v6671 = vadd.f32 %v6639, %v6527
        %v6672 = vadd.f32 %v6640, %v6532
        %v6673 = vadd.f32 %v6641, %v6535
        %v6674 = vadd.f32 %v6642, %v6540
        %v6675 = vadd.f32 %v6643, %v6543
        %v6676 = vadd.f32 %v6644, %v6548
        %v6677 = vadd.f32 %v6645, %v6551
        %v6678 = vadd.f32 %v6646, %v6556
        %v6679 = vadd.f32 %v6647, %v6559
        %v6680 = vadd.f32 %v6648, %v6564
        %v6681 = vadd.f32 %v6649, %v6567
        %v6682 = vadd.f32 %v6650, %v6572
        %v6683 = vadd.f32 %v6651, %v6575
        %v6684 = vadd.f32 %v6652, %v6580
        %v6685 = vadd.f32 %v6653, %v6583
        %v6686 = vadd.f32 %v6654, %v6588
        %v6687 = vadd.f32 %v6655, %v6591
        %v6688 = vadd.f32 %v6656, %v6596
        %v6689 = vadd.f32 %v6657, %v6599
        %v6690 = vadd.f32 %v6658, %v6604
        %v6691 = vadd.f32 %v6659, %v6607
        %v6692 = vadd.f32 %v6660, %v6612
        %v6693 = vadd.f32 %v6661, %v6615
        %v6694 = vadd.f32 %v6662, %v6620
        %v6695 = vadd.f32 %v6663, %v6623
        %v6696 = vadd.f32 %v6664, %v6628
        %v6697 = vadd.f32 %v6665, %v6631
        %6698 = vst [vmem:[#allocation2] sm:$0xff] %v6666
        %6699 = vst [vmem:[#allocation2 + $0x8] sm:$0xff] %v6667
        %6700 = vst [vmem:[#allocation2 + $0x10] sm:$0xff] %v6668
        %6701 = vst [vmem:[#allocation2 + $0x18] sm:$0xff] %v6669
        %6702 = vst [vmem:[#allocation2 + $0x20] sm:$0xff] %v6670
        %6703 = vst [vmem:[#allocation2 + $0x28] sm:$0xff] %v6671
        %6704 = vst [vmem:[#allocation2 + $0x30] sm:$0xff] %v6672
        %6705 = vst [vmem:[#allocation2 + $0x38] sm:$0xff] %v6673
        %6706 = vst [vmem:[#allocation2 + $0x40] sm:$0xff] %v6674
        %6707 = vst [vmem:[#allocation2 + $0x48] sm:$0xff] %v6675
        %6708 = vst [vmem:[#allocation2 + $0x50] sm:$0xff] %v6676
        %6709 = vst [vmem:[#allocation2 + $0x58] sm:$0xff] %v6677
        %6710 = vst [vmem:[#allocation2 + $0x60] sm:$0xff] %v6678
        %6711 = vst [vmem:[#allocation2 + $0x68] sm:$0xff] %v6679
        %6712 = vst [vmem:[#allocation2 + $0x70] sm:$0xff] %v6680
        %6713 = vst [vmem:[#allocation2 + $0x78] sm:$0xff] %v6681
        %6714 = vst [vmem:[#allocation2 + $0x80] sm:$0xff] %v6682
        %6715 = vst [vmem:[#allocation2 + $0x88] sm:$0xff] %v6683
        %6716 = vst [vmem:[#allocation2 + $0x90] sm:$0xff] %v6684
        %6717 = vst [vmem:[#allocation2 + $0x98] sm:$0xff] %v6685
        %6718 = vst [vmem:[#allocation2 + $0xa0] sm:$0xff] %v6686
        %6719 = vst [vmem:[#allocation2 + $0xa8] sm:$0xff] %v6687
        %6720 = vst [vmem:[#allocation2 + $0xb0] sm:$0xff] %v6688
        %6721 = vst [vmem:[#allocation2 + $0xb8] sm:$0xff] %v6689
        %6722 = vst [vmem:[#allocation2 + $0xc0] sm:$0xff] %v6690
        %6723 = vst [vmem:[#allocation2 + $0xc8] sm:$0xff] %v6691
        %6724 = vst [vmem:[#allocation2 + $0xd0] sm:$0xff] %v6692
        %6725 = vst [vmem:[#allocation2 + $0xd8] sm:$0xff] %v6693
        %6726 = vst [vmem:[#allocation2 + $0xe0] sm:$0xff] %v6694
        %6727 = vst [vmem:[#allocation2 + $0xe8] sm:$0xff] %v6695
        %6728 = vst [vmem:[#allocation2 + $0xf0] sm:$0xff] %v6696
        %6729 = vst [vmem:[#allocation2 + $0xf8] sm:$0xff] %v6697
        %v6730 = vld [vmem:[#allocation2] sm:$0xff]
        %v6731 = vld [vmem:[#allocation2 + $0x8] sm:$0xff]
        %v6732 = vld [vmem:[#allocation2 + $0x10] sm:$0xff]
        %v6733 = vld [vmem:[#allocation2 + $0x18] sm:$0xff]
        %v6734 = vld [vmem:[#allocation2 + $0x20] sm:$0xff]
        %v6735 = vld [vmem:[#allocation2 + $0x28] sm:$0xff]
        %v6736 = vld [vmem:[#allocation2 + $0x30] sm:$0xff]
        %v6737 = vld [vmem:[#allocation2 + $0x38] sm:$0xff]
        %v6738 = vld [vmem:[#allocation2 + $0x40] sm:$0xff]
        %v6739 = vld [vmem:[#allocation2 + $0x48] sm:$0xff]
        %v6740 = vld [vmem:[#allocation2 + $0x50] sm:$0xff]
        %v6741 = vld [vmem:[#allocation2 + $0x58] sm:$0xff]
        %v6742 = vld [vmem:[#allocation2 + $0x60] sm:$0xff]
        %v6743 = vld [vmem:[#allocation2 + $0x68] sm:$0xff]
        %v6744 = vld [vmem:[#allocation2 + $0x70] sm:$0xff]
        %v6745 = vld [vmem:[#allocation2 + $0x78] sm:$0xff]
        %v6746 = vld [vmem:[#allocation2 + $0x80] sm:$0xff]
        %v6747 = vld [vmem:[#allocation2 + $0x88] sm:$0xff]
        %v6748 = vld [vmem:[#allocation2 + $0x90] sm:$0xff]
        %v6749 = vld [vmem:[#allocation2 + $0x98] sm:$0xff]
        %v6750 = vld [vmem:[#allocation2 + $0xa0] sm:$0xff]
        %v6751 = vld [vmem:[#allocation2 + $0xa8] sm:$0xff]
        %v6752 = vld [vmem:[#allocation2 + $0xb0] sm:$0xff]
        %v6753 = vld [vmem:[#allocation2 + $0xb8] sm:$0xff]
        %v6754 = vld [vmem:[#allocation2 + $0xc0] sm:$0xff]
        %v6755 = vld [vmem:[#allocation2 + $0xc8] sm:$0xff]
        %v6756 = vld [vmem:[#allocation2 + $0xd0] sm:$0xff]
        %v6757 = vld [vmem:[#allocation2 + $0xd8] sm:$0xff]
        %v6758 = vld [vmem:[#allocation2 + $0xe0] sm:$0xff]
        %v6759 = vld [vmem:[#allocation2 + $0xe8] sm:$0xff]
        %v6760 = vld [vmem:[#allocation2 + $0xf0] sm:$0xff]
        %v6761 = vld [vmem:[#allocation2 + $0xf8] sm:$0xff]
        %v6762 = vpack.c.bf16 %v6731, %v6730
        %v6763 = vpack.c.bf16 %v6733, %v6732
        %v6764 = vpack.c.bf16 %v6735, %v6734
        %v6765 = vpack.c.bf16 %v6737, %v6736
        %v6766 = vpack.c.bf16 %v6739, %v6738
        %v6767 = vpack.c.bf16 %v6741, %v6740
        %v6768 = vpack.c.bf16 %v6743, %v6742
        %v6769 = vpack.c.bf16 %v6745, %v6744
        %v6770 = vpack.c.bf16 %v6747, %v6746
        %v6771 = vpack.c.bf16 %v6749, %v6748
        %v6772 = vpack.c.bf16 %v6751, %v6750
        %v6773 = vpack.c.bf16 %v6753, %v6752
        %v6774 = vpack.c.bf16 %v6755, %v6754
        %v6775 = vpack.c.bf16 %v6757, %v6756
        %v6776 = vpack.c.bf16 %v6759, %v6758
        %v6777 = vpack.c.bf16 %v6761, %v6760
        %v6794 = vunpack.c.l.b16 %v6762
        %v6795 = vunpack.c.h.b16 %v6762
        %v6796 = vunpack.c.l.b16 %v6763
        %v6797 = vunpack.c.h.b16 %v6763
        %v6798 = vunpack.c.l.b16 %v6764
        %v6799 = vunpack.c.h.b16 %v6764
        %v6800 = vunpack.c.l.b16 %v6765
        %v6801 = vunpack.c.h.b16 %v6765
        %v6802 = vunpack.c.l.b16 %v6766
        %v6803 = vunpack.c.h.b16 %v6766
        %v6804 = vunpack.c.l.b16 %v6767
        %v6805 = vunpack.c.h.b16 %v6767
        %v6806 = vunpack.c.l.b16 %v6768
        %v6807 = vunpack.c.h.b16 %v6768
        %v6808 = vunpack.c.l.b16 %v6769
        %v6809 = vunpack.c.h.b16 %v6769
        %v6810 = vunpack.c.l.b16 %v6770
        %v6811 = vunpack.c.h.b16 %v6770
        %v6812 = vunpack.c.l.b16 %v6771
        %v6813 = vunpack.c.h.b16 %v6771
        %v6814 = vunpack.c.l.b16 %v6772
        %v6815 = vunpack.c.h.b16 %v6772
        %v6816 = vunpack.c.l.b16 %v6773
        %v6817 = vunpack.c.h.b16 %v6773
        %v6818 = vunpack.c.l.b16 %v6774
        %v6819 = vunpack.c.h.b16 %v6774
        %v6820 = vunpack.c.l.b16 %v6775
        %v6821 = vunpack.c.h.b16 %v6775
        %v6822 = vunpack.c.l.b16 %v6776
        %v6823 = vunpack.c.h.b16 %v6776
        %v6824 = vunpack.c.l.b16 %v6777
        %v6825 = vunpack.c.h.b16 %v6777
        %v6826 = vpack.c.b16 %v6794, %v6794
        %v6827 = vpack.c.b16 %v6795, %v6795
        %v6828 = vpack.c.b16 %v6796, %v6796
        %v6829 = vpack.c.b16 %v6797, %v6797
        %v6830 = vpack.c.b16 %v6798, %v6798
        %v6831 = vpack.c.b16 %v6799, %v6799
        %v6832 = vpack.c.b16 %v6800, %v6800
        %v6833 = vpack.c.b16 %v6801, %v6801
        %v6834 = vpack.c.b16 %v6802, %v6802
        %v6835 = vpack.c.b16 %v6803, %v6803
        %v6836 = vpack.c.b16 %v6804, %v6804
        %v6837 = vpack.c.b16 %v6805, %v6805
        %v6838 = vpack.c.b16 %v6806, %v6806
        %v6839 = vpack.c.b16 %v6807, %v6807
        %v6840 = vpack.c.b16 %v6808, %v6808
        %v6841 = vpack.c.b16 %v6809, %v6809
        %v6842 = vpack.c.b16 %v6810, %v6810
        %v6843 = vpack.c.b16 %v6811, %v6811
        %v6844 = vpack.c.b16 %v6812, %v6812
        %v6845 = vpack.c.b16 %v6813, %v6813
        %v6846 = vpack.c.b16 %v6814, %v6814
        %v6847 = vpack.c.b16 %v6815, %v6815
        %v6848 = vpack.c.b16 %v6816, %v6816
        %v6849 = vpack.c.b16 %v6817, %v6817
        %v6850 = vpack.c.b16 %v6818, %v6818
        %v6851 = vpack.c.b16 %v6819, %v6819
        %v6852 = vpack.c.b16 %v6820, %v6820
        %v6853 = vpack.c.b16 %v6821, %v6821
        %v6854 = vpack.c.b16 %v6822, %v6822
        %v6855 = vpack.c.b16 %v6823, %v6823
        %v6856 = vpack.c.b16 %v6824, %v6824
        %v6857 = vpack.c.b16 %v6825, %v6825
        %6890 = vst [vmem:[%s429] sm:$0xf] %v6826
        %6891 = vst [vmem:[%s429 + $0x4] sm:$0xf] %v6827
        %6892 = vst [vmem:[%s429 + $0x8] sm:$0xf] %v6828
        %6893 = vst [vmem:[%s429 + $0xc] sm:$0xf] %v6829
        %6894 = vst [vmem:[%s429 + $0x10] sm:$0xf] %v6830
        %6895 = vst [vmem:[%s429 + $0x14] sm:$0xf] %v6831
        %6896 = vst [vmem:[%s429 + $0x18] sm:$0xf] %v6832
        %6897 = vst [vmem:[%s429 + $0x1c] sm:$0xf] %v6833
        %6898 = vst [vmem:[%s429 + $0x20] sm:$0xf] %v6834
        %6899 = vst [vmem:[%s429 + $0x24] sm:$0xf] %v6835
        %6900 = vst [vmem:[%s429 + $0x28] sm:$0xf] %v6836
        %6901 = vst [vmem:[%s429 + $0x2c] sm:$0xf] %v6837
        %6902 = vst [vmem:[%s429 + $0x30] sm:$0xf] %v6838
        %6903 = vst [vmem:[%s429 + $0x34] sm:$0xf] %v6839
        %6904 = vst [vmem:[%s429 + $0x38] sm:$0xf] %v6840
        %6905 = vst [vmem:[%s429 + $0x3c] sm:$0xf] %v6841
        %6906 = vst [vmem:[%s429 + $0x40] sm:$0xf] %v6842
        %6907 = vst [vmem:[%s429 + $0x44] sm:$0xf] %v6843
        %6908 = vst [vmem:[%s429 + $0x48] sm:$0xf] %v6844
        %6909 = vst [vmem:[%s429 + $0x4c] sm:$0xf] %v6845
        %6910 = vst [vmem:[%s429 + $0x50] sm:$0xf] %v6846
        %6911 = vst [vmem:[%s429 + $0x54] sm:$0xf] %v6847
        %6912 = vst [vmem:[%s429 + $0x58] sm:$0xf] %v6848
        %6913 = vst [vmem:[%s429 + $0x5c] sm:$0xf] %v6849
        %6914 = vst [vmem:[%s429 + $0x60] sm:$0xf] %v6850
        %6915 = vst [vmem:[%s429 + $0x64] sm:$0xf] %v6851
        %6916 = vst [vmem:[%s429 + $0x68] sm:$0xf] %v6852
        %6917 = vst [vmem:[%s429 + $0x6c] sm:$0xf] %v6853
        %6918 = vst [vmem:[%s429 + $0x70] sm:$0xf] %v6854
        %6919 = vst [vmem:[%s429 + $0x74] sm:$0xf] %v6855
        %6920 = vst [vmem:[%s429 + $0x78] sm:$0xf] %v6856
        %6921 = vst [vmem:[%s429 + $0x7c] sm:$0xf] %v6857
        %v6922 = vadd.f32 %v6730, %v6731
        %v6923 = vadd.f32 %v6922, %v6732
        %v6924 = vadd.f32 %v6923, %v6733
        %v6925 = vadd.f32 %v6924, %v6734
        %v6926 = vadd.f32 %v6925, %v6735
        %v6927 = vadd.f32 %v6926, %v6736
        %v6928 = vadd.f32 %v6927, %v6737
        %v6929 = vadd.f32 %v6928, %v6738
        %v6930 = vadd.f32 %v6929, %v6739
        %v6931 = vadd.f32 %v6930, %v6740
        %v6932 = vadd.f32 %v6931, %v6741
        %v6933 = vadd.f32 %v6932, %v6742
        %v6934 = vadd.f32 %v6933, %v6743
        %v6935 = vadd.f32 %v6934, %v6744
        %v6936 = vadd.f32 %v6935, %v6745
        %v6937 = vadd.f32 %v6936, %v6746
        %v6938 = vadd.f32 %v6937, %v6747
        %v6939 = vadd.f32 %v6938, %v6748
        %v6940 = vadd.f32 %v6939, %v6749
        %v6941 = vadd.f32 %v6940, %v6750
        %v6942 = vadd.f32 %v6941, %v6751
        %v6943 = vadd.f32 %v6942, %v6752
        %v6944 = vadd.f32 %v6943, %v6753
        %v6945 = vadd.f32 %v6944, %v6754
        %v6946 = vadd.f32 %v6945, %v6755
        %v6947 = vadd.f32 %v6946, %v6756
        %v6948 = vadd.f32 %v6947, %v6757
        %v6949 = vadd.f32 %v6948, %v6758
        %v6950 = vadd.f32 %v6949, %v6759
        %v6951 = vadd.f32 %v6950, %v6760
        %v6952 = vadd.f32 %v6951, %v6761
        %v6953 = vrot.slane %v6952, 4
        %v6954 = vadd.f32 %v6952, %v6953
        %v6955 = vrot.slane %v6954, 2
        %v6956 = vadd.f32 %v6954, %v6955
        %v6957 = vrot.slane %v6956, 1
        %v6958 = vadd.f32 %v6956, %v6957
        %6959 = vst [vmem:[%s432] sm:$0x1] %v6958
        %v6960 = vmul.f32 %v6730, %v6730
        %v6961 = vmul.f32 %v6731, %v6731
        %v6962 = vmul.f32 %v6732, %v6732
        %v6963 = vmul.f32 %v6733, %v6733
        %v6964 = vmul.f32 %v6734, %v6734
        %v6965 = vmul.f32 %v6735, %v6735
        %v6966 = vmul.f32 %v6736, %v6736
        %v6967 = vmul.f32 %v6737, %v6737
        %v6968 = vmul.f32 %v6738, %v6738
        %v6969 = vmul.f32 %v6739, %v6739
        %v6970 = vmul.f32 %v6740, %v6740
        %v6971 = vmul.f32 %v6741, %v6741
        %v6972 = vmul.f32 %v6742, %v6742
        %v6973 = vmul.f32 %v6743, %v6743
        %v6974 = vmul.f32 %v6744, %v6744
        %v6975 = vmul.f32 %v6745, %v6745
        %v6976 = vmul.f32 %v6746, %v6746
        %v6977 = vmul.f32 %v6747, %v6747
        %v6978 = vmul.f32 %v6748, %v6748
        %v6979 = vmul.f32 %v6749, %v6749
        %v6980 = vmul.f32 %v6750, %v6750
        %v6981 = vmul.f32 %v6751, %v6751
        %v6982 = vmul.f32 %v6752, %v6752
        %v6983 = vmul.f32 %v6753, %v6753
        %v6984 = vmul.f32 %v6754, %v6754
        %v6985 = vmul.f32 %v6755, %v6755
        %v6986 = vmul.f32 %v6756, %v6756
        %v6987 = vmul.f32 %v6757, %v6757
        %v6988 = vmul.f32 %v6758, %v6758
        %v6989 = vmul.f32 %v6759, %v6759
        %v6990 = vmul.f32 %v6760, %v6760
        %v6991 = vmul.f32 %v6761, %v6761
        %v6992 = vadd.f32 %v6960, %v6961
        %v6993 = vadd.f32 %v6992, %v6962
        %v6994 = vadd.f32 %v6993, %v6963
        %v6995 = vadd.f32 %v6994, %v6964
        %v6996 = vadd.f32 %v6995, %v6965
        %v6997 = vadd.f32 %v6996, %v6966
        %v6998 = vadd.f32 %v6997, %v6967
        %v6999 = vadd.f32 %v6998, %v6968
        %v7000 = vadd.f32 %v6999, %v6969
        %v7001 = vadd.f32 %v7000, %v6970
        %v7002 = vadd.f32 %v7001, %v6971
        %v7003 = vadd.f32 %v7002, %v6972
        %v7004 = vadd.f32 %v7003, %v6973
        %v7005 = vadd.f32 %v7004, %v6974
        %v7006 = vadd.f32 %v7005, %v6975
        %v7007 = vadd.f32 %v7006, %v6976
        %v7008 = vadd.f32 %v7007, %v6977
        %v7009 = vadd.f32 %v7008, %v6978
        %v7010 = vadd.f32 %v7009, %v6979
        %v7011 = vadd.f32 %v7010, %v6980
        %v7012 = vadd.f32 %v7011, %v6981
        %v7013 = vadd.f32 %v7012, %v6982
        %v7014 = vadd.f32 %v7013, %v6983
        %v7015 = vadd.f32 %v7014, %v6984
        %v7016 = vadd.f32 %v7015, %v6985
        %v7017 = vadd.f32 %v7016, %v6986
        %v7018 = vadd.f32 %v7017, %v6987
        %v7019 = vadd.f32 %v7018, %v6988
        %v7020 = vadd.f32 %v7019, %v6989
        %v7021 = vadd.f32 %v7020, %v6990
        %v7022 = vadd.f32 %v7021, %v6991
        %v7023 = vrot.slane %v7022, 4
        %v7024 = vadd.f32 %v7022, %v7023
        %v7025 = vrot.slane %v7024, 2
        %v7026 = vadd.f32 %v7024, %v7025
        %v7027 = vrot.slane %v7026, 1
        %v7028 = vadd.f32 %v7026, %v7027
        %7029 = vst [vmem:[%s435] sm:$0x1] %v7028
        %p7030 = scmp.lt.s32.totalorder %s18, 1
        %s7031 = scalar_select %p7030, %s18, 1
        %s7032 = smul.addr %s7031, 32
        %s7033 = smul.addr %s7032, 4
        %s7034 = scalar_lea.vmem %s4, %s7033
        %p7035 = scmp.lt.s32.totalorder %s18, 1
        %s7036 = scalar_select %p7035, %s18, 1
        %s7037 = scalar_lea.vmem %s5, %s7036
        %p7038 = scmp.lt.s32.totalorder %s18, 1
        %s7039 = scalar_select %p7038, %s18, 1
        %s7040 = scalar_lea.vmem %s6, %s7039
        // Predicated region
        $region78: #{bottleneck_forward.5} parent=72 // pred_check
          %p7041 = pneg %p125
        $region79: #{bottleneck_forward.5} parent=72 // pred_check_branch
          %7043 = sbr.rel (%p7041) target = $region81
        $region80: #{bottleneck_forward.5} parent=72 // pred_region
          _
        $region81: #{bottleneck_forward.5} parent=72 // pred_fallthru
          _
        // Predicated region
        $region82: #{bottleneck_forward.5} parent=72 // pred_check
          %p7044 = pneg %p151
        $region83: #{bottleneck_forward.5} parent=72 // pred_check_branch
          %7046 = sbr.rel (%p7044) target = $region85
        $region84: #{bottleneck_forward.5} parent=72 // pred_region
          _
        $region85: #{bottleneck_forward.5} parent=72 // pred_fallthru
          _
        // Predicated region
        $region86: #{bottleneck_forward.5} parent=72 // pred_check
          %p7047 = pneg %p177
        $region87: #{bottleneck_forward.5} parent=72 // pred_check_branch
          %7049 = sbr.rel (%p7047) target = $region89
        $region88: #{bottleneck_forward.5} parent=72 // pred_region
          _
        $region89: #{bottleneck_forward.5} parent=72 // pred_fallthru
          _
      $region73: #{bottleneck_forward.5} parent=5 // pred_fallthru
        _
      %p7050 = scmp.le.s32.totalorder 2, %s13
      // Predicated region
      $region90: #{bottleneck_forward.5} parent=5 // pred_check
        %p7051 = pneg %p7050
      $region91: #{bottleneck_forward.5} parent=5 // pred_check_branch
        %7053 = sbr.rel (%p7051) target = $region93
      $region92: #{bottleneck_forward.5} parent=5 // pred_region
        %s7054 = ssub.s32 %s13, 2
        // Predicated region
        $region94: #{bottleneck_forward.5} parent=92 // pred_check
          %p7055 = pneg %p131
        $region95: #{bottleneck_forward.5} parent=92 // pred_check_branch
          %7057 = sbr.rel (%p7055) target = $region97
        $region96: #{bottleneck_forward.5} parent=92 // pred_region
          %p7058 = scmp.lt.s32.totalorder %s19, 1
          %s7059 = scalar_select %p7058, %s19, 1
          %s7060 = smul.addr %s7059, 32
          %s7061 = smul.addr %s7060, 4
          %s7062 = scalar_lea.vmem %s4, %s7061
        $region97: #{bottleneck_forward.5} parent=92 // pred_fallthru
          _
        // Predicated region
        $region98: #{bottleneck_forward.5} parent=92 // pred_check
          %p7063 = pneg %p157
        $region99: #{bottleneck_forward.5} parent=92 // pred_check_branch
          %7065 = sbr.rel (%p7063) target = $region101
        $region100: #{bottleneck_forward.5} parent=92 // pred_region
          %p7066 = scmp.lt.s32.totalorder %s19, 1
          %s7067 = scalar_select %p7066, %s19, 1
          %s7068 = scalar_lea.vmem %s5, %s7067
        $region101: #{bottleneck_forward.5} parent=92 // pred_fallthru
          _
        // Predicated region
        $region102: #{bottleneck_forward.5} parent=92 // pred_check
          %p7069 = pneg %p183
        $region103: #{bottleneck_forward.5} parent=92 // pred_check_branch
          %7071 = sbr.rel (%p7069) target = $region105
        $region104: #{bottleneck_forward.5} parent=92 // pred_region
          %p7072 = scmp.lt.s32.totalorder %s19, 1
          %s7073 = scalar_select %p7072, %s19, 1
          %s7074 = scalar_lea.vmem %s6, %s7073
        $region105: #{bottleneck_forward.5} parent=92 // pred_fallthru
          _
      $region93: #{bottleneck_forward.5} parent=5 // pred_fallthru
        _
    $region6: #{bottleneck_forward.5} parent=1 // loop_footer
      %s17 = sadd.s32 1, %s13
    $region7: #{bottleneck_forward.5} parent=1 // loop_footer_branch
      %12 = sbr.rel target = $region3
    $region8: #{bottleneck_forward.5} parent=1 // loop_exit
      _

</llo_original>
